<compile_context>
chip_gen: v7x
topology: tpu7x:2x2x1
jax: 0.10.0
libtpu: 0.0.40
codegen_flags: <defaults>
</compile_context>

<pallas_src>
import jax
import jax.numpy as jnp
from jax.experimental import pallas as pl
from jax.experimental.pallas import tpu as pltpu


def _vrp_actor_kernel(x_ref, xo_ref,
                      we1_ref, we2_ref, wo1_ref, wo2_ref,
                      wa_ref, wb_ref, f1a_ref, f1b_ref, f2_ref,
                      vec_ref,
                      out_ref, a_scr):
    """One batch tile (TB lanes), all N nodes fused on the lane axis.

    Shapes:
      x_ref  : (c_pad, N*TB)  node features, lane index = n*TB + b
      xo_ref : (c_pad, TB)    origin/depot features
      weights: natural (out, in) orientation; compute dtype (bf16 or f32)
      vec_ref: (H, 8) packed f32 columns [be1, be2, bo1, bo2, fb1, fb2, v_att, v_ptr]
      out_ref: (1, N*TB)      pointer logits, lane index = n*TB + b
      a_scr  : (H, N*TB)      encoded node hiddens (compute dtype)
    """
    f32 = jnp.float32
    cdt = we2_ref.dtype                    # MXU operand dtype; accumulation is f32
    TB = xo_ref.shape[1]
    n_nodes = x_ref.shape[1] // TB
    H = we2_ref.shape[0]

    vec = vec_ref[...]                                                     # (H, 8)
    be1, be2 = vec[:, 0:1], vec[:, 1:2]
    bo1, bo2 = vec[:, 2:3], vec[:, 3:4]
    fb1, fb2 = vec[:, 4:5], vec[:, 5:6]
    vatt, vptr = vec[:, 6:7], vec[:, 7:8]

    # ---- origin encoder -> decoder hidden, one (H, TB) slab for the tile ----
    xo = xo_ref[...]
    ho = jnp.maximum(
        jnp.dot(wo1_ref[...], xo, preferred_element_type=f32) + bo1, 0.0)
    origin = jnp.dot(wo2_ref[...], ho.astype(cdt),
                     preferred_element_type=f32) + bo2                     # (H, TB)
    origin_c = origin.astype(cdt)
    # attention bias W[:, H:] @ decoder_hidden, shared by every node of a column
    att_bias = jnp.dot(wb_ref[...], origin_c, preferred_element_type=f32)  # (H, TB)

    # ---- node encoder + attention pre-activation: fused (·, N*TB) matmuls ----
    h = jnp.maximum(
        jnp.dot(we1_ref[...], x_ref[...], preferred_element_type=f32) + be1, 0.0)
    a = jnp.dot(we2_ref[...], h.astype(cdt),
                preferred_element_type=f32) + be2                          # (H, N*TB)
    a_c = a.astype(cdt)
    a_scr[...] = a_c
    wa_a = jnp.dot(wa_ref[...], a_c, preferred_element_type=f32)           # (H, N*TB)

    # ---- per-node v-projection (VPU mul + sublane reduce), softmax over nodes ----
    logits = []
    for n in range(n_nodes):
        sl = slice(n * TB, (n + 1) * TB)
        e_n = jnp.tanh(wa_a[:, sl] + att_bias)                             # (H, TB)
        logits.append(jnp.sum(vatt * e_n, axis=0, keepdims=True))          # (1, TB)
    m = logits[0]
    for n in range(1, n_nodes):
        m = jnp.maximum(m, logits[n])
    ps = [jnp.exp(l - m) for l in logits]
    s = ps[0]
    for n in range(1, n_nodes):
        s = s + ps[n]
    inv = 1.0 / s                                                          # (1, TB)

    # ---- attention context: ctx[h,b] = sum_n attn[n,b] * a[n,h,b] ----
    ctx = jnp.zeros((H, TB), f32)
    for n in range(n_nodes):
        sl = slice(n * TB, (n + 1) * TB)
        ctx = ctx + (ps[n] * inv) * a_scr[:, sl].astype(f32)               # (H, TB)

    # ---- pointer MLP: fc1 on cat(origin, context) via split weights; fc2 ----
    h1 = jnp.maximum(
        jnp.dot(f1a_ref[...], origin_c, preferred_element_type=f32)
        + jnp.dot(f1b_ref[...], ctx.astype(cdt), preferred_element_type=f32)
        + fb1, 0.0)
    h2 = jnp.maximum(
        jnp.dot(f2_ref[...], h1.astype(cdt), preferred_element_type=f32)
        + fb2, 0.0)                                                        # (H, TB)

    # ---- pointer v-projection -> lane-dense (1, N*TB) output ----
    rows = []
    for n in range(n_nodes):
        sl = slice(n * TB, (n + 1) * TB)
        t_n = jnp.tanh(a_scr[:, sl].astype(f32) + h2)                      # (H, TB)
        rows.append(jnp.sum(vptr * t_n, axis=0, keepdims=True))            # (1, TB)
    out_ref[...] = jnp.concatenate(rows, axis=1).astype(out_ref.dtype)     # (1, N*TB)


def vrp_actor_forward(params, static_input, dynamic_input, origin_static, origin_dynamic,
                      *, batch_tile=None, compute_dtype=jnp.bfloat16):
    """Full VRPActorModel.forward. Returns pointer logits of shape (B, N)."""
    f32 = jnp.float32
    cdt = compute_dtype
    B, N, c_s = static_input.shape
    c_d = dynamic_input.shape[2]
    c_in = c_s + c_d
    H = params["all_embed_w2"].shape[0]
    assert H % 128 == 0, "lane-dense layout assumes hidden_size is a multiple of 128"

    if batch_tile is None:
        # TB=256 fills the 256-wide MXU on v6e/v7x; only use it when there are
        # still >=2 grid steps so both v7x TensorCores get work.
        batch_tile = 256 if B >= 512 else 128
    TB = batch_tile
    G = -(-B // TB)                      # number of batch tiles (grid steps)
    b_pad = G * TB
    c_pad = 8                            # pad the tiny feature axis to one sublane group

    # 1) mask customer static features whose demand (dynamic feature 1) is <= 0.
    active = (dynamic_input[:, 1:, 1] > 0).astype(f32)[:, :, None]
    static_m = jnp.concatenate(
        [static_input[:, :1].astype(f32), static_input[:, 1:].astype(f32) * active], axis=1)

    # 2) feature concat, pad, and lay out as (c_pad, G*N*TB): lane = g*N*TB + n*TB + b.
    x = jnp.concatenate([static_m, dynamic_input.astype(f32)], axis=2)       # (B, N, c_in)
    x = jnp.pad(x, ((0, b_pad - B), (0, 0), (0, c_pad - c_in)))              # (b_pad, N, 8)
    x = x.reshape(G, TB, N, c_pad).transpose(3, 0, 2, 1).reshape(c_pad, G * N * TB)
    x = x.astype(cdt)

    xo = jnp.concatenate([origin_static.astype(f32), origin_dynamic.astype(f32)], axis=1)
    xo = jnp.pad(xo, ((0, b_pad - B), (0, c_pad - c_in))).T.astype(cdt)       # (8, b_pad)

    # 3) weights in the layouts the kernel consumes; MXU operands in compute dtype.
    we1 = jnp.pad(params["all_embed_w1"].astype(f32),
                  ((0, 0), (0, c_pad - c_in))).astype(cdt)
    wo1 = jnp.pad(params["origin_embed_w1"].astype(f32),
                  ((0, 0), (0, c_pad - c_in))).astype(cdt)
    we2 = params["all_embed_w2"].astype(cdt)
    wo2 = params["origin_embed_w2"].astype(cdt)
    w_att = params["att_W"].reshape(H, 2 * H)
    wa = w_att[:, :H].astype(cdt)        # acts on the node hiddens  (concat 1st half)
    wb = w_att[:, H:].astype(cdt)        # acts on the broadcast decoder hidden
    f1a = params["fc1_w"][:, :H].astype(cdt)   # acts on the origin hidden
    f1b = params["fc1_w"][:, H:].astype(cdt)   # acts on the attention context
    f2 = params["fc2_w"].astype(cdt)
    # packed bias / v table: one (H, 8) resident buffer instead of 8 (H,1) inputs
    vec = jnp.stack([params["all_embed_b1"], params["all_embed_b2"],
                     params["origin_embed_b1"], params["origin_embed_b2"],
                     params["fc1_b"], params["fc2_b"],
                     params["att_v"].reshape(H), params["ptr_v"].reshape(H)],
                    axis=1).astype(f32)                                      # (H, 8)

    w_in_spec = pl.BlockSpec((H, c_pad), lambda i: (0, 0))
    w_hh_spec = pl.BlockSpec((H, H), lambda i: (0, 0))

    probs_flat = pl.pallas_call(
        _vrp_actor_kernel,
        out_shape=jax.ShapeDtypeStruct((1, G * N * TB), f32),
        grid_spec=pltpu.PrefetchScalarGridSpec(
            num_scalar_prefetch=0,
            grid=(G,),
            in_specs=[
                pl.BlockSpec((c_pad, N * TB), lambda i: (0, i)),   # x (fused node slab)
                pl.BlockSpec((c_pad, TB), lambda i: (0, i)),       # origin features
                w_in_spec, w_hh_spec,                              # all_embed w1, w2
                w_in_spec, w_hh_spec,                              # origin_embed w1, w2
                w_hh_spec, w_hh_spec,                              # attention Wa, Wb
                w_hh_spec, w_hh_spec,                              # fc1 split halves
                w_hh_spec,                                         # fc2
                pl.BlockSpec((H, 8), lambda i: (0, 0)),            # packed bias/v table
            ],
            out_specs=pl.BlockSpec((1, N * TB), lambda i: (0, i)),
            scratch_shapes=[pltpu.VMEM((H, N * TB), cdt)],
        ),
        compiler_params=pltpu.CompilerParams(
            dimension_semantics=("parallel",),
        ),
    )(x, xo, we1, we2, wo1, wo2, wa, wb, f1a, f1b, f2, vec)

    # lane index = g*N*TB + n*TB + b  ->  (b_pad, N)
    probs = probs_flat.reshape(G, N, TB).transpose(0, 2, 1).reshape(b_pad, N)
    return probs[:B]


def vrp_actor_ref(params, static_input, dynamic_input, origin_static, origin_dynamic):
    """Pure-JAX mirror of the PyTorch VRPActorModel.forward (f32 everywhere)."""
    f32 = jnp.float32
    H = params["all_embed_w2"].shape[0]

    active = (dynamic_input[:, 1:, 1] > 0).astype(f32)[:, :, None]
    static_m = jnp.concatenate([static_input[:, :1], static_input[:, 1:] * active], axis=1)
    x = jnp.concatenate([static_m, dynamic_input], axis=2)                    # (B, N, 4)
    xo = jnp.concatenate([origin_static, origin_dynamic], axis=1)[:, None]    # (B, 1, 4)

    def encoder(inp, w1, b1, w2, b2):
        return jax.nn.relu(inp @ w1.T + b1) @ w2.T + b2

    all_h = encoder(x, params["all_embed_w1"], params["all_embed_b1"],
                    params["all_embed_w2"], params["all_embed_b2"])            # (B, N, H)
    origin_h = encoder(xo, params["origin_embed_w1"], params["origin_embed_b1"],
                       params["origin_embed_w2"], params["origin_embed_b2"])[:, 0]  # (B, H)

    w_att = params["att_W"].reshape(H, 2 * H)
    v_att = params["att_v"].reshape(H)
    e = jnp.tanh(jnp.einsum("hk,bnk->bnh", w_att[:, :H], all_h)
                 + jnp.einsum("hk,bk->bh", w_att[:, H:], origin_h)[:, None, :])
    attn = jax.nn.softmax(jnp.einsum("h,bnh->bn", v_att, e), axis=1)           # (B, N)
    context = jnp.einsum("bn,bnh->bh", attn, all_h)                            # (B, H)
    fc_in = jnp.concatenate([origin_h, context], axis=1)                       # (B, 2H)
    h1 = jax.nn.relu(fc_in @ params["fc1_w"].T + params["fc1_b"])
    h2 = jax.nn.relu(h1 @ params["fc2_w"].T + params["fc2_b"])                 # (B, H)
    v_ptr = params["ptr_v"].reshape(H)
    return jnp.einsum("h,bnh->bn", v_ptr, jnp.tanh(all_h + h2[:, None, :]))    # (B, N)


if __name__ == "__main__":
    B, N, H = 256, 10, 128          # hidden_size=128 is the module default
    keys = jax.random.split(jax.random.PRNGKey(0), 20)
    kit = iter(keys)

    static_input = jax.random.uniform(next(kit), (B, N, 2), dtype=jnp.float32)
    loads = jax.random.uniform(next(kit), (B, N, 1), dtype=jnp.float32)
    demands = jax.random.uniform(next(kit), (B, N, 1), dtype=jnp.float32,
                                 minval=-0.5, maxval=1.0)   # some <= 0 -> exercises the mask
    dynamic_input = jnp.concatenate([loads, demands], axis=2)                 # (B, N, 2)
    origin_static = jax.random.uniform(next(kit), (B, 2), dtype=jnp.float32)
    origin_dynamic = jax.random.uniform(next(kit), (B, 2), dtype=jnp.float32)

    scale = 0.1

    def rnd(shape):
        return scale * jax.random.normal(next(kit), shape, dtype=jnp.float32)

    params = {
        "all_embed_w1": rnd((H, 4)), "all_embed_b1": rnd((H,)),
        "all_embed_w2": rnd((H, H)), "all_embed_b2": rnd((H,)),
        "origin_embed_w1": rnd((H, 4)), "origin_embed_b1": rnd((H,)),
        "origin_embed_w2": rnd((H, H)), "origin_embed_b2": rnd((H,)),
        "att_v": rnd((1, 1, H)), "att_W": rnd((1, H, 2 * H)),
        "fc1_w": rnd((H, 2 * H)), "fc1_b": rnd((H,)),
        "fc2_w": rnd((H, H)), "fc2_b": rnd((H,)),
        "ptr_v": rnd((1, 1, H)),
    }

    fwd = jax.jit(vrp_actor_forward, static_argnames=("batch_tile", "compute_dtype"))

    with jax.default_matmul_precision("highest"):
        ref = vrp_actor_ref(params, static_input, dynamic_input,
                            origin_static, origin_dynamic)

    # exact-math check: f32 operands / f32 scratch
    out_f32 = jax.block_until_ready(
        fwd(params, static_input, dynamic_input, origin_static, origin_dynamic,
            compute_dtype=jnp.float32))
    assert out_f32.shape == (B, N)
    assert bool(jnp.allclose(out_f32, ref, atol=2e-3, rtol=2e-3)), "f32 kernel mismatch"

    # performance mode: bf16 MXU operands + bf16 scratch, f32 accumulation
    out_bf16 = jax.block_until_ready(
        fwd(params, static_input, dynamic_input, origin_static, origin_dynamic,
            compute_dtype=jnp.bfloat16))
    assert out_bf16.shape == (B, N)
    assert bool(jnp.allclose(out_bf16, ref, atol=5e-2, rtol=5e-2)), "bf16 kernel mismatch"

    print("KERNEL_OK")
</pallas_src>

<mosaic_0001>
module attributes {stable_mosaic.version = 11 : i64} {
  func.func @_vrp_actor_kernel(%arg0: i32, %arg1: memref<8x1280xf32, #tpu.memory_space<vmem>>, %arg2: memref<8x128xf32, #tpu.memory_space<vmem>>, %arg3: memref<128x8xf32, #tpu.memory_space<vmem>>, %arg4: memref<128x128xf32, #tpu.memory_space<vmem>>, %arg5: memref<128x8xf32, #tpu.memory_space<vmem>>, %arg6: memref<128x128xf32, #tpu.memory_space<vmem>>, %arg7: memref<128x128xf32, #tpu.memory_space<vmem>>, %arg8: memref<128x128xf32, #tpu.memory_space<vmem>>, %arg9: memref<128x128xf32, #tpu.memory_space<vmem>>, %arg10: memref<128x128xf32, #tpu.memory_space<vmem>>, %arg11: memref<128x128xf32, #tpu.memory_space<vmem>>, %arg12: memref<128x8xf32, #tpu.memory_space<vmem>>, %arg13: memref<1x1280xf32, #tpu.memory_space<vmem>>, %arg14: memref<128x1280xf32, #tpu.memory_space<vmem>>) attributes {dimension_semantics = [#tpu.dimension_semantics<parallel>], iteration_bounds = array<i64: 2>, scalar_prefetch = 0 : i64, scratch_operands = 1 : i64, tpu.core_type = #tpu.core_type<tc>, window_params = [{transform_indices = @transform_0, window_bounds = array<i64: 8, 1280>}, {transform_indices = @transform_1, window_bounds = array<i64: 8, 128>}, {pipeline_mode = #tpu.pipeline_mode<synchronous>, transform_indices = @transform_2, window_bounds = array<i64: 128, 8>}, {pipeline_mode = #tpu.pipeline_mode<synchronous>, transform_indices = @transform_3, window_bounds = array<i64: 128, 128>}, {pipeline_mode = #tpu.pipeline_mode<synchronous>, transform_indices = @transform_4, window_bounds = array<i64: 128, 8>}, {pipeline_mode = #tpu.pipeline_mode<synchronous>, transform_indices = @transform_5, window_bounds = array<i64: 128, 128>}, {pipeline_mode = #tpu.pipeline_mode<synchronous>, transform_indices = @transform_6, window_bounds = array<i64: 128, 128>}, {pipeline_mode = #tpu.pipeline_mode<synchronous>, transform_indices = @transform_7, window_bounds = array<i64: 128, 128>}, {pipeline_mode = #tpu.pipeline_mode<synchronous>, transform_indices = @transform_8, window_bounds = array<i64: 128, 128>}, {pipeline_mode = #tpu.pipeline_mode<synchronous>, transform_indices = @transform_9, window_bounds = array<i64: 128, 128>}, {pipeline_mode = #tpu.pipeline_mode<synchronous>, transform_indices = @transform_10, window_bounds = array<i64: 128, 128>}, {pipeline_mode = #tpu.pipeline_mode<synchronous>, transform_indices = @transform_11, window_bounds = array<i64: 128, 8>}, {transform_indices = @transform_12, window_bounds = array<i64: 1, 1280>}]} {
    %c0 = arith.constant 0 : index
    %c0_0 = arith.constant 0 : index
    %0 = vector.load %arg12[%c0, %c0_0] : memref<128x8xf32, #tpu.memory_space<vmem>>, vector<128x8xf32>
    %1 = vector.extract_strided_slice %0 {offsets = [0, 0], sizes = [128, 1], strides = [1, 1]} : vector<128x8xf32> to vector<128x1xf32>
    %2 = vector.extract_strided_slice %0 {offsets = [0, 1], sizes = [128, 1], strides = [1, 1]} : vector<128x8xf32> to vector<128x1xf32>
    %3 = vector.extract_strided_slice %0 {offsets = [0, 2], sizes = [128, 1], strides = [1, 1]} : vector<128x8xf32> to vector<128x1xf32>
    %4 = vector.extract_strided_slice %0 {offsets = [0, 3], sizes = [128, 1], strides = [1, 1]} : vector<128x8xf32> to vector<128x1xf32>
    %5 = vector.extract_strided_slice %0 {offsets = [0, 4], sizes = [128, 1], strides = [1, 1]} : vector<128x8xf32> to vector<128x1xf32>
    %6 = vector.extract_strided_slice %0 {offsets = [0, 5], sizes = [128, 1], strides = [1, 1]} : vector<128x8xf32> to vector<128x1xf32>
    %7 = vector.extract_strided_slice %0 {offsets = [0, 6], sizes = [128, 1], strides = [1, 1]} : vector<128x8xf32> to vector<128x1xf32>
    %8 = vector.extract_strided_slice %0 {offsets = [0, 7], sizes = [128, 1], strides = [1, 1]} : vector<128x8xf32> to vector<128x1xf32>
    %c0_1 = arith.constant 0 : index
    %c0_2 = arith.constant 0 : index
    %9 = vector.load %arg2[%c0_1, %c0_2] : memref<8x128xf32, #tpu.memory_space<vmem>>, vector<8x128xf32>
    %c0_3 = arith.constant 0 : index
    %c0_4 = arith.constant 0 : index
    %10 = vector.load %arg5[%c0_3, %c0_4] : memref<128x8xf32, #tpu.memory_space<vmem>>, vector<128x8xf32>
    %cst = arith.constant dense<0.000000e+00> : vector<128x128xf32>
    %11 = tpu.matmul %10, %9, %cst {dimension_numbers = #tpu.dot_dimension_numbers<[1], [0], [0], [1], [0, 0, 1, 1], [], []>} : vector<128x8xf32>, vector<8x128xf32>, vector<128x128xf32> -> vector<128x128xf32>
    %12 = vector.broadcast %3 : vector<128x1xf32> to vector<128x128xf32>
    %13 = arith.addf %11, %12 : vector<128x128xf32>
    %cst_5 = arith.constant 0.000000e+00 : f32
    %14 = vector.broadcast %cst_5 : f32 to vector<128x128xf32>
    %15 = arith.maximumf %13, %14 : vector<128x128xf32>
    %c0_6 = arith.constant 0 : index
    %c0_7 = arith.constant 0 : index
    %16 = vector.load %arg6[%c0_6, %c0_7] : memref<128x128xf32, #tpu.memory_space<vmem>>, vector<128x128xf32>
    %cst_8 = arith.constant dense<0.000000e+00> : vector<128x128xf32>
    %17 = tpu.matmul %16, %15, %cst_8 {dimension_numbers = #tpu.dot_dimension_numbers<[1], [0], [0], [1], [0, 0, 1, 1], [], []>} : vector<128x128xf32>, vector<128x128xf32>, vector<128x128xf32> -> vector<128x128xf32>
    %18 = vector.broadcast %4 : vector<128x1xf32> to vector<128x128xf32>
    %19 = arith.addf %17, %18 : vector<128x128xf32>
    %c0_9 = arith.constant 0 : index
    %c0_10 = arith.constant 0 : index
    %20 = vector.load %arg8[%c0_9, %c0_10] : memref<128x128xf32, #tpu.memory_space<vmem>>, vector<128x128xf32>
    %cst_11 = arith.constant dense<0.000000e+00> : vector<128x128xf32>
    %21 = tpu.matmul %20, %19, %cst_11 {dimension_numbers = #tpu.dot_dimension_numbers<[1], [0], [0], [1], [0, 0, 1, 1], [], []>} : vector<128x128xf32>, vector<128x128xf32>, vector<128x128xf32> -> vector<128x128xf32>
    %c0_12 = arith.constant 0 : index
    %c0_13 = arith.constant 0 : index
    %22 = vector.load %arg3[%c0_12, %c0_13] : memref<128x8xf32, #tpu.memory_space<vmem>>, vector<128x8xf32>
    %c0_14 = arith.constant 0 : index
    %c0_15 = arith.constant 0 : index
    %23 = vector.load %arg1[%c0_14, %c0_15] : memref<8x1280xf32, #tpu.memory_space<vmem>>, vector<8x1280xf32>
    %cst_16 = arith.constant dense<0.000000e+00> : vector<128x1280xf32>
    %24 = tpu.matmul %22, %23, %cst_16 {dimension_numbers = #tpu.dot_dimension_numbers<[1], [0], [0], [1], [0, 0, 1, 1], [], []>} : vector<128x8xf32>, vector<8x1280xf32>, vector<128x1280xf32> -> vector<128x1280xf32>
    %25 = vector.broadcast %1 : vector<128x1xf32> to vector<128x1280xf32>
    %26 = arith.addf %24, %25 : vector<128x1280xf32>
    %cst_17 = arith.constant 0.000000e+00 : f32
    %27 = vector.broadcast %cst_17 : f32 to vector<128x1280xf32>
    %28 = arith.maximumf %26, %27 : vector<128x1280xf32>
    %c0_18 = arith.constant 0 : index
    %c0_19 = arith.constant 0 : index
    %29 = vector.load %arg4[%c0_18, %c0_19] : memref<128x128xf32, #tpu.memory_space<vmem>>, vector<128x128xf32>
    %cst_20 = arith.constant dense<0.000000e+00> : vector<128x1280xf32>
    %30 = tpu.matmul %29, %28, %cst_20 {dimension_numbers = #tpu.dot_dimension_numbers<[1], [0], [0], [1], [0, 0, 1, 1], [], []>} : vector<128x128xf32>, vector<128x1280xf32>, vector<128x1280xf32> -> vector<128x1280xf32>
    %31 = vector.broadcast %2 : vector<128x1xf32> to vector<128x1280xf32>
    %32 = arith.addf %30, %31 : vector<128x1280xf32>
    %c0_21 = arith.constant 0 : index
    %c0_22 = arith.constant 0 : index
    %33 = vector.load %arg14[%c0_21, %c0_22] : memref<128x1280xf32, #tpu.memory_space<vmem>>, vector<128x1280xf32>
    tpu.vector_store %arg14[%c0_21, %c0_22], %32 {strides = array<i32>} : memref<128x1280xf32, #tpu.memory_space<vmem>>, vector<128x1280xf32>,
    %c0_23 = arith.constant 0 : index
    %c0_24 = arith.constant 0 : index
    %34 = vector.load %arg7[%c0_23, %c0_24] : memref<128x128xf32, #tpu.memory_space<vmem>>, vector<128x128xf32>
    %cst_25 = arith.constant dense<0.000000e+00> : vector<128x1280xf32>
    %35 = tpu.matmul %34, %32, %cst_25 {dimension_numbers = #tpu.dot_dimension_numbers<[1], [0], [0], [1], [0, 0, 1, 1], [], []>} : vector<128x128xf32>, vector<128x1280xf32>, vector<128x1280xf32> -> vector<128x1280xf32>
    %36 = vector.extract_strided_slice %35 {offsets = [0, 0], sizes = [128, 128], strides = [1, 1]} : vector<128x1280xf32> to vector<128x128xf32>
    %37 = arith.addf %36, %21 : vector<128x128xf32>
    %38 = math.tanh %37 : vector<128x128xf32>
    %39 = vector.broadcast %7 : vector<128x1xf32> to vector<128x128xf32>
    %40 = arith.mulf %39, %38 : vector<128x128xf32>
    %cst_26 = arith.constant dense<0.000000e+00> : vector<128xf32>
    %41 = vector.multi_reduction <add>, %40, %cst_26 [0] : vector<128x128xf32> to vector<128xf32>
    %42 = vector.shape_cast %41 : vector<128xf32> to vector<1x128xf32>
    %43 = vector.extract_strided_slice %35 {offsets = [0, 128], sizes = [128, 128], strides = [1, 1]} : vector<128x1280xf32> to vector<128x128xf32>
    %44 = arith.addf %43, %21 : vector<128x128xf32>
    %45 = math.tanh %44 : vector<128x128xf32>
    %46 = vector.broadcast %7 : vector<128x1xf32> to vector<128x128xf32>
    %47 = arith.mulf %46, %45 : vector<128x128xf32>
    %cst_27 = arith.constant dense<0.000000e+00> : vector<128xf32>
    %48 = vector.multi_reduction <add>, %47, %cst_27 [0] : vector<128x128xf32> to vector<128xf32>
    %49 = vector.shape_cast %48 : vector<128xf32> to vector<1x128xf32>
    %50 = vector.extract_strided_slice %35 {offsets = [0, 256], sizes = [128, 128], strides = [1, 1]} : vector<128x1280xf32> to vector<128x128xf32>
    %51 = arith.addf %50, %21 : vector<128x128xf32>
    %52 = math.tanh %51 : vector<128x128xf32>
    %53 = vector.broadcast %7 : vector<128x1xf32> to vector<128x128xf32>
    %54 = arith.mulf %53, %52 : vector<128x128xf32>
    %cst_28 = arith.constant dense<0.000000e+00> : vector<128xf32>
    %55 = vector.multi_reduction <add>, %54, %cst_28 [0] : vector<128x128xf32> to vector<128xf32>
    %56 = vector.shape_cast %55 : vector<128xf32> to vector<1x128xf32>
    %57 = vector.extract_strided_slice %35 {offsets = [0, 384], sizes = [128, 128], strides = [1, 1]} : vector<128x1280xf32> to vector<128x128xf32>
    %58 = arith.addf %57, %21 : vector<128x128xf32>
    %59 = math.tanh %58 : vector<128x128xf32>
    %60 = vector.broadcast %7 : vector<128x1xf32> to vector<128x128xf32>
    %61 = arith.mulf %60, %59 : vector<128x128xf32>
    %cst_29 = arith.constant dense<0.000000e+00> : vector<128xf32>
    %62 = vector.multi_reduction <add>, %61, %cst_29 [0] : vector<128x128xf32> to vector<128xf32>
    %63 = vector.shape_cast %62 : vector<128xf32> to vector<1x128xf32>
    %64 = vector.extract_strided_slice %35 {offsets = [0, 512], sizes = [128, 128], strides = [1, 1]} : vector<128x1280xf32> to vector<128x128xf32>
    %65 = arith.addf %64, %21 : vector<128x128xf32>
    %66 = math.tanh %65 : vector<128x128xf32>
    %67 = vector.broadcast %7 : vector<128x1xf32> to vector<128x128xf32>
    %68 = arith.mulf %67, %66 : vector<128x128xf32>
    %cst_30 = arith.constant dense<0.000000e+00> : vector<128xf32>
    %69 = vector.multi_reduction <add>, %68, %cst_30 [0] : vector<128x128xf32> to vector<128xf32>
    %70 = vector.shape_cast %69 : vector<128xf32> to vector<1x128xf32>
    %71 = vector.extract_strided_slice %35 {offsets = [0, 640], sizes = [128, 128], strides = [1, 1]} : vector<128x1280xf32> to vector<128x128xf32>
    %72 = arith.addf %71, %21 : vector<128x128xf32>
    %73 = math.tanh %72 : vector<128x128xf32>
    %74 = vector.broadcast %7 : vector<128x1xf32> to vector<128x128xf32>
    %75 = arith.mulf %74, %73 : vector<128x128xf32>
    %cst_31 = arith.constant dense<0.000000e+00> : vector<128xf32>
    %76 = vector.multi_reduction <add>, %75, %cst_31 [0] : vector<128x128xf32> to vector<128xf32>
    %77 = vector.shape_cast %76 : vector<128xf32> to vector<1x128xf32>
    %78 = vector.extract_strided_slice %35 {offsets = [0, 768], sizes = [128, 128], strides = [1, 1]} : vector<128x1280xf32> to vector<128x128xf32>
    %79 = arith.addf %78, %21 : vector<128x128xf32>
    %80 = math.tanh %79 : vector<128x128xf32>
    %81 = vector.broadcast %7 : vector<128x1xf32> to vector<128x128xf32>
    %82 = arith.mulf %81, %80 : vector<128x128xf32>
    %cst_32 = arith.constant dense<0.000000e+00> : vector<128xf32>
    %83 = vector.multi_reduction <add>, %82, %cst_32 [0] : vector<128x128xf32> to vector<128xf32>
    %84 = vector.shape_cast %83 : vector<128xf32> to vector<1x128xf32>
    %85 = vector.extract_strided_slice %35 {offsets = [0, 896], sizes = [128, 128], strides = [1, 1]} : vector<128x1280xf32> to vector<128x128xf32>
    %86 = arith.addf %85, %21 : vector<128x128xf32>
    %87 = math.tanh %86 : vector<128x128xf32>
    %88 = vector.broadcast %7 : vector<128x1xf32> to vector<128x128xf32>
    %89 = arith.mulf %88, %87 : vector<128x128xf32>
    %cst_33 = arith.constant dense<0.000000e+00> : vector<128xf32>
    %90 = vector.multi_reduction <add>, %89, %cst_33 [0] : vector<128x128xf32> to vector<128xf32>
    %91 = vector.shape_cast %90 : vector<128xf32> to vector<1x128xf32>
    %92 = vector.extract_strided_slice %35 {offsets = [0, 1024], sizes = [128, 128], strides = [1, 1]} : vector<128x1280xf32> to vector<128x128xf32>
    %93 = arith.addf %92, %21 : vector<128x128xf32>
    %94 = math.tanh %93 : vector<128x128xf32>
    %95 = vector.broadcast %7 : vector<128x1xf32> to vector<128x128xf32>
    %96 = arith.mulf %95, %94 : vector<128x128xf32>
    %cst_34 = arith.constant dense<0.000000e+00> : vector<128xf32>
    %97 = vector.multi_reduction <add>, %96, %cst_34 [0] : vector<128x128xf32> to vector<128xf32>
    %98 = vector.shape_cast %97 : vector<128xf32> to vector<1x128xf32>
    %99 = vector.extract_strided_slice %35 {offsets = [0, 1152], sizes = [128, 128], strides = [1, 1]} : vector<128x1280xf32> to vector<128x128xf32>
    %100 = arith.addf %99, %21 : vector<128x128xf32>
    %101 = math.tanh %100 : vector<128x128xf32>
    %102 = vector.broadcast %7 : vector<128x1xf32> to vector<128x128xf32>
    %103 = arith.mulf %102, %101 : vector<128x128xf32>
    %cst_35 = arith.constant dense<0.000000e+00> : vector<128xf32>
    %104 = vector.multi_reduction <add>, %103, %cst_35 [0] : vector<128x128xf32> to vector<128xf32>
    %105 = vector.shape_cast %104 : vector<128xf32> to vector<1x128xf32>
    %106 = arith.maximumf %42, %49 : vector<1x128xf32>
    %107 = arith.maximumf %106, %56 : vector<1x128xf32>
    %108 = arith.maximumf %107, %63 : vector<1x128xf32>
    %109 = arith.maximumf %108, %70 : vector<1x128xf32>
    %110 = arith.maximumf %109, %77 : vector<1x128xf32>
    %111 = arith.maximumf %110, %84 : vector<1x128xf32>
    %112 = arith.maximumf %111, %91 : vector<1x128xf32>
    %113 = arith.maximumf %112, %98 : vector<1x128xf32>
    %114 = arith.maximumf %113, %105 : vector<1x128xf32>
    %115 = arith.subf %42, %114 : vector<1x128xf32>
    %116 = math.exp %115 : vector<1x128xf32>
    %117 = arith.subf %49, %114 : vector<1x128xf32>
    %118 = math.exp %117 : vector<1x128xf32>
    %119 = arith.subf %56, %114 : vector<1x128xf32>
    %120 = math.exp %119 : vector<1x128xf32>
    %121 = arith.subf %63, %114 : vector<1x128xf32>
    %122 = math.exp %121 : vector<1x128xf32>
    %123 = arith.subf %70, %114 : vector<1x128xf32>
    %124 = math.exp %123 : vector<1x128xf32>
    %125 = arith.subf %77, %114 : vector<1x128xf32>
    %126 = math.exp %125 : vector<1x128xf32>
    %127 = arith.subf %84, %114 : vector<1x128xf32>
    %128 = math.exp %127 : vector<1x128xf32>
    %129 = arith.subf %91, %114 : vector<1x128xf32>
    %130 = math.exp %129 : vector<1x128xf32>
    %131 = arith.subf %98, %114 : vector<1x128xf32>
    %132 = math.exp %131 : vector<1x128xf32>
    %133 = arith.subf %105, %114 : vector<1x128xf32>
    %134 = math.exp %133 : vector<1x128xf32>
    %135 = arith.addf %116, %118 : vector<1x128xf32>
    %136 = arith.addf %135, %120 : vector<1x128xf32>
    %137 = arith.addf %136, %122 : vector<1x128xf32>
    %138 = arith.addf %137, %124 : vector<1x128xf32>
    %139 = arith.addf %138, %126 : vector<1x128xf32>
    %140 = arith.addf %139, %128 : vector<1x128xf32>
    %141 = arith.addf %140, %130 : vector<1x128xf32>
    %142 = arith.addf %141, %132 : vector<1x128xf32>
    %143 = arith.addf %142, %134 : vector<1x128xf32>
    %cst_36 = arith.constant 1.000000e+00 : f32
    %144 = vector.broadcast %cst_36 : f32 to vector<1x128xf32>
    %145 = arith.divf %144, %143 : vector<1x128xf32>
    %cst_37 = arith.constant 0.000000e+00 : f32
    %146 = vector.broadcast %cst_37 : f32 to vector<128x128xf32>
    %147 = arith.mulf %116, %145 : vector<1x128xf32>
    %c0_38 = arith.constant 0 : index
    %c0_39 = arith.constant 0 : index
    %148 = vector.load %arg14[%c0_38, %c0_39] : memref<128x1280xf32, #tpu.memory_space<vmem>>, vector<128x128xf32>
    %149 = vector.broadcast %147 : vector<1x128xf32> to vector<128x128xf32>
    %150 = arith.mulf %149, %148 : vector<128x128xf32>
    %151 = arith.addf %146, %150 : vector<128x128xf32>
    %152 = arith.mulf %118, %145 : vector<1x128xf32>
    %c0_40 = arith.constant 0 : index
    %c128 = arith.constant 128 : index
    %153 = vector.load %arg14[%c0_40, %c128] : memref<128x1280xf32, #tpu.memory_space<vmem>>, vector<128x128xf32>
    %154 = vector.broadcast %152 : vector<1x128xf32> to vector<128x128xf32>
    %155 = arith.mulf %154, %153 : vector<128x128xf32>
    %156 = arith.addf %151, %155 : vector<128x128xf32>
    %157 = arith.mulf %120, %145 : vector<1x128xf32>
    %c0_41 = arith.constant 0 : index
    %c256 = arith.constant 256 : index
    %158 = vector.load %arg14[%c0_41, %c256] : memref<128x1280xf32, #tpu.memory_space<vmem>>, vector<128x128xf32>
    %159 = vector.broadcast %157 : vector<1x128xf32> to vector<128x128xf32>
    %160 = arith.mulf %159, %158 : vector<128x128xf32>
    %161 = arith.addf %156, %160 : vector<128x128xf32>
    %162 = arith.mulf %122, %145 : vector<1x128xf32>
    %c0_42 = arith.constant 0 : index
    %c384 = arith.constant 384 : index
    %163 = vector.load %arg14[%c0_42, %c384] : memref<128x1280xf32, #tpu.memory_space<vmem>>, vector<128x128xf32>
    %164 = vector.broadcast %162 : vector<1x128xf32> to vector<128x128xf32>
    %165 = arith.mulf %164, %163 : vector<128x128xf32>
    %166 = arith.addf %161, %165 : vector<128x128xf32>
    %167 = arith.mulf %124, %145 : vector<1x128xf32>
    %c0_43 = arith.constant 0 : index
    %c512 = arith.constant 512 : index
    %168 = vector.load %arg14[%c0_43, %c512] : memref<128x1280xf32, #tpu.memory_space<vmem>>, vector<128x128xf32>
    %169 = vector.broadcast %167 : vector<1x128xf32> to vector<128x128xf32>
    %170 = arith.mulf %169, %168 : vector<128x128xf32>
    %171 = arith.addf %166, %170 : vector<128x128xf32>
    %172 = arith.mulf %126, %145 : vector<1x128xf32>
    %c0_44 = arith.constant 0 : index
    %c640 = arith.constant 640 : index
    %173 = vector.load %arg14[%c0_44, %c640] : memref<128x1280xf32, #tpu.memory_space<vmem>>, vector<128x128xf32>
    %174 = vector.broadcast %172 : vector<1x128xf32> to vector<128x128xf32>
    %175 = arith.mulf %174, %173 : vector<128x128xf32>
    %176 = arith.addf %171, %175 : vector<128x128xf32>
    %177 = arith.mulf %128, %145 : vector<1x128xf32>
    %c0_45 = arith.constant 0 : index
    %c768 = arith.constant 768 : index
    %178 = vector.load %arg14[%c0_45, %c768] : memref<128x1280xf32, #tpu.memory_space<vmem>>, vector<128x128xf32>
    %179 = vector.broadcast %177 : vector<1x128xf32> to vector<128x128xf32>
    %180 = arith.mulf %179, %178 : vector<128x128xf32>
    %181 = arith.addf %176, %180 : vector<128x128xf32>
    %182 = arith.mulf %130, %145 : vector<1x128xf32>
    %c0_46 = arith.constant 0 : index
    %c896 = arith.constant 896 : index
    %183 = vector.load %arg14[%c0_46, %c896] : memref<128x1280xf32, #tpu.memory_space<vmem>>, vector<128x128xf32>
    %184 = vector.broadcast %182 : vector<1x128xf32> to vector<128x128xf32>
    %185 = arith.mulf %184, %183 : vector<128x128xf32>
    %186 = arith.addf %181, %185 : vector<128x128xf32>
    %187 = arith.mulf %132, %145 : vector<1x128xf32>
    %c0_47 = arith.constant 0 : index
    %c1024 = arith.constant 1024 : index
    %188 = vector.load %arg14[%c0_47, %c1024] : memref<128x1280xf32, #tpu.memory_space<vmem>>, vector<128x128xf32>
    %189 = vector.broadcast %187 : vector<1x128xf32> to vector<128x128xf32>
    %190 = arith.mulf %189, %188 : vector<128x128xf32>
    %191 = arith.addf %186, %190 : vector<128x128xf32>
    %192 = arith.mulf %134, %145 : vector<1x128xf32>
    %c0_48 = arith.constant 0 : index
    %c1152 = arith.constant 1152 : index
    %193 = vector.load %arg14[%c0_48, %c1152] : memref<128x1280xf32, #tpu.memory_space<vmem>>, vector<128x128xf32>
    %194 = vector.broadcast %192 : vector<1x128xf32> to vector<128x128xf32>
    %195 = arith.mulf %194, %193 : vector<128x128xf32>
    %196 = arith.addf %191, %195 : vector<128x128xf32>
    %c0_49 = arith.constant 0 : index
    %c0_50 = arith.constant 0 : index
    %197 = vector.load %arg9[%c0_49, %c0_50] : memref<128x128xf32, #tpu.memory_space<vmem>>, vector<128x128xf32>
    %cst_51 = arith.constant dense<0.000000e+00> : vector<128x128xf32>
    %198 = tpu.matmul %197, %19, %cst_51 {dimension_numbers = #tpu.dot_dimension_numbers<[1], [0], [0], [1], [0, 0, 1, 1], [], []>} : vector<128x128xf32>, vector<128x128xf32>, vector<128x128xf32> -> vector<128x128xf32>
    %c0_52 = arith.constant 0 : index
    %c0_53 = arith.constant 0 : index
    %199 = vector.load %arg10[%c0_52, %c0_53] : memref<128x128xf32, #tpu.memory_space<vmem>>, vector<128x128xf32>
    %cst_54 = arith.constant dense<0.000000e+00> : vector<128x128xf32>
    %200 = tpu.matmul %199, %196, %cst_54 {dimension_numbers = #tpu.dot_dimension_numbers<[1], [0], [0], [1], [0, 0, 1, 1], [], []>} : vector<128x128xf32>, vector<128x128xf32>, vector<128x128xf32> -> vector<128x128xf32>
    %201 = arith.addf %198, %200 : vector<128x128xf32>
    %202 = vector.broadcast %5 : vector<128x1xf32> to vector<128x128xf32>
    %203 = arith.addf %201, %202 : vector<128x128xf32>
    %cst_55 = arith.constant 0.000000e+00 : f32
    %204 = vector.broadcast %cst_55 : f32 to vector<128x128xf32>
    %205 = arith.maximumf %203, %204 : vector<128x128xf32>
    %c0_56 = arith.constant 0 : index
    %c0_57 = arith.constant 0 : index
    %206 = vector.load %arg11[%c0_56, %c0_57] : memref<128x128xf32, #tpu.memory_space<vmem>>, vector<128x128xf32>
    %cst_58 = arith.constant dense<0.000000e+00> : vector<128x128xf32>
    %207 = tpu.matmul %206, %205, %cst_58 {dimension_numbers = #tpu.dot_dimension_numbers<[1], [0], [0], [1], [0, 0, 1, 1], [], []>} : vector<128x128xf32>, vector<128x128xf32>, vector<128x128xf32> -> vector<128x128xf32>
    %208 = vector.broadcast %6 : vector<128x1xf32> to vector<128x128xf32>
    %209 = arith.addf %207, %208 : vector<128x128xf32>
    %cst_59 = arith.constant 0.000000e+00 : f32
    %210 = vector.broadcast %cst_59 : f32 to vector<128x128xf32>
    %211 = arith.maximumf %209, %210 : vector<128x128xf32>
    %c0_60 = arith.constant 0 : index
    %c0_61 = arith.constant 0 : index
    %212 = vector.load %arg14[%c0_60, %c0_61] : memref<128x1280xf32, #tpu.memory_space<vmem>>, vector<128x128xf32>
    %213 = arith.addf %212, %211 : vector<128x128xf32>
    %214 = math.tanh %213 : vector<128x128xf32>
    %215 = vector.broadcast %8 : vector<128x1xf32> to vector<128x128xf32>
    %216 = arith.mulf %215, %214 : vector<128x128xf32>
    %cst_62 = arith.constant dense<0.000000e+00> : vector<128xf32>
    %217 = vector.multi_reduction <add>, %216, %cst_62 [0] : vector<128x128xf32> to vector<128xf32>
    %218 = vector.shape_cast %217 : vector<128xf32> to vector<1x128xf32>
    %c0_63 = arith.constant 0 : index
    %c128_64 = arith.constant 128 : index
    %219 = vector.load %arg14[%c0_63, %c128_64] : memref<128x1280xf32, #tpu.memory_space<vmem>>, vector<128x128xf32>
    %220 = arith.addf %219, %211 : vector<128x128xf32>
    %221 = math.tanh %220 : vector<128x128xf32>
    %222 = vector.broadcast %8 : vector<128x1xf32> to vector<128x128xf32>
    %223 = arith.mulf %222, %221 : vector<128x128xf32>
    %cst_65 = arith.constant dense<0.000000e+00> : vector<128xf32>
    %224 = vector.multi_reduction <add>, %223, %cst_65 [0] : vector<128x128xf32> to vector<128xf32>
    %225 = vector.shape_cast %224 : vector<128xf32> to vector<1x128xf32>
    %c0_66 = arith.constant 0 : index
    %c256_67 = arith.constant 256 : index
    %226 = vector.load %arg14[%c0_66, %c256_67] : memref<128x1280xf32, #tpu.memory_space<vmem>>, vector<128x128xf32>
    %227 = arith.addf %226, %211 : vector<128x128xf32>
    %228 = math.tanh %227 : vector<128x128xf32>
    %229 = vector.broadcast %8 : vector<128x1xf32> to vector<128x128xf32>
    %230 = arith.mulf %229, %228 : vector<128x128xf32>
    %cst_68 = arith.constant dense<0.000000e+00> : vector<128xf32>
    %231 = vector.multi_reduction <add>, %230, %cst_68 [0] : vector<128x128xf32> to vector<128xf32>
    %232 = vector.shape_cast %231 : vector<128xf32> to vector<1x128xf32>
    %c0_69 = arith.constant 0 : index
    %c384_70 = arith.constant 384 : index
    %233 = vector.load %arg14[%c0_69, %c384_70] : memref<128x1280xf32, #tpu.memory_space<vmem>>, vector<128x128xf32>
    %234 = arith.addf %233, %211 : vector<128x128xf32>
    %235 = math.tanh %234 : vector<128x128xf32>
    %236 = vector.broadcast %8 : vector<128x1xf32> to vector<128x128xf32>
    %237 = arith.mulf %236, %235 : vector<128x128xf32>
    %cst_71 = arith.constant dense<0.000000e+00> : vector<128xf32>
    %238 = vector.multi_reduction <add>, %237, %cst_71 [0] : vector<128x128xf32> to vector<128xf32>
    %239 = vector.shape_cast %238 : vector<128xf32> to vector<1x128xf32>
    %c0_72 = arith.constant 0 : index
    %c512_73 = arith.constant 512 : index
    %240 = vector.load %arg14[%c0_72, %c512_73] : memref<128x1280xf32, #tpu.memory_space<vmem>>, vector<128x128xf32>
    %241 = arith.addf %240, %211 : vector<128x128xf32>
    %242 = math.tanh %241 : vector<128x128xf32>
    %243 = vector.broadcast %8 : vector<128x1xf32> to vector<128x128xf32>
    %244 = arith.mulf %243, %242 : vector<128x128xf32>
    %cst_74 = arith.constant dense<0.000000e+00> : vector<128xf32>
    %245 = vector.multi_reduction <add>, %244, %cst_74 [0] : vector<128x128xf32> to vector<128xf32>
    %246 = vector.shape_cast %245 : vector<128xf32> to vector<1x128xf32>
    %c0_75 = arith.constant 0 : index
    %c640_76 = arith.constant 640 : index
    %247 = vector.load %arg14[%c0_75, %c640_76] : memref<128x1280xf32, #tpu.memory_space<vmem>>, vector<128x128xf32>
    %248 = arith.addf %247, %211 : vector<128x128xf32>
    %249 = math.tanh %248 : vector<128x128xf32>
    %250 = vector.broadcast %8 : vector<128x1xf32> to vector<128x128xf32>
    %251 = arith.mulf %250, %249 : vector<128x128xf32>
    %cst_77 = arith.constant dense<0.000000e+00> : vector<128xf32>
    %252 = vector.multi_reduction <add>, %251, %cst_77 [0] : vector<128x128xf32> to vector<128xf32>
    %253 = vector.shape_cast %252 : vector<128xf32> to vector<1x128xf32>
    %c0_78 = arith.constant 0 : index
    %c768_79 = arith.constant 768 : index
    %254 = vector.load %arg14[%c0_78, %c768_79] : memref<128x1280xf32, #tpu.memory_space<vmem>>, vector<128x128xf32>
    %255 = arith.addf %254, %211 : vector<128x128xf32>
    %256 = math.tanh %255 : vector<128x128xf32>
    %257 = vector.broadcast %8 : vector<128x1xf32> to vector<128x128xf32>
    %258 = arith.mulf %257, %256 : vector<128x128xf32>
    %cst_80 = arith.constant dense<0.000000e+00> : vector<128xf32>
    %259 = vector.multi_reduction <add>, %258, %cst_80 [0] : vector<128x128xf32> to vector<128xf32>
    %260 = vector.shape_cast %259 : vector<128xf32> to vector<1x128xf32>
    %c0_81 = arith.constant 0 : index
    %c896_82 = arith.constant 896 : index
    %261 = vector.load %arg14[%c0_81, %c896_82] : memref<128x1280xf32, #tpu.memory_space<vmem>>, vector<128x128xf32>
    %262 = arith.addf %261, %211 : vector<128x128xf32>
    %263 = math.tanh %262 : vector<128x128xf32>
    %264 = vector.broadcast %8 : vector<128x1xf32> to vector<128x128xf32>
    %265 = arith.mulf %264, %263 : vector<128x128xf32>
    %cst_83 = arith.constant dense<0.000000e+00> : vector<128xf32>
    %266 = vector.multi_reduction <add>, %265, %cst_83 [0] : vector<128x128xf32> to vector<128xf32>
    %267 = vector.shape_cast %266 : vector<128xf32> to vector<1x128xf32>
    %c0_84 = arith.constant 0 : index
    %c1024_85 = arith.constant 1024 : index
    %268 = vector.load %arg14[%c0_84, %c1024_85] : memref<128x1280xf32, #tpu.memory_space<vmem>>, vector<128x128xf32>
    %269 = arith.addf %268, %211 : vector<128x128xf32>
    %270 = math.tanh %269 : vector<128x128xf32>
    %271 = vector.broadcast %8 : vector<128x1xf32> to vector<128x128xf32>
    %272 = arith.mulf %271, %270 : vector<128x128xf32>
    %cst_86 = arith.constant dense<0.000000e+00> : vector<128xf32>
    %273 = vector.multi_reduction <add>, %272, %cst_86 [0] : vector<128x128xf32> to vector<128xf32>
    %274 = vector.shape_cast %273 : vector<128xf32> to vector<1x128xf32>
    %c0_87 = arith.constant 0 : index
    %c1152_88 = arith.constant 1152 : index
    %275 = vector.load %arg14[%c0_87, %c1152_88] : memref<128x1280xf32, #tpu.memory_space<vmem>>, vector<128x128xf32>
    %276 = arith.addf %275, %211 : vector<128x128xf32>
    %277 = math.tanh %276 : vector<128x128xf32>
    %278 = vector.broadcast %8 : vector<128x1xf32> to vector<128x128xf32>
    %279 = arith.mulf %278, %277 : vector<128x128xf32>
    %cst_89 = arith.constant dense<0.000000e+00> : vector<128xf32>
    %280 = vector.multi_reduction <add>, %279, %cst_89 [0] : vector<128x128xf32> to vector<128xf32>
    %281 = vector.shape_cast %280 : vector<128xf32> to vector<1x128xf32>
    %282 = tpu.concatenate %218, %225, %232, %239, %246, %253, %260, %267, %274, %281 in 1 : vector<1x128xf32>, vector<1x128xf32>, vector<1x128xf32>, vector<1x128xf32>, vector<1x128xf32>, vector<1x128xf32>, vector<1x128xf32>, vector<1x128xf32>, vector<1x128xf32>, vector<1x128xf32> -> vector<1x1280xf32>
    %c0_90 = arith.constant 0 : index
    %c0_91 = arith.constant 0 : index
    %283 = vector.load %arg13[%c0_90, %c0_91] : memref<1x1280xf32, #tpu.memory_space<vmem>>, vector<1x1280xf32>
    tpu.vector_store %arg13[%c0_90, %c0_91], %282 {strides = array<i32>} : memref<1x1280xf32, #tpu.memory_space<vmem>>, vector<1x1280xf32>,
    return
  }
  func.func @transform_0(%arg0: i32) -> (i32, i32) {
    %c0_i32 = arith.constant 0 : i32
    %c0_i32_0 = arith.constant 0 : i32
    return %c0_i32, %arg0 : i32, i32
  }
  func.func @transform_1(%arg0: i32) -> (i32, i32) {
    %c0_i32 = arith.constant 0 : i32
    %c0_i32_0 = arith.constant 0 : i32
    return %c0_i32, %arg0 : i32, i32
  }
  func.func @transform_2(%arg0: i32) -> (i32, i32) {
    %c0_i32 = arith.constant 0 : i32
    %c0_i32_0 = arith.constant 0 : i32
    %c0_i32_1 = arith.constant 0 : i32
    return %c0_i32, %c0_i32_0 : i32, i32
  }
  func.func @transform_3(%arg0: i32) -> (i32, i32) {
    %c0_i32 = arith.constant 0 : i32
    %c0_i32_0 = arith.constant 0 : i32
    %c0_i32_1 = arith.constant 0 : i32
    return %c0_i32, %c0_i32_0 : i32, i32
  }
  func.func @transform_4(%arg0: i32) -> (i32, i32) {
    %c0_i32 = arith.constant 0 : i32
    %c0_i32_0 = arith.constant 0 : i32
    %c0_i32_1 = arith.constant 0 : i32
    return %c0_i32, %c0_i32_0 : i32, i32
  }
  func.func @transform_5(%arg0: i32) -> (i32, i32) {
    %c0_i32 = arith.constant 0 : i32
    %c0_i32_0 = arith.constant 0 : i32
    %c0_i32_1 = arith.constant 0 : i32
    return %c0_i32, %c0_i32_0 : i32, i32
  }
  func.func @transform_6(%arg0: i32) -> (i32, i32) {
    %c0_i32 = arith.constant 0 : i32
    %c0_i32_0 = arith.constant 0 : i32
    %c0_i32_1 = arith.constant 0 : i32
    return %c0_i32, %c0_i32_0 : i32, i32
  }
  func.func @transform_7(%arg0: i32) -> (i32, i32) {
    %c0_i32 = arith.constant 0 : i32
    %c0_i32_0 = arith.constant 0 : i32
    %c0_i32_1 = arith.constant 0 : i32
    return %c0_i32, %c0_i32_0 : i32, i32
  }
  func.func @transform_8(%arg0: i32) -> (i32, i32) {
    %c0_i32 = arith.constant 0 : i32
    %c0_i32_0 = arith.constant 0 : i32
    %c0_i32_1 = arith.constant 0 : i32
    return %c0_i32, %c0_i32_0 : i32, i32
  }
  func.func @transform_9(%arg0: i32) -> (i32, i32) {
    %c0_i32 = arith.constant 0 : i32
    %c0_i32_0 = arith.constant 0 : i32
    %c0_i32_1 = arith.constant 0 : i32
    return %c0_i32, %c0_i32_0 : i32, i32
  }
  func.func @transform_10(%arg0: i32) -> (i32, i32) {
    %c0_i32 = arith.constant 0 : i32
    %c0_i32_0 = arith.constant 0 : i32
    %c0_i32_1 = arith.constant 0 : i32
    return %c0_i32, %c0_i32_0 : i32, i32
  }
  func.func @transform_11(%arg0: i32) -> (i32, i32) {
    %c0_i32 = arith.constant 0 : i32
    %c0_i32_0 = arith.constant 0 : i32
    %c0_i32_1 = arith.constant 0 : i32
    return %c0_i32, %c0_i32_0 : i32, i32
  }
  func.func @transform_12(%arg0: i32) -> (i32, i32) {
    %c0_i32 = arith.constant 0 : i32
    %c0_i32_0 = arith.constant 0 : i32
    return %c0_i32, %arg0 : i32, i32
  }
}

</mosaic_0001>

<llo_original>
// kernel: vrp_actor_forward.1
$region0: #{vrp_actor_forward.1}
  #allocation0 [shape = 'u32[]', space=smem, size = 0x4, offset = 0x4, fixed_abs, tag = 'smem constant byte address 0x4 - core index']
  #allocation1 [shape = 'u32[144,128]{1,0:T(1,128)}', space=vmem, size = 0x12000, scoped, tag = 'internal scratch']
  #allocation2 [shape = 'f32[128,1280]{1,0:T(8,128)}', space=vmem, size = 0xa0000, scoped, tag = 'scratch operand']
  %s0 = inlined_call_operand.vmem [shape: f32[8,2560], index: 0, kind: input, shape index: {}]
  %s1 = inlined_call_operand.vmem [shape: f32[8,256], index: 1, kind: input, shape index: {}]
  %s2 = inlined_call_operand.vmem [shape: f32[128,8], index: 2, kind: input, shape index: {}]
  %s3 = inlined_call_operand.vmem [shape: f32[128,128], index: 3, kind: input, shape index: {}]
  %s4 = inlined_call_operand.vmem [shape: f32[128,8], index: 4, kind: input, shape index: {}]
  %s5 = inlined_call_operand.vmem [shape: f32[128,128], index: 5, kind: input, shape index: {}]
  %s6 = inlined_call_operand.vmem [shape: f32[128,128], index: 6, kind: input, shape index: {}]
  %s7 = inlined_call_operand.vmem [shape: f32[128,128], index: 7, kind: input, shape index: {}]
  %s8 = inlined_call_operand.vmem [shape: f32[128,128], index: 8, kind: input, shape index: {}]
  %s9 = inlined_call_operand.vmem [shape: f32[128,128], index: 9, kind: input, shape index: {}]
  %s10 = inlined_call_operand.vmem [shape: f32[128,128], index: 10, kind: input, shape index: {}]
  %s11 = inlined_call_operand.vmem [shape: f32[128,8], index: 11, kind: input, shape index: {}]
  %s12 = inlined_call_operand.vmem [shape: f32[1,2560], index: 12, kind: output, shape index: {}]
  %s13 = sld [smem:[#allocation0]]
  $region81: #{vrp_actor_forward.1} parent=0
    _
  %s15 = ssub.s32 1, %s13
  %s16 = scalar_select 0, %s15, %s13
  loop: start=0, step=1, limit=4
  $region2: #{vrp_actor_forward.1} parent=0 // loop_pre_header
    _
  $region3: #{vrp_actor_forward.1} parent=0 // loop_header
    %s18 = sphi 0, %s22
    %p19 = scmp.ge.s32.totalorder %s18, 4
    %s28 = sphi 0, %s30
    %s31 = sphi 0, %s28
    %s32 = sphi 0, %s31
    %s48 = sphi 0, %s32
    %s54 = sphi 0, %s56
    %s57 = sphi 0, %s54
    %s58 = sphi 0, %s57
    %s74 = sphi 0, %s58
    %s78 = sphi 0, %s78
    %s80 = sphi 0, %s78
    %s81 = sphi 0, %s80
    %s95 = sphi 0, %s81
    %s99 = sphi 0, %s99
    %s101 = sphi 0, %s99
    %s102 = sphi 0, %s101
    %s116 = sphi 0, %s102
    %s120 = sphi 0, %s120
    %s122 = sphi 0, %s120
    %s123 = sphi 0, %s122
    %s137 = sphi 0, %s123
    %s141 = sphi 0, %s141
    %s143 = sphi 0, %s141
    %s144 = sphi 0, %s143
    %s158 = sphi 0, %s144
    %s162 = sphi 0, %s162
    %s164 = sphi 0, %s162
    %s165 = sphi 0, %s164
    %s179 = sphi 0, %s165
    %s183 = sphi 0, %s183
    %s185 = sphi 0, %s183
    %s186 = sphi 0, %s185
    %s200 = sphi 0, %s186
    %s204 = sphi 0, %s204
    %s206 = sphi 0, %s204
    %s207 = sphi 0, %s206
    %s221 = sphi 0, %s207
    %s225 = sphi 0, %s225
    %s227 = sphi 0, %s225
    %s228 = sphi 0, %s227
    %s242 = sphi 0, %s228
    %s246 = sphi 0, %s246
    %s248 = sphi 0, %s246
    %s249 = sphi 0, %s248
    %s263 = sphi 0, %s249
    %s267 = sphi 0, %s267
    %s269 = sphi 0, %s267
    %s270 = sphi 0, %s269
    %s284 = sphi 0, %s270
    %s290 = sphi 0, %s292
    %s293 = sphi 0, %s290
    %s294 = sphi 0, %s293
    %s310 = sphi 0, %s294
  $region4: #{vrp_actor_forward.1} parent=0 // loop_header_branch
    %21 = sbr.rel (%p19) target = $region8
  $region5: #{vrp_actor_forward.1} parent=0 // loop_body
    %s23 = ssub.s32 %s18, 1
    %s24 = ssub.s32 %s18, 2
    %s25 = sadd.s32 %s18, 1
    %s26 = ssub.s32 %s18, %s25
    %p27 = scmp.eq.s32.totalorder %s26, 0
    %s29 = sadd.s32 %s28, 1
    %s30 = scalar_select %p27, %s28, %s29
    %p33 = pneg %p27
    %p34 = scmp.eq.s32.totalorder %s18, 1
    %p35 = por %p33, %p34
    %p36 = scmp.ne.s32.totalorder %s28, %s31
    %p37 = scmp.eq.s32.totalorder %s18, 0
    %p38 = por %p36, %p37
    %p39 = scmp.ne.s32.totalorder %s28, %s31
    %p40 = scmp.eq.s32.totalorder %s23, 1
    %p41 = por %p39, %p40
    %p42 = scmp.ne.s32.totalorder %s31, %s32
    %p43 = scmp.eq.s32.totalorder %s23, 0
    %p44 = por %p42, %p43
    %p45 = scmp.ne.s32.totalorder %s31, %s32
    %p46 = scmp.eq.s32.totalorder %s24, 1
    %p47 = por %p45, %p46
    %p49 = scmp.ne.s32.totalorder %s32, %s48
    %p50 = scmp.eq.s32.totalorder %s24, 0
    %p51 = por %p49, %p50
    %s52 = ssub.s32 %s18, %s25
    %p53 = scmp.eq.s32.totalorder %s52, 0
    %s55 = sadd.s32 %s54, 1
    %s56 = scalar_select %p53, %s54, %s55
    %p59 = pneg %p53
    %p60 = scmp.eq.s32.totalorder %s18, 1
    %p61 = por %p59, %p60
    %p62 = scmp.ne.s32.totalorder %s54, %s57
    %p63 = scmp.eq.s32.totalorder %s18, 0
    %p64 = por %p62, %p63
    %p65 = scmp.ne.s32.totalorder %s54, %s57
    %p66 = scmp.eq.s32.totalorder %s23, 1
    %p67 = por %p65, %p66
    %p68 = scmp.ne.s32.totalorder %s57, %s58
    %p69 = scmp.eq.s32.totalorder %s23, 0
    %p70 = por %p68, %p69
    %p71 = scmp.ne.s32.totalorder %s57, %s58
    %p72 = scmp.eq.s32.totalorder %s24, 1
    %p73 = por %p71, %p72
    %p75 = scmp.ne.s32.totalorder %s58, %s74
    %p76 = scmp.eq.s32.totalorder %s24, 0
    %p77 = por %p75, %p76
    %s79 = sadd.s32 %s78, 1
    %p82 = scmp.eq.s32.totalorder %s18, 1
    %p83 = scmp.ne.s32.totalorder %s78, %s80
    %p84 = scmp.eq.s32.totalorder %s18, 0
    %p85 = por %p83, %p84
    %p86 = scmp.ne.s32.totalorder %s78, %s80
    %p87 = scmp.eq.s32.totalorder %s23, 1
    %p88 = por %p86, %p87
    %p89 = scmp.ne.s32.totalorder %s80, %s81
    %p90 = scmp.eq.s32.totalorder %s23, 0
    %p91 = por %p89, %p90
    %p92 = scmp.ne.s32.totalorder %s80, %s81
    %p93 = scmp.eq.s32.totalorder %s24, 1
    %p94 = por %p92, %p93
    %p96 = scmp.ne.s32.totalorder %s81, %s95
    %p97 = scmp.eq.s32.totalorder %s24, 0
    %p98 = por %p96, %p97
    %s100 = sadd.s32 %s99, 1
    %p103 = scmp.eq.s32.totalorder %s18, 1
    %p104 = scmp.ne.s32.totalorder %s99, %s101
    %p105 = scmp.eq.s32.totalorder %s18, 0
    %p106 = por %p104, %p105
    %p107 = scmp.ne.s32.totalorder %s99, %s101
    %p108 = scmp.eq.s32.totalorder %s23, 1
    %p109 = por %p107, %p108
    %p110 = scmp.ne.s32.totalorder %s101, %s102
    %p111 = scmp.eq.s32.totalorder %s23, 0
    %p112 = por %p110, %p111
    %p113 = scmp.ne.s32.totalorder %s101, %s102
    %p114 = scmp.eq.s32.totalorder %s24, 1
    %p115 = por %p113, %p114
    %p117 = scmp.ne.s32.totalorder %s102, %s116
    %p118 = scmp.eq.s32.totalorder %s24, 0
    %p119 = por %p117, %p118
    %s121 = sadd.s32 %s120, 1
    %p124 = scmp.eq.s32.totalorder %s18, 1
    %p125 = scmp.ne.s32.totalorder %s120, %s122
    %p126 = scmp.eq.s32.totalorder %s18, 0
    %p127 = por %p125, %p126
    %p128 = scmp.ne.s32.totalorder %s120, %s122
    %p129 = scmp.eq.s32.totalorder %s23, 1
    %p130 = por %p128, %p129
    %p131 = scmp.ne.s32.totalorder %s122, %s123
    %p132 = scmp.eq.s32.totalorder %s23, 0
    %p133 = por %p131, %p132
    %p134 = scmp.ne.s32.totalorder %s122, %s123
    %p135 = scmp.eq.s32.totalorder %s24, 1
    %p136 = por %p134, %p135
    %p138 = scmp.ne.s32.totalorder %s123, %s137
    %p139 = scmp.eq.s32.totalorder %s24, 0
    %p140 = por %p138, %p139
    %s142 = sadd.s32 %s141, 1
    %p145 = scmp.eq.s32.totalorder %s18, 1
    %p146 = scmp.ne.s32.totalorder %s141, %s143
    %p147 = scmp.eq.s32.totalorder %s18, 0
    %p148 = por %p146, %p147
    %p149 = scmp.ne.s32.totalorder %s141, %s143
    %p150 = scmp.eq.s32.totalorder %s23, 1
    %p151 = por %p149, %p150
    %p152 = scmp.ne.s32.totalorder %s143, %s144
    %p153 = scmp.eq.s32.totalorder %s23, 0
    %p154 = por %p152, %p153
    %p155 = scmp.ne.s32.totalorder %s143, %s144
    %p156 = scmp.eq.s32.totalorder %s24, 1
    %p157 = por %p155, %p156
    %p159 = scmp.ne.s32.totalorder %s144, %s158
    %p160 = scmp.eq.s32.totalorder %s24, 0
    %p161 = por %p159, %p160
    %s163 = sadd.s32 %s162, 1
    %p166 = scmp.eq.s32.totalorder %s18, 1
    %p167 = scmp.ne.s32.totalorder %s162, %s164
    %p168 = scmp.eq.s32.totalorder %s18, 0
    %p169 = por %p167, %p168
    %p170 = scmp.ne.s32.totalorder %s162, %s164
    %p171 = scmp.eq.s32.totalorder %s23, 1
    %p172 = por %p170, %p171
    %p173 = scmp.ne.s32.totalorder %s164, %s165
    %p174 = scmp.eq.s32.totalorder %s23, 0
    %p175 = por %p173, %p174
    %p176 = scmp.ne.s32.totalorder %s164, %s165
    %p177 = scmp.eq.s32.totalorder %s24, 1
    %p178 = por %p176, %p177
    %p180 = scmp.ne.s32.totalorder %s165, %s179
    %p181 = scmp.eq.s32.totalorder %s24, 0
    %p182 = por %p180, %p181
    %s184 = sadd.s32 %s183, 1
    %p187 = scmp.eq.s32.totalorder %s18, 1
    %p188 = scmp.ne.s32.totalorder %s183, %s185
    %p189 = scmp.eq.s32.totalorder %s18, 0
    %p190 = por %p188, %p189
    %p191 = scmp.ne.s32.totalorder %s183, %s185
    %p192 = scmp.eq.s32.totalorder %s23, 1
    %p193 = por %p191, %p192
    %p194 = scmp.ne.s32.totalorder %s185, %s186
    %p195 = scmp.eq.s32.totalorder %s23, 0
    %p196 = por %p194, %p195
    %p197 = scmp.ne.s32.totalorder %s185, %s186
    %p198 = scmp.eq.s32.totalorder %s24, 1
    %p199 = por %p197, %p198
    %p201 = scmp.ne.s32.totalorder %s186, %s200
    %p202 = scmp.eq.s32.totalorder %s24, 0
    %p203 = por %p201, %p202
    %s205 = sadd.s32 %s204, 1
    %p208 = scmp.eq.s32.totalorder %s18, 1
    %p209 = scmp.ne.s32.totalorder %s204, %s206
    %p210 = scmp.eq.s32.totalorder %s18, 0
    %p211 = por %p209, %p210
    %p212 = scmp.ne.s32.totalorder %s204, %s206
    %p213 = scmp.eq.s32.totalorder %s23, 1
    %p214 = por %p212, %p213
    %p215 = scmp.ne.s32.totalorder %s206, %s207
    %p216 = scmp.eq.s32.totalorder %s23, 0
    %p217 = por %p215, %p216
    %p218 = scmp.ne.s32.totalorder %s206, %s207
    %p219 = scmp.eq.s32.totalorder %s24, 1
    %p220 = por %p218, %p219
    %p222 = scmp.ne.s32.totalorder %s207, %s221
    %p223 = scmp.eq.s32.totalorder %s24, 0
    %p224 = por %p222, %p223
    %s226 = sadd.s32 %s225, 1
    %p229 = scmp.eq.s32.totalorder %s18, 1
    %p230 = scmp.ne.s32.totalorder %s225, %s227
    %p231 = scmp.eq.s32.totalorder %s18, 0
    %p232 = por %p230, %p231
    %p233 = scmp.ne.s32.totalorder %s225, %s227
    %p234 = scmp.eq.s32.totalorder %s23, 1
    %p235 = por %p233, %p234
    %p236 = scmp.ne.s32.totalorder %s227, %s228
    %p237 = scmp.eq.s32.totalorder %s23, 0
    %p238 = por %p236, %p237
    %p239 = scmp.ne.s32.totalorder %s227, %s228
    %p240 = scmp.eq.s32.totalorder %s24, 1
    %p241 = por %p239, %p240
    %p243 = scmp.ne.s32.totalorder %s228, %s242
    %p244 = scmp.eq.s32.totalorder %s24, 0
    %p245 = por %p243, %p244
    %s247 = sadd.s32 %s246, 1
    %p250 = scmp.eq.s32.totalorder %s18, 1
    %p251 = scmp.ne.s32.totalorder %s246, %s248
    %p252 = scmp.eq.s32.totalorder %s18, 0
    %p253 = por %p251, %p252
    %p254 = scmp.ne.s32.totalorder %s246, %s248
    %p255 = scmp.eq.s32.totalorder %s23, 1
    %p256 = por %p254, %p255
    %p257 = scmp.ne.s32.totalorder %s248, %s249
    %p258 = scmp.eq.s32.totalorder %s23, 0
    %p259 = por %p257, %p258
    %p260 = scmp.ne.s32.totalorder %s248, %s249
    %p261 = scmp.eq.s32.totalorder %s24, 1
    %p262 = por %p260, %p261
    %p264 = scmp.ne.s32.totalorder %s249, %s263
    %p265 = scmp.eq.s32.totalorder %s24, 0
    %p266 = por %p264, %p265
    %s268 = sadd.s32 %s267, 1
    %p271 = scmp.eq.s32.totalorder %s18, 1
    %p272 = scmp.ne.s32.totalorder %s267, %s269
    %p273 = scmp.eq.s32.totalorder %s18, 0
    %p274 = por %p272, %p273
    %p275 = scmp.ne.s32.totalorder %s267, %s269
    %p276 = scmp.eq.s32.totalorder %s23, 1
    %p277 = por %p275, %p276
    %p278 = scmp.ne.s32.totalorder %s269, %s270
    %p279 = scmp.eq.s32.totalorder %s23, 0
    %p280 = por %p278, %p279
    %p281 = scmp.ne.s32.totalorder %s269, %s270
    %p282 = scmp.eq.s32.totalorder %s24, 1
    %p283 = por %p281, %p282
    %p285 = scmp.ne.s32.totalorder %s270, %s284
    %p286 = scmp.eq.s32.totalorder %s24, 0
    %p287 = por %p285, %p286
    %s288 = ssub.s32 %s18, %s25
    %p289 = scmp.eq.s32.totalorder %s288, 0
    %s291 = sadd.s32 %s290, 1
    %s292 = scalar_select %p289, %s290, %s291
    %p295 = pneg %p289
    %p296 = scmp.eq.s32.totalorder %s18, 1
    %p297 = por %p295, %p296
    %p298 = scmp.ne.s32.totalorder %s290, %s293
    %p299 = scmp.eq.s32.totalorder %s18, 0
    %p300 = por %p298, %p299
    %p301 = scmp.ne.s32.totalorder %s290, %s293
    %p302 = scmp.eq.s32.totalorder %s23, 1
    %p303 = por %p301, %p302
    %p304 = scmp.ne.s32.totalorder %s293, %s294
    %p305 = scmp.eq.s32.totalorder %s23, 0
    %p306 = por %p304, %p305
    %p307 = scmp.ne.s32.totalorder %s293, %s294
    %p308 = scmp.eq.s32.totalorder %s24, 1
    %p309 = por %p307, %p308
    %p311 = scmp.ne.s32.totalorder %s294, %s310
    %p312 = scmp.eq.s32.totalorder %s24, 0
    %p313 = por %p311, %p312
    %p314 = scmp.le.s32.totalorder 1, %s18
    %p315 = scmp.lt.s32.totalorder %s18, 3
    %p316 = pnand %p314, %p315
    %p317 = pneg %p316
    // Predicated region
    $region9: #{vrp_actor_forward.1} parent=5 // pred_check
      _
    $region10: #{vrp_actor_forward.1} parent=5 // pred_check_branch
      %319 = sbr.rel (%p316) target = $region12
    $region11: #{vrp_actor_forward.1} parent=5 // pred_region
      %s320 = ssub.s32 %s18, 1
      // Predicated region
      $region13: #{vrp_actor_forward.1} parent=11 // pred_check
        %p321 = pneg %p91
      $region14: #{vrp_actor_forward.1} parent=11 // pred_check_branch
        %323 = sbr.rel (%p321) target = $region16
      $region15: #{vrp_actor_forward.1} parent=11 // pred_region
        _
      $region16: #{vrp_actor_forward.1} parent=11 // pred_fallthru
        _
      // Predicated region
      $region17: #{vrp_actor_forward.1} parent=11 // pred_check
        %p324 = pneg %p112
      $region18: #{vrp_actor_forward.1} parent=11 // pred_check_branch
        %326 = sbr.rel (%p324) target = $region20
      $region19: #{vrp_actor_forward.1} parent=11 // pred_region
        _
      $region20: #{vrp_actor_forward.1} parent=11 // pred_fallthru
        _
      // Predicated region
      $region21: #{vrp_actor_forward.1} parent=11 // pred_check
        %p327 = pneg %p133
      $region22: #{vrp_actor_forward.1} parent=11 // pred_check_branch
        %329 = sbr.rel (%p327) target = $region24
      $region23: #{vrp_actor_forward.1} parent=11 // pred_region
        _
      $region24: #{vrp_actor_forward.1} parent=11 // pred_fallthru
        _
      // Predicated region
      $region25: #{vrp_actor_forward.1} parent=11 // pred_check
        %p330 = pneg %p154
      $region26: #{vrp_actor_forward.1} parent=11 // pred_check_branch
        %332 = sbr.rel (%p330) target = $region28
      $region27: #{vrp_actor_forward.1} parent=11 // pred_region
        _
      $region28: #{vrp_actor_forward.1} parent=11 // pred_fallthru
        _
      // Predicated region
      $region29: #{vrp_actor_forward.1} parent=11 // pred_check
        %p333 = pneg %p175
      $region30: #{vrp_actor_forward.1} parent=11 // pred_check_branch
        %335 = sbr.rel (%p333) target = $region32
      $region31: #{vrp_actor_forward.1} parent=11 // pred_region
        _
      $region32: #{vrp_actor_forward.1} parent=11 // pred_fallthru
        _
      // Predicated region
      $region33: #{vrp_actor_forward.1} parent=11 // pred_check
        %p336 = pneg %p196
      $region34: #{vrp_actor_forward.1} parent=11 // pred_check_branch
        %338 = sbr.rel (%p336) target = $region36
      $region35: #{vrp_actor_forward.1} parent=11 // pred_region
        _
      $region36: #{vrp_actor_forward.1} parent=11 // pred_fallthru
        _
      // Predicated region
      $region37: #{vrp_actor_forward.1} parent=11 // pred_check
        %p339 = pneg %p217
      $region38: #{vrp_actor_forward.1} parent=11 // pred_check_branch
        %341 = sbr.rel (%p339) target = $region40
      $region39: #{vrp_actor_forward.1} parent=11 // pred_region
        _
      $region40: #{vrp_actor_forward.1} parent=11 // pred_fallthru
        _
      // Predicated region
      $region41: #{vrp_actor_forward.1} parent=11 // pred_check
        %p342 = pneg %p238
      $region42: #{vrp_actor_forward.1} parent=11 // pred_check_branch
        %344 = sbr.rel (%p342) target = $region44
      $region43: #{vrp_actor_forward.1} parent=11 // pred_region
        _
      $region44: #{vrp_actor_forward.1} parent=11 // pred_fallthru
        _
      // Predicated region
      $region45: #{vrp_actor_forward.1} parent=11 // pred_check
        %p345 = pneg %p259
      $region46: #{vrp_actor_forward.1} parent=11 // pred_check_branch
        %347 = sbr.rel (%p345) target = $region48
      $region47: #{vrp_actor_forward.1} parent=11 // pred_region
        _
      $region48: #{vrp_actor_forward.1} parent=11 // pred_fallthru
        _
      // Predicated region
      $region49: #{vrp_actor_forward.1} parent=11 // pred_check
        %p348 = pneg %p280
      $region50: #{vrp_actor_forward.1} parent=11 // pred_check_branch
        %350 = sbr.rel (%p348) target = $region52
      $region51: #{vrp_actor_forward.1} parent=11 // pred_region
        _
      $region52: #{vrp_actor_forward.1} parent=11 // pred_fallthru
        _
    $region12: #{vrp_actor_forward.1} parent=5 // pred_fallthru
      _
    %p351 = scmp.lt.s32.totalorder %s18, 2
    // Predicated region
    $region53: #{vrp_actor_forward.1} parent=5 // pred_check
      %p352 = pneg %p351
    $region54: #{vrp_actor_forward.1} parent=5 // pred_check_branch
      %354 = sbr.rel (%p352) target = $region56
    $region55: #{vrp_actor_forward.1} parent=5 // pred_region
      // Predicated region
      $region57: #{vrp_actor_forward.1} parent=55 // pred_check
        %p355 = pneg %p38
      $region58: #{vrp_actor_forward.1} parent=55 // pred_check_branch
        %357 = sbr.rel (%p355) target = $region60
      $region59: #{vrp_actor_forward.1} parent=55 // pred_region
        %s358 = smul.u32 10, %s18
        %p359 = scmp.lt.s32.totalorder %s358, 19
        %s360 = scalar_select %p359, %s358, 19
        %s361 = smul.addr %s360, 8
        %s362 = scalar_lea.vmem %s0, %s361
        %s363 = smul.u32 10, %s18
      $region60: #{vrp_actor_forward.1} parent=55 // pred_fallthru
        _
      // Predicated region
      $region61: #{vrp_actor_forward.1} parent=55 // pred_check
        %p364 = pneg %p64
      $region62: #{vrp_actor_forward.1} parent=55 // pred_check_branch
        %366 = sbr.rel (%p364) target = $region64
      $region63: #{vrp_actor_forward.1} parent=55 // pred_region
        %p367 = scmp.lt.s32.totalorder %s18, 1
        %s368 = scalar_select %p367, %s18, 1
        %s369 = smul.addr %s368, 8
        %s370 = scalar_lea.vmem %s1, %s369
      $region64: #{vrp_actor_forward.1} parent=55 // pred_fallthru
        _
    $region56: #{vrp_actor_forward.1} parent=5 // pred_fallthru
      _
    %p371 = scmp.le.s32.totalorder 1, %s18
    %p372 = scmp.lt.s32.totalorder %s18, 3
    %p373 = pnand %p371, %p372
    %p374 = pneg %p373
    // Predicated region
    $region65: #{vrp_actor_forward.1} parent=5 // pred_check
      _
    $region66: #{vrp_actor_forward.1} parent=5 // pred_check_branch
      %376 = sbr.rel (%p373) target = $region68
    $region67: #{vrp_actor_forward.1} parent=5 // pred_region
      %s377 = ssub.s32 %s18, 1
      %s378 = smul.u32 10, %s23
      %p379 = scmp.lt.s32.totalorder %s378, 19
      %s380 = scalar_select %p379, %s378, 19
      %s381 = smul.addr %s380, 8
      %s382 = scalar_lea.vmem %s0, %s381
      %p383 = pneg %p44
      %p384 = pneg %p41
      %p385 = scmp.lt.s32.totalorder %s23, 1
      %s386 = scalar_select %p385, %s23, 1
      %s387 = smul.addr %s386, 8
      %s388 = scalar_lea.vmem %s1, %s387
      %p389 = pneg %p70
      %p390 = pneg %p67
      %p391 = pneg %p91
      %p392 = pneg %p88
      %p393 = pneg %p112
      %p394 = pneg %p109
      %p395 = pneg %p133
      %p396 = pneg %p130
      %p397 = pneg %p154
      %p398 = pneg %p151
      %p399 = pneg %p175
      %p400 = pneg %p172
      %p401 = pneg %p196
      %p402 = pneg %p193
      %p403 = pneg %p217
      %p404 = pneg %p214
      %p405 = pneg %p238
      %p406 = pneg %p235
      %p407 = pneg %p259
      %p408 = pneg %p256
      %p409 = pneg %p280
      %p410 = pneg %p277
      %p411 = pneg %p306
      %p412 = pneg %p303
      %s413 = smul.u32 10, %s23
      %p414 = scmp.lt.s32.totalorder %s413, 19
      %s415 = scalar_select %p414, %s413, 19
      %s416 = scalar_lea.vmem %s12, %s415
      %s417 = smul.u32 10, %s23
      %p418 = scmp.lt.s32.totalorder %s417, 19
      %s419 = scalar_select %p418, %s417, 19
      %s420 = smul.addr %s419, 8
      %s421 = scalar_lea.vmem %s0, %s420
      %s422 = smul.u32 10, %s23
      %p423 = scmp.lt.s32.totalorder %s23, 1
      %s424 = scalar_select %p423, %s23, 1
      %s425 = smul.addr %s424, 8
      %s426 = scalar_lea.vmem %s1, %s425
      %s427 = smul.u32 10, %s23
      %p428 = scmp.lt.s32.totalorder %s427, 19
      %s429 = scalar_select %p428, %s427, 19
      %s430 = scalar_lea.vmem %s12, %s429
      %s431 = smul.u32 10, %s23
      %v432 = vld [vmem:[%s11] sm:$0xff]
      %v433 = vld [vmem:[%s11 + $0x8] sm:$0xff]
      %v434 = vld [vmem:[%s11 + $0x10] sm:$0xff]
      %v435 = vld [vmem:[%s11 + $0x18] sm:$0xff]
      %v436 = vld [vmem:[%s11 + $0x20] sm:$0xff]
      %v437 = vld [vmem:[%s11 + $0x28] sm:$0xff]
      %v438 = vld [vmem:[%s11 + $0x30] sm:$0xff]
      %v439 = vld [vmem:[%s11 + $0x38] sm:$0xff]
      %v440 = vld [vmem:[%s11 + $0x40] sm:$0xff]
      %v441 = vld [vmem:[%s11 + $0x48] sm:$0xff]
      %v442 = vld [vmem:[%s11 + $0x50] sm:$0xff]
      %v443 = vld [vmem:[%s11 + $0x58] sm:$0xff]
      %v444 = vld [vmem:[%s11 + $0x60] sm:$0xff]
      %v445 = vld [vmem:[%s11 + $0x68] sm:$0xff]
      %v446 = vld [vmem:[%s11 + $0x70] sm:$0xff]
      %v447 = vld [vmem:[%s11 + $0x78] sm:$0xff]
      %v448 = vld [vmem:[%s426] sm:$0xff]
      %v449 = vld [vmem:[%s4] sm:$0xff]
      %v450 = vld [vmem:[%s4 + $0x8] sm:$0xff]
      %v451 = vld [vmem:[%s4 + $0x10] sm:$0xff]
      %v452 = vld [vmem:[%s4 + $0x18] sm:$0xff]
      %v453 = vld [vmem:[%s4 + $0x20] sm:$0xff]
      %v454 = vld [vmem:[%s4 + $0x28] sm:$0xff]
      %v455 = vld [vmem:[%s4 + $0x30] sm:$0xff]
      %v456 = vld [vmem:[%s4 + $0x38] sm:$0xff]
      %v457 = vld [vmem:[%s4 + $0x40] sm:$0xff]
      %v458 = vld [vmem:[%s4 + $0x48] sm:$0xff]
      %v459 = vld [vmem:[%s4 + $0x50] sm:$0xff]
      %v460 = vld [vmem:[%s4 + $0x58] sm:$0xff]
      %v461 = vld [vmem:[%s4 + $0x60] sm:$0xff]
      %v462 = vld [vmem:[%s4 + $0x68] sm:$0xff]
      %v463 = vld [vmem:[%s4 + $0x70] sm:$0xff]
      %v464 = vld [vmem:[%s4 + $0x78] sm:$0xff]
      %466 = vset.pattern.permute.xlu0 2
      %467 = vperm.xlu0 %466, %v432
      %v468 = vpop.permute.xlu0 %467
      %471 = vset.pattern.permute.xlu0 2
      %472 = vperm.xlu0 %471, %v433
      %v473 = vpop.permute.xlu0 %472
      %476 = vset.pattern.permute.xlu0 2
      %477 = vperm.xlu0 %476, %v434
      %v478 = vpop.permute.xlu0 %477
      %481 = vset.pattern.permute.xlu0 2
      %482 = vperm.xlu0 %481, %v435
      %v483 = vpop.permute.xlu0 %482
      %486 = vset.pattern.permute.xlu0 2
      %487 = vperm.xlu0 %486, %v436
      %v488 = vpop.permute.xlu0 %487
      %491 = vset.pattern.permute.xlu0 2
      %492 = vperm.xlu0 %491, %v437
      %v493 = vpop.permute.xlu0 %492
      %496 = vset.pattern.permute.xlu0 2
      %497 = vperm.xlu0 %496, %v438
      %v498 = vpop.permute.xlu0 %497
      %501 = vset.pattern.permute.xlu0 2
      %502 = vperm.xlu0 %501, %v439
      %v503 = vpop.permute.xlu0 %502
      %506 = vset.pattern.permute.xlu0 2
      %507 = vperm.xlu0 %506, %v440
      %v508 = vpop.permute.xlu0 %507
      %511 = vset.pattern.permute.xlu0 2
      %512 = vperm.xlu0 %511, %v441
      %v513 = vpop.permute.xlu0 %512
      %516 = vset.pattern.permute.xlu0 2
      %517 = vperm.xlu0 %516, %v442
      %v518 = vpop.permute.xlu0 %517
      %521 = vset.pattern.permute.xlu0 2
      %522 = vperm.xlu0 %521, %v443
      %v523 = vpop.permute.xlu0 %522
      %526 = vset.pattern.permute.xlu0 2
      %527 = vperm.xlu0 %526, %v444
      %v528 = vpop.permute.xlu0 %527
      %531 = vset.pattern.permute.xlu0 2
      %532 = vperm.xlu0 %531, %v445
      %v533 = vpop.permute.xlu0 %532
      %536 = vset.pattern.permute.xlu0 2
      %537 = vperm.xlu0 %536, %v446
      %v538 = vpop.permute.xlu0 %537
      %541 = vset.pattern.permute.xlu0 2
      %542 = vperm.xlu0 %541, %v447
      %v543 = vpop.permute.xlu0 %542
      %vm545 = vcmask 64512
      %v547 = vsel %vm545, %v449, 0
      %v550 = vsel %vm545, %v450, 0
      %v553 = vsel %vm545, %v451, 0
      %v556 = vsel %vm545, %v452, 0
      %v559 = vsel %vm545, %v453, 0
      %v562 = vsel %vm545, %v454, 0
      %v565 = vsel %vm545, %v455, 0
      %v568 = vsel %vm545, %v456, 0
      %v571 = vsel %vm545, %v457, 0
      %v574 = vsel %vm545, %v458, 0
      %v577 = vsel %vm545, %v459, 0
      %v580 = vsel %vm545, %v460, 0
      %v583 = vsel %vm545, %v461, 0
      %v586 = vsel %vm545, %v462, 0
      %v589 = vsel %vm545, %v463, 0
      %v592 = vsel %vm545, %v464, 0
      %594 = vmatprep.subr.mxu0 0.0
      %595 = vmatpush1.msra.mxu0 %v448
      %596 = vmatprep.subr.mxu0 0.0
      %597 = vmatpush1.msra.mxu0 0.0
      %598 = vmatprep.subr.mxu0 0.0
      %599 = vmatpush1.msra.mxu0 0.0
      %600 = vmatprep.subr.mxu0 0.0
      %601 = vmatpush1.msra.mxu0 0.0
      %602 = vmatprep.subr.mxu0 0.0
      %603 = vmatpush1.msra.mxu0 0.0
      %604 = vmatprep.subr.mxu0 0.0
      %605 = vmatpush1.msra.mxu0 0.0
      %606 = vmatprep.subr.mxu0 0.0
      %607 = vmatpush1.msra.mxu0 0.0
      %608 = vmatprep.subr.mxu0 0.0
      %609 = vmatpush1.msra.mxu0 0.0
      %610 = vmatprep.subr.mxu0 0.0
      %611 = vmatpush1.msra.mxu0 0.0
      %612 = vmatprep.subr.mxu0 0.0
      %613 = vmatpush1.msra.mxu0 0.0
      %614 = vmatprep.subr.mxu0 0.0
      %615 = vmatpush1.msra.mxu0 0.0
      %616 = vmatprep.subr.mxu0 0.0
      %617 = vmatpush1.msra.mxu0 0.0
      %618 = vmatprep.subr.mxu0 0.0
      %619 = vmatpush1.msra.mxu0 0.0
      %620 = vmatprep.subr.mxu0 0.0
      %621 = vmatpush1.msra.mxu0 0.0
      %622 = vmatprep.subr.mxu0 0.0
      %623 = vmatpush1.msra.mxu0 0.0
      %624 = vmatprep.subr.mxu0 0.0
      %625 = vmatpush1.msra.mxu0 0.0
      %626 = vmatprep.subr.mxu0 0.0
      %627 = vmatpush1.msra.mxu0 0.0
      %628 = vmatprep.subr.mxu0 0.0
      %629 = vmatpush1.msra.mxu0 0.0
      %630 = vmatprep.subr.mxu0 0.0
      %631 = vmatpush1.msra.mxu0 0.0
      %632 = vmatprep.subr.mxu0 0.0
      %633 = vmatpush1.msra.mxu0 0.0
      %634 = vmatprep.subr.mxu0 0.0
      %635 = vmatpush1.msra.mxu0 0.0
      %636 = vmatprep.subr.mxu0 0.0
      %637 = vmatpush1.msra.mxu0 0.0
      %638 = vmatprep.subr.mxu0 0.0
      %639 = vmatpush1.msra.mxu0 0.0
      %640 = vmatprep.subr.mxu0 0.0
      %641 = vmatpush1.msra.mxu0 0.0
      %642 = vmatprep.subr.mxu0 0.0
      %643 = vmatpush1.msra.mxu0 0.0
      %644 = vmatprep.subr.mxu0 0.0
      %645 = vmatpush1.msra.mxu0 0.0
      %646 = vmatprep.subr.mxu0 0.0
      %647 = vmatpush1.msra.mxu0 0.0
      %648 = vmatprep.subr.mxu0 0.0
      %649 = vmatpush1.msra.mxu0 0.0
      %650 = vmatprep.subr.mxu0 0.0
      %651 = vmatpush1.msra.mxu0 0.0
      %652 = vmatprep.subr.mxu0 0.0
      %653 = vmatpush1.msra.mxu0 0.0
      %654 = vmatprep.subr.mxu0 0.0
      %655 = vmatpush1.msra.mxu0 0.0
      %656 = vmatprep.subr.mxu0 0.0
      %657 = vmatpush1.msra.mxu0 0.0
      %658 = vmatprep.mubr.f32.mxu0 0.0
      %659 = vmatmul.mubr.f32.gmra.mrb[0].mxu0 %v547
      %v660 = vpop.f32.mrb[0].mxu0
      %v661 = vadd.f32 %v468, %v660
      %v662 = vpop.f32.mrb[0].mxu0
      %663 = vmatprep.mubr.f32.mxu0 0.0
      %664 = vmatmul.mubr.f32.gmra.mrb[0].mxu0 %v550
      %v665 = vpop.f32.mrb[0].mxu0
      %v666 = vadd.f32 %v473, %v665
      %v667 = vpop.f32.mrb[0].mxu0
      %668 = vmatprep.mubr.f32.mxu0 0.0
      %669 = vmatmul.mubr.f32.gmra.mrb[0].mxu0 %v553
      %v670 = vpop.f32.mrb[0].mxu0
      %v671 = vadd.f32 %v478, %v670
      %v672 = vpop.f32.mrb[0].mxu0
      %673 = vmatprep.mubr.f32.mxu0 0.0
      %674 = vmatmul.mubr.f32.gmra.mrb[0].mxu0 %v556
      %v675 = vpop.f32.mrb[0].mxu0
      %v676 = vadd.f32 %v483, %v675
      %v677 = vpop.f32.mrb[0].mxu0
      %678 = vmatprep.mubr.f32.mxu0 0.0
      %679 = vmatmul.mubr.f32.gmra.mrb[0].mxu0 %v559
      %v680 = vpop.f32.mrb[0].mxu0
      %v681 = vadd.f32 %v488, %v680
      %v682 = vpop.f32.mrb[0].mxu0
      %683 = vmatprep.mubr.f32.mxu0 0.0
      %684 = vmatmul.mubr.f32.gmra.mrb[0].mxu0 %v562
      %v685 = vpop.f32.mrb[0].mxu0
      %v686 = vadd.f32 %v493, %v685
      %v687 = vpop.f32.mrb[0].mxu0
      %688 = vmatprep.mubr.f32.mxu0 0.0
      %689 = vmatmul.mubr.f32.gmra.mrb[0].mxu0 %v565
      %v690 = vpop.f32.mrb[0].mxu0
      %v691 = vadd.f32 %v498, %v690
      %v692 = vpop.f32.mrb[0].mxu0
      %693 = vmatprep.mubr.f32.mxu0 0.0
      %694 = vmatmul.mubr.f32.gmra.mrb[0].mxu0 %v568
      %v695 = vpop.f32.mrb[0].mxu0
      %v696 = vadd.f32 %v503, %v695
      %v697 = vpop.f32.mrb[0].mxu0
      %698 = vmatprep.mubr.f32.mxu0 0.0
      %699 = vmatmul.mubr.f32.gmra.mrb[0].mxu0 %v571
      %v700 = vpop.f32.mrb[0].mxu0
      %v701 = vadd.f32 %v508, %v700
      %v702 = vpop.f32.mrb[0].mxu0
      %703 = vmatprep.mubr.f32.mxu0 0.0
      %704 = vmatmul.mubr.f32.gmra.mrb[0].mxu0 %v574
      %v705 = vpop.f32.mrb[0].mxu0
      %v706 = vadd.f32 %v513, %v705
      %v707 = vpop.f32.mrb[0].mxu0
      %708 = vmatprep.mubr.f32.mxu0 0.0
      %709 = vmatmul.mubr.f32.gmra.mrb[0].mxu0 %v577
      %v710 = vpop.f32.mrb[0].mxu0
      %v711 = vadd.f32 %v518, %v710
      %v712 = vpop.f32.mrb[0].mxu0
      %713 = vmatprep.mubr.f32.mxu0 0.0
      %714 = vmatmul.mubr.f32.gmra.mrb[0].mxu0 %v580
      %v715 = vpop.f32.mrb[0].mxu0
      %v716 = vadd.f32 %v523, %v715
      %v717 = vpop.f32.mrb[0].mxu0
      %718 = vmatprep.mubr.f32.mxu0 0.0
      %719 = vmatmul.mubr.f32.gmra.mrb[0].mxu0 %v583
      %v720 = vpop.f32.mrb[0].mxu0
      %v721 = vadd.f32 %v528, %v720
      %v722 = vpop.f32.mrb[0].mxu0
      %723 = vmatprep.mubr.f32.mxu0 0.0
      %724 = vmatmul.mubr.f32.gmra.mrb[0].mxu0 %v586
      %v725 = vpop.f32.mrb[0].mxu0
      %v726 = vadd.f32 %v533, %v725
      %v727 = vpop.f32.mrb[0].mxu0
      %728 = vmatprep.mubr.f32.mxu0 0.0
      %729 = vmatmul.mubr.f32.gmra.mrb[0].mxu0 %v589
      %v730 = vpop.f32.mrb[0].mxu0
      %v731 = vadd.f32 %v538, %v730
      %v732 = vpop.f32.mrb[0].mxu0
      %733 = vmatprep.mubr.f32.mxu0 0.0
      %734 = vmatmul.mubr.f32.gmra.mrb[0].mxu0 %v592
      %v735 = vpop.f32.mrb[0].mxu0
      %v736 = vadd.f32 %v543, %v735
      %v737 = vpop.f32.mrb[0].mxu0
      %738 = vdwg.mxu0
      %v739 = vmax.f32 %v661, 0.0
      %v740 = vmax.f32 %v666, 0.0
      %v741 = vmax.f32 %v671, 0.0
      %v742 = vmax.f32 %v676, 0.0
      %v743 = vmax.f32 %v681, 0.0
      %v744 = vmax.f32 %v686, 0.0
      %v745 = vmax.f32 %v691, 0.0
      %v746 = vmax.f32 %v696, 0.0
      %v747 = vmax.f32 %v701, 0.0
      %v748 = vmax.f32 %v706, 0.0
      %v749 = vmax.f32 %v711, 0.0
      %v750 = vmax.f32 %v716, 0.0
      %v751 = vmax.f32 %v721, 0.0
      %v752 = vmax.f32 %v726, 0.0
      %v753 = vmax.f32 %v731, 0.0
      %v754 = vmax.f32 %v736, 0.0
      %v755 = vld [vmem:[%s5] sm:$0xff]
      %v756 = vld [vmem:[%s5 + $0x8] sm:$0xff]
      %v757 = vld [vmem:[%s5 + $0x10] sm:$0xff]
      %v758 = vld [vmem:[%s5 + $0x18] sm:$0xff]
      %v759 = vld [vmem:[%s5 + $0x20] sm:$0xff]
      %v760 = vld [vmem:[%s5 + $0x28] sm:$0xff]
      %v761 = vld [vmem:[%s5 + $0x30] sm:$0xff]
      %v762 = vld [vmem:[%s5 + $0x38] sm:$0xff]
      %v763 = vld [vmem:[%s5 + $0x40] sm:$0xff]
      %v764 = vld [vmem:[%s5 + $0x48] sm:$0xff]
      %v765 = vld [vmem:[%s5 + $0x50] sm:$0xff]
      %v766 = vld [vmem:[%s5 + $0x58] sm:$0xff]
      %v767 = vld [vmem:[%s5 + $0x60] sm:$0xff]
      %v768 = vld [vmem:[%s5 + $0x68] sm:$0xff]
      %v769 = vld [vmem:[%s5 + $0x70] sm:$0xff]
      %v770 = vld [vmem:[%s5 + $0x78] sm:$0xff]
      %771 = vset.pattern.permute.xlu0 3
      %772 = vperm.xlu0 %771, %v432
      %v773 = vpop.permute.xlu0 %772
      %775 = vset.pattern.permute.xlu0 3
      %776 = vperm.xlu0 %775, %v433
      %v777 = vpop.permute.xlu0 %776
      %779 = vset.pattern.permute.xlu0 3
      %780 = vperm.xlu0 %779, %v434
      %v781 = vpop.permute.xlu0 %780
      %783 = vset.pattern.permute.xlu0 3
      %784 = vperm.xlu0 %783, %v435
      %v785 = vpop.permute.xlu0 %784
      %787 = vset.pattern.permute.xlu0 3
      %788 = vperm.xlu0 %787, %v436
      %v789 = vpop.permute.xlu0 %788
      %791 = vset.pattern.permute.xlu0 3
      %792 = vperm.xlu0 %791, %v437
      %v793 = vpop.permute.xlu0 %792
      %795 = vset.pattern.permute.xlu0 3
      %796 = vperm.xlu0 %795, %v438
      %v797 = vpop.permute.xlu0 %796
      %799 = vset.pattern.permute.xlu0 3
      %800 = vperm.xlu0 %799, %v439
      %v801 = vpop.permute.xlu0 %800
      %803 = vset.pattern.permute.xlu0 3
      %804 = vperm.xlu0 %803, %v440
      %v805 = vpop.permute.xlu0 %804
      %807 = vset.pattern.permute.xlu0 3
      %808 = vperm.xlu0 %807, %v441
      %v809 = vpop.permute.xlu0 %808
      %811 = vset.pattern.permute.xlu0 3
      %812 = vperm.xlu0 %811, %v442
      %v813 = vpop.permute.xlu0 %812
      %815 = vset.pattern.permute.xlu0 3
      %816 = vperm.xlu0 %815, %v443
      %v817 = vpop.permute.xlu0 %816
      %819 = vset.pattern.permute.xlu0 3
      %820 = vperm.xlu0 %819, %v444
      %v821 = vpop.permute.xlu0 %820
      %823 = vset.pattern.permute.xlu0 3
      %824 = vperm.xlu0 %823, %v445
      %v825 = vpop.permute.xlu0 %824
      %827 = vset.pattern.permute.xlu0 3
      %828 = vperm.xlu0 %827, %v446
      %v829 = vpop.permute.xlu0 %828
      %831 = vset.pattern.permute.xlu0 3
      %832 = vperm.xlu0 %831, %v447
      %v833 = vpop.permute.xlu0 %832
      %835 = vmatprep.subr.mxu0 0.0
      %836 = vmatpush1.msra.mxu0 %v739
      %837 = vmatprep.subr.mxu0 0.0
      %838 = vmatpush1.msra.mxu0 %v740
      %839 = vmatprep.subr.mxu0 0.0
      %840 = vmatpush1.msra.mxu0 %v741
      %841 = vmatprep.subr.mxu0 0.0
      %842 = vmatpush1.msra.mxu0 %v742
      %843 = vmatprep.subr.mxu0 0.0
      %844 = vmatpush1.msra.mxu0 %v743
      %845 = vmatprep.subr.mxu0 0.0
      %846 = vmatpush1.msra.mxu0 %v744
      %847 = vmatprep.subr.mxu0 0.0
      %848 = vmatpush1.msra.mxu0 %v745
      %849 = vmatprep.subr.mxu0 0.0
      %850 = vmatpush1.msra.mxu0 %v746
      %851 = vmatprep.subr.mxu0 0.0
      %852 = vmatpush1.msra.mxu0 %v747
      %853 = vmatprep.subr.mxu0 0.0
      %854 = vmatpush1.msra.mxu0 %v748
      %855 = vmatprep.subr.mxu0 0.0
      %856 = vmatpush1.msra.mxu0 %v749
      %857 = vmatprep.subr.mxu0 0.0
      %858 = vmatpush1.msra.mxu0 %v750
      %859 = vmatprep.subr.mxu0 0.0
      %860 = vmatpush1.msra.mxu0 %v751
      %861 = vmatprep.subr.mxu0 0.0
      %862 = vmatpush1.msra.mxu0 %v752
      %863 = vmatprep.subr.mxu0 0.0
      %864 = vmatpush1.msra.mxu0 %v753
      %865 = vmatprep.subr.mxu0 0.0
      %866 = vmatpush1.msra.mxu0 %v754
      %867 = vmatprep.subr.mxu0 0.0
      %868 = vmatpush1.msra.mxu0 0.0
      %869 = vmatprep.subr.mxu0 0.0
      %870 = vmatpush1.msra.mxu0 0.0
      %871 = vmatprep.subr.mxu0 0.0
      %872 = vmatpush1.msra.mxu0 0.0
      %873 = vmatprep.subr.mxu0 0.0
      %874 = vmatpush1.msra.mxu0 0.0
      %875 = vmatprep.subr.mxu0 0.0
      %876 = vmatpush1.msra.mxu0 0.0
      %877 = vmatprep.subr.mxu0 0.0
      %878 = vmatpush1.msra.mxu0 0.0
      %879 = vmatprep.subr.mxu0 0.0
      %880 = vmatpush1.msra.mxu0 0.0
      %881 = vmatprep.subr.mxu0 0.0
      %882 = vmatpush1.msra.mxu0 0.0
      %883 = vmatprep.subr.mxu0 0.0
      %884 = vmatpush1.msra.mxu0 0.0
      %885 = vmatprep.subr.mxu0 0.0
      %886 = vmatpush1.msra.mxu0 0.0
      %887 = vmatprep.subr.mxu0 0.0
      %888 = vmatpush1.msra.mxu0 0.0
      %889 = vmatprep.subr.mxu0 0.0
      %890 = vmatpush1.msra.mxu0 0.0
      %891 = vmatprep.subr.mxu0 0.0
      %892 = vmatpush1.msra.mxu0 0.0
      %893 = vmatprep.subr.mxu0 0.0
      %894 = vmatpush1.msra.mxu0 0.0
      %895 = vmatprep.subr.mxu0 0.0
      %896 = vmatpush1.msra.mxu0 0.0
      %897 = vmatprep.subr.mxu0 0.0
      %898 = vmatpush1.msra.mxu0 0.0
      %899 = vmatprep.mubr.f32.mxu0 0.0
      %900 = vmatmul.mubr.f32.gmra.mrb[0].mxu0 %v755
      %v901 = vpop.f32.mrb[0].mxu0
      %v902 = vadd.f32 %v773, %v901
      %v903 = vpop.f32.mrb[0].mxu0
      %904 = vmatprep.mubr.f32.mxu0 0.0
      %905 = vmatmul.mubr.f32.gmra.mrb[0].mxu0 %v756
      %v906 = vpop.f32.mrb[0].mxu0
      %v907 = vadd.f32 %v777, %v906
      %v908 = vpop.f32.mrb[0].mxu0
      %909 = vmatprep.mubr.f32.mxu0 0.0
      %910 = vmatmul.mubr.f32.gmra.mrb[0].mxu0 %v757
      %v911 = vpop.f32.mrb[0].mxu0
      %v912 = vadd.f32 %v781, %v911
      %v913 = vpop.f32.mrb[0].mxu0
      %914 = vmatprep.mubr.f32.mxu0 0.0
      %915 = vmatmul.mubr.f32.gmra.mrb[0].mxu0 %v758
      %v916 = vpop.f32.mrb[0].mxu0
      %v917 = vadd.f32 %v785, %v916
      %v918 = vpop.f32.mrb[0].mxu0
      %919 = vmatprep.mubr.f32.mxu0 0.0
      %920 = vmatmul.mubr.f32.gmra.mrb[0].mxu0 %v759
      %v921 = vpop.f32.mrb[0].mxu0
      %v922 = vadd.f32 %v789, %v921
      %v923 = vpop.f32.mrb[0].mxu0
      %924 = vmatprep.mubr.f32.mxu0 0.0
      %925 = vmatmul.mubr.f32.gmra.mrb[0].mxu0 %v760
      %v926 = vpop.f32.mrb[0].mxu0
      %v927 = vadd.f32 %v793, %v926
      %v928 = vpop.f32.mrb[0].mxu0
      %929 = vmatprep.mubr.f32.mxu0 0.0
      %930 = vmatmul.mubr.f32.gmra.mrb[0].mxu0 %v761
      %v931 = vpop.f32.mrb[0].mxu0
      %v932 = vadd.f32 %v797, %v931
      %v933 = vpop.f32.mrb[0].mxu0
      %934 = vmatprep.mubr.f32.mxu0 0.0
      %935 = vmatmul.mubr.f32.gmra.mrb[0].mxu0 %v762
      %v936 = vpop.f32.mrb[0].mxu0
      %v937 = vadd.f32 %v801, %v936
      %v938 = vpop.f32.mrb[0].mxu0
      %939 = vmatprep.mubr.f32.mxu0 0.0
      %940 = vmatmul.mubr.f32.gmra.mrb[0].mxu0 %v763
      %v941 = vpop.f32.mrb[0].mxu0
      %v942 = vadd.f32 %v805, %v941
      %v943 = vpop.f32.mrb[0].mxu0
      %944 = vmatprep.mubr.f32.mxu0 0.0
      %945 = vmatmul.mubr.f32.gmra.mrb[0].mxu0 %v764
      %v946 = vpop.f32.mrb[0].mxu0
      %v947 = vadd.f32 %v809, %v946
      %v948 = vpop.f32.mrb[0].mxu0
      %949 = vmatprep.mubr.f32.mxu0 0.0
      %950 = vmatmul.mubr.f32.gmra.mrb[0].mxu0 %v765
      %v951 = vpop.f32.mrb[0].mxu0
      %v952 = vadd.f32 %v813, %v951
      %v953 = vpop.f32.mrb[0].mxu0
      %954 = vmatprep.mubr.f32.mxu0 0.0
      %955 = vmatmul.mubr.f32.gmra.mrb[0].mxu0 %v766
      %v956 = vpop.f32.mrb[0].mxu0
      %v957 = vadd.f32 %v817, %v956
      %v958 = vpop.f32.mrb[0].mxu0
      %959 = vmatprep.mubr.f32.mxu0 0.0
      %960 = vmatmul.mubr.f32.gmra.mrb[0].mxu0 %v767
      %v961 = vpop.f32.mrb[0].mxu0
      %v962 = vadd.f32 %v821, %v961
      %v963 = vpop.f32.mrb[0].mxu0
      %964 = vmatprep.mubr.f32.mxu0 0.0
      %965 = vmatmul.mubr.f32.gmra.mrb[0].mxu0 %v768
      %v966 = vpop.f32.mrb[0].mxu0
      %v967 = vadd.f32 %v825, %v966
      %v968 = vpop.f32.mrb[0].mxu0
      %969 = vmatprep.mubr.f32.mxu0 0.0
      %970 = vmatmul.mubr.f32.gmra.mrb[0].mxu0 %v769
      %v971 = vpop.f32.mrb[0].mxu0
      %v972 = vadd.f32 %v829, %v971
      %v973 = vpop.f32.mrb[0].mxu0
      %974 = vmatprep.mubr.f32.mxu0 0.0
      %975 = vmatmul.mubr.f32.gmra.mrb[0].mxu0 %v770
      %v976 = vpop.f32.mrb[0].mxu0
      %v977 = vadd.f32 %v833, %v976
      %v978 = vpop.f32.mrb[0].mxu0
      %979 = vdwg.mxu0
      %v980 = vld [vmem:[%s7] sm:$0xff]
      %v981 = vld [vmem:[%s7 + $0x8] sm:$0xff]
      %v982 = vld [vmem:[%s7 + $0x10] sm:$0xff]
      %v983 = vld [vmem:[%s7 + $0x18] sm:$0xff]
      %v984 = vld [vmem:[%s7 + $0x20] sm:$0xff]
      %v985 = vld [vmem:[%s7 + $0x28] sm:$0xff]
      %v986 = vld [vmem:[%s7 + $0x30] sm:$0xff]
      %v987 = vld [vmem:[%s7 + $0x38] sm:$0xff]
      %v988 = vld [vmem:[%s7 + $0x40] sm:$0xff]
      %v989 = vld [vmem:[%s7 + $0x48] sm:$0xff]
      %v990 = vld [vmem:[%s7 + $0x50] sm:$0xff]
      %v991 = vld [vmem:[%s7 + $0x58] sm:$0xff]
      %v992 = vld [vmem:[%s7 + $0x60] sm:$0xff]
      %v993 = vld [vmem:[%s7 + $0x68] sm:$0xff]
      %v994 = vld [vmem:[%s7 + $0x70] sm:$0xff]
      %v995 = vld [vmem:[%s7 + $0x78] sm:$0xff]
      %996 = vmatprep.subr.mxu0 0.0
      %997 = vmatpush1.msra.mxu0 %v902
      %998 = vmatprep.subr.mxu0 0.0
      %999 = vmatpush1.msra.mxu0 %v907
      %1000 = vmatprep.subr.mxu0 0.0
      %1001 = vmatpush1.msra.mxu0 %v912
      %1002 = vmatprep.subr.mxu0 0.0
      %1003 = vmatpush1.msra.mxu0 %v917
      %1004 = vmatprep.subr.mxu0 0.0
      %1005 = vmatpush1.msra.mxu0 %v922
      %1006 = vmatprep.subr.mxu0 0.0
      %1007 = vmatpush1.msra.mxu0 %v927
      %1008 = vmatprep.subr.mxu0 0.0
      %1009 = vmatpush1.msra.mxu0 %v932
      %1010 = vmatprep.subr.mxu0 0.0
      %1011 = vmatpush1.msra.mxu0 %v937
      %1012 = vmatprep.subr.mxu0 0.0
      %1013 = vmatpush1.msra.mxu0 %v942
      %1014 = vmatprep.subr.mxu0 0.0
      %1015 = vmatpush1.msra.mxu0 %v947
      %1016 = vmatprep.subr.mxu0 0.0
      %1017 = vmatpush1.msra.mxu0 %v952
      %1018 = vmatprep.subr.mxu0 0.0
      %1019 = vmatpush1.msra.mxu0 %v957
      %1020 = vmatprep.subr.mxu0 0.0
      %1021 = vmatpush1.msra.mxu0 %v962
      %1022 = vmatprep.subr.mxu0 0.0
      %1023 = vmatpush1.msra.mxu0 %v967
      %1024 = vmatprep.subr.mxu0 0.0
      %1025 = vmatpush1.msra.mxu0 %v972
      %1026 = vmatprep.subr.mxu0 0.0
      %1027 = vmatpush1.msra.mxu0 %v977
      %1028 = vmatprep.subr.mxu0 0.0
      %1029 = vmatpush1.msra.mxu0 0.0
      %1030 = vmatprep.subr.mxu0 0.0
      %1031 = vmatpush1.msra.mxu0 0.0
      %1032 = vmatprep.subr.mxu0 0.0
      %1033 = vmatpush1.msra.mxu0 0.0
      %1034 = vmatprep.subr.mxu0 0.0
      %1035 = vmatpush1.msra.mxu0 0.0
      %1036 = vmatprep.subr.mxu0 0.0
      %1037 = vmatpush1.msra.mxu0 0.0
      %1038 = vmatprep.subr.mxu0 0.0
      %1039 = vmatpush1.msra.mxu0 0.0
      %1040 = vmatprep.subr.mxu0 0.0
      %1041 = vmatpush1.msra.mxu0 0.0
      %1042 = vmatprep.subr.mxu0 0.0
      %1043 = vmatpush1.msra.mxu0 0.0
      %1044 = vmatprep.subr.mxu0 0.0
      %1045 = vmatpush1.msra.mxu0 0.0
      %1046 = vmatprep.subr.mxu0 0.0
      %1047 = vmatpush1.msra.mxu0 0.0
      %1048 = vmatprep.subr.mxu0 0.0
      %1049 = vmatpush1.msra.mxu0 0.0
      %1050 = vmatprep.subr.mxu0 0.0
      %1051 = vmatpush1.msra.mxu0 0.0
      %1052 = vmatprep.subr.mxu0 0.0
      %1053 = vmatpush1.msra.mxu0 0.0
      %1054 = vmatprep.subr.mxu0 0.0
      %1055 = vmatpush1.msra.mxu0 0.0
      %1056 = vmatprep.subr.mxu0 0.0
      %1057 = vmatpush1.msra.mxu0 0.0
      %1058 = vmatprep.subr.mxu0 0.0
      %1059 = vmatpush1.msra.mxu0 0.0
      %1060 = vmatprep.mubr.f32.mxu0 0.0
      %1061 = vmatmul.mubr.f32.gmra.mrb[0].mxu0 %v980
      %v1062 = vpop.f32.mrb[0].mxu0
      %v1063 = vadd.f32 0.0, %v1062
      %v1064 = vpop.f32.mrb[0].mxu0
      %1065 = vmatprep.mubr.f32.mxu0 0.0
      %1066 = vmatmul.mubr.f32.gmra.mrb[0].mxu0 %v981
      %v1067 = vpop.f32.mrb[0].mxu0
      %v1068 = vadd.f32 0.0, %v1067
      %v1069 = vpop.f32.mrb[0].mxu0
      %1070 = vmatprep.mubr.f32.mxu0 0.0
      %1071 = vmatmul.mubr.f32.gmra.mrb[0].mxu0 %v982
      %v1072 = vpop.f32.mrb[0].mxu0
      %v1073 = vadd.f32 0.0, %v1072
      %v1074 = vpop.f32.mrb[0].mxu0
      %1075 = vmatprep.mubr.f32.mxu0 0.0
      %1076 = vmatmul.mubr.f32.gmra.mrb[0].mxu0 %v983
      %v1077 = vpop.f32.mrb[0].mxu0
      %v1078 = vadd.f32 0.0, %v1077
      %v1079 = vpop.f32.mrb[0].mxu0
      %1080 = vmatprep.mubr.f32.mxu0 0.0
      %1081 = vmatmul.mubr.f32.gmra.mrb[0].mxu0 %v984
      %v1082 = vpop.f32.mrb[0].mxu0
      %v1083 = vadd.f32 0.0, %v1082
      %v1084 = vpop.f32.mrb[0].mxu0
      %1085 = vmatprep.mubr.f32.mxu0 0.0
      %1086 = vmatmul.mubr.f32.gmra.mrb[0].mxu0 %v985
      %v1087 = vpop.f32.mrb[0].mxu0
      %v1088 = vadd.f32 0.0, %v1087
      %v1089 = vpop.f32.mrb[0].mxu0
      %1090 = vmatprep.mubr.f32.mxu0 0.0
      %1091 = vmatmul.mubr.f32.gmra.mrb[0].mxu0 %v986
      %v1092 = vpop.f32.mrb[0].mxu0
      %v1093 = vadd.f32 0.0, %v1092
      %v1094 = vpop.f32.mrb[0].mxu0
      %1095 = vmatprep.mubr.f32.mxu0 0.0
      %1096 = vmatmul.mubr.f32.gmra.mrb[0].mxu0 %v987
      %v1097 = vpop.f32.mrb[0].mxu0
      %v1098 = vadd.f32 0.0, %v1097
      %v1099 = vpop.f32.mrb[0].mxu0
      %1100 = vmatprep.mubr.f32.mxu0 0.0
      %1101 = vmatmul.mubr.f32.gmra.mrb[0].mxu0 %v988
      %v1102 = vpop.f32.mrb[0].mxu0
      %v1103 = vadd.f32 0.0, %v1102
      %v1104 = vpop.f32.mrb[0].mxu0
      %1105 = vmatprep.mubr.f32.mxu0 0.0
      %1106 = vmatmul.mubr.f32.gmra.mrb[0].mxu0 %v989
      %v1107 = vpop.f32.mrb[0].mxu0
      %v1108 = vadd.f32 0.0, %v1107
      %v1109 = vpop.f32.mrb[0].mxu0
      %1110 = vmatprep.mubr.f32.mxu0 0.0
      %1111 = vmatmul.mubr.f32.gmra.mrb[0].mxu0 %v990
      %v1112 = vpop.f32.mrb[0].mxu0
      %v1113 = vadd.f32 0.0, %v1112
      %v1114 = vpop.f32.mrb[0].mxu0
      %1115 = vmatprep.mubr.f32.mxu0 0.0
      %1116 = vmatmul.mubr.f32.gmra.mrb[0].mxu0 %v991
      %v1117 = vpop.f32.mrb[0].mxu0
      %v1118 = vadd.f32 0.0, %v1117
      %v1119 = vpop.f32.mrb[0].mxu0
      %1120 = vmatprep.mubr.f32.mxu0 0.0
      %1121 = vmatmul.mubr.f32.gmra.mrb[0].mxu0 %v992
      %v1122 = vpop.f32.mrb[0].mxu0
      %v1123 = vadd.f32 0.0, %v1122
      %v1124 = vpop.f32.mrb[0].mxu0
      %1125 = vmatprep.mubr.f32.mxu0 0.0
      %1126 = vmatmul.mubr.f32.gmra.mrb[0].mxu0 %v993
      %v1127 = vpop.f32.mrb[0].mxu0
      %v1128 = vadd.f32 0.0, %v1127
      %v1129 = vpop.f32.mrb[0].mxu0
      %1130 = vmatprep.mubr.f32.mxu0 0.0
      %1131 = vmatmul.mubr.f32.gmra.mrb[0].mxu0 %v994
      %v1132 = vpop.f32.mrb[0].mxu0
      %v1133 = vadd.f32 0.0, %v1132
      %v1134 = vpop.f32.mrb[0].mxu0
      %1135 = vmatprep.mubr.f32.mxu0 0.0
      %1136 = vmatmul.mubr.f32.gmra.mrb[0].mxu0 %v995
      %v1137 = vpop.f32.mrb[0].mxu0
      %v1138 = vadd.f32 0.0, %v1137
      %v1139 = vpop.f32.mrb[0].mxu0
      %1140 = vdwg.mxu0
      %v1141 = vld [vmem:[%s2] sm:$0xff]
      %v1142 = vld [vmem:[%s2 + $0x8] sm:$0xff]
      %v1143 = vld [vmem:[%s2 + $0x10] sm:$0xff]
      %v1144 = vld [vmem:[%s2 + $0x18] sm:$0xff]
      %v1145 = vld [vmem:[%s2 + $0x20] sm:$0xff]
      %v1146 = vld [vmem:[%s2 + $0x28] sm:$0xff]
      %v1147 = vld [vmem:[%s2 + $0x30] sm:$0xff]
      %v1148 = vld [vmem:[%s2 + $0x38] sm:$0xff]
      %v1149 = vld [vmem:[%s2 + $0x40] sm:$0xff]
      %v1150 = vld [vmem:[%s2 + $0x48] sm:$0xff]
      %v1151 = vld [vmem:[%s2 + $0x50] sm:$0xff]
      %v1152 = vld [vmem:[%s2 + $0x58] sm:$0xff]
      %v1153 = vld [vmem:[%s2 + $0x60] sm:$0xff]
      %v1154 = vld [vmem:[%s2 + $0x68] sm:$0xff]
      %v1155 = vld [vmem:[%s2 + $0x70] sm:$0xff]
      %v1156 = vld [vmem:[%s2 + $0x78] sm:$0xff]
      %v1157 = vld [vmem:[%s421] sm:$0xff]
      %v1158 = vld [vmem:[%s421 + $0x8] sm:$0xff]
      %v1159 = vld [vmem:[%s421 + $0x10] sm:$0xff]
      %v1160 = vld [vmem:[%s421 + $0x18] sm:$0xff]
      %v1161 = vld [vmem:[%s421 + $0x20] sm:$0xff]
      %v1162 = vld [vmem:[%s421 + $0x28] sm:$0xff]
      %v1163 = vld [vmem:[%s421 + $0x30] sm:$0xff]
      %v1164 = vld [vmem:[%s421 + $0x38] sm:$0xff]
      %v1165 = vld [vmem:[%s421 + $0x40] sm:$0xff]
      %v1166 = vld [vmem:[%s421 + $0x48] sm:$0xff]
      %1167 = vset.pattern.permute.xlu0 0
      %1168 = vperm.xlu0 %1167, %v432
      %v1169 = vpop.permute.xlu0 %1168
      %1171 = vset.pattern.permute.xlu0 0
      %1172 = vperm.xlu0 %1171, %v433
      %v1173 = vpop.permute.xlu0 %1172
      %1175 = vset.pattern.permute.xlu0 0
      %1176 = vperm.xlu0 %1175, %v434
      %v1177 = vpop.permute.xlu0 %1176
      %1179 = vset.pattern.permute.xlu0 0
      %1180 = vperm.xlu0 %1179, %v435
      %v1181 = vpop.permute.xlu0 %1180
      %1183 = vset.pattern.permute.xlu0 0
      %1184 = vperm.xlu0 %1183, %v436
      %v1185 = vpop.permute.xlu0 %1184
      %1187 = vset.pattern.permute.xlu0 0
      %1188 = vperm.xlu0 %1187, %v437
      %v1189 = vpop.permute.xlu0 %1188
      %1191 = vset.pattern.permute.xlu0 0
      %1192 = vperm.xlu0 %1191, %v438
      %v1193 = vpop.permute.xlu0 %1192
      %1195 = vset.pattern.permute.xlu0 0
      %1196 = vperm.xlu0 %1195, %v439
      %v1197 = vpop.permute.xlu0 %1196
      %1199 = vset.pattern.permute.xlu0 0
      %1200 = vperm.xlu0 %1199, %v440
      %v1201 = vpop.permute.xlu0 %1200
      %1203 = vset.pattern.permute.xlu0 0
      %1204 = vperm.xlu0 %1203, %v441
      %v1205 = vpop.permute.xlu0 %1204
      %1207 = vset.pattern.permute.xlu0 0
      %1208 = vperm.xlu0 %1207, %v442
      %v1209 = vpop.permute.xlu0 %1208
      %1211 = vset.pattern.permute.xlu0 0
      %1212 = vperm.xlu0 %1211, %v443
      %v1213 = vpop.permute.xlu0 %1212
      %1215 = vset.pattern.permute.xlu0 0
      %1216 = vperm.xlu0 %1215, %v444
      %v1217 = vpop.permute.xlu0 %1216
      %1219 = vset.pattern.permute.xlu0 0
      %1220 = vperm.xlu0 %1219, %v445
      %v1221 = vpop.permute.xlu0 %1220
      %1223 = vset.pattern.permute.xlu0 0
      %1224 = vperm.xlu0 %1223, %v446
      %v1225 = vpop.permute.xlu0 %1224
      %1227 = vset.pattern.permute.xlu0 0
      %1228 = vperm.xlu0 %1227, %v447
      %v1229 = vpop.permute.xlu0 %1228
      %v1232 = vsel %vm545, %v1141, 0
      %v1235 = vsel %vm545, %v1142, 0
      %v1238 = vsel %vm545, %v1143, 0
      %v1241 = vsel %vm545, %v1144, 0
      %v1244 = vsel %vm545, %v1145, 0
      %v1247 = vsel %vm545, %v1146, 0
      %v1250 = vsel %vm545, %v1147, 0
      %v1253 = vsel %vm545, %v1148, 0
      %v1256 = vsel %vm545, %v1149, 0
      %v1259 = vsel %vm545, %v1150, 0
      %v1262 = vsel %vm545, %v1151, 0
      %v1265 = vsel %vm545, %v1152, 0
      %v1268 = vsel %vm545, %v1153, 0
      %v1271 = vsel %vm545, %v1154, 0
      %v1274 = vsel %vm545, %v1155, 0
      %v1277 = vsel %vm545, %v1156, 0
      %1279 = vmatprep.subr.mxu0 %v1158
      %1280 = vmatpush1.msra.mxu0 %v1157
      %1281 = vmatprep.subr.mxu0 0.0
      %1282 = vmatpush1.msra.mxu0 0.0
      %1283 = vmatprep.subr.mxu0 0.0
      %1284 = vmatpush1.msra.mxu0 0.0
      %1285 = vmatprep.subr.mxu0 0.0
      %1286 = vmatpush1.msra.mxu0 0.0
      %1287 = vmatprep.subr.mxu0 0.0
      %1288 = vmatpush1.msra.mxu0 0.0
      %1289 = vmatprep.subr.mxu0 0.0
      %1290 = vmatpush1.msra.mxu0 0.0
      %1291 = vmatprep.subr.mxu0 0.0
      %1292 = vmatpush1.msra.mxu0 0.0
      %1293 = vmatprep.subr.mxu0 0.0
      %1294 = vmatpush1.msra.mxu0 0.0
      %1295 = vmatprep.subr.mxu0 0.0
      %1296 = vmatpush1.msra.mxu0 0.0
      %1297 = vmatprep.subr.mxu0 0.0
      %1298 = vmatpush1.msra.mxu0 0.0
      %1299 = vmatprep.subr.mxu0 0.0
      %1300 = vmatpush1.msra.mxu0 0.0
      %1301 = vmatprep.subr.mxu0 0.0
      %1302 = vmatpush1.msra.mxu0 0.0
      %1303 = vmatprep.subr.mxu0 0.0
      %1304 = vmatpush1.msra.mxu0 0.0
      %1305 = vmatprep.subr.mxu0 0.0
      %1306 = vmatpush1.msra.mxu0 0.0
      %1307 = vmatprep.subr.mxu0 0.0
      %1308 = vmatpush1.msra.mxu0 0.0
      %1309 = vmatprep.subr.mxu0 0.0
      %1310 = vmatpush1.msra.mxu0 0.0
      %1311 = vmatprep.subr.mxu0 0.0
      %1312 = vmatpush1.msra.mxu0 0.0
      %1313 = vmatprep.subr.mxu0 0.0
      %1314 = vmatpush1.msra.mxu0 0.0
      %1315 = vmatprep.subr.mxu0 0.0
      %1316 = vmatpush1.msra.mxu0 0.0
      %1317 = vmatprep.subr.mxu0 0.0
      %1318 = vmatpush1.msra.mxu0 0.0
      %1319 = vmatprep.subr.mxu0 0.0
      %1320 = vmatpush1.msra.mxu0 0.0
      %1321 = vmatprep.subr.mxu0 0.0
      %1322 = vmatpush1.msra.mxu0 0.0
      %1323 = vmatprep.subr.mxu0 0.0
      %1324 = vmatpush1.msra.mxu0 0.0
      %1325 = vmatprep.subr.mxu0 0.0
      %1326 = vmatpush1.msra.mxu0 0.0
      %1327 = vmatprep.subr.mxu0 0.0
      %1328 = vmatpush1.msra.mxu0 0.0
      %1329 = vmatprep.subr.mxu0 0.0
      %1330 = vmatpush1.msra.mxu0 0.0
      %1331 = vmatprep.subr.mxu0 0.0
      %1332 = vmatpush1.msra.mxu0 0.0
      %1333 = vmatprep.subr.mxu0 0.0
      %1334 = vmatpush1.msra.mxu0 0.0
      %1335 = vmatprep.subr.mxu0 0.0
      %1336 = vmatpush1.msra.mxu0 0.0
      %1337 = vmatprep.subr.mxu0 0.0
      %1338 = vmatpush1.msra.mxu0 0.0
      %1339 = vmatprep.subr.mxu0 0.0
      %1340 = vmatpush1.msra.mxu0 0.0
      %1341 = vmatprep.subr.mxu0 0.0
      %1342 = vmatpush1.msra.mxu0 0.0
      %1343 = vmatprep.mubr.f32.mxu0 0.0
      %1344 = vmatmul.mubr.f32.gmra.mrb[0].mxu0 %v1232
      %v1345 = vpop.f32.mrb[0].mxu0
      %v1346 = vadd.f32 %v1169, %v1345
      %v1347 = vpop.f32.mrb[0].mxu0
      %v1348 = vadd.f32 %v1169, %v1347
      %1349 = vmatprep.mubr.f32.mxu0 0.0
      %1350 = vmatmul.mubr.f32.gmra.mrb[0].mxu0 %v1235
      %v1351 = vpop.f32.mrb[0].mxu0
      %v1352 = vadd.f32 %v1173, %v1351
      %v1353 = vpop.f32.mrb[0].mxu0
      %v1354 = vadd.f32 %v1173, %v1353
      %1355 = vmatprep.mubr.f32.mxu0 0.0
      %1356 = vmatmul.mubr.f32.gmra.mrb[0].mxu0 %v1238
      %v1357 = vpop.f32.mrb[0].mxu0
      %v1358 = vadd.f32 %v1177, %v1357
      %v1359 = vpop.f32.mrb[0].mxu0
      %v1360 = vadd.f32 %v1177, %v1359
      %1361 = vmatprep.mubr.f32.mxu0 0.0
      %1362 = vmatmul.mubr.f32.gmra.mrb[0].mxu0 %v1241
      %v1363 = vpop.f32.mrb[0].mxu0
      %v1364 = vadd.f32 %v1181, %v1363
      %v1365 = vpop.f32.mrb[0].mxu0
      %v1366 = vadd.f32 %v1181, %v1365
      %1367 = vmatprep.mubr.f32.mxu0 0.0
      %1368 = vmatmul.mubr.f32.gmra.mrb[0].mxu0 %v1244
      %v1369 = vpop.f32.mrb[0].mxu0
      %v1370 = vadd.f32 %v1185, %v1369
      %v1371 = vpop.f32.mrb[0].mxu0
      %v1372 = vadd.f32 %v1185, %v1371
      %1373 = vmatprep.mubr.f32.mxu0 0.0
      %1374 = vmatmul.mubr.f32.gmra.mrb[0].mxu0 %v1247
      %v1375 = vpop.f32.mrb[0].mxu0
      %v1376 = vadd.f32 %v1189, %v1375
      %v1377 = vpop.f32.mrb[0].mxu0
      %v1378 = vadd.f32 %v1189, %v1377
      %1379 = vmatprep.mubr.f32.mxu0 0.0
      %1380 = vmatmul.mubr.f32.gmra.mrb[0].mxu0 %v1250
      %v1381 = vpop.f32.mrb[0].mxu0
      %v1382 = vadd.f32 %v1193, %v1381
      %v1383 = vpop.f32.mrb[0].mxu0
      %v1384 = vadd.f32 %v1193, %v1383
      %1385 = vmatprep.mubr.f32.mxu0 0.0
      %1386 = vmatmul.mubr.f32.gmra.mrb[0].mxu0 %v1253
      %v1387 = vpop.f32.mrb[0].mxu0
      %v1388 = vadd.f32 %v1197, %v1387
      %v1389 = vpop.f32.mrb[0].mxu0
      %v1390 = vadd.f32 %v1197, %v1389
      %1391 = vmatprep.mubr.f32.mxu0 0.0
      %1392 = vmatmul.mubr.f32.gmra.mrb[0].mxu0 %v1256
      %v1393 = vpop.f32.mrb[0].mxu0
      %v1394 = vadd.f32 %v1201, %v1393
      %v1395 = vpop.f32.mrb[0].mxu0
      %v1396 = vadd.f32 %v1201, %v1395
      %1397 = vmatprep.mubr.f32.mxu0 0.0
      %1398 = vmatmul.mubr.f32.gmra.mrb[0].mxu0 %v1259
      %v1399 = vpop.f32.mrb[0].mxu0
      %v1400 = vadd.f32 %v1205, %v1399
      %v1401 = vpop.f32.mrb[0].mxu0
      %v1402 = vadd.f32 %v1205, %v1401
      %1403 = vmatprep.mubr.f32.mxu0 0.0
      %1404 = vmatmul.mubr.f32.gmra.mrb[0].mxu0 %v1262
      %v1405 = vpop.f32.mrb[0].mxu0
      %v1406 = vadd.f32 %v1209, %v1405
      %v1407 = vpop.f32.mrb[0].mxu0
      %v1408 = vadd.f32 %v1209, %v1407
      %1409 = vmatprep.mubr.f32.mxu0 0.0
      %1410 = vmatmul.mubr.f32.gmra.mrb[0].mxu0 %v1265
      %v1411 = vpop.f32.mrb[0].mxu0
      %v1412 = vadd.f32 %v1213, %v1411
      %v1413 = vpop.f32.mrb[0].mxu0
      %v1414 = vadd.f32 %v1213, %v1413
      %1415 = vmatprep.mubr.f32.mxu0 0.0
      %1416 = vmatmul.mubr.f32.gmra.mrb[0].mxu0 %v1268
      %v1417 = vpop.f32.mrb[0].mxu0
      %v1418 = vadd.f32 %v1217, %v1417
      %v1419 = vpop.f32.mrb[0].mxu0
      %v1420 = vadd.f32 %v1217, %v1419
      %1421 = vmatprep.mubr.f32.mxu0 0.0
      %1422 = vmatmul.mubr.f32.gmra.mrb[0].mxu0 %v1271
      %v1423 = vpop.f32.mrb[0].mxu0
      %v1424 = vadd.f32 %v1221, %v1423
      %v1425 = vpop.f32.mrb[0].mxu0
      %v1426 = vadd.f32 %v1221, %v1425
      %1427 = vmatprep.mubr.f32.mxu0 0.0
      %1428 = vmatmul.mubr.f32.gmra.mrb[0].mxu0 %v1274
      %v1429 = vpop.f32.mrb[0].mxu0
      %v1430 = vadd.f32 %v1225, %v1429
      %v1431 = vpop.f32.mrb[0].mxu0
      %v1432 = vadd.f32 %v1225, %v1431
      %1433 = vmatprep.mubr.f32.mxu0 0.0
      %1434 = vmatmul.mubr.f32.gmra.mrb[0].mxu0 %v1277
      %v1435 = vpop.f32.mrb[0].mxu0
      %v1436 = vadd.f32 %v1229, %v1435
      %v1437 = vpop.f32.mrb[0].mxu0
      %v1438 = vadd.f32 %v1229, %v1437
      %1439 = vdwg.mxu0
      %1440 = vmatprep.subr.mxu0 %v1160
      %1441 = vmatpush1.msra.mxu0 %v1159
      %1442 = vmatprep.subr.mxu0 0.0
      %1443 = vmatpush1.msra.mxu0 0.0
      %1444 = vmatprep.subr.mxu0 0.0
      %1445 = vmatpush1.msra.mxu0 0.0
      %1446 = vmatprep.subr.mxu0 0.0
      %1447 = vmatpush1.msra.mxu0 0.0
      %1448 = vmatprep.subr.mxu0 0.0
      %1449 = vmatpush1.msra.mxu0 0.0
      %1450 = vmatprep.subr.mxu0 0.0
      %1451 = vmatpush1.msra.mxu0 0.0
      %1452 = vmatprep.subr.mxu0 0.0
      %1453 = vmatpush1.msra.mxu0 0.0
      %1454 = vmatprep.subr.mxu0 0.0
      %1455 = vmatpush1.msra.mxu0 0.0
      %1456 = vmatprep.subr.mxu0 0.0
      %1457 = vmatpush1.msra.mxu0 0.0
      %1458 = vmatprep.subr.mxu0 0.0
      %1459 = vmatpush1.msra.mxu0 0.0
      %1460 = vmatprep.subr.mxu0 0.0
      %1461 = vmatpush1.msra.mxu0 0.0
      %1462 = vmatprep.subr.mxu0 0.0
      %1463 = vmatpush1.msra.mxu0 0.0
      %1464 = vmatprep.subr.mxu0 0.0
      %1465 = vmatpush1.msra.mxu0 0.0
      %1466 = vmatprep.subr.mxu0 0.0
      %1467 = vmatpush1.msra.mxu0 0.0
      %1468 = vmatprep.subr.mxu0 0.0
      %1469 = vmatpush1.msra.mxu0 0.0
      %1470 = vmatprep.subr.mxu0 0.0
      %1471 = vmatpush1.msra.mxu0 0.0
      %1472 = vmatprep.subr.mxu0 0.0
      %1473 = vmatpush1.msra.mxu0 0.0
      %1474 = vmatprep.subr.mxu0 0.0
      %1475 = vmatpush1.msra.mxu0 0.0
      %1476 = vmatprep.subr.mxu0 0.0
      %1477 = vmatpush1.msra.mxu0 0.0
      %1478 = vmatprep.subr.mxu0 0.0
      %1479 = vmatpush1.msra.mxu0 0.0
      %1480 = vmatprep.subr.mxu0 0.0
      %1481 = vmatpush1.msra.mxu0 0.0
      %1482 = vmatprep.subr.mxu0 0.0
      %1483 = vmatpush1.msra.mxu0 0.0
      %1484 = vmatprep.subr.mxu0 0.0
      %1485 = vmatpush1.msra.mxu0 0.0
      %1486 = vmatprep.subr.mxu0 0.0
      %1487 = vmatpush1.msra.mxu0 0.0
      %1488 = vmatprep.subr.mxu0 0.0
      %1489 = vmatpush1.msra.mxu0 0.0
      %1490 = vmatprep.subr.mxu0 0.0
      %1491 = vmatpush1.msra.mxu0 0.0
      %1492 = vmatprep.subr.mxu0 0.0
      %1493 = vmatpush1.msra.mxu0 0.0
      %1494 = vmatprep.subr.mxu0 0.0
      %1495 = vmatpush1.msra.mxu0 0.0
      %1496 = vmatprep.subr.mxu0 0.0
      %1497 = vmatpush1.msra.mxu0 0.0
      %1498 = vmatprep.subr.mxu0 0.0
      %1499 = vmatpush1.msra.mxu0 0.0
      %1500 = vmatprep.subr.mxu0 0.0
      %1501 = vmatpush1.msra.mxu0 0.0
      %1502 = vmatprep.subr.mxu0 0.0
      %1503 = vmatpush1.msra.mxu0 0.0
      %1504 = vmatprep.mubr.f32.mxu0 0.0
      %1505 = vmatmul.mubr.f32.gmra.mrb[0].mxu0 %v1232
      %v1506 = vpop.f32.mrb[0].mxu0
      %v1507 = vadd.f32 %v1169, %v1506
      %v1508 = vpop.f32.mrb[0].mxu0
      %v1509 = vadd.f32 %v1169, %v1508
      %1510 = vmatprep.mubr.f32.mxu0 0.0
      %1511 = vmatmul.mubr.f32.gmra.mrb[0].mxu0 %v1235
      %v1512 = vpop.f32.mrb[0].mxu0
      %v1513 = vadd.f32 %v1173, %v1512
      %v1514 = vpop.f32.mrb[0].mxu0
      %v1515 = vadd.f32 %v1173, %v1514
      %1516 = vmatprep.mubr.f32.mxu0 0.0
      %1517 = vmatmul.mubr.f32.gmra.mrb[0].mxu0 %v1238
      %v1518 = vpop.f32.mrb[0].mxu0
      %v1519 = vadd.f32 %v1177, %v1518
      %v1520 = vpop.f32.mrb[0].mxu0
      %v1521 = vadd.f32 %v1177, %v1520
      %1522 = vmatprep.mubr.f32.mxu0 0.0
      %1523 = vmatmul.mubr.f32.gmra.mrb[0].mxu0 %v1241
      %v1524 = vpop.f32.mrb[0].mxu0
      %v1525 = vadd.f32 %v1181, %v1524
      %v1526 = vpop.f32.mrb[0].mxu0
      %v1527 = vadd.f32 %v1181, %v1526
      %1528 = vmatprep.mubr.f32.mxu0 0.0
      %1529 = vmatmul.mubr.f32.gmra.mrb[0].mxu0 %v1244
      %v1530 = vpop.f32.mrb[0].mxu0
      %v1531 = vadd.f32 %v1185, %v1530
      %v1532 = vpop.f32.mrb[0].mxu0
      %v1533 = vadd.f32 %v1185, %v1532
      %1534 = vmatprep.mubr.f32.mxu0 0.0
      %1535 = vmatmul.mubr.f32.gmra.mrb[0].mxu0 %v1247
      %v1536 = vpop.f32.mrb[0].mxu0
      %v1537 = vadd.f32 %v1189, %v1536
      %v1538 = vpop.f32.mrb[0].mxu0
      %v1539 = vadd.f32 %v1189, %v1538
      %1540 = vmatprep.mubr.f32.mxu0 0.0
      %1541 = vmatmul.mubr.f32.gmra.mrb[0].mxu0 %v1250
      %v1542 = vpop.f32.mrb[0].mxu0
      %v1543 = vadd.f32 %v1193, %v1542
      %v1544 = vpop.f32.mrb[0].mxu0
      %v1545 = vadd.f32 %v1193, %v1544
      %1546 = vmatprep.mubr.f32.mxu0 0.0
      %1547 = vmatmul.mubr.f32.gmra.mrb[0].mxu0 %v1253
      %v1548 = vpop.f32.mrb[0].mxu0
      %v1549 = vadd.f32 %v1197, %v1548
      %v1550 = vpop.f32.mrb[0].mxu0
      %v1551 = vadd.f32 %v1197, %v1550
      %1552 = vmatprep.mubr.f32.mxu0 0.0
      %1553 = vmatmul.mubr.f32.gmra.mrb[0].mxu0 %v1256
      %v1554 = vpop.f32.mrb[0].mxu0
      %v1555 = vadd.f32 %v1201, %v1554
      %v1556 = vpop.f32.mrb[0].mxu0
      %v1557 = vadd.f32 %v1201, %v1556
      %1558 = vmatprep.mubr.f32.mxu0 0.0
      %1559 = vmatmul.mubr.f32.gmra.mrb[0].mxu0 %v1259
      %v1560 = vpop.f32.mrb[0].mxu0
      %v1561 = vadd.f32 %v1205, %v1560
      %v1562 = vpop.f32.mrb[0].mxu0
      %v1563 = vadd.f32 %v1205, %v1562
      %1564 = vmatprep.mubr.f32.mxu0 0.0
      %1565 = vmatmul.mubr.f32.gmra.mrb[0].mxu0 %v1262
      %v1566 = vpop.f32.mrb[0].mxu0
      %v1567 = vadd.f32 %v1209, %v1566
      %v1568 = vpop.f32.mrb[0].mxu0
      %v1569 = vadd.f32 %v1209, %v1568
      %1570 = vmatprep.mubr.f32.mxu0 0.0
      %1571 = vmatmul.mubr.f32.gmra.mrb[0].mxu0 %v1265
      %v1572 = vpop.f32.mrb[0].mxu0
      %v1573 = vadd.f32 %v1213, %v1572
      %v1574 = vpop.f32.mrb[0].mxu0
      %v1575 = vadd.f32 %v1213, %v1574
      %1576 = vmatprep.mubr.f32.mxu0 0.0
      %1577 = vmatmul.mubr.f32.gmra.mrb[0].mxu0 %v1268
      %v1578 = vpop.f32.mrb[0].mxu0
      %v1579 = vadd.f32 %v1217, %v1578
      %v1580 = vpop.f32.mrb[0].mxu0
      %v1581 = vadd.f32 %v1217, %v1580
      %1582 = vmatprep.mubr.f32.mxu0 0.0
      %1583 = vmatmul.mubr.f32.gmra.mrb[0].mxu0 %v1271
      %v1584 = vpop.f32.mrb[0].mxu0
      %v1585 = vadd.f32 %v1221, %v1584
      %v1586 = vpop.f32.mrb[0].mxu0
      %v1587 = vadd.f32 %v1221, %v1586
      %1588 = vmatprep.mubr.f32.mxu0 0.0
      %1589 = vmatmul.mubr.f32.gmra.mrb[0].mxu0 %v1274
      %v1590 = vpop.f32.mrb[0].mxu0
      %v1591 = vadd.f32 %v1225, %v1590
      %v1592 = vpop.f32.mrb[0].mxu0
      %v1593 = vadd.f32 %v1225, %v1592
      %1594 = vmatprep.mubr.f32.mxu0 0.0
      %1595 = vmatmul.mubr.f32.gmra.mrb[0].mxu0 %v1277
      %v1596 = vpop.f32.mrb[0].mxu0
      %v1597 = vadd.f32 %v1229, %v1596
      %v1598 = vpop.f32.mrb[0].mxu0
      %v1599 = vadd.f32 %v1229, %v1598
      %1600 = vdwg.mxu0
      %1601 = vmatprep.subr.mxu0 %v1162
      %1602 = vmatpush1.msra.mxu0 %v1161
      %1603 = vmatprep.subr.mxu0 0.0
      %1604 = vmatpush1.msra.mxu0 0.0
      %1605 = vmatprep.subr.mxu0 0.0
      %1606 = vmatpush1.msra.mxu0 0.0
      %1607 = vmatprep.subr.mxu0 0.0
      %1608 = vmatpush1.msra.mxu0 0.0
      %1609 = vmatprep.subr.mxu0 0.0
      %1610 = vmatpush1.msra.mxu0 0.0
      %1611 = vmatprep.subr.mxu0 0.0
      %1612 = vmatpush1.msra.mxu0 0.0
      %1613 = vmatprep.subr.mxu0 0.0
      %1614 = vmatpush1.msra.mxu0 0.0
      %1615 = vmatprep.subr.mxu0 0.0
      %1616 = vmatpush1.msra.mxu0 0.0
      %1617 = vmatprep.subr.mxu0 0.0
      %1618 = vmatpush1.msra.mxu0 0.0
      %1619 = vmatprep.subr.mxu0 0.0
      %1620 = vmatpush1.msra.mxu0 0.0
      %1621 = vmatprep.subr.mxu0 0.0
      %1622 = vmatpush1.msra.mxu0 0.0
      %1623 = vmatprep.subr.mxu0 0.0
      %1624 = vmatpush1.msra.mxu0 0.0
      %1625 = vmatprep.subr.mxu0 0.0
      %1626 = vmatpush1.msra.mxu0 0.0
      %1627 = vmatprep.subr.mxu0 0.0
      %1628 = vmatpush1.msra.mxu0 0.0
      %1629 = vmatprep.subr.mxu0 0.0
      %1630 = vmatpush1.msra.mxu0 0.0
      %1631 = vmatprep.subr.mxu0 0.0
      %1632 = vmatpush1.msra.mxu0 0.0
      %1633 = vmatprep.subr.mxu0 0.0
      %1634 = vmatpush1.msra.mxu0 0.0
      %1635 = vmatprep.subr.mxu0 0.0
      %1636 = vmatpush1.msra.mxu0 0.0
      %1637 = vmatprep.subr.mxu0 0.0
      %1638 = vmatpush1.msra.mxu0 0.0
      %1639 = vmatprep.subr.mxu0 0.0
      %1640 = vmatpush1.msra.mxu0 0.0
      %1641 = vmatprep.subr.mxu0 0.0
      %1642 = vmatpush1.msra.mxu0 0.0
      %1643 = vmatprep.subr.mxu0 0.0
      %1644 = vmatpush1.msra.mxu0 0.0
      %1645 = vmatprep.subr.mxu0 0.0
      %1646 = vmatpush1.msra.mxu0 0.0
      %1647 = vmatprep.subr.mxu0 0.0
      %1648 = vmatpush1.msra.mxu0 0.0
      %1649 = vmatprep.subr.mxu0 0.0
      %1650 = vmatpush1.msra.mxu0 0.0
      %1651 = vmatprep.subr.mxu0 0.0
      %1652 = vmatpush1.msra.mxu0 0.0
      %1653 = vmatprep.subr.mxu0 0.0
      %1654 = vmatpush1.msra.mxu0 0.0
      %1655 = vmatprep.subr.mxu0 0.0
      %1656 = vmatpush1.msra.mxu0 0.0
      %1657 = vmatprep.subr.mxu0 0.0
      %1658 = vmatpush1.msra.mxu0 0.0
      %1659 = vmatprep.subr.mxu0 0.0
      %1660 = vmatpush1.msra.mxu0 0.0
      %1661 = vmatprep.subr.mxu0 0.0
      %1662 = vmatpush1.msra.mxu0 0.0
      %1663 = vmatprep.subr.mxu0 0.0
      %1664 = vmatpush1.msra.mxu0 0.0
      %1665 = vmatprep.mubr.f32.mxu0 0.0
      %1666 = vmatmul.mubr.f32.gmra.mrb[0].mxu0 %v1232
      %v1667 = vpop.f32.mrb[0].mxu0
      %v1668 = vadd.f32 %v1169, %v1667
      %v1669 = vpop.f32.mrb[0].mxu0
      %v1670 = vadd.f32 %v1169, %v1669
      %1671 = vmatprep.mubr.f32.mxu0 0.0
      %1672 = vmatmul.mubr.f32.gmra.mrb[0].mxu0 %v1235
      %v1673 = vpop.f32.mrb[0].mxu0
      %v1674 = vadd.f32 %v1173, %v1673
      %v1675 = vpop.f32.mrb[0].mxu0
      %v1676 = vadd.f32 %v1173, %v1675
      %1677 = vmatprep.mubr.f32.mxu0 0.0
      %1678 = vmatmul.mubr.f32.gmra.mrb[0].mxu0 %v1238
      %v1679 = vpop.f32.mrb[0].mxu0
      %v1680 = vadd.f32 %v1177, %v1679
      %v1681 = vpop.f32.mrb[0].mxu0
      %v1682 = vadd.f32 %v1177, %v1681
      %1683 = vmatprep.mubr.f32.mxu0 0.0
      %1684 = vmatmul.mubr.f32.gmra.mrb[0].mxu0 %v1241
      %v1685 = vpop.f32.mrb[0].mxu0
      %v1686 = vadd.f32 %v1181, %v1685
      %v1687 = vpop.f32.mrb[0].mxu0
      %v1688 = vadd.f32 %v1181, %v1687
      %1689 = vmatprep.mubr.f32.mxu0 0.0
      %1690 = vmatmul.mubr.f32.gmra.mrb[0].mxu0 %v1244
      %v1691 = vpop.f32.mrb[0].mxu0
      %v1692 = vadd.f32 %v1185, %v1691
      %v1693 = vpop.f32.mrb[0].mxu0
      %v1694 = vadd.f32 %v1185, %v1693
      %1695 = vmatprep.mubr.f32.mxu0 0.0
      %1696 = vmatmul.mubr.f32.gmra.mrb[0].mxu0 %v1247
      %v1697 = vpop.f32.mrb[0].mxu0
      %v1698 = vadd.f32 %v1189, %v1697
      %v1699 = vpop.f32.mrb[0].mxu0
      %v1700 = vadd.f32 %v1189, %v1699
      %1701 = vmatprep.mubr.f32.mxu0 0.0
      %1702 = vmatmul.mubr.f32.gmra.mrb[0].mxu0 %v1250
      %v1703 = vpop.f32.mrb[0].mxu0
      %v1704 = vadd.f32 %v1193, %v1703
      %v1705 = vpop.f32.mrb[0].mxu0
      %v1706 = vadd.f32 %v1193, %v1705
      %1707 = vmatprep.mubr.f32.mxu0 0.0
      %1708 = vmatmul.mubr.f32.gmra.mrb[0].mxu0 %v1253
      %v1709 = vpop.f32.mrb[0].mxu0
      %v1710 = vadd.f32 %v1197, %v1709
      %v1711 = vpop.f32.mrb[0].mxu0
      %v1712 = vadd.f32 %v1197, %v1711
      %1713 = vmatprep.mubr.f32.mxu0 0.0
      %1714 = vmatmul.mubr.f32.gmra.mrb[0].mxu0 %v1256
      %v1715 = vpop.f32.mrb[0].mxu0
      %v1716 = vadd.f32 %v1201, %v1715
      %v1717 = vpop.f32.mrb[0].mxu0
      %v1718 = vadd.f32 %v1201, %v1717
      %1719 = vmatprep.mubr.f32.mxu0 0.0
      %1720 = vmatmul.mubr.f32.gmra.mrb[0].mxu0 %v1259
      %v1721 = vpop.f32.mrb[0].mxu0
      %v1722 = vadd.f32 %v1205, %v1721
      %v1723 = vpop.f32.mrb[0].mxu0
      %v1724 = vadd.f32 %v1205, %v1723
      %1725 = vmatprep.mubr.f32.mxu0 0.0
      %1726 = vmatmul.mubr.f32.gmra.mrb[0].mxu0 %v1262
      %v1727 = vpop.f32.mrb[0].mxu0
      %v1728 = vadd.f32 %v1209, %v1727
      %v1729 = vpop.f32.mrb[0].mxu0
      %v1730 = vadd.f32 %v1209, %v1729
      %1731 = vmatprep.mubr.f32.mxu0 0.0
      %1732 = vmatmul.mubr.f32.gmra.mrb[0].mxu0 %v1265
      %v1733 = vpop.f32.mrb[0].mxu0
      %v1734 = vadd.f32 %v1213, %v1733
      %v1735 = vpop.f32.mrb[0].mxu0
      %v1736 = vadd.f32 %v1213, %v1735
      %1737 = vmatprep.mubr.f32.mxu0 0.0
      %1738 = vmatmul.mubr.f32.gmra.mrb[0].mxu0 %v1268
      %v1739 = vpop.f32.mrb[0].mxu0
      %v1740 = vadd.f32 %v1217, %v1739
      %v1741 = vpop.f32.mrb[0].mxu0
      %v1742 = vadd.f32 %v1217, %v1741
      %1743 = vmatprep.mubr.f32.mxu0 0.0
      %1744 = vmatmul.mubr.f32.gmra.mrb[0].mxu0 %v1271
      %v1745 = vpop.f32.mrb[0].mxu0
      %v1746 = vadd.f32 %v1221, %v1745
      %v1747 = vpop.f32.mrb[0].mxu0
      %v1748 = vadd.f32 %v1221, %v1747
      %1749 = vmatprep.mubr.f32.mxu0 0.0
      %1750 = vmatmul.mubr.f32.gmra.mrb[0].mxu0 %v1274
      %v1751 = vpop.f32.mrb[0].mxu0
      %v1752 = vadd.f32 %v1225, %v1751
      %v1753 = vpop.f32.mrb[0].mxu0
      %v1754 = vadd.f32 %v1225, %v1753
      %1755 = vmatprep.mubr.f32.mxu0 0.0
      %1756 = vmatmul.mubr.f32.gmra.mrb[0].mxu0 %v1277
      %v1757 = vpop.f32.mrb[0].mxu0
      %v1758 = vadd.f32 %v1229, %v1757
      %v1759 = vpop.f32.mrb[0].mxu0
      %v1760 = vadd.f32 %v1229, %v1759
      %1761 = vdwg.mxu0
      %1762 = vmatprep.subr.mxu0 %v1164
      %1763 = vmatpush1.msra.mxu0 %v1163
      %1764 = vmatprep.subr.mxu0 0.0
      %1765 = vmatpush1.msra.mxu0 0.0
      %1766 = vmatprep.subr.mxu0 0.0
      %1767 = vmatpush1.msra.mxu0 0.0
      %1768 = vmatprep.subr.mxu0 0.0
      %1769 = vmatpush1.msra.mxu0 0.0
      %1770 = vmatprep.subr.mxu0 0.0
      %1771 = vmatpush1.msra.mxu0 0.0
      %1772 = vmatprep.subr.mxu0 0.0
      %1773 = vmatpush1.msra.mxu0 0.0
      %1774 = vmatprep.subr.mxu0 0.0
      %1775 = vmatpush1.msra.mxu0 0.0
      %1776 = vmatprep.subr.mxu0 0.0
      %1777 = vmatpush1.msra.mxu0 0.0
      %1778 = vmatprep.subr.mxu0 0.0
      %1779 = vmatpush1.msra.mxu0 0.0
      %1780 = vmatprep.subr.mxu0 0.0
      %1781 = vmatpush1.msra.mxu0 0.0
      %1782 = vmatprep.subr.mxu0 0.0
      %1783 = vmatpush1.msra.mxu0 0.0
      %1784 = vmatprep.subr.mxu0 0.0
      %1785 = vmatpush1.msra.mxu0 0.0
      %1786 = vmatprep.subr.mxu0 0.0
      %1787 = vmatpush1.msra.mxu0 0.0
      %1788 = vmatprep.subr.mxu0 0.0
      %1789 = vmatpush1.msra.mxu0 0.0
      %1790 = vmatprep.subr.mxu0 0.0
      %1791 = vmatpush1.msra.mxu0 0.0
      %1792 = vmatprep.subr.mxu0 0.0
      %1793 = vmatpush1.msra.mxu0 0.0
      %1794 = vmatprep.subr.mxu0 0.0
      %1795 = vmatpush1.msra.mxu0 0.0
      %1796 = vmatprep.subr.mxu0 0.0
      %1797 = vmatpush1.msra.mxu0 0.0
      %1798 = vmatprep.subr.mxu0 0.0
      %1799 = vmatpush1.msra.mxu0 0.0
      %1800 = vmatprep.subr.mxu0 0.0
      %1801 = vmatpush1.msra.mxu0 0.0
      %1802 = vmatprep.subr.mxu0 0.0
      %1803 = vmatpush1.msra.mxu0 0.0
      %1804 = vmatprep.subr.mxu0 0.0
      %1805 = vmatpush1.msra.mxu0 0.0
      %1806 = vmatprep.subr.mxu0 0.0
      %1807 = vmatpush1.msra.mxu0 0.0
      %1808 = vmatprep.subr.mxu0 0.0
      %1809 = vmatpush1.msra.mxu0 0.0
      %1810 = vmatprep.subr.mxu0 0.0
      %1811 = vmatpush1.msra.mxu0 0.0
      %1812 = vmatprep.subr.mxu0 0.0
      %1813 = vmatpush1.msra.mxu0 0.0
      %1814 = vmatprep.subr.mxu0 0.0
      %1815 = vmatpush1.msra.mxu0 0.0
      %1816 = vmatprep.subr.mxu0 0.0
      %1817 = vmatpush1.msra.mxu0 0.0
      %1818 = vmatprep.subr.mxu0 0.0
      %1819 = vmatpush1.msra.mxu0 0.0
      %1820 = vmatprep.subr.mxu0 0.0
      %1821 = vmatpush1.msra.mxu0 0.0
      %1822 = vmatprep.subr.mxu0 0.0
      %1823 = vmatpush1.msra.mxu0 0.0
      %1824 = vmatprep.subr.mxu0 0.0
      %1825 = vmatpush1.msra.mxu0 0.0
      %1826 = vmatprep.mubr.f32.mxu0 0.0
      %1827 = vmatmul.mubr.f32.gmra.mrb[0].mxu0 %v1232
      %v1828 = vpop.f32.mrb[0].mxu0
      %v1829 = vadd.f32 %v1169, %v1828
      %v1830 = vpop.f32.mrb[0].mxu0
      %v1831 = vadd.f32 %v1169, %v1830
      %1832 = vmatprep.mubr.f32.mxu0 0.0
      %1833 = vmatmul.mubr.f32.gmra.mrb[0].mxu0 %v1235
      %v1834 = vpop.f32.mrb[0].mxu0
      %v1835 = vadd.f32 %v1173, %v1834
      %v1836 = vpop.f32.mrb[0].mxu0
      %v1837 = vadd.f32 %v1173, %v1836
      %1838 = vmatprep.mubr.f32.mxu0 0.0
      %1839 = vmatmul.mubr.f32.gmra.mrb[0].mxu0 %v1238
      %v1840 = vpop.f32.mrb[0].mxu0
      %v1841 = vadd.f32 %v1177, %v1840
      %v1842 = vpop.f32.mrb[0].mxu0
      %v1843 = vadd.f32 %v1177, %v1842
      %1844 = vmatprep.mubr.f32.mxu0 0.0
      %1845 = vmatmul.mubr.f32.gmra.mrb[0].mxu0 %v1241
      %v1846 = vpop.f32.mrb[0].mxu0
      %v1847 = vadd.f32 %v1181, %v1846
      %v1848 = vpop.f32.mrb[0].mxu0
      %v1849 = vadd.f32 %v1181, %v1848
      %1850 = vmatprep.mubr.f32.mxu0 0.0
      %1851 = vmatmul.mubr.f32.gmra.mrb[0].mxu0 %v1244
      %v1852 = vpop.f32.mrb[0].mxu0
      %v1853 = vadd.f32 %v1185, %v1852
      %v1854 = vpop.f32.mrb[0].mxu0
      %v1855 = vadd.f32 %v1185, %v1854
      %1856 = vmatprep.mubr.f32.mxu0 0.0
      %1857 = vmatmul.mubr.f32.gmra.mrb[0].mxu0 %v1247
      %v1858 = vpop.f32.mrb[0].mxu0
      %v1859 = vadd.f32 %v1189, %v1858
      %v1860 = vpop.f32.mrb[0].mxu0
      %v1861 = vadd.f32 %v1189, %v1860
      %1862 = vmatprep.mubr.f32.mxu0 0.0
      %1863 = vmatmul.mubr.f32.gmra.mrb[0].mxu0 %v1250
      %v1864 = vpop.f32.mrb[0].mxu0
      %v1865 = vadd.f32 %v1193, %v1864
      %v1866 = vpop.f32.mrb[0].mxu0
      %v1867 = vadd.f32 %v1193, %v1866
      %1868 = vmatprep.mubr.f32.mxu0 0.0
      %1869 = vmatmul.mubr.f32.gmra.mrb[0].mxu0 %v1253
      %v1870 = vpop.f32.mrb[0].mxu0
      %v1871 = vadd.f32 %v1197, %v1870
      %v1872 = vpop.f32.mrb[0].mxu0
      %v1873 = vadd.f32 %v1197, %v1872
      %1874 = vmatprep.mubr.f32.mxu0 0.0
      %1875 = vmatmul.mubr.f32.gmra.mrb[0].mxu0 %v1256
      %v1876 = vpop.f32.mrb[0].mxu0
      %v1877 = vadd.f32 %v1201, %v1876
      %v1878 = vpop.f32.mrb[0].mxu0
      %v1879 = vadd.f32 %v1201, %v1878
      %1880 = vmatprep.mubr.f32.mxu0 0.0
      %1881 = vmatmul.mubr.f32.gmra.mrb[0].mxu0 %v1259
      %v1882 = vpop.f32.mrb[0].mxu0
      %v1883 = vadd.f32 %v1205, %v1882
      %v1884 = vpop.f32.mrb[0].mxu0
      %v1885 = vadd.f32 %v1205, %v1884
      %1886 = vmatprep.mubr.f32.mxu0 0.0
      %1887 = vmatmul.mubr.f32.gmra.mrb[0].mxu0 %v1262
      %v1888 = vpop.f32.mrb[0].mxu0
      %v1889 = vadd.f32 %v1209, %v1888
      %v1890 = vpop.f32.mrb[0].mxu0
      %v1891 = vadd.f32 %v1209, %v1890
      %1892 = vmatprep.mubr.f32.mxu0 0.0
      %1893 = vmatmul.mubr.f32.gmra.mrb[0].mxu0 %v1265
      %v1894 = vpop.f32.mrb[0].mxu0
      %v1895 = vadd.f32 %v1213, %v1894
      %v1896 = vpop.f32.mrb[0].mxu0
      %v1897 = vadd.f32 %v1213, %v1896
      %1898 = vmatprep.mubr.f32.mxu0 0.0
      %1899 = vmatmul.mubr.f32.gmra.mrb[0].mxu0 %v1268
      %v1900 = vpop.f32.mrb[0].mxu0
      %v1901 = vadd.f32 %v1217, %v1900
      %v1902 = vpop.f32.mrb[0].mxu0
      %v1903 = vadd.f32 %v1217, %v1902
      %1904 = vmatprep.mubr.f32.mxu0 0.0
      %1905 = vmatmul.mubr.f32.gmra.mrb[0].mxu0 %v1271
      %v1906 = vpop.f32.mrb[0].mxu0
      %v1907 = vadd.f32 %v1221, %v1906
      %v1908 = vpop.f32.mrb[0].mxu0
      %v1909 = vadd.f32 %v1221, %v1908
      %1910 = vmatprep.mubr.f32.mxu0 0.0
      %1911 = vmatmul.mubr.f32.gmra.mrb[0].mxu0 %v1274
      %v1912 = vpop.f32.mrb[0].mxu0
      %v1913 = vadd.f32 %v1225, %v1912
      %v1914 = vpop.f32.mrb[0].mxu0
      %v1915 = vadd.f32 %v1225, %v1914
      %1916 = vmatprep.mubr.f32.mxu0 0.0
      %1917 = vmatmul.mubr.f32.gmra.mrb[0].mxu0 %v1277
      %v1918 = vpop.f32.mrb[0].mxu0
      %v1919 = vadd.f32 %v1229, %v1918
      %v1920 = vpop.f32.mrb[0].mxu0
      %v1921 = vadd.f32 %v1229, %v1920
      %1922 = vdwg.mxu0
      %1923 = vmatprep.subr.mxu0 %v1166
      %1924 = vmatpush1.msra.mxu0 %v1165
      %1925 = vmatprep.subr.mxu0 0.0
      %1926 = vmatpush1.msra.mxu0 0.0
      %1927 = vmatprep.subr.mxu0 0.0
      %1928 = vmatpush1.msra.mxu0 0.0
      %1929 = vmatprep.subr.mxu0 0.0
      %1930 = vmatpush1.msra.mxu0 0.0
      %1931 = vmatprep.subr.mxu0 0.0
      %1932 = vmatpush1.msra.mxu0 0.0
      %1933 = vmatprep.subr.mxu0 0.0
      %1934 = vmatpush1.msra.mxu0 0.0
      %1935 = vmatprep.subr.mxu0 0.0
      %1936 = vmatpush1.msra.mxu0 0.0
      %1937 = vmatprep.subr.mxu0 0.0
      %1938 = vmatpush1.msra.mxu0 0.0
      %1939 = vmatprep.subr.mxu0 0.0
      %1940 = vmatpush1.msra.mxu0 0.0
      %1941 = vmatprep.subr.mxu0 0.0
      %1942 = vmatpush1.msra.mxu0 0.0
      %1943 = vmatprep.subr.mxu0 0.0
      %1944 = vmatpush1.msra.mxu0 0.0
      %1945 = vmatprep.subr.mxu0 0.0
      %1946 = vmatpush1.msra.mxu0 0.0
      %1947 = vmatprep.subr.mxu0 0.0
      %1948 = vmatpush1.msra.mxu0 0.0
      %1949 = vmatprep.subr.mxu0 0.0
      %1950 = vmatpush1.msra.mxu0 0.0
      %1951 = vmatprep.subr.mxu0 0.0
      %1952 = vmatpush1.msra.mxu0 0.0
      %1953 = vmatprep.subr.mxu0 0.0
      %1954 = vmatpush1.msra.mxu0 0.0
      %1955 = vmatprep.subr.mxu0 0.0
      %1956 = vmatpush1.msra.mxu0 0.0
      %1957 = vmatprep.subr.mxu0 0.0
      %1958 = vmatpush1.msra.mxu0 0.0
      %1959 = vmatprep.subr.mxu0 0.0
      %1960 = vmatpush1.msra.mxu0 0.0
      %1961 = vmatprep.subr.mxu0 0.0
      %1962 = vmatpush1.msra.mxu0 0.0
      %1963 = vmatprep.subr.mxu0 0.0
      %1964 = vmatpush1.msra.mxu0 0.0
      %1965 = vmatprep.subr.mxu0 0.0
      %1966 = vmatpush1.msra.mxu0 0.0
      %1967 = vmatprep.subr.mxu0 0.0
      %1968 = vmatpush1.msra.mxu0 0.0
      %1969 = vmatprep.subr.mxu0 0.0
      %1970 = vmatpush1.msra.mxu0 0.0
      %1971 = vmatprep.subr.mxu0 0.0
      %1972 = vmatpush1.msra.mxu0 0.0
      %1973 = vmatprep.subr.mxu0 0.0
      %1974 = vmatpush1.msra.mxu0 0.0
      %1975 = vmatprep.subr.mxu0 0.0
      %1976 = vmatpush1.msra.mxu0 0.0
      %1977 = vmatprep.subr.mxu0 0.0
      %1978 = vmatpush1.msra.mxu0 0.0
      %1979 = vmatprep.subr.mxu0 0.0
      %1980 = vmatpush1.msra.mxu0 0.0
      %1981 = vmatprep.subr.mxu0 0.0
      %1982 = vmatpush1.msra.mxu0 0.0
      %1983 = vmatprep.subr.mxu0 0.0
      %1984 = vmatpush1.msra.mxu0 0.0
      %1985 = vmatprep.subr.mxu0 0.0
      %1986 = vmatpush1.msra.mxu0 0.0
      %1987 = vmatprep.mubr.f32.mxu0 0.0
      %1988 = vmatmul.mubr.f32.gmra.mrb[0].mxu0 %v1232
      %v1989 = vpop.f32.mrb[0].mxu0
      %v1990 = vadd.f32 %v1169, %v1989
      %v1991 = vpop.f32.mrb[0].mxu0
      %v1992 = vadd.f32 %v1169, %v1991
      %1993 = vmatprep.mubr.f32.mxu0 0.0
      %1994 = vmatmul.mubr.f32.gmra.mrb[0].mxu0 %v1235
      %v1995 = vpop.f32.mrb[0].mxu0
      %v1996 = vadd.f32 %v1173, %v1995
      %v1997 = vpop.f32.mrb[0].mxu0
      %v1998 = vadd.f32 %v1173, %v1997
      %1999 = vmatprep.mubr.f32.mxu0 0.0
      %2000 = vmatmul.mubr.f32.gmra.mrb[0].mxu0 %v1238
      %v2001 = vpop.f32.mrb[0].mxu0
      %v2002 = vadd.f32 %v1177, %v2001
      %v2003 = vpop.f32.mrb[0].mxu0
      %v2004 = vadd.f32 %v1177, %v2003
      %2005 = vmatprep.mubr.f32.mxu0 0.0
      %2006 = vmatmul.mubr.f32.gmra.mrb[0].mxu0 %v1241
      %v2007 = vpop.f32.mrb[0].mxu0
      %v2008 = vadd.f32 %v1181, %v2007
      %v2009 = vpop.f32.mrb[0].mxu0
      %v2010 = vadd.f32 %v1181, %v2009
      %2011 = vmatprep.mubr.f32.mxu0 0.0
      %2012 = vmatmul.mubr.f32.gmra.mrb[0].mxu0 %v1244
      %v2013 = vpop.f32.mrb[0].mxu0
      %v2014 = vadd.f32 %v1185, %v2013
      %v2015 = vpop.f32.mrb[0].mxu0
      %v2016 = vadd.f32 %v1185, %v2015
      %2017 = vmatprep.mubr.f32.mxu0 0.0
      %2018 = vmatmul.mubr.f32.gmra.mrb[0].mxu0 %v1247
      %v2019 = vpop.f32.mrb[0].mxu0
      %v2020 = vadd.f32 %v1189, %v2019
      %v2021 = vpop.f32.mrb[0].mxu0
      %v2022 = vadd.f32 %v1189, %v2021
      %2023 = vmatprep.mubr.f32.mxu0 0.0
      %2024 = vmatmul.mubr.f32.gmra.mrb[0].mxu0 %v1250
      %v2025 = vpop.f32.mrb[0].mxu0
      %v2026 = vadd.f32 %v1193, %v2025
      %v2027 = vpop.f32.mrb[0].mxu0
      %v2028 = vadd.f32 %v1193, %v2027
      %2029 = vmatprep.mubr.f32.mxu0 0.0
      %2030 = vmatmul.mubr.f32.gmra.mrb[0].mxu0 %v1253
      %v2031 = vpop.f32.mrb[0].mxu0
      %v2032 = vadd.f32 %v1197, %v2031
      %v2033 = vpop.f32.mrb[0].mxu0
      %v2034 = vadd.f32 %v1197, %v2033
      %2035 = vmatprep.mubr.f32.mxu0 0.0
      %2036 = vmatmul.mubr.f32.gmra.mrb[0].mxu0 %v1256
      %v2037 = vpop.f32.mrb[0].mxu0
      %v2038 = vadd.f32 %v1201, %v2037
      %v2039 = vpop.f32.mrb[0].mxu0
      %v2040 = vadd.f32 %v1201, %v2039
      %2041 = vmatprep.mubr.f32.mxu0 0.0
      %2042 = vmatmul.mubr.f32.gmra.mrb[0].mxu0 %v1259
      %v2043 = vpop.f32.mrb[0].mxu0
      %v2044 = vadd.f32 %v1205, %v2043
      %v2045 = vpop.f32.mrb[0].mxu0
      %v2046 = vadd.f32 %v1205, %v2045
      %2047 = vmatprep.mubr.f32.mxu0 0.0
      %2048 = vmatmul.mubr.f32.gmra.mrb[0].mxu0 %v1262
      %v2049 = vpop.f32.mrb[0].mxu0
      %v2050 = vadd.f32 %v1209, %v2049
      %v2051 = vpop.f32.mrb[0].mxu0
      %v2052 = vadd.f32 %v1209, %v2051
      %2053 = vmatprep.mubr.f32.mxu0 0.0
      %2054 = vmatmul.mubr.f32.gmra.mrb[0].mxu0 %v1265
      %v2055 = vpop.f32.mrb[0].mxu0
      %v2056 = vadd.f32 %v1213, %v2055
      %v2057 = vpop.f32.mrb[0].mxu0
      %v2058 = vadd.f32 %v1213, %v2057
      %2059 = vmatprep.mubr.f32.mxu0 0.0
      %2060 = vmatmul.mubr.f32.gmra.mrb[0].mxu0 %v1268
      %v2061 = vpop.f32.mrb[0].mxu0
      %v2062 = vadd.f32 %v1217, %v2061
      %v2063 = vpop.f32.mrb[0].mxu0
      %v2064 = vadd.f32 %v1217, %v2063
      %2065 = vmatprep.mubr.f32.mxu0 0.0
      %2066 = vmatmul.mubr.f32.gmra.mrb[0].mxu0 %v1271
      %v2067 = vpop.f32.mrb[0].mxu0
      %v2068 = vadd.f32 %v1221, %v2067
      %v2069 = vpop.f32.mrb[0].mxu0
      %v2070 = vadd.f32 %v1221, %v2069
      %2071 = vmatprep.mubr.f32.mxu0 0.0
      %2072 = vmatmul.mubr.f32.gmra.mrb[0].mxu0 %v1274
      %v2073 = vpop.f32.mrb[0].mxu0
      %v2074 = vadd.f32 %v1225, %v2073
      %v2075 = vpop.f32.mrb[0].mxu0
      %v2076 = vadd.f32 %v1225, %v2075
      %2077 = vmatprep.mubr.f32.mxu0 0.0
      %2078 = vmatmul.mubr.f32.gmra.mrb[0].mxu0 %v1277
      %v2079 = vpop.f32.mrb[0].mxu0
      %v2080 = vadd.f32 %v1229, %v2079
      %v2081 = vpop.f32.mrb[0].mxu0
      %v2082 = vadd.f32 %v1229, %v2081
      %2083 = vdwg.mxu0
      %v2084 = vmax.f32 %v1346, 0.0
      %v2085 = vmax.f32 %v1348, 0.0
      %v2086 = vmax.f32 %v1507, 0.0
      %v2087 = vmax.f32 %v1509, 0.0
      %v2088 = vmax.f32 %v1668, 0.0
      %v2089 = vmax.f32 %v1670, 0.0
      %v2090 = vmax.f32 %v1829, 0.0
      %v2091 = vmax.f32 %v1831, 0.0
      %v2092 = vmax.f32 %v1990, 0.0
      %v2093 = vmax.f32 %v1992, 0.0
      %v2094 = vmax.f32 %v1352, 0.0
      %v2095 = vmax.f32 %v1354, 0.0
      %v2096 = vmax.f32 %v1513, 0.0
      %v2097 = vmax.f32 %v1515, 0.0
      %v2098 = vmax.f32 %v1674, 0.0
      %v2099 = vmax.f32 %v1676, 0.0
      %v2100 = vmax.f32 %v1835, 0.0
      %v2101 = vmax.f32 %v1837, 0.0
      %v2102 = vmax.f32 %v1996, 0.0
      %v2103 = vmax.f32 %v1998, 0.0
      %v2104 = vmax.f32 %v1358, 0.0
      %v2105 = vmax.f32 %v1360, 0.0
      %v2106 = vmax.f32 %v1519, 0.0
      %v2107 = vmax.f32 %v1521, 0.0
      %v2108 = vmax.f32 %v1680, 0.0
      %v2109 = vmax.f32 %v1682, 0.0
      %v2110 = vmax.f32 %v1841, 0.0
      %v2111 = vmax.f32 %v1843, 0.0
      %v2112 = vmax.f32 %v2002, 0.0
      %v2113 = vmax.f32 %v2004, 0.0
      %v2114 = vmax.f32 %v1364, 0.0
      %v2115 = vmax.f32 %v1366, 0.0
      %v2116 = vmax.f32 %v1525, 0.0
      %v2117 = vmax.f32 %v1527, 0.0
      %v2118 = vmax.f32 %v1686, 0.0
      %v2119 = vmax.f32 %v1688, 0.0
      %v2120 = vmax.f32 %v1847, 0.0
      %v2121 = vmax.f32 %v1849, 0.0
      %v2122 = vmax.f32 %v2008, 0.0
      %v2123 = vmax.f32 %v2010, 0.0
      %v2124 = vmax.f32 %v1370, 0.0
      %v2125 = vmax.f32 %v1372, 0.0
      %v2126 = vmax.f32 %v1531, 0.0
      %v2127 = vmax.f32 %v1533, 0.0
      %v2128 = vmax.f32 %v1692, 0.0
      %v2129 = vmax.f32 %v1694, 0.0
      %v2130 = vmax.f32 %v1853, 0.0
      %v2131 = vmax.f32 %v1855, 0.0
      %v2132 = vmax.f32 %v2014, 0.0
      %v2133 = vmax.f32 %v2016, 0.0
      %v2134 = vmax.f32 %v1376, 0.0
      %v2135 = vmax.f32 %v1378, 0.0
      %v2136 = vmax.f32 %v1537, 0.0
      %v2137 = vmax.f32 %v1539, 0.0
      %v2138 = vmax.f32 %v1698, 0.0
      %v2139 = vmax.f32 %v1700, 0.0
      %v2140 = vmax.f32 %v1859, 0.0
      %v2141 = vmax.f32 %v1861, 0.0
      %v2142 = vmax.f32 %v2020, 0.0
      %v2143 = vmax.f32 %v2022, 0.0
      %v2144 = vmax.f32 %v1382, 0.0
      %v2145 = vmax.f32 %v1384, 0.0
      %v2146 = vmax.f32 %v1543, 0.0
      %v2147 = vmax.f32 %v1545, 0.0
      %v2148 = vmax.f32 %v1704, 0.0
      %v2149 = vmax.f32 %v1706, 0.0
      %v2150 = vmax.f32 %v1865, 0.0
      %v2151 = vmax.f32 %v1867, 0.0
      %v2152 = vmax.f32 %v2026, 0.0
      %v2153 = vmax.f32 %v2028, 0.0
      %v2154 = vmax.f32 %v1388, 0.0
      %v2155 = vmax.f32 %v1390, 0.0
      %v2156 = vmax.f32 %v1549, 0.0
      %v2157 = vmax.f32 %v1551, 0.0
      %v2158 = vmax.f32 %v1710, 0.0
      %v2159 = vmax.f32 %v1712, 0.0
      %v2160 = vmax.f32 %v1871, 0.0
      %v2161 = vmax.f32 %v1873, 0.0
      %v2162 = vmax.f32 %v2032, 0.0
      %v2163 = vmax.f32 %v2034, 0.0
      %v2164 = vmax.f32 %v1394, 0.0
      %v2165 = vmax.f32 %v1396, 0.0
      %v2166 = vmax.f32 %v1555, 0.0
      %v2167 = vmax.f32 %v1557, 0.0
      %v2168 = vmax.f32 %v1716, 0.0
      %v2169 = vmax.f32 %v1718, 0.0
      %v2170 = vmax.f32 %v1877, 0.0
      %v2171 = vmax.f32 %v1879, 0.0
      %v2172 = vmax.f32 %v2038, 0.0
      %v2173 = vmax.f32 %v2040, 0.0
      %v2174 = vmax.f32 %v1400, 0.0
      %v2175 = vmax.f32 %v1402, 0.0
      %v2176 = vmax.f32 %v1561, 0.0
      %v2177 = vmax.f32 %v1563, 0.0
      %v2178 = vmax.f32 %v1722, 0.0
      %v2179 = vmax.f32 %v1724, 0.0
      %v2180 = vmax.f32 %v1883, 0.0
      %v2181 = vmax.f32 %v1885, 0.0
      %v2182 = vmax.f32 %v2044, 0.0
      %v2183 = vmax.f32 %v2046, 0.0
      %v2184 = vmax.f32 %v1406, 0.0
      %v2185 = vmax.f32 %v1408, 0.0
      %v2186 = vmax.f32 %v1567, 0.0
      %v2187 = vmax.f32 %v1569, 0.0
      %v2188 = vmax.f32 %v1728, 0.0
      %v2189 = vmax.f32 %v1730, 0.0
      %v2190 = vmax.f32 %v1889, 0.0
      %v2191 = vmax.f32 %v1891, 0.0
      %v2192 = vmax.f32 %v2050, 0.0
      %v2193 = vmax.f32 %v2052, 0.0
      %v2194 = vmax.f32 %v1412, 0.0
      %v2195 = vmax.f32 %v1414, 0.0
      %v2196 = vmax.f32 %v1573, 0.0
      %v2197 = vmax.f32 %v1575, 0.0
      %v2198 = vmax.f32 %v1734, 0.0
      %v2199 = vmax.f32 %v1736, 0.0
      %v2200 = vmax.f32 %v1895, 0.0
      %v2201 = vmax.f32 %v1897, 0.0
      %v2202 = vmax.f32 %v2056, 0.0
      %v2203 = vmax.f32 %v2058, 0.0
      %v2204 = vmax.f32 %v1418, 0.0
      %v2205 = vmax.f32 %v1420, 0.0
      %v2206 = vmax.f32 %v1579, 0.0
      %v2207 = vmax.f32 %v1581, 0.0
      %v2208 = vmax.f32 %v1740, 0.0
      %v2209 = vmax.f32 %v1742, 0.0
      %v2210 = vmax.f32 %v1901, 0.0
      %v2211 = vmax.f32 %v1903, 0.0
      %v2212 = vmax.f32 %v2062, 0.0
      %v2213 = vmax.f32 %v2064, 0.0
      %v2214 = vmax.f32 %v1424, 0.0
      %v2215 = vmax.f32 %v1426, 0.0
      %v2216 = vmax.f32 %v1585, 0.0
      %v2217 = vmax.f32 %v1587, 0.0
      %v2218 = vmax.f32 %v1746, 0.0
      %v2219 = vmax.f32 %v1748, 0.0
      %v2220 = vmax.f32 %v1907, 0.0
      %v2221 = vmax.f32 %v1909, 0.0
      %v2222 = vmax.f32 %v2068, 0.0
      %v2223 = vmax.f32 %v2070, 0.0
      %v2224 = vmax.f32 %v1430, 0.0
      %v2225 = vmax.f32 %v1432, 0.0
      %v2226 = vmax.f32 %v1591, 0.0
      %v2227 = vmax.f32 %v1593, 0.0
      %v2228 = vmax.f32 %v1752, 0.0
      %v2229 = vmax.f32 %v1754, 0.0
      %v2230 = vmax.f32 %v1913, 0.0
      %v2231 = vmax.f32 %v1915, 0.0
      %v2232 = vmax.f32 %v2074, 0.0
      %v2233 = vmax.f32 %v2076, 0.0
      %v2234 = vmax.f32 %v1436, 0.0
      %v2235 = vmax.f32 %v1438, 0.0
      %v2236 = vmax.f32 %v1597, 0.0
      %v2237 = vmax.f32 %v1599, 0.0
      %v2238 = vmax.f32 %v1758, 0.0
      %v2239 = vmax.f32 %v1760, 0.0
      %v2240 = vmax.f32 %v1919, 0.0
      %v2241 = vmax.f32 %v1921, 0.0
      %v2242 = vmax.f32 %v2080, 0.0
      %v2243 = vmax.f32 %v2082, 0.0
      %v2244 = vld [vmem:[%s3] sm:$0xff]
      %v2245 = vld [vmem:[%s3 + $0x8] sm:$0xff]
      %v2246 = vld [vmem:[%s3 + $0x10] sm:$0xff]
      %v2247 = vld [vmem:[%s3 + $0x18] sm:$0xff]
      %v2248 = vld [vmem:[%s3 + $0x20] sm:$0xff]
      %v2249 = vld [vmem:[%s3 + $0x28] sm:$0xff]
      %v2250 = vld [vmem:[%s3 + $0x30] sm:$0xff]
      %v2251 = vld [vmem:[%s3 + $0x38] sm:$0xff]
      %v2252 = vld [vmem:[%s3 + $0x40] sm:$0xff]
      %v2253 = vld [vmem:[%s3 + $0x48] sm:$0xff]
      %v2254 = vld [vmem:[%s3 + $0x50] sm:$0xff]
      %v2255 = vld [vmem:[%s3 + $0x58] sm:$0xff]
      %v2256 = vld [vmem:[%s3 + $0x60] sm:$0xff]
      %v2257 = vld [vmem:[%s3 + $0x68] sm:$0xff]
      %v2258 = vld [vmem:[%s3 + $0x70] sm:$0xff]
      %v2259 = vld [vmem:[%s3 + $0x78] sm:$0xff]
      %2260 = vset.pattern.permute.xlu0 1
      %2261 = vperm.xlu0 %2260, %v432
      %v2262 = vpop.permute.xlu0 %2261
      %2264 = vset.pattern.permute.xlu0 1
      %2265 = vperm.xlu0 %2264, %v433
      %v2266 = vpop.permute.xlu0 %2265
      %2268 = vset.pattern.permute.xlu0 1
      %2269 = vperm.xlu0 %2268, %v434
      %v2270 = vpop.permute.xlu0 %2269
      %2272 = vset.pattern.permute.xlu0 1
      %2273 = vperm.xlu0 %2272, %v435
      %v2274 = vpop.permute.xlu0 %2273
      %2276 = vset.pattern.permute.xlu0 1
      %2277 = vperm.xlu0 %2276, %v436
      %v2278 = vpop.permute.xlu0 %2277
      %2280 = vset.pattern.permute.xlu0 1
      %2281 = vperm.xlu0 %2280, %v437
      %v2282 = vpop.permute.xlu0 %2281
      %2284 = vset.pattern.permute.xlu0 1
      %2285 = vperm.xlu0 %2284, %v438
      %v2286 = vpop.permute.xlu0 %2285
      %2288 = vset.pattern.permute.xlu0 1
      %2289 = vperm.xlu0 %2288, %v439
      %v2290 = vpop.permute.xlu0 %2289
      %2292 = vset.pattern.permute.xlu0 1
      %2293 = vperm.xlu0 %2292, %v440
      %v2294 = vpop.permute.xlu0 %2293
      %2296 = vset.pattern.permute.xlu0 1
      %2297 = vperm.xlu0 %2296, %v441
      %v2298 = vpop.permute.xlu0 %2297
      %2300 = vset.pattern.permute.xlu0 1
      %2301 = vperm.xlu0 %2300, %v442
      %v2302 = vpop.permute.xlu0 %2301
      %2304 = vset.pattern.permute.xlu0 1
      %2305 = vperm.xlu0 %2304, %v443
      %v2306 = vpop.permute.xlu0 %2305
      %2308 = vset.pattern.permute.xlu0 1
      %2309 = vperm.xlu0 %2308, %v444
      %v2310 = vpop.permute.xlu0 %2309
      %2312 = vset.pattern.permute.xlu0 1
      %2313 = vperm.xlu0 %2312, %v445
      %v2314 = vpop.permute.xlu0 %2313
      %2316 = vset.pattern.permute.xlu0 1
      %2317 = vperm.xlu0 %2316, %v446
      %v2318 = vpop.permute.xlu0 %2317
      %2320 = vset.pattern.permute.xlu0 1
      %2321 = vperm.xlu0 %2320, %v447
      %v2322 = vpop.permute.xlu0 %2321
      %2324 = vmatprep.subr.mxu0 %v2085
      %2325 = vmatpush1.msra.mxu0 %v2084
      %2326 = vmatprep.subr.mxu0 %v2095
      %2327 = vmatpush1.msra.mxu0 %v2094
      %2328 = vmatprep.subr.mxu0 %v2105
      %2329 = vmatpush1.msra.mxu0 %v2104
      %2330 = vmatprep.subr.mxu0 %v2115
      %2331 = vmatpush1.msra.mxu0 %v2114
      %2332 = vmatprep.subr.mxu0 %v2125
      %2333 = vmatpush1.msra.mxu0 %v2124
      %2334 = vmatprep.subr.mxu0 %v2135
      %2335 = vmatpush1.msra.mxu0 %v2134
      %2336 = vmatprep.subr.mxu0 %v2145
      %2337 = vmatpush1.msra.mxu0 %v2144
      %2338 = vmatprep.subr.mxu0 %v2155
      %2339 = vmatpush1.msra.mxu0 %v2154
      %2340 = vmatprep.subr.mxu0 %v2165
      %2341 = vmatpush1.msra.mxu0 %v2164
      %2342 = vmatprep.subr.mxu0 %v2175
      %2343 = vmatpush1.msra.mxu0 %v2174
      %2344 = vmatprep.subr.mxu0 %v2185
      %2345 = vmatpush1.msra.mxu0 %v2184
      %2346 = vmatprep.subr.mxu0 %v2195
      %2347 = vmatpush1.msra.mxu0 %v2194
      %2348 = vmatprep.subr.mxu0 %v2205
      %2349 = vmatpush1.msra.mxu0 %v2204
      %2350 = vmatprep.subr.mxu0 %v2215
      %2351 = vmatpush1.msra.mxu0 %v2214
      %2352 = vmatprep.subr.mxu0 %v2225
      %2353 = vmatpush1.msra.mxu0 %v2224
      %2354 = vmatprep.subr.mxu0 %v2235
      %2355 = vmatpush1.msra.mxu0 %v2234
      %2356 = vmatprep.subr.mxu0 0.0
      %2357 = vmatpush1.msra.mxu0 0.0
      %2358 = vmatprep.subr.mxu0 0.0
      %2359 = vmatpush1.msra.mxu0 0.0
      %2360 = vmatprep.subr.mxu0 0.0
      %2361 = vmatpush1.msra.mxu0 0.0
      %2362 = vmatprep.subr.mxu0 0.0
      %2363 = vmatpush1.msra.mxu0 0.0
      %2364 = vmatprep.subr.mxu0 0.0
      %2365 = vmatpush1.msra.mxu0 0.0
      %2366 = vmatprep.subr.mxu0 0.0
      %2367 = vmatpush1.msra.mxu0 0.0
      %2368 = vmatprep.subr.mxu0 0.0
      %2369 = vmatpush1.msra.mxu0 0.0
      %2370 = vmatprep.subr.mxu0 0.0
      %2371 = vmatpush1.msra.mxu0 0.0
      %2372 = vmatprep.subr.mxu0 0.0
      %2373 = vmatpush1.msra.mxu0 0.0
      %2374 = vmatprep.subr.mxu0 0.0
      %2375 = vmatpush1.msra.mxu0 0.0
      %2376 = vmatprep.subr.mxu0 0.0
      %2377 = vmatpush1.msra.mxu0 0.0
      %2378 = vmatprep.subr.mxu0 0.0
      %2379 = vmatpush1.msra.mxu0 0.0
      %2380 = vmatprep.subr.mxu0 0.0
      %2381 = vmatpush1.msra.mxu0 0.0
      %2382 = vmatprep.subr.mxu0 0.0
      %2383 = vmatpush1.msra.mxu0 0.0
      %2384 = vmatprep.subr.mxu0 0.0
      %2385 = vmatpush1.msra.mxu0 0.0
      %2386 = vmatprep.subr.mxu0 0.0
      %2387 = vmatpush1.msra.mxu0 0.0
      %2388 = vmatprep.mubr.f32.mxu0 0.0
      %2389 = vmatmul.mubr.f32.gmra.mrb[0].mxu0 %v2244
      %v2390 = vpop.f32.mrb[0].mxu0
      %v2391 = vadd.f32 %v2262, %v2390
      %v2392 = vpop.f32.mrb[0].mxu0
      %v2393 = vadd.f32 %v2262, %v2392
      %2394 = vmatprep.mubr.f32.mxu0 0.0
      %2395 = vmatmul.mubr.f32.gmra.mrb[0].mxu0 %v2245
      %v2396 = vpop.f32.mrb[0].mxu0
      %v2397 = vadd.f32 %v2266, %v2396
      %v2398 = vpop.f32.mrb[0].mxu0
      %v2399 = vadd.f32 %v2266, %v2398
      %2400 = vmatprep.mubr.f32.mxu0 0.0
      %2401 = vmatmul.mubr.f32.gmra.mrb[0].mxu0 %v2246
      %v2402 = vpop.f32.mrb[0].mxu0
      %v2403 = vadd.f32 %v2270, %v2402
      %v2404 = vpop.f32.mrb[0].mxu0
      %v2405 = vadd.f32 %v2270, %v2404
      %2406 = vmatprep.mubr.f32.mxu0 0.0
      %2407 = vmatmul.mubr.f32.gmra.mrb[0].mxu0 %v2247
      %v2408 = vpop.f32.mrb[0].mxu0
      %v2409 = vadd.f32 %v2274, %v2408
      %v2410 = vpop.f32.mrb[0].mxu0
      %v2411 = vadd.f32 %v2274, %v2410
      %2412 = vmatprep.mubr.f32.mxu0 0.0
      %2413 = vmatmul.mubr.f32.gmra.mrb[0].mxu0 %v2248
      %v2414 = vpop.f32.mrb[0].mxu0
      %v2415 = vadd.f32 %v2278, %v2414
      %v2416 = vpop.f32.mrb[0].mxu0
      %v2417 = vadd.f32 %v2278, %v2416
      %2418 = vmatprep.mubr.f32.mxu0 0.0
      %2419 = vmatmul.mubr.f32.gmra.mrb[0].mxu0 %v2249
      %v2420 = vpop.f32.mrb[0].mxu0
      %v2421 = vadd.f32 %v2282, %v2420
      %v2422 = vpop.f32.mrb[0].mxu0
      %v2423 = vadd.f32 %v2282, %v2422
      %2424 = vmatprep.mubr.f32.mxu0 0.0
      %2425 = vmatmul.mubr.f32.gmra.mrb[0].mxu0 %v2250
      %v2426 = vpop.f32.mrb[0].mxu0
      %v2427 = vadd.f32 %v2286, %v2426
      %v2428 = vpop.f32.mrb[0].mxu0
      %v2429 = vadd.f32 %v2286, %v2428
      %2430 = vmatprep.mubr.f32.mxu0 0.0
      %2431 = vmatmul.mubr.f32.gmra.mrb[0].mxu0 %v2251
      %v2432 = vpop.f32.mrb[0].mxu0
      %v2433 = vadd.f32 %v2290, %v2432
      %v2434 = vpop.f32.mrb[0].mxu0
      %v2435 = vadd.f32 %v2290, %v2434
      %2436 = vmatprep.mubr.f32.mxu0 0.0
      %2437 = vmatmul.mubr.f32.gmra.mrb[0].mxu0 %v2252
      %v2438 = vpop.f32.mrb[0].mxu0
      %v2439 = vadd.f32 %v2294, %v2438
      %v2440 = vpop.f32.mrb[0].mxu0
      %v2441 = vadd.f32 %v2294, %v2440
      %2442 = vmatprep.mubr.f32.mxu0 0.0
      %2443 = vmatmul.mubr.f32.gmra.mrb[0].mxu0 %v2253
      %v2444 = vpop.f32.mrb[0].mxu0
      %v2445 = vadd.f32 %v2298, %v2444
      %v2446 = vpop.f32.mrb[0].mxu0
      %v2447 = vadd.f32 %v2298, %v2446
      %2448 = vmatprep.mubr.f32.mxu0 0.0
      %2449 = vmatmul.mubr.f32.gmra.mrb[0].mxu0 %v2254
      %v2450 = vpop.f32.mrb[0].mxu0
      %v2451 = vadd.f32 %v2302, %v2450
      %v2452 = vpop.f32.mrb[0].mxu0
      %v2453 = vadd.f32 %v2302, %v2452
      %2454 = vmatprep.mubr.f32.mxu0 0.0
      %2455 = vmatmul.mubr.f32.gmra.mrb[0].mxu0 %v2255
      %v2456 = vpop.f32.mrb[0].mxu0
      %v2457 = vadd.f32 %v2306, %v2456
      %v2458 = vpop.f32.mrb[0].mxu0
      %v2459 = vadd.f32 %v2306, %v2458
      %2460 = vmatprep.mubr.f32.mxu0 0.0
      %2461 = vmatmul.mubr.f32.gmra.mrb[0].mxu0 %v2256
      %v2462 = vpop.f32.mrb[0].mxu0
      %v2463 = vadd.f32 %v2310, %v2462
      %v2464 = vpop.f32.mrb[0].mxu0
      %v2465 = vadd.f32 %v2310, %v2464
      %2466 = vmatprep.mubr.f32.mxu0 0.0
      %2467 = vmatmul.mubr.f32.gmra.mrb[0].mxu0 %v2257
      %v2468 = vpop.f32.mrb[0].mxu0
      %v2469 = vadd.f32 %v2314, %v2468
      %v2470 = vpop.f32.mrb[0].mxu0
      %v2471 = vadd.f32 %v2314, %v2470
      %2472 = vmatprep.mubr.f32.mxu0 0.0
      %2473 = vmatmul.mubr.f32.gmra.mrb[0].mxu0 %v2258
      %v2474 = vpop.f32.mrb[0].mxu0
      %v2475 = vadd.f32 %v2318, %v2474
      %v2476 = vpop.f32.mrb[0].mxu0
      %v2477 = vadd.f32 %v2318, %v2476
      %2478 = vmatprep.mubr.f32.mxu0 0.0
      %2479 = vmatmul.mubr.f32.gmra.mrb[0].mxu0 %v2259
      %v2480 = vpop.f32.mrb[0].mxu0
      %v2481 = vadd.f32 %v2322, %v2480
      %v2482 = vpop.f32.mrb[0].mxu0
      %v2483 = vadd.f32 %v2322, %v2482
      %2484 = vdwg.mxu0
      %2485 = vmatprep.subr.mxu0 %v2087
      %2486 = vmatpush1.msra.mxu0 %v2086
      %2487 = vmatprep.subr.mxu0 %v2097
      %2488 = vmatpush1.msra.mxu0 %v2096
      %2489 = vmatprep.subr.mxu0 %v2107
      %2490 = vmatpush1.msra.mxu0 %v2106
      %2491 = vmatprep.subr.mxu0 %v2117
      %2492 = vmatpush1.msra.mxu0 %v2116
      %2493 = vmatprep.subr.mxu0 %v2127
      %2494 = vmatpush1.msra.mxu0 %v2126
      %2495 = vmatprep.subr.mxu0 %v2137
      %2496 = vmatpush1.msra.mxu0 %v2136
      %2497 = vmatprep.subr.mxu0 %v2147
      %2498 = vmatpush1.msra.mxu0 %v2146
      %2499 = vmatprep.subr.mxu0 %v2157
      %2500 = vmatpush1.msra.mxu0 %v2156
      %2501 = vmatprep.subr.mxu0 %v2167
      %2502 = vmatpush1.msra.mxu0 %v2166
      %2503 = vmatprep.subr.mxu0 %v2177
      %2504 = vmatpush1.msra.mxu0 %v2176
      %2505 = vmatprep.subr.mxu0 %v2187
      %2506 = vmatpush1.msra.mxu0 %v2186
      %2507 = vmatprep.subr.mxu0 %v2197
      %2508 = vmatpush1.msra.mxu0 %v2196
      %2509 = vmatprep.subr.mxu0 %v2207
      %2510 = vmatpush1.msra.mxu0 %v2206
      %2511 = vmatprep.subr.mxu0 %v2217
      %2512 = vmatpush1.msra.mxu0 %v2216
      %2513 = vmatprep.subr.mxu0 %v2227
      %2514 = vmatpush1.msra.mxu0 %v2226
      %2515 = vmatprep.subr.mxu0 %v2237
      %2516 = vmatpush1.msra.mxu0 %v2236
      %2517 = vmatprep.subr.mxu0 0.0
      %2518 = vmatpush1.msra.mxu0 0.0
      %2519 = vmatprep.subr.mxu0 0.0
      %2520 = vmatpush1.msra.mxu0 0.0
      %2521 = vmatprep.subr.mxu0 0.0
      %2522 = vmatpush1.msra.mxu0 0.0
      %2523 = vmatprep.subr.mxu0 0.0
      %2524 = vmatpush1.msra.mxu0 0.0
      %2525 = vmatprep.subr.mxu0 0.0
      %2526 = vmatpush1.msra.mxu0 0.0
      %2527 = vmatprep.subr.mxu0 0.0
      %2528 = vmatpush1.msra.mxu0 0.0
      %2529 = vmatprep.subr.mxu0 0.0
      %2530 = vmatpush1.msra.mxu0 0.0
      %2531 = vmatprep.subr.mxu0 0.0
      %2532 = vmatpush1.msra.mxu0 0.0
      %2533 = vmatprep.subr.mxu0 0.0
      %2534 = vmatpush1.msra.mxu0 0.0
      %2535 = vmatprep.subr.mxu0 0.0
      %2536 = vmatpush1.msra.mxu0 0.0
      %2537 = vmatprep.subr.mxu0 0.0
      %2538 = vmatpush1.msra.mxu0 0.0
      %2539 = vmatprep.subr.mxu0 0.0
      %2540 = vmatpush1.msra.mxu0 0.0
      %2541 = vmatprep.subr.mxu0 0.0
      %2542 = vmatpush1.msra.mxu0 0.0
      %2543 = vmatprep.subr.mxu0 0.0
      %2544 = vmatpush1.msra.mxu0 0.0
      %2545 = vmatprep.subr.mxu0 0.0
      %2546 = vmatpush1.msra.mxu0 0.0
      %2547 = vmatprep.subr.mxu0 0.0
      %2548 = vmatpush1.msra.mxu0 0.0
      %2549 = vmatprep.mubr.f32.mxu0 0.0
      %2550 = vmatmul.mubr.f32.gmra.mrb[0].mxu0 %v2244
      %v2551 = vpop.f32.mrb[0].mxu0
      %v2552 = vadd.f32 %v2262, %v2551
      %v2553 = vpop.f32.mrb[0].mxu0
      %v2554 = vadd.f32 %v2262, %v2553
      %2555 = vmatprep.mubr.f32.mxu0 0.0
      %2556 = vmatmul.mubr.f32.gmra.mrb[0].mxu0 %v2245
      %v2557 = vpop.f32.mrb[0].mxu0
      %v2558 = vadd.f32 %v2266, %v2557
      %v2559 = vpop.f32.mrb[0].mxu0
      %v2560 = vadd.f32 %v2266, %v2559
      %2561 = vmatprep.mubr.f32.mxu0 0.0
      %2562 = vmatmul.mubr.f32.gmra.mrb[0].mxu0 %v2246
      %v2563 = vpop.f32.mrb[0].mxu0
      %v2564 = vadd.f32 %v2270, %v2563
      %v2565 = vpop.f32.mrb[0].mxu0
      %v2566 = vadd.f32 %v2270, %v2565
      %2567 = vmatprep.mubr.f32.mxu0 0.0
      %2568 = vmatmul.mubr.f32.gmra.mrb[0].mxu0 %v2247
      %v2569 = vpop.f32.mrb[0].mxu0
      %v2570 = vadd.f32 %v2274, %v2569
      %v2571 = vpop.f32.mrb[0].mxu0
      %v2572 = vadd.f32 %v2274, %v2571
      %2573 = vmatprep.mubr.f32.mxu0 0.0
      %2574 = vmatmul.mubr.f32.gmra.mrb[0].mxu0 %v2248
      %v2575 = vpop.f32.mrb[0].mxu0
      %v2576 = vadd.f32 %v2278, %v2575
      %v2577 = vpop.f32.mrb[0].mxu0
      %v2578 = vadd.f32 %v2278, %v2577
      %2579 = vmatprep.mubr.f32.mxu0 0.0
      %2580 = vmatmul.mubr.f32.gmra.mrb[0].mxu0 %v2249
      %v2581 = vpop.f32.mrb[0].mxu0
      %v2582 = vadd.f32 %v2282, %v2581
      %v2583 = vpop.f32.mrb[0].mxu0
      %v2584 = vadd.f32 %v2282, %v2583
      %2585 = vmatprep.mubr.f32.mxu0 0.0
      %2586 = vmatmul.mubr.f32.gmra.mrb[0].mxu0 %v2250
      %v2587 = vpop.f32.mrb[0].mxu0
      %v2588 = vadd.f32 %v2286, %v2587
      %v2589 = vpop.f32.mrb[0].mxu0
      %v2590 = vadd.f32 %v2286, %v2589
      %2591 = vmatprep.mubr.f32.mxu0 0.0
      %2592 = vmatmul.mubr.f32.gmra.mrb[0].mxu0 %v2251
      %v2593 = vpop.f32.mrb[0].mxu0
      %v2594 = vadd.f32 %v2290, %v2593
      %v2595 = vpop.f32.mrb[0].mxu0
      %v2596 = vadd.f32 %v2290, %v2595
      %2597 = vmatprep.mubr.f32.mxu0 0.0
      %2598 = vmatmul.mubr.f32.gmra.mrb[0].mxu0 %v2252
      %v2599 = vpop.f32.mrb[0].mxu0
      %v2600 = vadd.f32 %v2294, %v2599
      %v2601 = vpop.f32.mrb[0].mxu0
      %v2602 = vadd.f32 %v2294, %v2601
      %2603 = vmatprep.mubr.f32.mxu0 0.0
      %2604 = vmatmul.mubr.f32.gmra.mrb[0].mxu0 %v2253
      %v2605 = vpop.f32.mrb[0].mxu0
      %v2606 = vadd.f32 %v2298, %v2605
      %v2607 = vpop.f32.mrb[0].mxu0
      %v2608 = vadd.f32 %v2298, %v2607
      %2609 = vmatprep.mubr.f32.mxu0 0.0
      %2610 = vmatmul.mubr.f32.gmra.mrb[0].mxu0 %v2254
      %v2611 = vpop.f32.mrb[0].mxu0
      %v2612 = vadd.f32 %v2302, %v2611
      %v2613 = vpop.f32.mrb[0].mxu0
      %v2614 = vadd.f32 %v2302, %v2613
      %2615 = vmatprep.mubr.f32.mxu0 0.0
      %2616 = vmatmul.mubr.f32.gmra.mrb[0].mxu0 %v2255
      %v2617 = vpop.f32.mrb[0].mxu0
      %v2618 = vadd.f32 %v2306, %v2617
      %v2619 = vpop.f32.mrb[0].mxu0
      %v2620 = vadd.f32 %v2306, %v2619
      %2621 = vmatprep.mubr.f32.mxu0 0.0
      %2622 = vmatmul.mubr.f32.gmra.mrb[0].mxu0 %v2256
      %v2623 = vpop.f32.mrb[0].mxu0
      %v2624 = vadd.f32 %v2310, %v2623
      %v2625 = vpop.f32.mrb[0].mxu0
      %v2626 = vadd.f32 %v2310, %v2625
      %2627 = vmatprep.mubr.f32.mxu0 0.0
      %2628 = vmatmul.mubr.f32.gmra.mrb[0].mxu0 %v2257
      %v2629 = vpop.f32.mrb[0].mxu0
      %v2630 = vadd.f32 %v2314, %v2629
      %v2631 = vpop.f32.mrb[0].mxu0
      %v2632 = vadd.f32 %v2314, %v2631
      %2633 = vmatprep.mubr.f32.mxu0 0.0
      %2634 = vmatmul.mubr.f32.gmra.mrb[0].mxu0 %v2258
      %v2635 = vpop.f32.mrb[0].mxu0
      %v2636 = vadd.f32 %v2318, %v2635
      %v2637 = vpop.f32.mrb[0].mxu0
      %v2638 = vadd.f32 %v2318, %v2637
      %2639 = vmatprep.mubr.f32.mxu0 0.0
      %2640 = vmatmul.mubr.f32.gmra.mrb[0].mxu0 %v2259
      %v2641 = vpop.f32.mrb[0].mxu0
      %v2642 = vadd.f32 %v2322, %v2641
      %v2643 = vpop.f32.mrb[0].mxu0
      %v2644 = vadd.f32 %v2322, %v2643
      %2645 = vdwg.mxu0
      %2646 = vmatprep.subr.mxu0 %v2089
      %2647 = vmatpush1.msra.mxu0 %v2088
      %2648 = vmatprep.subr.mxu0 %v2099
      %2649 = vmatpush1.msra.mxu0 %v2098
      %2650 = vmatprep.subr.mxu0 %v2109
      %2651 = vmatpush1.msra.mxu0 %v2108
      %2652 = vmatprep.subr.mxu0 %v2119
      %2653 = vmatpush1.msra.mxu0 %v2118
      %2654 = vmatprep.subr.mxu0 %v2129
      %2655 = vmatpush1.msra.mxu0 %v2128
      %2656 = vmatprep.subr.mxu0 %v2139
      %2657 = vmatpush1.msra.mxu0 %v2138
      %2658 = vmatprep.subr.mxu0 %v2149
      %2659 = vmatpush1.msra.mxu0 %v2148
      %2660 = vmatprep.subr.mxu0 %v2159
      %2661 = vmatpush1.msra.mxu0 %v2158
      %2662 = vmatprep.subr.mxu0 %v2169
      %2663 = vmatpush1.msra.mxu0 %v2168
      %2664 = vmatprep.subr.mxu0 %v2179
      %2665 = vmatpush1.msra.mxu0 %v2178
      %2666 = vmatprep.subr.mxu0 %v2189
      %2667 = vmatpush1.msra.mxu0 %v2188
      %2668 = vmatprep.subr.mxu0 %v2199
      %2669 = vmatpush1.msra.mxu0 %v2198
      %2670 = vmatprep.subr.mxu0 %v2209
      %2671 = vmatpush1.msra.mxu0 %v2208
      %2672 = vmatprep.subr.mxu0 %v2219
      %2673 = vmatpush1.msra.mxu0 %v2218
      %2674 = vmatprep.subr.mxu0 %v2229
      %2675 = vmatpush1.msra.mxu0 %v2228
      %2676 = vmatprep.subr.mxu0 %v2239
      %2677 = vmatpush1.msra.mxu0 %v2238
      %2678 = vmatprep.subr.mxu0 0.0
      %2679 = vmatpush1.msra.mxu0 0.0
      %2680 = vmatprep.subr.mxu0 0.0
      %2681 = vmatpush1.msra.mxu0 0.0
      %2682 = vmatprep.subr.mxu0 0.0
      %2683 = vmatpush1.msra.mxu0 0.0
      %2684 = vmatprep.subr.mxu0 0.0
      %2685 = vmatpush1.msra.mxu0 0.0
      %2686 = vmatprep.subr.mxu0 0.0
      %2687 = vmatpush1.msra.mxu0 0.0
      %2688 = vmatprep.subr.mxu0 0.0
      %2689 = vmatpush1.msra.mxu0 0.0
      %2690 = vmatprep.subr.mxu0 0.0
      %2691 = vmatpush1.msra.mxu0 0.0
      %2692 = vmatprep.subr.mxu0 0.0
      %2693 = vmatpush1.msra.mxu0 0.0
      %2694 = vmatprep.subr.mxu0 0.0
      %2695 = vmatpush1.msra.mxu0 0.0
      %2696 = vmatprep.subr.mxu0 0.0
      %2697 = vmatpush1.msra.mxu0 0.0
      %2698 = vmatprep.subr.mxu0 0.0
      %2699 = vmatpush1.msra.mxu0 0.0
      %2700 = vmatprep.subr.mxu0 0.0
      %2701 = vmatpush1.msra.mxu0 0.0
      %2702 = vmatprep.subr.mxu0 0.0
      %2703 = vmatpush1.msra.mxu0 0.0
      %2704 = vmatprep.subr.mxu0 0.0
      %2705 = vmatpush1.msra.mxu0 0.0
      %2706 = vmatprep.subr.mxu0 0.0
      %2707 = vmatpush1.msra.mxu0 0.0
      %2708 = vmatprep.subr.mxu0 0.0
      %2709 = vmatpush1.msra.mxu0 0.0
      %2710 = vmatprep.mubr.f32.mxu0 0.0
      %2711 = vmatmul.mubr.f32.gmra.mrb[0].mxu0 %v2244
      %v2712 = vpop.f32.mrb[0].mxu0
      %v2713 = vadd.f32 %v2262, %v2712
      %v2714 = vpop.f32.mrb[0].mxu0
      %v2715 = vadd.f32 %v2262, %v2714
      %2716 = vmatprep.mubr.f32.mxu0 0.0
      %2717 = vmatmul.mubr.f32.gmra.mrb[0].mxu0 %v2245
      %v2718 = vpop.f32.mrb[0].mxu0
      %v2719 = vadd.f32 %v2266, %v2718
      %v2720 = vpop.f32.mrb[0].mxu0
      %v2721 = vadd.f32 %v2266, %v2720
      %2722 = vmatprep.mubr.f32.mxu0 0.0
      %2723 = vmatmul.mubr.f32.gmra.mrb[0].mxu0 %v2246
      %v2724 = vpop.f32.mrb[0].mxu0
      %v2725 = vadd.f32 %v2270, %v2724
      %v2726 = vpop.f32.mrb[0].mxu0
      %v2727 = vadd.f32 %v2270, %v2726
      %2728 = vmatprep.mubr.f32.mxu0 0.0
      %2729 = vmatmul.mubr.f32.gmra.mrb[0].mxu0 %v2247
      %v2730 = vpop.f32.mrb[0].mxu0
      %v2731 = vadd.f32 %v2274, %v2730
      %v2732 = vpop.f32.mrb[0].mxu0
      %v2733 = vadd.f32 %v2274, %v2732
      %2734 = vmatprep.mubr.f32.mxu0 0.0
      %2735 = vmatmul.mubr.f32.gmra.mrb[0].mxu0 %v2248
      %v2736 = vpop.f32.mrb[0].mxu0
      %v2737 = vadd.f32 %v2278, %v2736
      %v2738 = vpop.f32.mrb[0].mxu0
      %v2739 = vadd.f32 %v2278, %v2738
      %2740 = vmatprep.mubr.f32.mxu0 0.0
      %2741 = vmatmul.mubr.f32.gmra.mrb[0].mxu0 %v2249
      %v2742 = vpop.f32.mrb[0].mxu0
      %v2743 = vadd.f32 %v2282, %v2742
      %v2744 = vpop.f32.mrb[0].mxu0
      %v2745 = vadd.f32 %v2282, %v2744
      %2746 = vmatprep.mubr.f32.mxu0 0.0
      %2747 = vmatmul.mubr.f32.gmra.mrb[0].mxu0 %v2250
      %v2748 = vpop.f32.mrb[0].mxu0
      %v2749 = vadd.f32 %v2286, %v2748
      %v2750 = vpop.f32.mrb[0].mxu0
      %v2751 = vadd.f32 %v2286, %v2750
      %2752 = vmatprep.mubr.f32.mxu0 0.0
      %2753 = vmatmul.mubr.f32.gmra.mrb[0].mxu0 %v2251
      %v2754 = vpop.f32.mrb[0].mxu0
      %v2755 = vadd.f32 %v2290, %v2754
      %v2756 = vpop.f32.mrb[0].mxu0
      %v2757 = vadd.f32 %v2290, %v2756
      %2758 = vmatprep.mubr.f32.mxu0 0.0
      %2759 = vmatmul.mubr.f32.gmra.mrb[0].mxu0 %v2252
      %v2760 = vpop.f32.mrb[0].mxu0
      %v2761 = vadd.f32 %v2294, %v2760
      %v2762 = vpop.f32.mrb[0].mxu0
      %v2763 = vadd.f32 %v2294, %v2762
      %2764 = vmatprep.mubr.f32.mxu0 0.0
      %2765 = vmatmul.mubr.f32.gmra.mrb[0].mxu0 %v2253
      %v2766 = vpop.f32.mrb[0].mxu0
      %v2767 = vadd.f32 %v2298, %v2766
      %v2768 = vpop.f32.mrb[0].mxu0
      %v2769 = vadd.f32 %v2298, %v2768
      %2770 = vmatprep.mubr.f32.mxu0 0.0
      %2771 = vmatmul.mubr.f32.gmra.mrb[0].mxu0 %v2254
      %v2772 = vpop.f32.mrb[0].mxu0
      %v2773 = vadd.f32 %v2302, %v2772
      %v2774 = vpop.f32.mrb[0].mxu0
      %v2775 = vadd.f32 %v2302, %v2774
      %2776 = vmatprep.mubr.f32.mxu0 0.0
      %2777 = vmatmul.mubr.f32.gmra.mrb[0].mxu0 %v2255
      %v2778 = vpop.f32.mrb[0].mxu0
      %v2779 = vadd.f32 %v2306, %v2778
      %v2780 = vpop.f32.mrb[0].mxu0
      %v2781 = vadd.f32 %v2306, %v2780
      %2782 = vmatprep.mubr.f32.mxu0 0.0
      %2783 = vmatmul.mubr.f32.gmra.mrb[0].mxu0 %v2256
      %v2784 = vpop.f32.mrb[0].mxu0
      %v2785 = vadd.f32 %v2310, %v2784
      %v2786 = vpop.f32.mrb[0].mxu0
      %v2787 = vadd.f32 %v2310, %v2786
      %2788 = vmatprep.mubr.f32.mxu0 0.0
      %2789 = vmatmul.mubr.f32.gmra.mrb[0].mxu0 %v2257
      %v2790 = vpop.f32.mrb[0].mxu0
      %v2791 = vadd.f32 %v2314, %v2790
      %v2792 = vpop.f32.mrb[0].mxu0
      %v2793 = vadd.f32 %v2314, %v2792
      %2794 = vmatprep.mubr.f32.mxu0 0.0
      %2795 = vmatmul.mubr.f32.gmra.mrb[0].mxu0 %v2258
      %v2796 = vpop.f32.mrb[0].mxu0
      %v2797 = vadd.f32 %v2318, %v2796
      %v2798 = vpop.f32.mrb[0].mxu0
      %v2799 = vadd.f32 %v2318, %v2798
      %2800 = vmatprep.mubr.f32.mxu0 0.0
      %2801 = vmatmul.mubr.f32.gmra.mrb[0].mxu0 %v2259
      %v2802 = vpop.f32.mrb[0].mxu0
      %v2803 = vadd.f32 %v2322, %v2802
      %v2804 = vpop.f32.mrb[0].mxu0
      %v2805 = vadd.f32 %v2322, %v2804
      %2806 = vdwg.mxu0
      %2807 = vmatprep.subr.mxu0 %v2091
      %2808 = vmatpush1.msra.mxu0 %v2090
      %2809 = vmatprep.subr.mxu0 %v2101
      %2810 = vmatpush1.msra.mxu0 %v2100
      %2811 = vmatprep.subr.mxu0 %v2111
      %2812 = vmatpush1.msra.mxu0 %v2110
      %2813 = vmatprep.subr.mxu0 %v2121
      %2814 = vmatpush1.msra.mxu0 %v2120
      %2815 = vmatprep.subr.mxu0 %v2131
      %2816 = vmatpush1.msra.mxu0 %v2130
      %2817 = vmatprep.subr.mxu0 %v2141
      %2818 = vmatpush1.msra.mxu0 %v2140
      %2819 = vmatprep.subr.mxu0 %v2151
      %2820 = vmatpush1.msra.mxu0 %v2150
      %2821 = vmatprep.subr.mxu0 %v2161
      %2822 = vmatpush1.msra.mxu0 %v2160
      %2823 = vmatprep.subr.mxu0 %v2171
      %2824 = vmatpush1.msra.mxu0 %v2170
      %2825 = vmatprep.subr.mxu0 %v2181
      %2826 = vmatpush1.msra.mxu0 %v2180
      %2827 = vmatprep.subr.mxu0 %v2191
      %2828 = vmatpush1.msra.mxu0 %v2190
      %2829 = vmatprep.subr.mxu0 %v2201
      %2830 = vmatpush1.msra.mxu0 %v2200
      %2831 = vmatprep.subr.mxu0 %v2211
      %2832 = vmatpush1.msra.mxu0 %v2210
      %2833 = vmatprep.subr.mxu0 %v2221
      %2834 = vmatpush1.msra.mxu0 %v2220
      %2835 = vmatprep.subr.mxu0 %v2231
      %2836 = vmatpush1.msra.mxu0 %v2230
      %2837 = vmatprep.subr.mxu0 %v2241
      %2838 = vmatpush1.msra.mxu0 %v2240
      %2839 = vmatprep.subr.mxu0 0.0
      %2840 = vmatpush1.msra.mxu0 0.0
      %2841 = vmatprep.subr.mxu0 0.0
      %2842 = vmatpush1.msra.mxu0 0.0
      %2843 = vmatprep.subr.mxu0 0.0
      %2844 = vmatpush1.msra.mxu0 0.0
      %2845 = vmatprep.subr.mxu0 0.0
      %2846 = vmatpush1.msra.mxu0 0.0
      %2847 = vmatprep.subr.mxu0 0.0
      %2848 = vmatpush1.msra.mxu0 0.0
      %2849 = vmatprep.subr.mxu0 0.0
      %2850 = vmatpush1.msra.mxu0 0.0
      %2851 = vmatprep.subr.mxu0 0.0
      %2852 = vmatpush1.msra.mxu0 0.0
      %2853 = vmatprep.subr.mxu0 0.0
      %2854 = vmatpush1.msra.mxu0 0.0
      %2855 = vmatprep.subr.mxu0 0.0
      %2856 = vmatpush1.msra.mxu0 0.0
      %2857 = vmatprep.subr.mxu0 0.0
      %2858 = vmatpush1.msra.mxu0 0.0
      %2859 = vmatprep.subr.mxu0 0.0
      %2860 = vmatpush1.msra.mxu0 0.0
      %2861 = vmatprep.subr.mxu0 0.0
      %2862 = vmatpush1.msra.mxu0 0.0
      %2863 = vmatprep.subr.mxu0 0.0
      %2864 = vmatpush1.msra.mxu0 0.0
      %2865 = vmatprep.subr.mxu0 0.0
      %2866 = vmatpush1.msra.mxu0 0.0
      %2867 = vmatprep.subr.mxu0 0.0
      %2868 = vmatpush1.msra.mxu0 0.0
      %2869 = vmatprep.subr.mxu0 0.0
      %2870 = vmatpush1.msra.mxu0 0.0
      %2871 = vmatprep.mubr.f32.mxu0 0.0
      %2872 = vmatmul.mubr.f32.gmra.mrb[0].mxu0 %v2244
      %v2873 = vpop.f32.mrb[0].mxu0
      %v2874 = vadd.f32 %v2262, %v2873
      %v2875 = vpop.f32.mrb[0].mxu0
      %v2876 = vadd.f32 %v2262, %v2875
      %2877 = vmatprep.mubr.f32.mxu0 0.0
      %2878 = vmatmul.mubr.f32.gmra.mrb[0].mxu0 %v2245
      %v2879 = vpop.f32.mrb[0].mxu0
      %v2880 = vadd.f32 %v2266, %v2879
      %v2881 = vpop.f32.mrb[0].mxu0
      %v2882 = vadd.f32 %v2266, %v2881
      %2883 = vmatprep.mubr.f32.mxu0 0.0
      %2884 = vmatmul.mubr.f32.gmra.mrb[0].mxu0 %v2246
      %v2885 = vpop.f32.mrb[0].mxu0
      %v2886 = vadd.f32 %v2270, %v2885
      %v2887 = vpop.f32.mrb[0].mxu0
      %v2888 = vadd.f32 %v2270, %v2887
      %2889 = vmatprep.mubr.f32.mxu0 0.0
      %2890 = vmatmul.mubr.f32.gmra.mrb[0].mxu0 %v2247
      %v2891 = vpop.f32.mrb[0].mxu0
      %v2892 = vadd.f32 %v2274, %v2891
      %v2893 = vpop.f32.mrb[0].mxu0
      %v2894 = vadd.f32 %v2274, %v2893
      %2895 = vmatprep.mubr.f32.mxu0 0.0
      %2896 = vmatmul.mubr.f32.gmra.mrb[0].mxu0 %v2248
      %v2897 = vpop.f32.mrb[0].mxu0
      %v2898 = vadd.f32 %v2278, %v2897
      %v2899 = vpop.f32.mrb[0].mxu0
      %v2900 = vadd.f32 %v2278, %v2899
      %2901 = vmatprep.mubr.f32.mxu0 0.0
      %2902 = vmatmul.mubr.f32.gmra.mrb[0].mxu0 %v2249
      %v2903 = vpop.f32.mrb[0].mxu0
      %v2904 = vadd.f32 %v2282, %v2903
      %v2905 = vpop.f32.mrb[0].mxu0
      %v2906 = vadd.f32 %v2282, %v2905
      %2907 = vmatprep.mubr.f32.mxu0 0.0
      %2908 = vmatmul.mubr.f32.gmra.mrb[0].mxu0 %v2250
      %v2909 = vpop.f32.mrb[0].mxu0
      %v2910 = vadd.f32 %v2286, %v2909
      %v2911 = vpop.f32.mrb[0].mxu0
      %v2912 = vadd.f32 %v2286, %v2911
      %2913 = vmatprep.mubr.f32.mxu0 0.0
      %2914 = vmatmul.mubr.f32.gmra.mrb[0].mxu0 %v2251
      %v2915 = vpop.f32.mrb[0].mxu0
      %v2916 = vadd.f32 %v2290, %v2915
      %v2917 = vpop.f32.mrb[0].mxu0
      %v2918 = vadd.f32 %v2290, %v2917
      %2919 = vmatprep.mubr.f32.mxu0 0.0
      %2920 = vmatmul.mubr.f32.gmra.mrb[0].mxu0 %v2252
      %v2921 = vpop.f32.mrb[0].mxu0
      %v2922 = vadd.f32 %v2294, %v2921
      %v2923 = vpop.f32.mrb[0].mxu0
      %v2924 = vadd.f32 %v2294, %v2923
      %2925 = vmatprep.mubr.f32.mxu0 0.0
      %2926 = vmatmul.mubr.f32.gmra.mrb[0].mxu0 %v2253
      %v2927 = vpop.f32.mrb[0].mxu0
      %v2928 = vadd.f32 %v2298, %v2927
      %v2929 = vpop.f32.mrb[0].mxu0
      %v2930 = vadd.f32 %v2298, %v2929
      %2931 = vmatprep.mubr.f32.mxu0 0.0
      %2932 = vmatmul.mubr.f32.gmra.mrb[0].mxu0 %v2254
      %v2933 = vpop.f32.mrb[0].mxu0
      %v2934 = vadd.f32 %v2302, %v2933
      %v2935 = vpop.f32.mrb[0].mxu0
      %v2936 = vadd.f32 %v2302, %v2935
      %2937 = vmatprep.mubr.f32.mxu0 0.0
      %2938 = vmatmul.mubr.f32.gmra.mrb[0].mxu0 %v2255
      %v2939 = vpop.f32.mrb[0].mxu0
      %v2940 = vadd.f32 %v2306, %v2939
      %v2941 = vpop.f32.mrb[0].mxu0
      %v2942 = vadd.f32 %v2306, %v2941
      %2943 = vmatprep.mubr.f32.mxu0 0.0
      %2944 = vmatmul.mubr.f32.gmra.mrb[0].mxu0 %v2256
      %v2945 = vpop.f32.mrb[0].mxu0
      %v2946 = vadd.f32 %v2310, %v2945
      %v2947 = vpop.f32.mrb[0].mxu0
      %v2948 = vadd.f32 %v2310, %v2947
      %2949 = vmatprep.mubr.f32.mxu0 0.0
      %2950 = vmatmul.mubr.f32.gmra.mrb[0].mxu0 %v2257
      %v2951 = vpop.f32.mrb[0].mxu0
      %v2952 = vadd.f32 %v2314, %v2951
      %v2953 = vpop.f32.mrb[0].mxu0
      %v2954 = vadd.f32 %v2314, %v2953
      %2955 = vmatprep.mubr.f32.mxu0 0.0
      %2956 = vmatmul.mubr.f32.gmra.mrb[0].mxu0 %v2258
      %v2957 = vpop.f32.mrb[0].mxu0
      %v2958 = vadd.f32 %v2318, %v2957
      %v2959 = vpop.f32.mrb[0].mxu0
      %v2960 = vadd.f32 %v2318, %v2959
      %2961 = vmatprep.mubr.f32.mxu0 0.0
      %2962 = vmatmul.mubr.f32.gmra.mrb[0].mxu0 %v2259
      %v2963 = vpop.f32.mrb[0].mxu0
      %v2964 = vadd.f32 %v2322, %v2963
      %v2965 = vpop.f32.mrb[0].mxu0
      %v2966 = vadd.f32 %v2322, %v2965
      %2967 = vdwg.mxu0
      %2968 = vmatprep.subr.mxu0 %v2093
      %2969 = vmatpush1.msra.mxu0 %v2092
      %2970 = vmatprep.subr.mxu0 %v2103
      %2971 = vmatpush1.msra.mxu0 %v2102
      %2972 = vmatprep.subr.mxu0 %v2113
      %2973 = vmatpush1.msra.mxu0 %v2112
      %2974 = vmatprep.subr.mxu0 %v2123
      %2975 = vmatpush1.msra.mxu0 %v2122
      %2976 = vmatprep.subr.mxu0 %v2133
      %2977 = vmatpush1.msra.mxu0 %v2132
      %2978 = vmatprep.subr.mxu0 %v2143
      %2979 = vmatpush1.msra.mxu0 %v2142
      %2980 = vmatprep.subr.mxu0 %v2153
      %2981 = vmatpush1.msra.mxu0 %v2152
      %2982 = vmatprep.subr.mxu0 %v2163
      %2983 = vmatpush1.msra.mxu0 %v2162
      %2984 = vmatprep.subr.mxu0 %v2173
      %2985 = vmatpush1.msra.mxu0 %v2172
      %2986 = vmatprep.subr.mxu0 %v2183
      %2987 = vmatpush1.msra.mxu0 %v2182
      %2988 = vmatprep.subr.mxu0 %v2193
      %2989 = vmatpush1.msra.mxu0 %v2192
      %2990 = vmatprep.subr.mxu0 %v2203
      %2991 = vmatpush1.msra.mxu0 %v2202
      %2992 = vmatprep.subr.mxu0 %v2213
      %2993 = vmatpush1.msra.mxu0 %v2212
      %2994 = vmatprep.subr.mxu0 %v2223
      %2995 = vmatpush1.msra.mxu0 %v2222
      %2996 = vmatprep.subr.mxu0 %v2233
      %2997 = vmatpush1.msra.mxu0 %v2232
      %2998 = vmatprep.subr.mxu0 %v2243
      %2999 = vmatpush1.msra.mxu0 %v2242
      %3000 = vmatprep.subr.mxu0 0.0
      %3001 = vmatpush1.msra.mxu0 0.0
      %3002 = vmatprep.subr.mxu0 0.0
      %3003 = vmatpush1.msra.mxu0 0.0
      %3004 = vmatprep.subr.mxu0 0.0
      %3005 = vmatpush1.msra.mxu0 0.0
      %3006 = vmatprep.subr.mxu0 0.0
      %3007 = vmatpush1.msra.mxu0 0.0
      %3008 = vmatprep.subr.mxu0 0.0
      %3009 = vmatpush1.msra.mxu0 0.0
      %3010 = vmatprep.subr.mxu0 0.0
      %3011 = vmatpush1.msra.mxu0 0.0
      %3012 = vmatprep.subr.mxu0 0.0
      %3013 = vmatpush1.msra.mxu0 0.0
      %3014 = vmatprep.subr.mxu0 0.0
      %3015 = vmatpush1.msra.mxu0 0.0
      %3016 = vmatprep.subr.mxu0 0.0
      %3017 = vmatpush1.msra.mxu0 0.0
      %3018 = vmatprep.subr.mxu0 0.0
      %3019 = vmatpush1.msra.mxu0 0.0
      %3020 = vmatprep.subr.mxu0 0.0
      %3021 = vmatpush1.msra.mxu0 0.0
      %3022 = vmatprep.subr.mxu0 0.0
      %3023 = vmatpush1.msra.mxu0 0.0
      %3024 = vmatprep.subr.mxu0 0.0
      %3025 = vmatpush1.msra.mxu0 0.0
      %3026 = vmatprep.subr.mxu0 0.0
      %3027 = vmatpush1.msra.mxu0 0.0
      %3028 = vmatprep.subr.mxu0 0.0
      %3029 = vmatpush1.msra.mxu0 0.0
      %3030 = vmatprep.subr.mxu0 0.0
      %3031 = vmatpush1.msra.mxu0 0.0
      %3032 = vmatprep.mubr.f32.mxu0 0.0
      %3033 = vmatmul.mubr.f32.gmra.mrb[0].mxu0 %v2244
      %v3034 = vpop.f32.mrb[0].mxu0
      %v3035 = vadd.f32 %v2262, %v3034
      %v3036 = vpop.f32.mrb[0].mxu0
      %v3037 = vadd.f32 %v2262, %v3036
      %3038 = vmatprep.mubr.f32.mxu0 0.0
      %3039 = vmatmul.mubr.f32.gmra.mrb[0].mxu0 %v2245
      %v3040 = vpop.f32.mrb[0].mxu0
      %v3041 = vadd.f32 %v2266, %v3040
      %v3042 = vpop.f32.mrb[0].mxu0
      %v3043 = vadd.f32 %v2266, %v3042
      %3044 = vmatprep.mubr.f32.mxu0 0.0
      %3045 = vmatmul.mubr.f32.gmra.mrb[0].mxu0 %v2246
      %v3046 = vpop.f32.mrb[0].mxu0
      %v3047 = vadd.f32 %v2270, %v3046
      %v3048 = vpop.f32.mrb[0].mxu0
      %v3049 = vadd.f32 %v2270, %v3048
      %3050 = vmatprep.mubr.f32.mxu0 0.0
      %3051 = vmatmul.mubr.f32.gmra.mrb[0].mxu0 %v2247
      %v3052 = vpop.f32.mrb[0].mxu0
      %v3053 = vadd.f32 %v2274, %v3052
      %v3054 = vpop.f32.mrb[0].mxu0
      %v3055 = vadd.f32 %v2274, %v3054
      %3056 = vmatprep.mubr.f32.mxu0 0.0
      %3057 = vmatmul.mubr.f32.gmra.mrb[0].mxu0 %v2248
      %v3058 = vpop.f32.mrb[0].mxu0
      %v3059 = vadd.f32 %v2278, %v3058
      %v3060 = vpop.f32.mrb[0].mxu0
      %v3061 = vadd.f32 %v2278, %v3060
      %3062 = vmatprep.mubr.f32.mxu0 0.0
      %3063 = vmatmul.mubr.f32.gmra.mrb[0].mxu0 %v2249
      %v3064 = vpop.f32.mrb[0].mxu0
      %v3065 = vadd.f32 %v2282, %v3064
      %v3066 = vpop.f32.mrb[0].mxu0
      %v3067 = vadd.f32 %v2282, %v3066
      %3068 = vmatprep.mubr.f32.mxu0 0.0
      %3069 = vmatmul.mubr.f32.gmra.mrb[0].mxu0 %v2250
      %v3070 = vpop.f32.mrb[0].mxu0
      %v3071 = vadd.f32 %v2286, %v3070
      %v3072 = vpop.f32.mrb[0].mxu0
      %v3073 = vadd.f32 %v2286, %v3072
      %3074 = vmatprep.mubr.f32.mxu0 0.0
      %3075 = vmatmul.mubr.f32.gmra.mrb[0].mxu0 %v2251
      %v3076 = vpop.f32.mrb[0].mxu0
      %v3077 = vadd.f32 %v2290, %v3076
      %v3078 = vpop.f32.mrb[0].mxu0
      %v3079 = vadd.f32 %v2290, %v3078
      %3080 = vmatprep.mubr.f32.mxu0 0.0
      %3081 = vmatmul.mubr.f32.gmra.mrb[0].mxu0 %v2252
      %v3082 = vpop.f32.mrb[0].mxu0
      %v3083 = vadd.f32 %v2294, %v3082
      %v3084 = vpop.f32.mrb[0].mxu0
      %v3085 = vadd.f32 %v2294, %v3084
      %3086 = vmatprep.mubr.f32.mxu0 0.0
      %3087 = vmatmul.mubr.f32.gmra.mrb[0].mxu0 %v2253
      %v3088 = vpop.f32.mrb[0].mxu0
      %v3089 = vadd.f32 %v2298, %v3088
      %v3090 = vpop.f32.mrb[0].mxu0
      %v3091 = vadd.f32 %v2298, %v3090
      %3092 = vmatprep.mubr.f32.mxu0 0.0
      %3093 = vmatmul.mubr.f32.gmra.mrb[0].mxu0 %v2254
      %v3094 = vpop.f32.mrb[0].mxu0
      %v3095 = vadd.f32 %v2302, %v3094
      %v3096 = vpop.f32.mrb[0].mxu0
      %v3097 = vadd.f32 %v2302, %v3096
      %3098 = vmatprep.mubr.f32.mxu0 0.0
      %3099 = vmatmul.mubr.f32.gmra.mrb[0].mxu0 %v2255
      %v3100 = vpop.f32.mrb[0].mxu0
      %v3101 = vadd.f32 %v2306, %v3100
      %v3102 = vpop.f32.mrb[0].mxu0
      %v3103 = vadd.f32 %v2306, %v3102
      %3104 = vmatprep.mubr.f32.mxu0 0.0
      %3105 = vmatmul.mubr.f32.gmra.mrb[0].mxu0 %v2256
      %v3106 = vpop.f32.mrb[0].mxu0
      %v3107 = vadd.f32 %v2310, %v3106
      %v3108 = vpop.f32.mrb[0].mxu0
      %v3109 = vadd.f32 %v2310, %v3108
      %3110 = vmatprep.mubr.f32.mxu0 0.0
      %3111 = vmatmul.mubr.f32.gmra.mrb[0].mxu0 %v2257
      %v3112 = vpop.f32.mrb[0].mxu0
      %v3113 = vadd.f32 %v2314, %v3112
      %v3114 = vpop.f32.mrb[0].mxu0
      %v3115 = vadd.f32 %v2314, %v3114
      %3116 = vmatprep.mubr.f32.mxu0 0.0
      %3117 = vmatmul.mubr.f32.gmra.mrb[0].mxu0 %v2258
      %v3118 = vpop.f32.mrb[0].mxu0
      %v3119 = vadd.f32 %v2318, %v3118
      %v3120 = vpop.f32.mrb[0].mxu0
      %v3121 = vadd.f32 %v2318, %v3120
      %3122 = vmatprep.mubr.f32.mxu0 0.0
      %3123 = vmatmul.mubr.f32.gmra.mrb[0].mxu0 %v2259
      %v3124 = vpop.f32.mrb[0].mxu0
      %v3125 = vadd.f32 %v2322, %v3124
      %v3126 = vpop.f32.mrb[0].mxu0
      %v3127 = vadd.f32 %v2322, %v3126
      %3128 = vdwg.mxu0
      %3129 = vst [vmem:[#allocation2] sm:$0xff] %v2391
      %3130 = vst [vmem:[#allocation2 + $0x8] sm:$0xff] %v2393
      %3131 = vst [vmem:[#allocation2 + $0x10] sm:$0xff] %v2552
      %3132 = vst [vmem:[#allocation2 + $0x18] sm:$0xff] %v2554
      %3133 = vst [vmem:[#allocation2 + $0x20] sm:$0xff] %v2713
      %3134 = vst [vmem:[#allocation2 + $0x28] sm:$0xff] %v2715
      %3135 = vst [vmem:[#allocation2 + $0x30] sm:$0xff] %v2874
      %3136 = vst [vmem:[#allocation2 + $0x38] sm:$0xff] %v2876
      %3137 = vst [vmem:[#allocation2 + $0x40] sm:$0xff] %v3035
      %3138 = vst [vmem:[#allocation2 + $0x48] sm:$0xff] %v3037
      %3139 = vst [vmem:[#allocation2 + $0x50] sm:$0xff] %v2397
      %3140 = vst [vmem:[#allocation2 + $0x58] sm:$0xff] %v2399
      %3141 = vst [vmem:[#allocation2 + $0x60] sm:$0xff] %v2558
      %3142 = vst [vmem:[#allocation2 + $0x68] sm:$0xff] %v2560
      %3143 = vst [vmem:[#allocation2 + $0x70] sm:$0xff] %v2719
      %3144 = vst [vmem:[#allocation2 + $0x78] sm:$0xff] %v2721
      %3145 = vst [vmem:[#allocation2 + $0x80] sm:$0xff] %v2880
      %3146 = vst [vmem:[#allocation2 + $0x88] sm:$0xff] %v2882
      %3147 = vst [vmem:[#allocation2 + $0x90] sm:$0xff] %v3041
      %3148 = vst [vmem:[#allocation2 + $0x98] sm:$0xff] %v3043
      %3149 = vst [vmem:[#allocation2 + $0xa0] sm:$0xff] %v2403
      %3150 = vst [vmem:[#allocation2 + $0xa8] sm:$0xff] %v2405
      %3151 = vst [vmem:[#allocation2 + $0xb0] sm:$0xff] %v2564
      %3152 = vst [vmem:[#allocation2 + $0xb8] sm:$0xff] %v2566
      %3153 = vst [vmem:[#allocation2 + $0xc0] sm:$0xff] %v2725
      %3154 = vst [vmem:[#allocation2 + $0xc8] sm:$0xff] %v2727
      %3155 = vst [vmem:[#allocation2 + $0xd0] sm:$0xff] %v2886
      %3156 = vst [vmem:[#allocation2 + $0xd8] sm:$0xff] %v2888
      %3157 = vst [vmem:[#allocation2 + $0xe0] sm:$0xff] %v3047
      %3158 = vst [vmem:[#allocation2 + $0xe8] sm:$0xff] %v3049
      %3159 = vst [vmem:[#allocation2 + $0xf0] sm:$0xff] %v2409
      %3160 = vst [vmem:[#allocation2 + $0xf8] sm:$0xff] %v2411
      %3161 = vst [vmem:[#allocation2 + $0x100] sm:$0xff] %v2570
      %3162 = vst [vmem:[#allocation2 + $0x108] sm:$0xff] %v2572
      %3163 = vst [vmem:[#allocation2 + $0x110] sm:$0xff] %v2731
      %3164 = vst [vmem:[#allocation2 + $0x118] sm:$0xff] %v2733
      %3165 = vst [vmem:[#allocation2 + $0x120] sm:$0xff] %v2892
      %3166 = vst [vmem:[#allocation2 + $0x128] sm:$0xff] %v2894
      %3167 = vst [vmem:[#allocation2 + $0x130] sm:$0xff] %v3053
      %3168 = vst [vmem:[#allocation2 + $0x138] sm:$0xff] %v3055
      %3169 = vst [vmem:[#allocation2 + $0x140] sm:$0xff] %v2415
      %3170 = vst [vmem:[#allocation2 + $0x148] sm:$0xff] %v2417
      %3171 = vst [vmem:[#allocation2 + $0x150] sm:$0xff] %v2576
      %3172 = vst [vmem:[#allocation2 + $0x158] sm:$0xff] %v2578
      %3173 = vst [vmem:[#allocation2 + $0x160] sm:$0xff] %v2737
      %3174 = vst [vmem:[#allocation2 + $0x168] sm:$0xff] %v2739
      %3175 = vst [vmem:[#allocation2 + $0x170] sm:$0xff] %v2898
      %3176 = vst [vmem:[#allocation2 + $0x178] sm:$0xff] %v2900
      %3177 = vst [vmem:[#allocation2 + $0x180] sm:$0xff] %v3059
      %3178 = vst [vmem:[#allocation2 + $0x188] sm:$0xff] %v3061
      %3179 = vst [vmem:[#allocation2 + $0x190] sm:$0xff] %v2421
      %3180 = vst [vmem:[#allocation2 + $0x198] sm:$0xff] %v2423
      %3181 = vst [vmem:[#allocation2 + $0x1a0] sm:$0xff] %v2582
      %3182 = vst [vmem:[#allocation2 + $0x1a8] sm:$0xff] %v2584
      %3183 = vst [vmem:[#allocation2 + $0x1b0] sm:$0xff] %v2743
      %3184 = vst [vmem:[#allocation2 + $0x1b8] sm:$0xff] %v2745
      %3185 = vst [vmem:[#allocation2 + $0x1c0] sm:$0xff] %v2904
      %3186 = vst [vmem:[#allocation2 + $0x1c8] sm:$0xff] %v2906
      %3187 = vst [vmem:[#allocation2 + $0x1d0] sm:$0xff] %v3065
      %3188 = vst [vmem:[#allocation2 + $0x1d8] sm:$0xff] %v3067
      %3189 = vst [vmem:[#allocation2 + $0x1e0] sm:$0xff] %v2427
      %3190 = vst [vmem:[#allocation2 + $0x1e8] sm:$0xff] %v2429
      %3191 = vst [vmem:[#allocation2 + $0x1f0] sm:$0xff] %v2588
      %3192 = vst [vmem:[#allocation2 + $0x1f8] sm:$0xff] %v2590
      %3193 = vst [vmem:[#allocation2 + $0x200] sm:$0xff] %v2749
      %3194 = vst [vmem:[#allocation2 + $0x208] sm:$0xff] %v2751
      %3195 = vst [vmem:[#allocation2 + $0x210] sm:$0xff] %v2910
      %3196 = vst [vmem:[#allocation2 + $0x218] sm:$0xff] %v2912
      %3197 = vst [vmem:[#allocation2 + $0x220] sm:$0xff] %v3071
      %3198 = vst [vmem:[#allocation2 + $0x228] sm:$0xff] %v3073
      %3199 = vst [vmem:[#allocation2 + $0x230] sm:$0xff] %v2433
      %3200 = vst [vmem:[#allocation2 + $0x238] sm:$0xff] %v2435
      %3201 = vst [vmem:[#allocation2 + $0x240] sm:$0xff] %v2594
      %3202 = vst [vmem:[#allocation2 + $0x248] sm:$0xff] %v2596
      %3203 = vst [vmem:[#allocation2 + $0x250] sm:$0xff] %v2755
      %3204 = vst [vmem:[#allocation2 + $0x258] sm:$0xff] %v2757
      %3205 = vst [vmem:[#allocation2 + $0x260] sm:$0xff] %v2916
      %3206 = vst [vmem:[#allocation2 + $0x268] sm:$0xff] %v2918
      %3207 = vst [vmem:[#allocation2 + $0x270] sm:$0xff] %v3077
      %3208 = vst [vmem:[#allocation2 + $0x278] sm:$0xff] %v3079
      %3209 = vst [vmem:[#allocation2 + $0x280] sm:$0xff] %v2439
      %3210 = vst [vmem:[#allocation2 + $0x288] sm:$0xff] %v2441
      %3211 = vst [vmem:[#allocation2 + $0x290] sm:$0xff] %v2600
      %3212 = vst [vmem:[#allocation2 + $0x298] sm:$0xff] %v2602
      %3213 = vst [vmem:[#allocation2 + $0x2a0] sm:$0xff] %v2761
      %3214 = vst [vmem:[#allocation2 + $0x2a8] sm:$0xff] %v2763
      %3215 = vst [vmem:[#allocation2 + $0x2b0] sm:$0xff] %v2922
      %3216 = vst [vmem:[#allocation2 + $0x2b8] sm:$0xff] %v2924
      %3217 = vst [vmem:[#allocation2 + $0x2c0] sm:$0xff] %v3083
      %3218 = vst [vmem:[#allocation2 + $0x2c8] sm:$0xff] %v3085
      %3219 = vst [vmem:[#allocation2 + $0x2d0] sm:$0xff] %v2445
      %3220 = vst [vmem:[#allocation2 + $0x2d8] sm:$0xff] %v2447
      %3221 = vst [vmem:[#allocation2 + $0x2e0] sm:$0xff] %v2606
      %3222 = vst [vmem:[#allocation2 + $0x2e8] sm:$0xff] %v2608
      %3223 = vst [vmem:[#allocation2 + $0x2f0] sm:$0xff] %v2767
      %3224 = vst [vmem:[#allocation2 + $0x2f8] sm:$0xff] %v2769
      %3225 = vst [vmem:[#allocation2 + $0x300] sm:$0xff] %v2928
      %3226 = vst [vmem:[#allocation2 + $0x308] sm:$0xff] %v2930
      %3227 = vst [vmem:[#allocation2 + $0x310] sm:$0xff] %v3089
      %3228 = vst [vmem:[#allocation2 + $0x318] sm:$0xff] %v3091
      %3229 = vst [vmem:[#allocation2 + $0x320] sm:$0xff] %v2451
      %3230 = vst [vmem:[#allocation2 + $0x328] sm:$0xff] %v2453
      %3231 = vst [vmem:[#allocation2 + $0x330] sm:$0xff] %v2612
      %3232 = vst [vmem:[#allocation2 + $0x338] sm:$0xff] %v2614
      %3233 = vst [vmem:[#allocation2 + $0x340] sm:$0xff] %v2773
      %3234 = vst [vmem:[#allocation2 + $0x348] sm:$0xff] %v2775
      %3235 = vst [vmem:[#allocation2 + $0x350] sm:$0xff] %v2934
      %3236 = vst [vmem:[#allocation2 + $0x358] sm:$0xff] %v2936
      %3237 = vst [vmem:[#allocation2 + $0x360] sm:$0xff] %v3095
      %3238 = vst [vmem:[#allocation2 + $0x368] sm:$0xff] %v3097
      %3239 = vst [vmem:[#allocation2 + $0x370] sm:$0xff] %v2457
      %3240 = vst [vmem:[#allocation2 + $0x378] sm:$0xff] %v2459
      %3241 = vst [vmem:[#allocation2 + $0x380] sm:$0xff] %v2618
      %3242 = vst [vmem:[#allocation2 + $0x388] sm:$0xff] %v2620
      %3243 = vst [vmem:[#allocation2 + $0x390] sm:$0xff] %v2779
      %3244 = vst [vmem:[#allocation2 + $0x398] sm:$0xff] %v2781
      %3245 = vst [vmem:[#allocation2 + $0x3a0] sm:$0xff] %v2940
      %3246 = vst [vmem:[#allocation2 + $0x3a8] sm:$0xff] %v2942
      %3247 = vst [vmem:[#allocation2 + $0x3b0] sm:$0xff] %v3101
      %3248 = vst [vmem:[#allocation2 + $0x3b8] sm:$0xff] %v3103
      %3249 = vst [vmem:[#allocation2 + $0x3c0] sm:$0xff] %v2463
      %3250 = vst [vmem:[#allocation2 + $0x3c8] sm:$0xff] %v2465
      %3251 = vst [vmem:[#allocation2 + $0x3d0] sm:$0xff] %v2624
      %3252 = vst [vmem:[#allocation2 + $0x3d8] sm:$0xff] %v2626
      %3253 = vst [vmem:[#allocation2 + $0x3e0] sm:$0xff] %v2785
      %3254 = vst [vmem:[#allocation2 + $0x3e8] sm:$0xff] %v2787
      %3255 = vst [vmem:[#allocation2 + $0x3f0] sm:$0xff] %v2946
      %3256 = vst [vmem:[#allocation2 + $0x3f8] sm:$0xff] %v2948
      %3257 = vst [vmem:[#allocation2 + $0x400] sm:$0xff] %v3107
      %3258 = vst [vmem:[#allocation2 + $0x408] sm:$0xff] %v3109
      %3259 = vst [vmem:[#allocation2 + $0x410] sm:$0xff] %v2469
      %3260 = vst [vmem:[#allocation2 + $0x418] sm:$0xff] %v2471
      %3261 = vst [vmem:[#allocation2 + $0x420] sm:$0xff] %v2630
      %3262 = vst [vmem:[#allocation2 + $0x428] sm:$0xff] %v2632
      %3263 = vst [vmem:[#allocation2 + $0x430] sm:$0xff] %v2791
      %3264 = vst [vmem:[#allocation2 + $0x438] sm:$0xff] %v2793
      %3265 = vst [vmem:[#allocation2 + $0x440] sm:$0xff] %v2952
      %3266 = vst [vmem:[#allocation2 + $0x448] sm:$0xff] %v2954
      %3267 = vst [vmem:[#allocation2 + $0x450] sm:$0xff] %v3113
      %3268 = vst [vmem:[#allocation2 + $0x458] sm:$0xff] %v3115
      %3269 = vst [vmem:[#allocation2 + $0x460] sm:$0xff] %v2475
      %3270 = vst [vmem:[#allocation2 + $0x468] sm:$0xff] %v2477
      %3271 = vst [vmem:[#allocation2 + $0x470] sm:$0xff] %v2636
      %3272 = vst [vmem:[#allocation2 + $0x478] sm:$0xff] %v2638
      %3273 = vst [vmem:[#allocation2 + $0x480] sm:$0xff] %v2797
      %3274 = vst [vmem:[#allocation2 + $0x488] sm:$0xff] %v2799
      %3275 = vst [vmem:[#allocation2 + $0x490] sm:$0xff] %v2958
      %3276 = vst [vmem:[#allocation2 + $0x498] sm:$0xff] %v2960
      %3277 = vst [vmem:[#allocation2 + $0x4a0] sm:$0xff] %v3119
      %3278 = vst [vmem:[#allocation2 + $0x4a8] sm:$0xff] %v3121
      %3279 = vst [vmem:[#allocation2 + $0x4b0] sm:$0xff] %v2481
      %3280 = vst [vmem:[#allocation2 + $0x4b8] sm:$0xff] %v2483
      %3281 = vst [vmem:[#allocation2 + $0x4c0] sm:$0xff] %v2642
      %3282 = vst [vmem:[#allocation2 + $0x4c8] sm:$0xff] %v2644
      %3283 = vst [vmem:[#allocation2 + $0x4d0] sm:$0xff] %v2803
      %3284 = vst [vmem:[#allocation2 + $0x4d8] sm:$0xff] %v2805
      %3285 = vst [vmem:[#allocation2 + $0x4e0] sm:$0xff] %v2964
      %3286 = vst [vmem:[#allocation2 + $0x4e8] sm:$0xff] %v2966
      %3287 = vst [vmem:[#allocation2 + $0x4f0] sm:$0xff] %v3125
      %3288 = vst [vmem:[#allocation2 + $0x4f8] sm:$0xff] %v3127
      %v3289 = vld [vmem:[%s6] sm:$0xff]
      %v3290 = vld [vmem:[%s6 + $0x8] sm:$0xff]
      %v3291 = vld [vmem:[%s6 + $0x10] sm:$0xff]
      %v3292 = vld [vmem:[%s6 + $0x18] sm:$0xff]
      %v3293 = vld [vmem:[%s6 + $0x20] sm:$0xff]
      %v3294 = vld [vmem:[%s6 + $0x28] sm:$0xff]
      %v3295 = vld [vmem:[%s6 + $0x30] sm:$0xff]
      %v3296 = vld [vmem:[%s6 + $0x38] sm:$0xff]
      %v3297 = vld [vmem:[%s6 + $0x40] sm:$0xff]
      %v3298 = vld [vmem:[%s6 + $0x48] sm:$0xff]
      %v3299 = vld [vmem:[%s6 + $0x50] sm:$0xff]
      %v3300 = vld [vmem:[%s6 + $0x58] sm:$0xff]
      %v3301 = vld [vmem:[%s6 + $0x60] sm:$0xff]
      %v3302 = vld [vmem:[%s6 + $0x68] sm:$0xff]
      %v3303 = vld [vmem:[%s6 + $0x70] sm:$0xff]
      %v3304 = vld [vmem:[%s6 + $0x78] sm:$0xff]
      %3305 = vmatprep.subr.mxu0 %v2393
      %3306 = vmatpush1.msra.mxu0 %v2391
      %3307 = vmatprep.subr.mxu0 %v2399
      %3308 = vmatpush1.msra.mxu0 %v2397
      %3309 = vmatprep.subr.mxu0 %v2405
      %3310 = vmatpush1.msra.mxu0 %v2403
      %3311 = vmatprep.subr.mxu0 %v2411
      %3312 = vmatpush1.msra.mxu0 %v2409
      %3313 = vmatprep.subr.mxu0 %v2417
      %3314 = vmatpush1.msra.mxu0 %v2415
      %3315 = vmatprep.subr.mxu0 %v2423
      %3316 = vmatpush1.msra.mxu0 %v2421
      %3317 = vmatprep.subr.mxu0 %v2429
      %3318 = vmatpush1.msra.mxu0 %v2427
      %3319 = vmatprep.subr.mxu0 %v2435
      %3320 = vmatpush1.msra.mxu0 %v2433
      %3321 = vmatprep.subr.mxu0 %v2441
      %3322 = vmatpush1.msra.mxu0 %v2439
      %3323 = vmatprep.subr.mxu0 %v2447
      %3324 = vmatpush1.msra.mxu0 %v2445
      %3325 = vmatprep.subr.mxu0 %v2453
      %3326 = vmatpush1.msra.mxu0 %v2451
      %3327 = vmatprep.subr.mxu0 %v2459
      %3328 = vmatpush1.msra.mxu0 %v2457
      %3329 = vmatprep.subr.mxu0 %v2465
      %3330 = vmatpush1.msra.mxu0 %v2463
      %3331 = vmatprep.subr.mxu0 %v2471
      %3332 = vmatpush1.msra.mxu0 %v2469
      %3333 = vmatprep.subr.mxu0 %v2477
      %3334 = vmatpush1.msra.mxu0 %v2475
      %3335 = vmatprep.subr.mxu0 %v2483
      %3336 = vmatpush1.msra.mxu0 %v2481
      %3337 = vmatprep.subr.mxu0 0.0
      %3338 = vmatpush1.msra.mxu0 0.0
      %3339 = vmatprep.subr.mxu0 0.0
      %3340 = vmatpush1.msra.mxu0 0.0
      %3341 = vmatprep.subr.mxu0 0.0
      %3342 = vmatpush1.msra.mxu0 0.0
      %3343 = vmatprep.subr.mxu0 0.0
      %3344 = vmatpush1.msra.mxu0 0.0
      %3345 = vmatprep.subr.mxu0 0.0
      %3346 = vmatpush1.msra.mxu0 0.0
      %3347 = vmatprep.subr.mxu0 0.0
      %3348 = vmatpush1.msra.mxu0 0.0
      %3349 = vmatprep.subr.mxu0 0.0
      %3350 = vmatpush1.msra.mxu0 0.0
      %3351 = vmatprep.subr.mxu0 0.0
      %3352 = vmatpush1.msra.mxu0 0.0
      %3353 = vmatprep.subr.mxu0 0.0
      %3354 = vmatpush1.msra.mxu0 0.0
      %3355 = vmatprep.subr.mxu0 0.0
      %3356 = vmatpush1.msra.mxu0 0.0
      %3357 = vmatprep.subr.mxu0 0.0
      %3358 = vmatpush1.msra.mxu0 0.0
      %3359 = vmatprep.subr.mxu0 0.0
      %3360 = vmatpush1.msra.mxu0 0.0
      %3361 = vmatprep.subr.mxu0 0.0
      %3362 = vmatpush1.msra.mxu0 0.0
      %3363 = vmatprep.subr.mxu0 0.0
      %3364 = vmatpush1.msra.mxu0 0.0
      %3365 = vmatprep.subr.mxu0 0.0
      %3366 = vmatpush1.msra.mxu0 0.0
      %3367 = vmatprep.subr.mxu0 0.0
      %3368 = vmatpush1.msra.mxu0 0.0
      %3369 = vmatprep.mubr.f32.mxu0 0.0
      %3370 = vmatmul.mubr.f32.gmra.mrb[0].mxu0 %v3289
      %v3371 = vpop.f32.mrb[0].mxu0
      %v3372 = vadd.f32 0.0, %v3371
      %v3373 = vpop.f32.mrb[0].mxu0
      %v3374 = vadd.f32 0.0, %v3373
      %3375 = vmatprep.mubr.f32.mxu0 0.0
      %3376 = vmatmul.mubr.f32.gmra.mrb[0].mxu0 %v3290
      %v3377 = vpop.f32.mrb[0].mxu0
      %v3378 = vadd.f32 0.0, %v3377
      %v3379 = vpop.f32.mrb[0].mxu0
      %v3380 = vadd.f32 0.0, %v3379
      %3381 = vmatprep.mubr.f32.mxu0 0.0
      %3382 = vmatmul.mubr.f32.gmra.mrb[0].mxu0 %v3291
      %v3383 = vpop.f32.mrb[0].mxu0
      %v3384 = vadd.f32 0.0, %v3383
      %v3385 = vpop.f32.mrb[0].mxu0
      %v3386 = vadd.f32 0.0, %v3385
      %3387 = vmatprep.mubr.f32.mxu0 0.0
      %3388 = vmatmul.mubr.f32.gmra.mrb[0].mxu0 %v3292
      %v3389 = vpop.f32.mrb[0].mxu0
      %v3390 = vadd.f32 0.0, %v3389
      %v3391 = vpop.f32.mrb[0].mxu0
      %v3392 = vadd.f32 0.0, %v3391
      %3393 = vmatprep.mubr.f32.mxu0 0.0
      %3394 = vmatmul.mubr.f32.gmra.mrb[0].mxu0 %v3293
      %v3395 = vpop.f32.mrb[0].mxu0
      %v3396 = vadd.f32 0.0, %v3395
      %v3397 = vpop.f32.mrb[0].mxu0
      %v3398 = vadd.f32 0.0, %v3397
      %3399 = vmatprep.mubr.f32.mxu0 0.0
      %3400 = vmatmul.mubr.f32.gmra.mrb[0].mxu0 %v3294
      %v3401 = vpop.f32.mrb[0].mxu0
      %v3402 = vadd.f32 0.0, %v3401
      %v3403 = vpop.f32.mrb[0].mxu0
      %v3404 = vadd.f32 0.0, %v3403
      %3405 = vmatprep.mubr.f32.mxu0 0.0
      %3406 = vmatmul.mubr.f32.gmra.mrb[0].mxu0 %v3295
      %v3407 = vpop.f32.mrb[0].mxu0
      %v3408 = vadd.f32 0.0, %v3407
      %v3409 = vpop.f32.mrb[0].mxu0
      %v3410 = vadd.f32 0.0, %v3409
      %3411 = vmatprep.mubr.f32.mxu0 0.0
      %3412 = vmatmul.mubr.f32.gmra.mrb[0].mxu0 %v3296
      %v3413 = vpop.f32.mrb[0].mxu0
      %v3414 = vadd.f32 0.0, %v3413
      %v3415 = vpop.f32.mrb[0].mxu0
      %v3416 = vadd.f32 0.0, %v3415
      %3417 = vmatprep.mubr.f32.mxu0 0.0
      %3418 = vmatmul.mubr.f32.gmra.mrb[0].mxu0 %v3297
      %v3419 = vpop.f32.mrb[0].mxu0
      %v3420 = vadd.f32 0.0, %v3419
      %v3421 = vpop.f32.mrb[0].mxu0
      %v3422 = vadd.f32 0.0, %v3421
      %3423 = vmatprep.mubr.f32.mxu0 0.0
      %3424 = vmatmul.mubr.f32.gmra.mrb[0].mxu0 %v3298
      %v3425 = vpop.f32.mrb[0].mxu0
      %v3426 = vadd.f32 0.0, %v3425
      %v3427 = vpop.f32.mrb[0].mxu0
      %v3428 = vadd.f32 0.0, %v3427
      %3429 = vmatprep.mubr.f32.mxu0 0.0
      %3430 = vmatmul.mubr.f32.gmra.mrb[0].mxu0 %v3299
      %v3431 = vpop.f32.mrb[0].mxu0
      %v3432 = vadd.f32 0.0, %v3431
      %v3433 = vpop.f32.mrb[0].mxu0
      %v3434 = vadd.f32 0.0, %v3433
      %3435 = vmatprep.mubr.f32.mxu0 0.0
      %3436 = vmatmul.mubr.f32.gmra.mrb[0].mxu0 %v3300
      %v3437 = vpop.f32.mrb[0].mxu0
      %v3438 = vadd.f32 0.0, %v3437
      %v3439 = vpop.f32.mrb[0].mxu0
      %v3440 = vadd.f32 0.0, %v3439
      %3441 = vmatprep.mubr.f32.mxu0 0.0
      %3442 = vmatmul.mubr.f32.gmra.mrb[0].mxu0 %v3301
      %v3443 = vpop.f32.mrb[0].mxu0
      %v3444 = vadd.f32 0.0, %v3443
      %v3445 = vpop.f32.mrb[0].mxu0
      %v3446 = vadd.f32 0.0, %v3445
      %3447 = vmatprep.mubr.f32.mxu0 0.0
      %3448 = vmatmul.mubr.f32.gmra.mrb[0].mxu0 %v3302
      %v3449 = vpop.f32.mrb[0].mxu0
      %v3450 = vadd.f32 0.0, %v3449
      %v3451 = vpop.f32.mrb[0].mxu0
      %v3452 = vadd.f32 0.0, %v3451
      %3453 = vmatprep.mubr.f32.mxu0 0.0
      %3454 = vmatmul.mubr.f32.gmra.mrb[0].mxu0 %v3303
      %v3455 = vpop.f32.mrb[0].mxu0
      %v3456 = vadd.f32 0.0, %v3455
      %v3457 = vpop.f32.mrb[0].mxu0
      %v3458 = vadd.f32 0.0, %v3457
      %3459 = vmatprep.mubr.f32.mxu0 0.0
      %3460 = vmatmul.mubr.f32.gmra.mrb[0].mxu0 %v3304
      %v3461 = vpop.f32.mrb[0].mxu0
      %v3462 = vadd.f32 0.0, %v3461
      %v3463 = vpop.f32.mrb[0].mxu0
      %v3464 = vadd.f32 0.0, %v3463
      %3465 = vdwg.mxu0
      %3466 = vmatprep.subr.mxu0 %v2554
      %3467 = vmatpush1.msra.mxu0 %v2552
      %3468 = vmatprep.subr.mxu0 %v2560
      %3469 = vmatpush1.msra.mxu0 %v2558
      %3470 = vmatprep.subr.mxu0 %v2566
      %3471 = vmatpush1.msra.mxu0 %v2564
      %3472 = vmatprep.subr.mxu0 %v2572
      %3473 = vmatpush1.msra.mxu0 %v2570
      %3474 = vmatprep.subr.mxu0 %v2578
      %3475 = vmatpush1.msra.mxu0 %v2576
      %3476 = vmatprep.subr.mxu0 %v2584
      %3477 = vmatpush1.msra.mxu0 %v2582
      %3478 = vmatprep.subr.mxu0 %v2590
      %3479 = vmatpush1.msra.mxu0 %v2588
      %3480 = vmatprep.subr.mxu0 %v2596
      %3481 = vmatpush1.msra.mxu0 %v2594
      %3482 = vmatprep.subr.mxu0 %v2602
      %3483 = vmatpush1.msra.mxu0 %v2600
      %3484 = vmatprep.subr.mxu0 %v2608
      %3485 = vmatpush1.msra.mxu0 %v2606
      %3486 = vmatprep.subr.mxu0 %v2614
      %3487 = vmatpush1.msra.mxu0 %v2612
      %3488 = vmatprep.subr.mxu0 %v2620
      %3489 = vmatpush1.msra.mxu0 %v2618
      %3490 = vmatprep.subr.mxu0 %v2626
      %3491 = vmatpush1.msra.mxu0 %v2624
      %3492 = vmatprep.subr.mxu0 %v2632
      %3493 = vmatpush1.msra.mxu0 %v2630
      %3494 = vmatprep.subr.mxu0 %v2638
      %3495 = vmatpush1.msra.mxu0 %v2636
      %3496 = vmatprep.subr.mxu0 %v2644
      %3497 = vmatpush1.msra.mxu0 %v2642
      %3498 = vmatprep.subr.mxu0 0.0
      %3499 = vmatpush1.msra.mxu0 0.0
      %3500 = vmatprep.subr.mxu0 0.0
      %3501 = vmatpush1.msra.mxu0 0.0
      %3502 = vmatprep.subr.mxu0 0.0
      %3503 = vmatpush1.msra.mxu0 0.0
      %3504 = vmatprep.subr.mxu0 0.0
      %3505 = vmatpush1.msra.mxu0 0.0
      %3506 = vmatprep.subr.mxu0 0.0
      %3507 = vmatpush1.msra.mxu0 0.0
      %3508 = vmatprep.subr.mxu0 0.0
      %3509 = vmatpush1.msra.mxu0 0.0
      %3510 = vmatprep.subr.mxu0 0.0
      %3511 = vmatpush1.msra.mxu0 0.0
      %3512 = vmatprep.subr.mxu0 0.0
      %3513 = vmatpush1.msra.mxu0 0.0
      %3514 = vmatprep.subr.mxu0 0.0
      %3515 = vmatpush1.msra.mxu0 0.0
      %3516 = vmatprep.subr.mxu0 0.0
      %3517 = vmatpush1.msra.mxu0 0.0
      %3518 = vmatprep.subr.mxu0 0.0
      %3519 = vmatpush1.msra.mxu0 0.0
      %3520 = vmatprep.subr.mxu0 0.0
      %3521 = vmatpush1.msra.mxu0 0.0
      %3522 = vmatprep.subr.mxu0 0.0
      %3523 = vmatpush1.msra.mxu0 0.0
      %3524 = vmatprep.subr.mxu0 0.0
      %3525 = vmatpush1.msra.mxu0 0.0
      %3526 = vmatprep.subr.mxu0 0.0
      %3527 = vmatpush1.msra.mxu0 0.0
      %3528 = vmatprep.subr.mxu0 0.0
      %3529 = vmatpush1.msra.mxu0 0.0
      %3530 = vmatprep.mubr.f32.mxu0 0.0
      %3531 = vmatmul.mubr.f32.gmra.mrb[0].mxu0 %v3289
      %v3532 = vpop.f32.mrb[0].mxu0
      %v3533 = vadd.f32 0.0, %v3532
      %v3534 = vpop.f32.mrb[0].mxu0
      %v3535 = vadd.f32 0.0, %v3534
      %3536 = vmatprep.mubr.f32.mxu0 0.0
      %3537 = vmatmul.mubr.f32.gmra.mrb[0].mxu0 %v3290
      %v3538 = vpop.f32.mrb[0].mxu0
      %v3539 = vadd.f32 0.0, %v3538
      %v3540 = vpop.f32.mrb[0].mxu0
      %v3541 = vadd.f32 0.0, %v3540
      %3542 = vmatprep.mubr.f32.mxu0 0.0
      %3543 = vmatmul.mubr.f32.gmra.mrb[0].mxu0 %v3291
      %v3544 = vpop.f32.mrb[0].mxu0
      %v3545 = vadd.f32 0.0, %v3544
      %v3546 = vpop.f32.mrb[0].mxu0
      %v3547 = vadd.f32 0.0, %v3546
      %3548 = vmatprep.mubr.f32.mxu0 0.0
      %3549 = vmatmul.mubr.f32.gmra.mrb[0].mxu0 %v3292
      %v3550 = vpop.f32.mrb[0].mxu0
      %v3551 = vadd.f32 0.0, %v3550
      %v3552 = vpop.f32.mrb[0].mxu0
      %v3553 = vadd.f32 0.0, %v3552
      %3554 = vmatprep.mubr.f32.mxu0 0.0
      %3555 = vmatmul.mubr.f32.gmra.mrb[0].mxu0 %v3293
      %v3556 = vpop.f32.mrb[0].mxu0
      %v3557 = vadd.f32 0.0, %v3556
      %v3558 = vpop.f32.mrb[0].mxu0
      %v3559 = vadd.f32 0.0, %v3558
      %3560 = vmatprep.mubr.f32.mxu0 0.0
      %3561 = vmatmul.mubr.f32.gmra.mrb[0].mxu0 %v3294
      %v3562 = vpop.f32.mrb[0].mxu0
      %v3563 = vadd.f32 0.0, %v3562
      %v3564 = vpop.f32.mrb[0].mxu0
      %v3565 = vadd.f32 0.0, %v3564
      %3566 = vmatprep.mubr.f32.mxu0 0.0
      %3567 = vmatmul.mubr.f32.gmra.mrb[0].mxu0 %v3295
      %v3568 = vpop.f32.mrb[0].mxu0
      %v3569 = vadd.f32 0.0, %v3568
      %v3570 = vpop.f32.mrb[0].mxu0
      %v3571 = vadd.f32 0.0, %v3570
      %3572 = vmatprep.mubr.f32.mxu0 0.0
      %3573 = vmatmul.mubr.f32.gmra.mrb[0].mxu0 %v3296
      %v3574 = vpop.f32.mrb[0].mxu0
      %v3575 = vadd.f32 0.0, %v3574
      %v3576 = vpop.f32.mrb[0].mxu0
      %v3577 = vadd.f32 0.0, %v3576
      %3578 = vmatprep.mubr.f32.mxu0 0.0
      %3579 = vmatmul.mubr.f32.gmra.mrb[0].mxu0 %v3297
      %v3580 = vpop.f32.mrb[0].mxu0
      %v3581 = vadd.f32 0.0, %v3580
      %v3582 = vpop.f32.mrb[0].mxu0
      %v3583 = vadd.f32 0.0, %v3582
      %3584 = vmatprep.mubr.f32.mxu0 0.0
      %3585 = vmatmul.mubr.f32.gmra.mrb[0].mxu0 %v3298
      %v3586 = vpop.f32.mrb[0].mxu0
      %v3587 = vadd.f32 0.0, %v3586
      %v3588 = vpop.f32.mrb[0].mxu0
      %v3589 = vadd.f32 0.0, %v3588
      %3590 = vmatprep.mubr.f32.mxu0 0.0
      %3591 = vmatmul.mubr.f32.gmra.mrb[0].mxu0 %v3299
      %v3592 = vpop.f32.mrb[0].mxu0
      %v3593 = vadd.f32 0.0, %v3592
      %v3594 = vpop.f32.mrb[0].mxu0
      %v3595 = vadd.f32 0.0, %v3594
      %3596 = vmatprep.mubr.f32.mxu0 0.0
      %3597 = vmatmul.mubr.f32.gmra.mrb[0].mxu0 %v3300
      %v3598 = vpop.f32.mrb[0].mxu0
      %v3599 = vadd.f32 0.0, %v3598
      %v3600 = vpop.f32.mrb[0].mxu0
      %v3601 = vadd.f32 0.0, %v3600
      %3602 = vmatprep.mubr.f32.mxu0 0.0
      %3603 = vmatmul.mubr.f32.gmra.mrb[0].mxu0 %v3301
      %v3604 = vpop.f32.mrb[0].mxu0
      %v3605 = vadd.f32 0.0, %v3604
      %v3606 = vpop.f32.mrb[0].mxu0
      %v3607 = vadd.f32 0.0, %v3606
      %3608 = vmatprep.mubr.f32.mxu0 0.0
      %3609 = vmatmul.mubr.f32.gmra.mrb[0].mxu0 %v3302
      %v3610 = vpop.f32.mrb[0].mxu0
      %v3611 = vadd.f32 0.0, %v3610
      %v3612 = vpop.f32.mrb[0].mxu0
      %v3613 = vadd.f32 0.0, %v3612
      %3614 = vmatprep.mubr.f32.mxu0 0.0
      %3615 = vmatmul.mubr.f32.gmra.mrb[0].mxu0 %v3303
      %v3616 = vpop.f32.mrb[0].mxu0
      %v3617 = vadd.f32 0.0, %v3616
      %v3618 = vpop.f32.mrb[0].mxu0
      %v3619 = vadd.f32 0.0, %v3618
      %3620 = vmatprep.mubr.f32.mxu0 0.0
      %3621 = vmatmul.mubr.f32.gmra.mrb[0].mxu0 %v3304
      %v3622 = vpop.f32.mrb[0].mxu0
      %v3623 = vadd.f32 0.0, %v3622
      %v3624 = vpop.f32.mrb[0].mxu0
      %v3625 = vadd.f32 0.0, %v3624
      %3626 = vdwg.mxu0
      %3627 = vmatprep.subr.mxu0 %v2715
      %3628 = vmatpush1.msra.mxu0 %v2713
      %3629 = vmatprep.subr.mxu0 %v2721
      %3630 = vmatpush1.msra.mxu0 %v2719
      %3631 = vmatprep.subr.mxu0 %v2727
      %3632 = vmatpush1.msra.mxu0 %v2725
      %3633 = vmatprep.subr.mxu0 %v2733
      %3634 = vmatpush1.msra.mxu0 %v2731
      %3635 = vmatprep.subr.mxu0 %v2739
      %3636 = vmatpush1.msra.mxu0 %v2737
      %3637 = vmatprep.subr.mxu0 %v2745
      %3638 = vmatpush1.msra.mxu0 %v2743
      %3639 = vmatprep.subr.mxu0 %v2751
      %3640 = vmatpush1.msra.mxu0 %v2749
      %3641 = vmatprep.subr.mxu0 %v2757
      %3642 = vmatpush1.msra.mxu0 %v2755
      %3643 = vmatprep.subr.mxu0 %v2763
      %3644 = vmatpush1.msra.mxu0 %v2761
      %3645 = vmatprep.subr.mxu0 %v2769
      %3646 = vmatpush1.msra.mxu0 %v2767
      %3647 = vmatprep.subr.mxu0 %v2775
      %3648 = vmatpush1.msra.mxu0 %v2773
      %3649 = vmatprep.subr.mxu0 %v2781
      %3650 = vmatpush1.msra.mxu0 %v2779
      %3651 = vmatprep.subr.mxu0 %v2787
      %3652 = vmatpush1.msra.mxu0 %v2785
      %3653 = vmatprep.subr.mxu0 %v2793
      %3654 = vmatpush1.msra.mxu0 %v2791
      %3655 = vmatprep.subr.mxu0 %v2799
      %3656 = vmatpush1.msra.mxu0 %v2797
      %3657 = vmatprep.subr.mxu0 %v2805
      %3658 = vmatpush1.msra.mxu0 %v2803
      %3659 = vmatprep.subr.mxu0 0.0
      %3660 = vmatpush1.msra.mxu0 0.0
      %3661 = vmatprep.subr.mxu0 0.0
      %3662 = vmatpush1.msra.mxu0 0.0
      %3663 = vmatprep.subr.mxu0 0.0
      %3664 = vmatpush1.msra.mxu0 0.0
      %3665 = vmatprep.subr.mxu0 0.0
      %3666 = vmatpush1.msra.mxu0 0.0
      %3667 = vmatprep.subr.mxu0 0.0
      %3668 = vmatpush1.msra.mxu0 0.0
      %3669 = vmatprep.subr.mxu0 0.0
      %3670 = vmatpush1.msra.mxu0 0.0
      %3671 = vmatprep.subr.mxu0 0.0
      %3672 = vmatpush1.msra.mxu0 0.0
      %3673 = vmatprep.subr.mxu0 0.0
      %3674 = vmatpush1.msra.mxu0 0.0
      %3675 = vmatprep.subr.mxu0 0.0
      %3676 = vmatpush1.msra.mxu0 0.0
      %3677 = vmatprep.subr.mxu0 0.0
      %3678 = vmatpush1.msra.mxu0 0.0
      %3679 = vmatprep.subr.mxu0 0.0
      %3680 = vmatpush1.msra.mxu0 0.0
      %3681 = vmatprep.subr.mxu0 0.0
      %3682 = vmatpush1.msra.mxu0 0.0
      %3683 = vmatprep.subr.mxu0 0.0
      %3684 = vmatpush1.msra.mxu0 0.0
      %3685 = vmatprep.subr.mxu0 0.0
      %3686 = vmatpush1.msra.mxu0 0.0
      %3687 = vmatprep.subr.mxu0 0.0
      %3688 = vmatpush1.msra.mxu0 0.0
      %3689 = vmatprep.subr.mxu0 0.0
      %3690 = vmatpush1.msra.mxu0 0.0
      %3691 = vmatprep.mubr.f32.mxu0 0.0
      %3692 = vmatmul.mubr.f32.gmra.mrb[0].mxu0 %v3289
      %v3693 = vpop.f32.mrb[0].mxu0
      %v3694 = vadd.f32 0.0, %v3693
      %v3695 = vpop.f32.mrb[0].mxu0
      %v3696 = vadd.f32 0.0, %v3695
      %3697 = vmatprep.mubr.f32.mxu0 0.0
      %3698 = vmatmul.mubr.f32.gmra.mrb[0].mxu0 %v3290
      %v3699 = vpop.f32.mrb[0].mxu0
      %v3700 = vadd.f32 0.0, %v3699
      %v3701 = vpop.f32.mrb[0].mxu0
      %v3702 = vadd.f32 0.0, %v3701
      %3703 = vmatprep.mubr.f32.mxu0 0.0
      %3704 = vmatmul.mubr.f32.gmra.mrb[0].mxu0 %v3291
      %v3705 = vpop.f32.mrb[0].mxu0
      %v3706 = vadd.f32 0.0, %v3705
      %v3707 = vpop.f32.mrb[0].mxu0
      %v3708 = vadd.f32 0.0, %v3707
      %3709 = vmatprep.mubr.f32.mxu0 0.0
      %3710 = vmatmul.mubr.f32.gmra.mrb[0].mxu0 %v3292
      %v3711 = vpop.f32.mrb[0].mxu0
      %v3712 = vadd.f32 0.0, %v3711
      %v3713 = vpop.f32.mrb[0].mxu0
      %v3714 = vadd.f32 0.0, %v3713
      %3715 = vmatprep.mubr.f32.mxu0 0.0
      %3716 = vmatmul.mubr.f32.gmra.mrb[0].mxu0 %v3293
      %v3717 = vpop.f32.mrb[0].mxu0
      %v3718 = vadd.f32 0.0, %v3717
      %v3719 = vpop.f32.mrb[0].mxu0
      %v3720 = vadd.f32 0.0, %v3719
      %3721 = vmatprep.mubr.f32.mxu0 0.0
      %3722 = vmatmul.mubr.f32.gmra.mrb[0].mxu0 %v3294
      %v3723 = vpop.f32.mrb[0].mxu0
      %v3724 = vadd.f32 0.0, %v3723
      %v3725 = vpop.f32.mrb[0].mxu0
      %v3726 = vadd.f32 0.0, %v3725
      %3727 = vmatprep.mubr.f32.mxu0 0.0
      %3728 = vmatmul.mubr.f32.gmra.mrb[0].mxu0 %v3295
      %v3729 = vpop.f32.mrb[0].mxu0
      %v3730 = vadd.f32 0.0, %v3729
      %v3731 = vpop.f32.mrb[0].mxu0
      %v3732 = vadd.f32 0.0, %v3731
      %3733 = vmatprep.mubr.f32.mxu0 0.0
      %3734 = vmatmul.mubr.f32.gmra.mrb[0].mxu0 %v3296
      %v3735 = vpop.f32.mrb[0].mxu0
      %v3736 = vadd.f32 0.0, %v3735
      %v3737 = vpop.f32.mrb[0].mxu0
      %v3738 = vadd.f32 0.0, %v3737
      %3739 = vmatprep.mubr.f32.mxu0 0.0
      %3740 = vmatmul.mubr.f32.gmra.mrb[0].mxu0 %v3297
      %v3741 = vpop.f32.mrb[0].mxu0
      %v3742 = vadd.f32 0.0, %v3741
      %v3743 = vpop.f32.mrb[0].mxu0
      %v3744 = vadd.f32 0.0, %v3743
      %3745 = vmatprep.mubr.f32.mxu0 0.0
      %3746 = vmatmul.mubr.f32.gmra.mrb[0].mxu0 %v3298
      %v3747 = vpop.f32.mrb[0].mxu0
      %v3748 = vadd.f32 0.0, %v3747
      %v3749 = vpop.f32.mrb[0].mxu0
      %v3750 = vadd.f32 0.0, %v3749
      %3751 = vmatprep.mubr.f32.mxu0 0.0
      %3752 = vmatmul.mubr.f32.gmra.mrb[0].mxu0 %v3299
      %v3753 = vpop.f32.mrb[0].mxu0
      %v3754 = vadd.f32 0.0, %v3753
      %v3755 = vpop.f32.mrb[0].mxu0
      %v3756 = vadd.f32 0.0, %v3755
      %3757 = vmatprep.mubr.f32.mxu0 0.0
      %3758 = vmatmul.mubr.f32.gmra.mrb[0].mxu0 %v3300
      %v3759 = vpop.f32.mrb[0].mxu0
      %v3760 = vadd.f32 0.0, %v3759
      %v3761 = vpop.f32.mrb[0].mxu0
      %v3762 = vadd.f32 0.0, %v3761
      %3763 = vmatprep.mubr.f32.mxu0 0.0
      %3764 = vmatmul.mubr.f32.gmra.mrb[0].mxu0 %v3301
      %v3765 = vpop.f32.mrb[0].mxu0
      %v3766 = vadd.f32 0.0, %v3765
      %v3767 = vpop.f32.mrb[0].mxu0
      %v3768 = vadd.f32 0.0, %v3767
      %3769 = vmatprep.mubr.f32.mxu0 0.0
      %3770 = vmatmul.mubr.f32.gmra.mrb[0].mxu0 %v3302
      %v3771 = vpop.f32.mrb[0].mxu0
      %v3772 = vadd.f32 0.0, %v3771
      %v3773 = vpop.f32.mrb[0].mxu0
      %v3774 = vadd.f32 0.0, %v3773
      %3775 = vmatprep.mubr.f32.mxu0 0.0
      %3776 = vmatmul.mubr.f32.gmra.mrb[0].mxu0 %v3303
      %v3777 = vpop.f32.mrb[0].mxu0
      %v3778 = vadd.f32 0.0, %v3777
      %v3779 = vpop.f32.mrb[0].mxu0
      %v3780 = vadd.f32 0.0, %v3779
      %3781 = vmatprep.mubr.f32.mxu0 0.0
      %3782 = vmatmul.mubr.f32.gmra.mrb[0].mxu0 %v3304
      %v3783 = vpop.f32.mrb[0].mxu0
      %v3784 = vadd.f32 0.0, %v3783
      %v3785 = vpop.f32.mrb[0].mxu0
      %v3786 = vadd.f32 0.0, %v3785
      %3787 = vdwg.mxu0
      %3788 = vmatprep.subr.mxu0 %v2876
      %3789 = vmatpush1.msra.mxu0 %v2874
      %3790 = vmatprep.subr.mxu0 %v2882
      %3791 = vmatpush1.msra.mxu0 %v2880
      %3792 = vmatprep.subr.mxu0 %v2888
      %3793 = vmatpush1.msra.mxu0 %v2886
      %3794 = vmatprep.subr.mxu0 %v2894
      %3795 = vmatpush1.msra.mxu0 %v2892
      %3796 = vmatprep.subr.mxu0 %v2900
      %3797 = vmatpush1.msra.mxu0 %v2898
      %3798 = vmatprep.subr.mxu0 %v2906
      %3799 = vmatpush1.msra.mxu0 %v2904
      %3800 = vmatprep.subr.mxu0 %v2912
      %3801 = vmatpush1.msra.mxu0 %v2910
      %3802 = vmatprep.subr.mxu0 %v2918
      %3803 = vmatpush1.msra.mxu0 %v2916
      %3804 = vmatprep.subr.mxu0 %v2924
      %3805 = vmatpush1.msra.mxu0 %v2922
      %3806 = vmatprep.subr.mxu0 %v2930
      %3807 = vmatpush1.msra.mxu0 %v2928
      %3808 = vmatprep.subr.mxu0 %v2936
      %3809 = vmatpush1.msra.mxu0 %v2934
      %3810 = vmatprep.subr.mxu0 %v2942
      %3811 = vmatpush1.msra.mxu0 %v2940
      %3812 = vmatprep.subr.mxu0 %v2948
      %3813 = vmatpush1.msra.mxu0 %v2946
      %3814 = vmatprep.subr.mxu0 %v2954
      %3815 = vmatpush1.msra.mxu0 %v2952
      %3816 = vmatprep.subr.mxu0 %v2960
      %3817 = vmatpush1.msra.mxu0 %v2958
      %3818 = vmatprep.subr.mxu0 %v2966
      %3819 = vmatpush1.msra.mxu0 %v2964
      %3820 = vmatprep.subr.mxu0 0.0
      %3821 = vmatpush1.msra.mxu0 0.0
      %3822 = vmatprep.subr.mxu0 0.0
      %3823 = vmatpush1.msra.mxu0 0.0
      %3824 = vmatprep.subr.mxu0 0.0
      %3825 = vmatpush1.msra.mxu0 0.0
      %3826 = vmatprep.subr.mxu0 0.0
      %3827 = vmatpush1.msra.mxu0 0.0
      %3828 = vmatprep.subr.mxu0 0.0
      %3829 = vmatpush1.msra.mxu0 0.0
      %3830 = vmatprep.subr.mxu0 0.0
      %3831 = vmatpush1.msra.mxu0 0.0
      %3832 = vmatprep.subr.mxu0 0.0
      %3833 = vmatpush1.msra.mxu0 0.0
      %3834 = vmatprep.subr.mxu0 0.0
      %3835 = vmatpush1.msra.mxu0 0.0
      %3836 = vmatprep.subr.mxu0 0.0
      %3837 = vmatpush1.msra.mxu0 0.0
      %3838 = vmatprep.subr.mxu0 0.0
      %3839 = vmatpush1.msra.mxu0 0.0
      %3840 = vmatprep.subr.mxu0 0.0
      %3841 = vmatpush1.msra.mxu0 0.0
      %3842 = vmatprep.subr.mxu0 0.0
      %3843 = vmatpush1.msra.mxu0 0.0
      %3844 = vmatprep.subr.mxu0 0.0
      %3845 = vmatpush1.msra.mxu0 0.0
      %3846 = vmatprep.subr.mxu0 0.0
      %3847 = vmatpush1.msra.mxu0 0.0
      %3848 = vmatprep.subr.mxu0 0.0
      %3849 = vmatpush1.msra.mxu0 0.0
      %3850 = vmatprep.subr.mxu0 0.0
      %3851 = vmatpush1.msra.mxu0 0.0
      %3852 = vmatprep.mubr.f32.mxu0 0.0
      %3853 = vmatmul.mubr.f32.gmra.mrb[0].mxu0 %v3289
      %v3854 = vpop.f32.mrb[0].mxu0
      %v3855 = vadd.f32 0.0, %v3854
      %v3856 = vpop.f32.mrb[0].mxu0
      %v3857 = vadd.f32 0.0, %v3856
      %3858 = vmatprep.mubr.f32.mxu0 0.0
      %3859 = vmatmul.mubr.f32.gmra.mrb[0].mxu0 %v3290
      %v3860 = vpop.f32.mrb[0].mxu0
      %v3861 = vadd.f32 0.0, %v3860
      %v3862 = vpop.f32.mrb[0].mxu0
      %v3863 = vadd.f32 0.0, %v3862
      %3864 = vmatprep.mubr.f32.mxu0 0.0
      %3865 = vmatmul.mubr.f32.gmra.mrb[0].mxu0 %v3291
      %v3866 = vpop.f32.mrb[0].mxu0
      %v3867 = vadd.f32 0.0, %v3866
      %v3868 = vpop.f32.mrb[0].mxu0
      %v3869 = vadd.f32 0.0, %v3868
      %3870 = vmatprep.mubr.f32.mxu0 0.0
      %3871 = vmatmul.mubr.f32.gmra.mrb[0].mxu0 %v3292
      %v3872 = vpop.f32.mrb[0].mxu0
      %v3873 = vadd.f32 0.0, %v3872
      %v3874 = vpop.f32.mrb[0].mxu0
      %v3875 = vadd.f32 0.0, %v3874
      %3876 = vmatprep.mubr.f32.mxu0 0.0
      %3877 = vmatmul.mubr.f32.gmra.mrb[0].mxu0 %v3293
      %v3878 = vpop.f32.mrb[0].mxu0
      %v3879 = vadd.f32 0.0, %v3878
      %v3880 = vpop.f32.mrb[0].mxu0
      %v3881 = vadd.f32 0.0, %v3880
      %3882 = vmatprep.mubr.f32.mxu0 0.0
      %3883 = vmatmul.mubr.f32.gmra.mrb[0].mxu0 %v3294
      %v3884 = vpop.f32.mrb[0].mxu0
      %v3885 = vadd.f32 0.0, %v3884
      %v3886 = vpop.f32.mrb[0].mxu0
      %v3887 = vadd.f32 0.0, %v3886
      %3888 = vmatprep.mubr.f32.mxu0 0.0
      %3889 = vmatmul.mubr.f32.gmra.mrb[0].mxu0 %v3295
      %v3890 = vpop.f32.mrb[0].mxu0
      %v3891 = vadd.f32 0.0, %v3890
      %v3892 = vpop.f32.mrb[0].mxu0
      %v3893 = vadd.f32 0.0, %v3892
      %3894 = vmatprep.mubr.f32.mxu0 0.0
      %3895 = vmatmul.mubr.f32.gmra.mrb[0].mxu0 %v3296
      %v3896 = vpop.f32.mrb[0].mxu0
      %v3897 = vadd.f32 0.0, %v3896
      %v3898 = vpop.f32.mrb[0].mxu0
      %v3899 = vadd.f32 0.0, %v3898
      %3900 = vmatprep.mubr.f32.mxu0 0.0
      %3901 = vmatmul.mubr.f32.gmra.mrb[0].mxu0 %v3297
      %v3902 = vpop.f32.mrb[0].mxu0
      %v3903 = vadd.f32 0.0, %v3902
      %v3904 = vpop.f32.mrb[0].mxu0
      %v3905 = vadd.f32 0.0, %v3904
      %3906 = vmatprep.mubr.f32.mxu0 0.0
      %3907 = vmatmul.mubr.f32.gmra.mrb[0].mxu0 %v3298
      %v3908 = vpop.f32.mrb[0].mxu0
      %v3909 = vadd.f32 0.0, %v3908
      %v3910 = vpop.f32.mrb[0].mxu0
      %v3911 = vadd.f32 0.0, %v3910
      %3912 = vmatprep.mubr.f32.mxu0 0.0
      %3913 = vmatmul.mubr.f32.gmra.mrb[0].mxu0 %v3299
      %v3914 = vpop.f32.mrb[0].mxu0
      %v3915 = vadd.f32 0.0, %v3914
      %v3916 = vpop.f32.mrb[0].mxu0
      %v3917 = vadd.f32 0.0, %v3916
      %3918 = vmatprep.mubr.f32.mxu0 0.0
      %3919 = vmatmul.mubr.f32.gmra.mrb[0].mxu0 %v3300
      %v3920 = vpop.f32.mrb[0].mxu0
      %v3921 = vadd.f32 0.0, %v3920
      %v3922 = vpop.f32.mrb[0].mxu0
      %v3923 = vadd.f32 0.0, %v3922
      %3924 = vmatprep.mubr.f32.mxu0 0.0
      %3925 = vmatmul.mubr.f32.gmra.mrb[0].mxu0 %v3301
      %v3926 = vpop.f32.mrb[0].mxu0
      %v3927 = vadd.f32 0.0, %v3926
      %v3928 = vpop.f32.mrb[0].mxu0
      %v3929 = vadd.f32 0.0, %v3928
      %3930 = vmatprep.mubr.f32.mxu0 0.0
      %3931 = vmatmul.mubr.f32.gmra.mrb[0].mxu0 %v3302
      %v3932 = vpop.f32.mrb[0].mxu0
      %v3933 = vadd.f32 0.0, %v3932
      %v3934 = vpop.f32.mrb[0].mxu0
      %v3935 = vadd.f32 0.0, %v3934
      %3936 = vmatprep.mubr.f32.mxu0 0.0
      %3937 = vmatmul.mubr.f32.gmra.mrb[0].mxu0 %v3303
      %v3938 = vpop.f32.mrb[0].mxu0
      %v3939 = vadd.f32 0.0, %v3938
      %v3940 = vpop.f32.mrb[0].mxu0
      %v3941 = vadd.f32 0.0, %v3940
      %3942 = vmatprep.mubr.f32.mxu0 0.0
      %3943 = vmatmul.mubr.f32.gmra.mrb[0].mxu0 %v3304
      %v3944 = vpop.f32.mrb[0].mxu0
      %v3945 = vadd.f32 0.0, %v3944
      %v3946 = vpop.f32.mrb[0].mxu0
      %v3947 = vadd.f32 0.0, %v3946
      %3948 = vdwg.mxu0
      %3949 = vmatprep.subr.mxu0 %v3037
      %3950 = vmatpush1.msra.mxu0 %v3035
      %3951 = vmatprep.subr.mxu0 %v3043
      %3952 = vmatpush1.msra.mxu0 %v3041
      %3953 = vmatprep.subr.mxu0 %v3049
      %3954 = vmatpush1.msra.mxu0 %v3047
      %3955 = vmatprep.subr.mxu0 %v3055
      %3956 = vmatpush1.msra.mxu0 %v3053
      %3957 = vmatprep.subr.mxu0 %v3061
      %3958 = vmatpush1.msra.mxu0 %v3059
      %3959 = vmatprep.subr.mxu0 %v3067
      %3960 = vmatpush1.msra.mxu0 %v3065
      %3961 = vmatprep.subr.mxu0 %v3073
      %3962 = vmatpush1.msra.mxu0 %v3071
      %3963 = vmatprep.subr.mxu0 %v3079
      %3964 = vmatpush1.msra.mxu0 %v3077
      %3965 = vmatprep.subr.mxu0 %v3085
      %3966 = vmatpush1.msra.mxu0 %v3083
      %3967 = vmatprep.subr.mxu0 %v3091
      %3968 = vmatpush1.msra.mxu0 %v3089
      %3969 = vmatprep.subr.mxu0 %v3097
      %3970 = vmatpush1.msra.mxu0 %v3095
      %3971 = vmatprep.subr.mxu0 %v3103
      %3972 = vmatpush1.msra.mxu0 %v3101
      %3973 = vmatprep.subr.mxu0 %v3109
      %3974 = vmatpush1.msra.mxu0 %v3107
      %3975 = vmatprep.subr.mxu0 %v3115
      %3976 = vmatpush1.msra.mxu0 %v3113
      %3977 = vmatprep.subr.mxu0 %v3121
      %3978 = vmatpush1.msra.mxu0 %v3119
      %3979 = vmatprep.subr.mxu0 %v3127
      %3980 = vmatpush1.msra.mxu0 %v3125
      %3981 = vmatprep.subr.mxu0 0.0
      %3982 = vmatpush1.msra.mxu0 0.0
      %3983 = vmatprep.subr.mxu0 0.0
      %3984 = vmatpush1.msra.mxu0 0.0
      %3985 = vmatprep.subr.mxu0 0.0
      %3986 = vmatpush1.msra.mxu0 0.0
      %3987 = vmatprep.subr.mxu0 0.0
      %3988 = vmatpush1.msra.mxu0 0.0
      %3989 = vmatprep.subr.mxu0 0.0
      %3990 = vmatpush1.msra.mxu0 0.0
      %3991 = vmatprep.subr.mxu0 0.0
      %3992 = vmatpush1.msra.mxu0 0.0
      %3993 = vmatprep.subr.mxu0 0.0
      %3994 = vmatpush1.msra.mxu0 0.0
      %3995 = vmatprep.subr.mxu0 0.0
      %3996 = vmatpush1.msra.mxu0 0.0
      %3997 = vmatprep.subr.mxu0 0.0
      %3998 = vmatpush1.msra.mxu0 0.0
      %3999 = vmatprep.subr.mxu0 0.0
      %4000 = vmatpush1.msra.mxu0 0.0
      %4001 = vmatprep.subr.mxu0 0.0
      %4002 = vmatpush1.msra.mxu0 0.0
      %4003 = vmatprep.subr.mxu0 0.0
      %4004 = vmatpush1.msra.mxu0 0.0
      %4005 = vmatprep.subr.mxu0 0.0
      %4006 = vmatpush1.msra.mxu0 0.0
      %4007 = vmatprep.subr.mxu0 0.0
      %4008 = vmatpush1.msra.mxu0 0.0
      %4009 = vmatprep.subr.mxu0 0.0
      %4010 = vmatpush1.msra.mxu0 0.0
      %4011 = vmatprep.subr.mxu0 0.0
      %4012 = vmatpush1.msra.mxu0 0.0
      %4013 = vmatprep.mubr.f32.mxu0 0.0
      %4014 = vmatmul.mubr.f32.gmra.mrb[0].mxu0 %v3289
      %v4015 = vpop.f32.mrb[0].mxu0
      %v4016 = vadd.f32 0.0, %v4015
      %v4017 = vpop.f32.mrb[0].mxu0
      %v4018 = vadd.f32 0.0, %v4017
      %4019 = vmatprep.mubr.f32.mxu0 0.0
      %4020 = vmatmul.mubr.f32.gmra.mrb[0].mxu0 %v3290
      %v4021 = vpop.f32.mrb[0].mxu0
      %v4022 = vadd.f32 0.0, %v4021
      %v4023 = vpop.f32.mrb[0].mxu0
      %v4024 = vadd.f32 0.0, %v4023
      %4025 = vmatprep.mubr.f32.mxu0 0.0
      %4026 = vmatmul.mubr.f32.gmra.mrb[0].mxu0 %v3291
      %v4027 = vpop.f32.mrb[0].mxu0
      %v4028 = vadd.f32 0.0, %v4027
      %v4029 = vpop.f32.mrb[0].mxu0
      %v4030 = vadd.f32 0.0, %v4029
      %4031 = vmatprep.mubr.f32.mxu0 0.0
      %4032 = vmatmul.mubr.f32.gmra.mrb[0].mxu0 %v3292
      %v4033 = vpop.f32.mrb[0].mxu0
      %v4034 = vadd.f32 0.0, %v4033
      %v4035 = vpop.f32.mrb[0].mxu0
      %v4036 = vadd.f32 0.0, %v4035
      %4037 = vmatprep.mubr.f32.mxu0 0.0
      %4038 = vmatmul.mubr.f32.gmra.mrb[0].mxu0 %v3293
      %v4039 = vpop.f32.mrb[0].mxu0
      %v4040 = vadd.f32 0.0, %v4039
      %v4041 = vpop.f32.mrb[0].mxu0
      %v4042 = vadd.f32 0.0, %v4041
      %4043 = vmatprep.mubr.f32.mxu0 0.0
      %4044 = vmatmul.mubr.f32.gmra.mrb[0].mxu0 %v3294
      %v4045 = vpop.f32.mrb[0].mxu0
      %v4046 = vadd.f32 0.0, %v4045
      %v4047 = vpop.f32.mrb[0].mxu0
      %v4048 = vadd.f32 0.0, %v4047
      %4049 = vmatprep.mubr.f32.mxu0 0.0
      %4050 = vmatmul.mubr.f32.gmra.mrb[0].mxu0 %v3295
      %v4051 = vpop.f32.mrb[0].mxu0
      %v4052 = vadd.f32 0.0, %v4051
      %v4053 = vpop.f32.mrb[0].mxu0
      %v4054 = vadd.f32 0.0, %v4053
      %4055 = vmatprep.mubr.f32.mxu0 0.0
      %4056 = vmatmul.mubr.f32.gmra.mrb[0].mxu0 %v3296
      %v4057 = vpop.f32.mrb[0].mxu0
      %v4058 = vadd.f32 0.0, %v4057
      %v4059 = vpop.f32.mrb[0].mxu0
      %v4060 = vadd.f32 0.0, %v4059
      %4061 = vmatprep.mubr.f32.mxu0 0.0
      %4062 = vmatmul.mubr.f32.gmra.mrb[0].mxu0 %v3297
      %v4063 = vpop.f32.mrb[0].mxu0
      %v4064 = vadd.f32 0.0, %v4063
      %v4065 = vpop.f32.mrb[0].mxu0
      %v4066 = vadd.f32 0.0, %v4065
      %4067 = vmatprep.mubr.f32.mxu0 0.0
      %4068 = vmatmul.mubr.f32.gmra.mrb[0].mxu0 %v3298
      %v4069 = vpop.f32.mrb[0].mxu0
      %v4070 = vadd.f32 0.0, %v4069
      %v4071 = vpop.f32.mrb[0].mxu0
      %v4072 = vadd.f32 0.0, %v4071
      %4073 = vmatprep.mubr.f32.mxu0 0.0
      %4074 = vmatmul.mubr.f32.gmra.mrb[0].mxu0 %v3299
      %v4075 = vpop.f32.mrb[0].mxu0
      %v4076 = vadd.f32 0.0, %v4075
      %v4077 = vpop.f32.mrb[0].mxu0
      %v4078 = vadd.f32 0.0, %v4077
      %4079 = vmatprep.mubr.f32.mxu0 0.0
      %4080 = vmatmul.mubr.f32.gmra.mrb[0].mxu0 %v3300
      %v4081 = vpop.f32.mrb[0].mxu0
      %v4082 = vadd.f32 0.0, %v4081
      %v4083 = vpop.f32.mrb[0].mxu0
      %v4084 = vadd.f32 0.0, %v4083
      %4085 = vmatprep.mubr.f32.mxu0 0.0
      %4086 = vmatmul.mubr.f32.gmra.mrb[0].mxu0 %v3301
      %v4087 = vpop.f32.mrb[0].mxu0
      %v4088 = vadd.f32 0.0, %v4087
      %v4089 = vpop.f32.mrb[0].mxu0
      %v4090 = vadd.f32 0.0, %v4089
      %4091 = vmatprep.mubr.f32.mxu0 0.0
      %4092 = vmatmul.mubr.f32.gmra.mrb[0].mxu0 %v3302
      %v4093 = vpop.f32.mrb[0].mxu0
      %v4094 = vadd.f32 0.0, %v4093
      %v4095 = vpop.f32.mrb[0].mxu0
      %v4096 = vadd.f32 0.0, %v4095
      %4097 = vmatprep.mubr.f32.mxu0 0.0
      %4098 = vmatmul.mubr.f32.gmra.mrb[0].mxu0 %v3303
      %v4099 = vpop.f32.mrb[0].mxu0
      %v4100 = vadd.f32 0.0, %v4099
      %v4101 = vpop.f32.mrb[0].mxu0
      %v4102 = vadd.f32 0.0, %v4101
      %4103 = vmatprep.mubr.f32.mxu0 0.0
      %4104 = vmatmul.mubr.f32.gmra.mrb[0].mxu0 %v3304
      %v4105 = vpop.f32.mrb[0].mxu0
      %v4106 = vadd.f32 0.0, %v4105
      %v4107 = vpop.f32.mrb[0].mxu0
      %v4108 = vadd.f32 0.0, %v4107
      %4109 = vdwg.mxu0
      %v4110 = vadd.f32 %v3372, %v1063
      %v4111 = vadd.f32 %v3378, %v1068
      %v4112 = vadd.f32 %v3384, %v1073
      %v4113 = vadd.f32 %v3390, %v1078
      %v4114 = vadd.f32 %v3396, %v1083
      %v4115 = vadd.f32 %v3402, %v1088
      %v4116 = vadd.f32 %v3408, %v1093
      %v4117 = vadd.f32 %v3414, %v1098
      %v4118 = vadd.f32 %v3420, %v1103
      %v4119 = vadd.f32 %v3426, %v1108
      %v4120 = vadd.f32 %v3432, %v1113
      %v4121 = vadd.f32 %v3438, %v1118
      %v4122 = vadd.f32 %v3444, %v1123
      %v4123 = vadd.f32 %v3450, %v1128
      %v4124 = vadd.f32 %v3456, %v1133
      %v4125 = vadd.f32 %v3462, %v1138
      %v4126 = vtanh.pop %v4110
      %v4127 = vtanh.pop %v4111
      %v4128 = vtanh.pop %v4112
      %v4129 = vtanh.pop %v4113
      %v4130 = vtanh.pop %v4114
      %v4131 = vtanh.pop %v4115
      %v4132 = vtanh.pop %v4116
      %v4133 = vtanh.pop %v4117
      %v4134 = vtanh.pop %v4118
      %v4135 = vtanh.pop %v4119
      %v4136 = vtanh.pop %v4120
      %v4137 = vtanh.pop %v4121
      %v4138 = vtanh.pop %v4122
      %v4139 = vtanh.pop %v4123
      %v4140 = vtanh.pop %v4124
      %v4141 = vtanh.pop %v4125
      %4142 = vset.pattern.permute.xlu0 6
      %4143 = vperm.xlu0 %4142, %v432
      %v4144 = vpop.permute.xlu0 %4143
      %4146 = vset.pattern.permute.xlu0 6
      %4147 = vperm.xlu0 %4146, %v433
      %v4148 = vpop.permute.xlu0 %4147
      %4150 = vset.pattern.permute.xlu0 6
      %4151 = vperm.xlu0 %4150, %v434
      %v4152 = vpop.permute.xlu0 %4151
      %4154 = vset.pattern.permute.xlu0 6
      %4155 = vperm.xlu0 %4154, %v435
      %v4156 = vpop.permute.xlu0 %4155
      %4158 = vset.pattern.permute.xlu0 6
      %4159 = vperm.xlu0 %4158, %v436
      %v4160 = vpop.permute.xlu0 %4159
      %4162 = vset.pattern.permute.xlu0 6
      %4163 = vperm.xlu0 %4162, %v437
      %v4164 = vpop.permute.xlu0 %4163
      %4166 = vset.pattern.permute.xlu0 6
      %4167 = vperm.xlu0 %4166, %v438
      %v4168 = vpop.permute.xlu0 %4167
      %4170 = vset.pattern.permute.xlu0 6
      %4171 = vperm.xlu0 %4170, %v439
      %v4172 = vpop.permute.xlu0 %4171
      %4174 = vset.pattern.permute.xlu0 6
      %4175 = vperm.xlu0 %4174, %v440
      %v4176 = vpop.permute.xlu0 %4175
      %4178 = vset.pattern.permute.xlu0 6
      %4179 = vperm.xlu0 %4178, %v441
      %v4180 = vpop.permute.xlu0 %4179
      %4182 = vset.pattern.permute.xlu0 6
      %4183 = vperm.xlu0 %4182, %v442
      %v4184 = vpop.permute.xlu0 %4183
      %4186 = vset.pattern.permute.xlu0 6
      %4187 = vperm.xlu0 %4186, %v443
      %v4188 = vpop.permute.xlu0 %4187
      %4190 = vset.pattern.permute.xlu0 6
      %4191 = vperm.xlu0 %4190, %v444
      %v4192 = vpop.permute.xlu0 %4191
      %4194 = vset.pattern.permute.xlu0 6
      %4195 = vperm.xlu0 %4194, %v445
      %v4196 = vpop.permute.xlu0 %4195
      %4198 = vset.pattern.permute.xlu0 6
      %4199 = vperm.xlu0 %4198, %v446
      %v4200 = vpop.permute.xlu0 %4199
      %4202 = vset.pattern.permute.xlu0 6
      %4203 = vperm.xlu0 %4202, %v447
      %v4204 = vpop.permute.xlu0 %4203
      %v4206 = vmul.f32 %v4144, %v4126
      %v4207 = vmul.f32 %v4148, %v4127
      %v4208 = vmul.f32 %v4152, %v4128
      %v4209 = vmul.f32 %v4156, %v4129
      %v4210 = vmul.f32 %v4160, %v4130
      %v4211 = vmul.f32 %v4164, %v4131
      %v4212 = vmul.f32 %v4168, %v4132
      %v4213 = vmul.f32 %v4172, %v4133
      %v4214 = vmul.f32 %v4176, %v4134
      %v4215 = vmul.f32 %v4180, %v4135
      %v4216 = vmul.f32 %v4184, %v4136
      %v4217 = vmul.f32 %v4188, %v4137
      %v4218 = vmul.f32 %v4192, %v4138
      %v4219 = vmul.f32 %v4196, %v4139
      %v4220 = vmul.f32 %v4200, %v4140
      %v4221 = vmul.f32 %v4204, %v4141
      %v4222 = vadd.f32 %v4206, %v4207
      %v4223 = vadd.f32 %v4222, %v4208
      %v4224 = vadd.f32 %v4223, %v4209
      %v4225 = vadd.f32 %v4224, %v4210
      %v4226 = vadd.f32 %v4225, %v4211
      %v4227 = vadd.f32 %v4226, %v4212
      %v4228 = vadd.f32 %v4227, %v4213
      %v4229 = vadd.f32 %v4228, %v4214
      %v4230 = vadd.f32 %v4229, %v4215
      %v4231 = vadd.f32 %v4230, %v4216
      %v4232 = vadd.f32 %v4231, %v4217
      %v4233 = vadd.f32 %v4232, %v4218
      %v4234 = vadd.f32 %v4233, %v4219
      %v4235 = vadd.f32 %v4234, %v4220
      %v4236 = vadd.f32 %v4235, %v4221
      %v4237 = vrot.slane %v4236, 4
      %v4238 = vadd.f32 %v4236, %v4237
      %v4239 = vrot.slane %v4238, 2
      %v4240 = vadd.f32 %v4238, %v4239
      %v4241 = vrot.slane %v4240, 1
      %v4242 = vadd.f32 %v4240, %v4241
      %v4243 = vadd.f32 %v3374, %v1063
      %v4244 = vadd.f32 %v3380, %v1068
      %v4245 = vadd.f32 %v3386, %v1073
      %v4246 = vadd.f32 %v3392, %v1078
      %v4247 = vadd.f32 %v3398, %v1083
      %v4248 = vadd.f32 %v3404, %v1088
      %v4249 = vadd.f32 %v3410, %v1093
      %v4250 = vadd.f32 %v3416, %v1098
      %v4251 = vadd.f32 %v3422, %v1103
      %v4252 = vadd.f32 %v3428, %v1108
      %v4253 = vadd.f32 %v3434, %v1113
      %v4254 = vadd.f32 %v3440, %v1118
      %v4255 = vadd.f32 %v3446, %v1123
      %v4256 = vadd.f32 %v3452, %v1128
      %v4257 = vadd.f32 %v3458, %v1133
      %v4258 = vadd.f32 %v3464, %v1138
      %v4259 = vtanh.pop %v4243
      %v4260 = vtanh.pop %v4244
      %v4261 = vtanh.pop %v4245
      %v4262 = vtanh.pop %v4246
      %v4263 = vtanh.pop %v4247
      %v4264 = vtanh.pop %v4248
      %v4265 = vtanh.pop %v4249
      %v4266 = vtanh.pop %v4250
      %v4267 = vtanh.pop %v4251
      %v4268 = vtanh.pop %v4252
      %v4269 = vtanh.pop %v4253
      %v4270 = vtanh.pop %v4254
      %v4271 = vtanh.pop %v4255
      %v4272 = vtanh.pop %v4256
      %v4273 = vtanh.pop %v4257
      %v4274 = vtanh.pop %v4258
      %v4275 = vmul.f32 %v4144, %v4259
      %v4276 = vmul.f32 %v4148, %v4260
      %v4277 = vmul.f32 %v4152, %v4261
      %v4278 = vmul.f32 %v4156, %v4262
      %v4279 = vmul.f32 %v4160, %v4263
      %v4280 = vmul.f32 %v4164, %v4264
      %v4281 = vmul.f32 %v4168, %v4265
      %v4282 = vmul.f32 %v4172, %v4266
      %v4283 = vmul.f32 %v4176, %v4267
      %v4284 = vmul.f32 %v4180, %v4268
      %v4285 = vmul.f32 %v4184, %v4269
      %v4286 = vmul.f32 %v4188, %v4270
      %v4287 = vmul.f32 %v4192, %v4271
      %v4288 = vmul.f32 %v4196, %v4272
      %v4289 = vmul.f32 %v4200, %v4273
      %v4290 = vmul.f32 %v4204, %v4274
      %v4291 = vadd.f32 %v4275, %v4276
      %v4292 = vadd.f32 %v4291, %v4277
      %v4293 = vadd.f32 %v4292, %v4278
      %v4294 = vadd.f32 %v4293, %v4279
      %v4295 = vadd.f32 %v4294, %v4280
      %v4296 = vadd.f32 %v4295, %v4281
      %v4297 = vadd.f32 %v4296, %v4282
      %v4298 = vadd.f32 %v4297, %v4283
      %v4299 = vadd.f32 %v4298, %v4284
      %v4300 = vadd.f32 %v4299, %v4285
      %v4301 = vadd.f32 %v4300, %v4286
      %v4302 = vadd.f32 %v4301, %v4287
      %v4303 = vadd.f32 %v4302, %v4288
      %v4304 = vadd.f32 %v4303, %v4289
      %v4305 = vadd.f32 %v4304, %v4290
      %v4306 = vrot.slane %v4305, 4
      %v4307 = vadd.f32 %v4305, %v4306
      %v4308 = vrot.slane %v4307, 2
      %v4309 = vadd.f32 %v4307, %v4308
      %v4310 = vrot.slane %v4309, 1
      %v4311 = vadd.f32 %v4309, %v4310
      %v4312 = vadd.f32 %v3533, %v1063
      %v4313 = vadd.f32 %v3539, %v1068
      %v4314 = vadd.f32 %v3545, %v1073
      %v4315 = vadd.f32 %v3551, %v1078
      %v4316 = vadd.f32 %v3557, %v1083
      %v4317 = vadd.f32 %v3563, %v1088
      %v4318 = vadd.f32 %v3569, %v1093
      %v4319 = vadd.f32 %v3575, %v1098
      %v4320 = vadd.f32 %v3581, %v1103
      %v4321 = vadd.f32 %v3587, %v1108
      %v4322 = vadd.f32 %v3593, %v1113
      %v4323 = vadd.f32 %v3599, %v1118
      %v4324 = vadd.f32 %v3605, %v1123
      %v4325 = vadd.f32 %v3611, %v1128
      %v4326 = vadd.f32 %v3617, %v1133
      %v4327 = vadd.f32 %v3623, %v1138
      %v4328 = vtanh.pop %v4312
      %v4329 = vtanh.pop %v4313
      %v4330 = vtanh.pop %v4314
      %v4331 = vtanh.pop %v4315
      %v4332 = vtanh.pop %v4316
      %v4333 = vtanh.pop %v4317
      %v4334 = vtanh.pop %v4318
      %v4335 = vtanh.pop %v4319
      %v4336 = vtanh.pop %v4320
      %v4337 = vtanh.pop %v4321
      %v4338 = vtanh.pop %v4322
      %v4339 = vtanh.pop %v4323
      %v4340 = vtanh.pop %v4324
      %v4341 = vtanh.pop %v4325
      %v4342 = vtanh.pop %v4326
      %v4343 = vtanh.pop %v4327
      %v4344 = vmul.f32 %v4144, %v4328
      %v4345 = vmul.f32 %v4148, %v4329
      %v4346 = vmul.f32 %v4152, %v4330
      %v4347 = vmul.f32 %v4156, %v4331
      %v4348 = vmul.f32 %v4160, %v4332
      %v4349 = vmul.f32 %v4164, %v4333
      %v4350 = vmul.f32 %v4168, %v4334
      %v4351 = vmul.f32 %v4172, %v4335
      %v4352 = vmul.f32 %v4176, %v4336
      %v4353 = vmul.f32 %v4180, %v4337
      %v4354 = vmul.f32 %v4184, %v4338
      %v4355 = vmul.f32 %v4188, %v4339
      %v4356 = vmul.f32 %v4192, %v4340
      %v4357 = vmul.f32 %v4196, %v4341
      %v4358 = vmul.f32 %v4200, %v4342
      %v4359 = vmul.f32 %v4204, %v4343
      %v4360 = vadd.f32 %v4344, %v4345
      %v4361 = vadd.f32 %v4360, %v4346
      %v4362 = vadd.f32 %v4361, %v4347
      %v4363 = vadd.f32 %v4362, %v4348
      %v4364 = vadd.f32 %v4363, %v4349
      %v4365 = vadd.f32 %v4364, %v4350
      %v4366 = vadd.f32 %v4365, %v4351
      %v4367 = vadd.f32 %v4366, %v4352
      %v4368 = vadd.f32 %v4367, %v4353
      %v4369 = vadd.f32 %v4368, %v4354
      %v4370 = vadd.f32 %v4369, %v4355
      %v4371 = vadd.f32 %v4370, %v4356
      %v4372 = vadd.f32 %v4371, %v4357
      %v4373 = vadd.f32 %v4372, %v4358
      %v4374 = vadd.f32 %v4373, %v4359
      %v4375 = vrot.slane %v4374, 4
      %v4376 = vadd.f32 %v4374, %v4375
      %v4377 = vrot.slane %v4376, 2
      %v4378 = vadd.f32 %v4376, %v4377
      %v4379 = vrot.slane %v4378, 1
      %v4380 = vadd.f32 %v4378, %v4379
      %v4381 = vadd.f32 %v3535, %v1063
      %v4382 = vadd.f32 %v3541, %v1068
      %v4383 = vadd.f32 %v3547, %v1073
      %v4384 = vadd.f32 %v3553, %v1078
      %v4385 = vadd.f32 %v3559, %v1083
      %v4386 = vadd.f32 %v3565, %v1088
      %v4387 = vadd.f32 %v3571, %v1093
      %v4388 = vadd.f32 %v3577, %v1098
      %v4389 = vadd.f32 %v3583, %v1103
      %v4390 = vadd.f32 %v3589, %v1108
      %v4391 = vadd.f32 %v3595, %v1113
      %v4392 = vadd.f32 %v3601, %v1118
      %v4393 = vadd.f32 %v3607, %v1123
      %v4394 = vadd.f32 %v3613, %v1128
      %v4395 = vadd.f32 %v3619, %v1133
      %v4396 = vadd.f32 %v3625, %v1138
      %v4397 = vtanh.pop %v4381
      %v4398 = vtanh.pop %v4382
      %v4399 = vtanh.pop %v4383
      %v4400 = vtanh.pop %v4384
      %v4401 = vtanh.pop %v4385
      %v4402 = vtanh.pop %v4386
      %v4403 = vtanh.pop %v4387
      %v4404 = vtanh.pop %v4388
      %v4405 = vtanh.pop %v4389
      %v4406 = vtanh.pop %v4390
      %v4407 = vtanh.pop %v4391
      %v4408 = vtanh.pop %v4392
      %v4409 = vtanh.pop %v4393
      %v4410 = vtanh.pop %v4394
      %v4411 = vtanh.pop %v4395
      %v4412 = vtanh.pop %v4396
      %v4413 = vmul.f32 %v4144, %v4397
      %v4414 = vmul.f32 %v4148, %v4398
      %v4415 = vmul.f32 %v4152, %v4399
      %v4416 = vmul.f32 %v4156, %v4400
      %v4417 = vmul.f32 %v4160, %v4401
      %v4418 = vmul.f32 %v4164, %v4402
      %v4419 = vmul.f32 %v4168, %v4403
      %v4420 = vmul.f32 %v4172, %v4404
      %v4421 = vmul.f32 %v4176, %v4405
      %v4422 = vmul.f32 %v4180, %v4406
      %v4423 = vmul.f32 %v4184, %v4407
      %v4424 = vmul.f32 %v4188, %v4408
      %v4425 = vmul.f32 %v4192, %v4409
      %v4426 = vmul.f32 %v4196, %v4410
      %v4427 = vmul.f32 %v4200, %v4411
      %v4428 = vmul.f32 %v4204, %v4412
      %v4429 = vadd.f32 %v4413, %v4414
      %v4430 = vadd.f32 %v4429, %v4415
      %v4431 = vadd.f32 %v4430, %v4416
      %v4432 = vadd.f32 %v4431, %v4417
      %v4433 = vadd.f32 %v4432, %v4418
      %v4434 = vadd.f32 %v4433, %v4419
      %v4435 = vadd.f32 %v4434, %v4420
      %v4436 = vadd.f32 %v4435, %v4421
      %v4437 = vadd.f32 %v4436, %v4422
      %v4438 = vadd.f32 %v4437, %v4423
      %v4439 = vadd.f32 %v4438, %v4424
      %v4440 = vadd.f32 %v4439, %v4425
      %v4441 = vadd.f32 %v4440, %v4426
      %v4442 = vadd.f32 %v4441, %v4427
      %v4443 = vadd.f32 %v4442, %v4428
      %v4444 = vrot.slane %v4443, 4
      %v4445 = vadd.f32 %v4443, %v4444
      %v4446 = vrot.slane %v4445, 2
      %v4447 = vadd.f32 %v4445, %v4446
      %v4448 = vrot.slane %v4447, 1
      %v4449 = vadd.f32 %v4447, %v4448
      %v4450 = vadd.f32 %v3694, %v1063
      %v4451 = vadd.f32 %v3700, %v1068
      %v4452 = vadd.f32 %v3706, %v1073
      %v4453 = vadd.f32 %v3712, %v1078
      %v4454 = vadd.f32 %v3718, %v1083
      %v4455 = vadd.f32 %v3724, %v1088
      %v4456 = vadd.f32 %v3730, %v1093
      %v4457 = vadd.f32 %v3736, %v1098
      %v4458 = vadd.f32 %v3742, %v1103
      %v4459 = vadd.f32 %v3748, %v1108
      %v4460 = vadd.f32 %v3754, %v1113
      %v4461 = vadd.f32 %v3760, %v1118
      %v4462 = vadd.f32 %v3766, %v1123
      %v4463 = vadd.f32 %v3772, %v1128
      %v4464 = vadd.f32 %v3778, %v1133
      %v4465 = vadd.f32 %v3784, %v1138
      %v4466 = vtanh.pop %v4450
      %v4467 = vtanh.pop %v4451
      %v4468 = vtanh.pop %v4452
      %v4469 = vtanh.pop %v4453
      %v4470 = vtanh.pop %v4454
      %v4471 = vtanh.pop %v4455
      %v4472 = vtanh.pop %v4456
      %v4473 = vtanh.pop %v4457
      %v4474 = vtanh.pop %v4458
      %v4475 = vtanh.pop %v4459
      %v4476 = vtanh.pop %v4460
      %v4477 = vtanh.pop %v4461
      %v4478 = vtanh.pop %v4462
      %v4479 = vtanh.pop %v4463
      %v4480 = vtanh.pop %v4464
      %v4481 = vtanh.pop %v4465
      %v4482 = vmul.f32 %v4144, %v4466
      %v4483 = vmul.f32 %v4148, %v4467
      %v4484 = vmul.f32 %v4152, %v4468
      %v4485 = vmul.f32 %v4156, %v4469
      %v4486 = vmul.f32 %v4160, %v4470
      %v4487 = vmul.f32 %v4164, %v4471
      %v4488 = vmul.f32 %v4168, %v4472
      %v4489 = vmul.f32 %v4172, %v4473
      %v4490 = vmul.f32 %v4176, %v4474
      %v4491 = vmul.f32 %v4180, %v4475
      %v4492 = vmul.f32 %v4184, %v4476
      %v4493 = vmul.f32 %v4188, %v4477
      %v4494 = vmul.f32 %v4192, %v4478
      %v4495 = vmul.f32 %v4196, %v4479
      %v4496 = vmul.f32 %v4200, %v4480
      %v4497 = vmul.f32 %v4204, %v4481
      %v4498 = vadd.f32 %v4482, %v4483
      %v4499 = vadd.f32 %v4498, %v4484
      %v4500 = vadd.f32 %v4499, %v4485
      %v4501 = vadd.f32 %v4500, %v4486
      %v4502 = vadd.f32 %v4501, %v4487
      %v4503 = vadd.f32 %v4502, %v4488
      %v4504 = vadd.f32 %v4503, %v4489
      %v4505 = vadd.f32 %v4504, %v4490
      %v4506 = vadd.f32 %v4505, %v4491
      %v4507 = vadd.f32 %v4506, %v4492
      %v4508 = vadd.f32 %v4507, %v4493
      %v4509 = vadd.f32 %v4508, %v4494
      %v4510 = vadd.f32 %v4509, %v4495
      %v4511 = vadd.f32 %v4510, %v4496
      %v4512 = vadd.f32 %v4511, %v4497
      %v4513 = vrot.slane %v4512, 4
      %v4514 = vadd.f32 %v4512, %v4513
      %v4515 = vrot.slane %v4514, 2
      %v4516 = vadd.f32 %v4514, %v4515
      %v4517 = vrot.slane %v4516, 1
      %v4518 = vadd.f32 %v4516, %v4517
      %v4519 = vadd.f32 %v3696, %v1063
      %v4520 = vadd.f32 %v3702, %v1068
      %v4521 = vadd.f32 %v3708, %v1073
      %v4522 = vadd.f32 %v3714, %v1078
      %v4523 = vadd.f32 %v3720, %v1083
      %v4524 = vadd.f32 %v3726, %v1088
      %v4525 = vadd.f32 %v3732, %v1093
      %v4526 = vadd.f32 %v3738, %v1098
      %v4527 = vadd.f32 %v3744, %v1103
      %v4528 = vadd.f32 %v3750, %v1108
      %v4529 = vadd.f32 %v3756, %v1113
      %v4530 = vadd.f32 %v3762, %v1118
      %v4531 = vadd.f32 %v3768, %v1123
      %v4532 = vadd.f32 %v3774, %v1128
      %v4533 = vadd.f32 %v3780, %v1133
      %v4534 = vadd.f32 %v3786, %v1138
      %v4535 = vtanh.pop %v4519
      %v4536 = vtanh.pop %v4520
      %v4537 = vtanh.pop %v4521
      %v4538 = vtanh.pop %v4522
      %v4539 = vtanh.pop %v4523
      %v4540 = vtanh.pop %v4524
      %v4541 = vtanh.pop %v4525
      %v4542 = vtanh.pop %v4526
      %v4543 = vtanh.pop %v4527
      %v4544 = vtanh.pop %v4528
      %v4545 = vtanh.pop %v4529
      %v4546 = vtanh.pop %v4530
      %v4547 = vtanh.pop %v4531
      %v4548 = vtanh.pop %v4532
      %v4549 = vtanh.pop %v4533
      %v4550 = vtanh.pop %v4534
      %v4551 = vmul.f32 %v4144, %v4535
      %v4552 = vmul.f32 %v4148, %v4536
      %v4553 = vmul.f32 %v4152, %v4537
      %v4554 = vmul.f32 %v4156, %v4538
      %v4555 = vmul.f32 %v4160, %v4539
      %v4556 = vmul.f32 %v4164, %v4540
      %v4557 = vmul.f32 %v4168, %v4541
      %v4558 = vmul.f32 %v4172, %v4542
      %v4559 = vmul.f32 %v4176, %v4543
      %v4560 = vmul.f32 %v4180, %v4544
      %v4561 = vmul.f32 %v4184, %v4545
      %v4562 = vmul.f32 %v4188, %v4546
      %v4563 = vmul.f32 %v4192, %v4547
      %v4564 = vmul.f32 %v4196, %v4548
      %v4565 = vmul.f32 %v4200, %v4549
      %v4566 = vmul.f32 %v4204, %v4550
      %v4567 = vadd.f32 %v4551, %v4552
      %v4568 = vadd.f32 %v4567, %v4553
      %v4569 = vadd.f32 %v4568, %v4554
      %v4570 = vadd.f32 %v4569, %v4555
      %v4571 = vadd.f32 %v4570, %v4556
      %v4572 = vadd.f32 %v4571, %v4557
      %v4573 = vadd.f32 %v4572, %v4558
      %v4574 = vadd.f32 %v4573, %v4559
      %v4575 = vadd.f32 %v4574, %v4560
      %v4576 = vadd.f32 %v4575, %v4561
      %v4577 = vadd.f32 %v4576, %v4562
      %v4578 = vadd.f32 %v4577, %v4563
      %v4579 = vadd.f32 %v4578, %v4564
      %v4580 = vadd.f32 %v4579, %v4565
      %v4581 = vadd.f32 %v4580, %v4566
      %v4582 = vrot.slane %v4581, 4
      %v4583 = vadd.f32 %v4581, %v4582
      %v4584 = vrot.slane %v4583, 2
      %v4585 = vadd.f32 %v4583, %v4584
      %v4586 = vrot.slane %v4585, 1
      %v4587 = vadd.f32 %v4585, %v4586
      %v4588 = vadd.f32 %v3855, %v1063
      %v4589 = vadd.f32 %v3861, %v1068
      %v4590 = vadd.f32 %v3867, %v1073
      %v4591 = vadd.f32 %v3873, %v1078
      %v4592 = vadd.f32 %v3879, %v1083
      %v4593 = vadd.f32 %v3885, %v1088
      %v4594 = vadd.f32 %v3891, %v1093
      %v4595 = vadd.f32 %v3897, %v1098
      %v4596 = vadd.f32 %v3903, %v1103
      %v4597 = vadd.f32 %v3909, %v1108
      %v4598 = vadd.f32 %v3915, %v1113
      %v4599 = vadd.f32 %v3921, %v1118
      %v4600 = vadd.f32 %v3927, %v1123
      %v4601 = vadd.f32 %v3933, %v1128
      %v4602 = vadd.f32 %v3939, %v1133
      %v4603 = vadd.f32 %v3945, %v1138
      %v4604 = vtanh.pop %v4588
      %v4605 = vtanh.pop %v4589
      %v4606 = vtanh.pop %v4590
      %v4607 = vtanh.pop %v4591
      %v4608 = vtanh.pop %v4592
      %v4609 = vtanh.pop %v4593
      %v4610 = vtanh.pop %v4594
      %v4611 = vtanh.pop %v4595
      %v4612 = vtanh.pop %v4596
      %v4613 = vtanh.pop %v4597
      %v4614 = vtanh.pop %v4598
      %v4615 = vtanh.pop %v4599
      %v4616 = vtanh.pop %v4600
      %v4617 = vtanh.pop %v4601
      %v4618 = vtanh.pop %v4602
      %v4619 = vtanh.pop %v4603
      %v4620 = vmul.f32 %v4144, %v4604
      %v4621 = vmul.f32 %v4148, %v4605
      %v4622 = vmul.f32 %v4152, %v4606
      %v4623 = vmul.f32 %v4156, %v4607
      %v4624 = vmul.f32 %v4160, %v4608
      %v4625 = vmul.f32 %v4164, %v4609
      %v4626 = vmul.f32 %v4168, %v4610
      %v4627 = vmul.f32 %v4172, %v4611
      %v4628 = vmul.f32 %v4176, %v4612
      %v4629 = vmul.f32 %v4180, %v4613
      %v4630 = vmul.f32 %v4184, %v4614
      %v4631 = vmul.f32 %v4188, %v4615
      %v4632 = vmul.f32 %v4192, %v4616
      %v4633 = vmul.f32 %v4196, %v4617
      %v4634 = vmul.f32 %v4200, %v4618
      %v4635 = vmul.f32 %v4204, %v4619
      %v4636 = vadd.f32 %v4620, %v4621
      %v4637 = vadd.f32 %v4636, %v4622
      %v4638 = vadd.f32 %v4637, %v4623
      %v4639 = vadd.f32 %v4638, %v4624
      %v4640 = vadd.f32 %v4639, %v4625
      %v4641 = vadd.f32 %v4640, %v4626
      %v4642 = vadd.f32 %v4641, %v4627
      %v4643 = vadd.f32 %v4642, %v4628
      %v4644 = vadd.f32 %v4643, %v4629
      %v4645 = vadd.f32 %v4644, %v4630
      %v4646 = vadd.f32 %v4645, %v4631
      %v4647 = vadd.f32 %v4646, %v4632
      %v4648 = vadd.f32 %v4647, %v4633
      %v4649 = vadd.f32 %v4648, %v4634
      %v4650 = vadd.f32 %v4649, %v4635
      %v4651 = vrot.slane %v4650, 4
      %v4652 = vadd.f32 %v4650, %v4651
      %v4653 = vrot.slane %v4652, 2
      %v4654 = vadd.f32 %v4652, %v4653
      %v4655 = vrot.slane %v4654, 1
      %v4656 = vadd.f32 %v4654, %v4655
      %v4657 = vadd.f32 %v3857, %v1063
      %v4658 = vadd.f32 %v3863, %v1068
      %v4659 = vadd.f32 %v3869, %v1073
      %v4660 = vadd.f32 %v3875, %v1078
      %v4661 = vadd.f32 %v3881, %v1083
      %v4662 = vadd.f32 %v3887, %v1088
      %v4663 = vadd.f32 %v3893, %v1093
      %v4664 = vadd.f32 %v3899, %v1098
      %v4665 = vadd.f32 %v3905, %v1103
      %v4666 = vadd.f32 %v3911, %v1108
      %v4667 = vadd.f32 %v3917, %v1113
      %v4668 = vadd.f32 %v3923, %v1118
      %v4669 = vadd.f32 %v3929, %v1123
      %v4670 = vadd.f32 %v3935, %v1128
      %v4671 = vadd.f32 %v3941, %v1133
      %v4672 = vadd.f32 %v3947, %v1138
      %v4673 = vtanh.pop %v4657
      %v4674 = vtanh.pop %v4658
      %v4675 = vtanh.pop %v4659
      %v4676 = vtanh.pop %v4660
      %v4677 = vtanh.pop %v4661
      %v4678 = vtanh.pop %v4662
      %v4679 = vtanh.pop %v4663
      %v4680 = vtanh.pop %v4664
      %v4681 = vtanh.pop %v4665
      %v4682 = vtanh.pop %v4666
      %v4683 = vtanh.pop %v4667
      %v4684 = vtanh.pop %v4668
      %v4685 = vtanh.pop %v4669
      %v4686 = vtanh.pop %v4670
      %v4687 = vtanh.pop %v4671
      %v4688 = vtanh.pop %v4672
      %v4689 = vmul.f32 %v4144, %v4673
      %v4690 = vmul.f32 %v4148, %v4674
      %v4691 = vmul.f32 %v4152, %v4675
      %v4692 = vmul.f32 %v4156, %v4676
      %v4693 = vmul.f32 %v4160, %v4677
      %v4694 = vmul.f32 %v4164, %v4678
      %v4695 = vmul.f32 %v4168, %v4679
      %v4696 = vmul.f32 %v4172, %v4680
      %v4697 = vmul.f32 %v4176, %v4681
      %v4698 = vmul.f32 %v4180, %v4682
      %v4699 = vmul.f32 %v4184, %v4683
      %v4700 = vmul.f32 %v4188, %v4684
      %v4701 = vmul.f32 %v4192, %v4685
      %v4702 = vmul.f32 %v4196, %v4686
      %v4703 = vmul.f32 %v4200, %v4687
      %v4704 = vmul.f32 %v4204, %v4688
      %v4705 = vadd.f32 %v4689, %v4690
      %v4706 = vadd.f32 %v4705, %v4691
      %v4707 = vadd.f32 %v4706, %v4692
      %v4708 = vadd.f32 %v4707, %v4693
      %v4709 = vadd.f32 %v4708, %v4694
      %v4710 = vadd.f32 %v4709, %v4695
      %v4711 = vadd.f32 %v4710, %v4696
      %v4712 = vadd.f32 %v4711, %v4697
      %v4713 = vadd.f32 %v4712, %v4698
      %v4714 = vadd.f32 %v4713, %v4699
      %v4715 = vadd.f32 %v4714, %v4700
      %v4716 = vadd.f32 %v4715, %v4701
      %v4717 = vadd.f32 %v4716, %v4702
      %v4718 = vadd.f32 %v4717, %v4703
      %v4719 = vadd.f32 %v4718, %v4704
      %v4720 = vrot.slane %v4719, 4
      %v4721 = vadd.f32 %v4719, %v4720
      %v4722 = vrot.slane %v4721, 2
      %v4723 = vadd.f32 %v4721, %v4722
      %v4724 = vrot.slane %v4723, 1
      %v4725 = vadd.f32 %v4723, %v4724
      %v4726 = vadd.f32 %v4016, %v1063
      %v4727 = vadd.f32 %v4022, %v1068
      %v4728 = vadd.f32 %v4028, %v1073
      %v4729 = vadd.f32 %v4034, %v1078
      %v4730 = vadd.f32 %v4040, %v1083
      %v4731 = vadd.f32 %v4046, %v1088
      %v4732 = vadd.f32 %v4052, %v1093
      %v4733 = vadd.f32 %v4058, %v1098
      %v4734 = vadd.f32 %v4064, %v1103
      %v4735 = vadd.f32 %v4070, %v1108
      %v4736 = vadd.f32 %v4076, %v1113
      %v4737 = vadd.f32 %v4082, %v1118
      %v4738 = vadd.f32 %v4088, %v1123
      %v4739 = vadd.f32 %v4094, %v1128
      %v4740 = vadd.f32 %v4100, %v1133
      %v4741 = vadd.f32 %v4106, %v1138
      %v4742 = vtanh.pop %v4726
      %v4743 = vtanh.pop %v4727
      %v4744 = vtanh.pop %v4728
      %v4745 = vtanh.pop %v4729
      %v4746 = vtanh.pop %v4730
      %v4747 = vtanh.pop %v4731
      %v4748 = vtanh.pop %v4732
      %v4749 = vtanh.pop %v4733
      %v4750 = vtanh.pop %v4734
      %v4751 = vtanh.pop %v4735
      %v4752 = vtanh.pop %v4736
      %v4753 = vtanh.pop %v4737
      %v4754 = vtanh.pop %v4738
      %v4755 = vtanh.pop %v4739
      %v4756 = vtanh.pop %v4740
      %v4757 = vtanh.pop %v4741
      %v4758 = vmul.f32 %v4144, %v4742
      %v4759 = vmul.f32 %v4148, %v4743
      %v4760 = vmul.f32 %v4152, %v4744
      %v4761 = vmul.f32 %v4156, %v4745
      %v4762 = vmul.f32 %v4160, %v4746
      %v4763 = vmul.f32 %v4164, %v4747
      %v4764 = vmul.f32 %v4168, %v4748
      %v4765 = vmul.f32 %v4172, %v4749
      %v4766 = vmul.f32 %v4176, %v4750
      %v4767 = vmul.f32 %v4180, %v4751
      %v4768 = vmul.f32 %v4184, %v4752
      %v4769 = vmul.f32 %v4188, %v4753
      %v4770 = vmul.f32 %v4192, %v4754
      %v4771 = vmul.f32 %v4196, %v4755
      %v4772 = vmul.f32 %v4200, %v4756
      %v4773 = vmul.f32 %v4204, %v4757
      %v4774 = vadd.f32 %v4758, %v4759
      %v4775 = vadd.f32 %v4774, %v4760
      %v4776 = vadd.f32 %v4775, %v4761
      %v4777 = vadd.f32 %v4776, %v4762
      %v4778 = vadd.f32 %v4777, %v4763
      %v4779 = vadd.f32 %v4778, %v4764
      %v4780 = vadd.f32 %v4779, %v4765
      %v4781 = vadd.f32 %v4780, %v4766
      %v4782 = vadd.f32 %v4781, %v4767
      %v4783 = vadd.f32 %v4782, %v4768
      %v4784 = vadd.f32 %v4783, %v4769
      %v4785 = vadd.f32 %v4784, %v4770
      %v4786 = vadd.f32 %v4785, %v4771
      %v4787 = vadd.f32 %v4786, %v4772
      %v4788 = vadd.f32 %v4787, %v4773
      %v4789 = vrot.slane %v4788, 4
      %v4790 = vadd.f32 %v4788, %v4789
      %v4791 = vrot.slane %v4790, 2
      %v4792 = vadd.f32 %v4790, %v4791
      %v4793 = vrot.slane %v4792, 1
      %v4794 = vadd.f32 %v4792, %v4793
      %v4795 = vadd.f32 %v4018, %v1063
      %v4796 = vadd.f32 %v4024, %v1068
      %v4797 = vadd.f32 %v4030, %v1073
      %v4798 = vadd.f32 %v4036, %v1078
      %v4799 = vadd.f32 %v4042, %v1083
      %v4800 = vadd.f32 %v4048, %v1088
      %v4801 = vadd.f32 %v4054, %v1093
      %v4802 = vadd.f32 %v4060, %v1098
      %v4803 = vadd.f32 %v4066, %v1103
      %v4804 = vadd.f32 %v4072, %v1108
      %v4805 = vadd.f32 %v4078, %v1113
      %v4806 = vadd.f32 %v4084, %v1118
      %v4807 = vadd.f32 %v4090, %v1123
      %v4808 = vadd.f32 %v4096, %v1128
      %v4809 = vadd.f32 %v4102, %v1133
      %v4810 = vadd.f32 %v4108, %v1138
      %v4811 = vtanh.pop %v4795
      %v4812 = vtanh.pop %v4796
      %v4813 = vtanh.pop %v4797
      %v4814 = vtanh.pop %v4798
      %v4815 = vtanh.pop %v4799
      %v4816 = vtanh.pop %v4800
      %v4817 = vtanh.pop %v4801
      %v4818 = vtanh.pop %v4802
      %v4819 = vtanh.pop %v4803
      %v4820 = vtanh.pop %v4804
      %v4821 = vtanh.pop %v4805
      %v4822 = vtanh.pop %v4806
      %v4823 = vtanh.pop %v4807
      %v4824 = vtanh.pop %v4808
      %v4825 = vtanh.pop %v4809
      %v4826 = vtanh.pop %v4810
      %v4827 = vmul.f32 %v4144, %v4811
      %v4828 = vmul.f32 %v4148, %v4812
      %v4829 = vmul.f32 %v4152, %v4813
      %v4830 = vmul.f32 %v4156, %v4814
      %v4831 = vmul.f32 %v4160, %v4815
      %v4832 = vmul.f32 %v4164, %v4816
      %v4833 = vmul.f32 %v4168, %v4817
      %v4834 = vmul.f32 %v4172, %v4818
      %v4835 = vmul.f32 %v4176, %v4819
      %v4836 = vmul.f32 %v4180, %v4820
      %v4837 = vmul.f32 %v4184, %v4821
      %v4838 = vmul.f32 %v4188, %v4822
      %v4839 = vmul.f32 %v4192, %v4823
      %v4840 = vmul.f32 %v4196, %v4824
      %v4841 = vmul.f32 %v4200, %v4825
      %v4842 = vmul.f32 %v4204, %v4826
      %v4843 = vadd.f32 %v4827, %v4828
      %v4844 = vadd.f32 %v4843, %v4829
      %v4845 = vadd.f32 %v4844, %v4830
      %v4846 = vadd.f32 %v4845, %v4831
      %v4847 = vadd.f32 %v4846, %v4832
      %v4848 = vadd.f32 %v4847, %v4833
      %v4849 = vadd.f32 %v4848, %v4834
      %v4850 = vadd.f32 %v4849, %v4835
      %v4851 = vadd.f32 %v4850, %v4836
      %v4852 = vadd.f32 %v4851, %v4837
      %v4853 = vadd.f32 %v4852, %v4838
      %v4854 = vadd.f32 %v4853, %v4839
      %v4855 = vadd.f32 %v4854, %v4840
      %v4856 = vadd.f32 %v4855, %v4841
      %v4857 = vadd.f32 %v4856, %v4842
      %v4858 = vrot.slane %v4857, 4
      %v4859 = vadd.f32 %v4857, %v4858
      %v4860 = vrot.slane %v4859, 2
      %v4861 = vadd.f32 %v4859, %v4860
      %v4862 = vrot.slane %v4861, 1
      %v4863 = vadd.f32 %v4861, %v4862
      %v4864 = vmax.f32 %v4242, %v4311
      %v4865 = vmax.f32 %v4864, %v4380
      %v4866 = vmax.f32 %v4865, %v4449
      %v4867 = vmax.f32 %v4866, %v4518
      %v4868 = vmax.f32 %v4867, %v4587
      %v4869 = vmax.f32 %v4868, %v4656
      %v4870 = vmax.f32 %v4869, %v4725
      %v4871 = vmax.f32 %v4870, %v4794
      %v4872 = vmax.f32 %v4871, %v4863
      %v4873 = vsub.f32 %v4242, %v4872
      %v4874 = vmul.f32 %v4873, 1.442695
      %v4875 = vpow.pop %v4874
      %v4876 = vsub.f32 %v4311, %v4872
      %v4877 = vmul.f32 %v4876, 1.442695
      %v4878 = vpow.pop %v4877
      %v4879 = vsub.f32 %v4380, %v4872
      %v4880 = vmul.f32 %v4879, 1.442695
      %v4881 = vpow.pop %v4880
      %v4882 = vsub.f32 %v4449, %v4872
      %v4883 = vmul.f32 %v4882, 1.442695
      %v4884 = vpow.pop %v4883
      %v4885 = vsub.f32 %v4518, %v4872
      %v4886 = vmul.f32 %v4885, 1.442695
      %v4887 = vpow.pop %v4886
      %v4888 = vsub.f32 %v4587, %v4872
      %v4889 = vmul.f32 %v4888, 1.442695
      %v4890 = vpow.pop %v4889
      %v4891 = vsub.f32 %v4656, %v4872
      %v4892 = vmul.f32 %v4891, 1.442695
      %v4893 = vpow.pop %v4892
      %v4894 = vsub.f32 %v4725, %v4872
      %v4895 = vmul.f32 %v4894, 1.442695
      %v4896 = vpow.pop %v4895
      %v4897 = vsub.f32 %v4794, %v4872
      %v4898 = vmul.f32 %v4897, 1.442695
      %v4899 = vpow.pop %v4898
      %v4900 = vsub.f32 %v4863, %v4872
      %v4901 = vmul.f32 %v4900, 1.442695
      %v4902 = vpow.pop %v4901
      %v4903 = vadd.f32 %v4875, %v4878
      %v4904 = vadd.f32 %v4903, %v4881
      %v4905 = vadd.f32 %v4904, %v4884
      %v4906 = vadd.f32 %v4905, %v4887
      %v4907 = vadd.f32 %v4906, %v4890
      %v4908 = vadd.f32 %v4907, %v4893
      %v4909 = vadd.f32 %v4908, %v4896
      %v4910 = vadd.f32 %v4909, %v4899
      %v4911 = vadd.f32 %v4910, %v4902
      %v4912 = vrcp.pop %v4911
      %v4913 = vmul.f32 1.0, %v4912
      %v4914 = vmul.f32 %v4875, %v4913
      %v4915 = vld [vmem:[#allocation2] sm:$0xff]
      %v4916 = vld [vmem:[#allocation2 + $0x50] sm:$0xff]
      %v4917 = vld [vmem:[#allocation2 + $0xa0] sm:$0xff]
      %v4918 = vld [vmem:[#allocation2 + $0xf0] sm:$0xff]
      %v4919 = vld [vmem:[#allocation2 + $0x140] sm:$0xff]
      %v4920 = vld [vmem:[#allocation2 + $0x190] sm:$0xff]
      %v4921 = vld [vmem:[#allocation2 + $0x1e0] sm:$0xff]
      %v4922 = vld [vmem:[#allocation2 + $0x230] sm:$0xff]
      %v4923 = vld [vmem:[#allocation2 + $0x280] sm:$0xff]
      %v4924 = vld [vmem:[#allocation2 + $0x2d0] sm:$0xff]
      %v4925 = vld [vmem:[#allocation2 + $0x320] sm:$0xff]
      %v4926 = vld [vmem:[#allocation2 + $0x370] sm:$0xff]
      %v4927 = vld [vmem:[#allocation2 + $0x3c0] sm:$0xff]
      %v4928 = vld [vmem:[#allocation2 + $0x410] sm:$0xff]
      %v4929 = vld [vmem:[#allocation2 + $0x460] sm:$0xff]
      %v4930 = vld [vmem:[#allocation2 + $0x4b0] sm:$0xff]
      %v4931 = vmul.f32 %v4914, %v4915
      %v4932 = vmul.f32 %v4914, %v4916
      %v4933 = vmul.f32 %v4914, %v4917
      %v4934 = vmul.f32 %v4914, %v4918
      %v4935 = vmul.f32 %v4914, %v4919
      %v4936 = vmul.f32 %v4914, %v4920
      %v4937 = vmul.f32 %v4914, %v4921
      %v4938 = vmul.f32 %v4914, %v4922
      %v4939 = vmul.f32 %v4914, %v4923
      %v4940 = vmul.f32 %v4914, %v4924
      %v4941 = vmul.f32 %v4914, %v4925
      %v4942 = vmul.f32 %v4914, %v4926
      %v4943 = vmul.f32 %v4914, %v4927
      %v4944 = vmul.f32 %v4914, %v4928
      %v4945 = vmul.f32 %v4914, %v4929
      %v4946 = vmul.f32 %v4914, %v4930
      %v4947 = vadd.f32 %v4931, 0.0
      %v4948 = vadd.f32 %v4932, 0.0
      %v4949 = vadd.f32 %v4933, 0.0
      %v4950 = vadd.f32 %v4934, 0.0
      %v4951 = vadd.f32 %v4935, 0.0
      %v4952 = vadd.f32 %v4936, 0.0
      %v4953 = vadd.f32 %v4937, 0.0
      %v4954 = vadd.f32 %v4938, 0.0
      %v4955 = vadd.f32 %v4939, 0.0
      %v4956 = vadd.f32 %v4940, 0.0
      %v4957 = vadd.f32 %v4941, 0.0
      %v4958 = vadd.f32 %v4942, 0.0
      %v4959 = vadd.f32 %v4943, 0.0
      %v4960 = vadd.f32 %v4944, 0.0
      %v4961 = vadd.f32 %v4945, 0.0
      %v4962 = vadd.f32 %v4946, 0.0
      %v4963 = vmul.f32 %v4878, %v4913
      %v4964 = vld [vmem:[#allocation2 + $0x8] sm:$0xff]
      %v4965 = vld [vmem:[#allocation2 + $0x58] sm:$0xff]
      %v4966 = vld [vmem:[#allocation2 + $0xa8] sm:$0xff]
      %v4967 = vld [vmem:[#allocation2 + $0xf8] sm:$0xff]
      %v4968 = vld [vmem:[#allocation2 + $0x148] sm:$0xff]
      %v4969 = vld [vmem:[#allocation2 + $0x198] sm:$0xff]
      %v4970 = vld [vmem:[#allocation2 + $0x1e8] sm:$0xff]
      %v4971 = vld [vmem:[#allocation2 + $0x238] sm:$0xff]
      %v4972 = vld [vmem:[#allocation2 + $0x288] sm:$0xff]
      %v4973 = vld [vmem:[#allocation2 + $0x2d8] sm:$0xff]
      %v4974 = vld [vmem:[#allocation2 + $0x328] sm:$0xff]
      %v4975 = vld [vmem:[#allocation2 + $0x378] sm:$0xff]
      %v4976 = vld [vmem:[#allocation2 + $0x3c8] sm:$0xff]
      %v4977 = vld [vmem:[#allocation2 + $0x418] sm:$0xff]
      %v4978 = vld [vmem:[#allocation2 + $0x468] sm:$0xff]
      %v4979 = vld [vmem:[#allocation2 + $0x4b8] sm:$0xff]
      %v4980 = vmul.f32 %v4963, %v4964
      %v4981 = vmul.f32 %v4963, %v4965
      %v4982 = vmul.f32 %v4963, %v4966
      %v4983 = vmul.f32 %v4963, %v4967
      %v4984 = vmul.f32 %v4963, %v4968
      %v4985 = vmul.f32 %v4963, %v4969
      %v4986 = vmul.f32 %v4963, %v4970
      %v4987 = vmul.f32 %v4963, %v4971
      %v4988 = vmul.f32 %v4963, %v4972
      %v4989 = vmul.f32 %v4963, %v4973
      %v4990 = vmul.f32 %v4963, %v4974
      %v4991 = vmul.f32 %v4963, %v4975
      %v4992 = vmul.f32 %v4963, %v4976
      %v4993 = vmul.f32 %v4963, %v4977
      %v4994 = vmul.f32 %v4963, %v4978
      %v4995 = vmul.f32 %v4963, %v4979
      %v4996 = vadd.f32 %v4947, %v4980
      %v4997 = vadd.f32 %v4948, %v4981
      %v4998 = vadd.f32 %v4949, %v4982
      %v4999 = vadd.f32 %v4950, %v4983
      %v5000 = vadd.f32 %v4951, %v4984
      %v5001 = vadd.f32 %v4952, %v4985
      %v5002 = vadd.f32 %v4953, %v4986
      %v5003 = vadd.f32 %v4954, %v4987
      %v5004 = vadd.f32 %v4955, %v4988
      %v5005 = vadd.f32 %v4956, %v4989
      %v5006 = vadd.f32 %v4957, %v4990
      %v5007 = vadd.f32 %v4958, %v4991
      %v5008 = vadd.f32 %v4959, %v4992
      %v5009 = vadd.f32 %v4960, %v4993
      %v5010 = vadd.f32 %v4961, %v4994
      %v5011 = vadd.f32 %v4962, %v4995
      %v5012 = vmul.f32 %v4881, %v4913
      %v5013 = vld [vmem:[#allocation2 + $0x10] sm:$0xff]
      %v5014 = vld [vmem:[#allocation2 + $0x60] sm:$0xff]
      %v5015 = vld [vmem:[#allocation2 + $0xb0] sm:$0xff]
      %v5016 = vld [vmem:[#allocation2 + $0x100] sm:$0xff]
      %v5017 = vld [vmem:[#allocation2 + $0x150] sm:$0xff]
      %v5018 = vld [vmem:[#allocation2 + $0x1a0] sm:$0xff]
      %v5019 = vld [vmem:[#allocation2 + $0x1f0] sm:$0xff]
      %v5020 = vld [vmem:[#allocation2 + $0x240] sm:$0xff]
      %v5021 = vld [vmem:[#allocation2 + $0x290] sm:$0xff]
      %v5022 = vld [vmem:[#allocation2 + $0x2e0] sm:$0xff]
      %v5023 = vld [vmem:[#allocation2 + $0x330] sm:$0xff]
      %v5024 = vld [vmem:[#allocation2 + $0x380] sm:$0xff]
      %v5025 = vld [vmem:[#allocation2 + $0x3d0] sm:$0xff]
      %v5026 = vld [vmem:[#allocation2 + $0x420] sm:$0xff]
      %v5027 = vld [vmem:[#allocation2 + $0x470] sm:$0xff]
      %v5028 = vld [vmem:[#allocation2 + $0x4c0] sm:$0xff]
      %v5029 = vmul.f32 %v5012, %v5013
      %v5030 = vmul.f32 %v5012, %v5014
      %v5031 = vmul.f32 %v5012, %v5015
      %v5032 = vmul.f32 %v5012, %v5016
      %v5033 = vmul.f32 %v5012, %v5017
      %v5034 = vmul.f32 %v5012, %v5018
      %v5035 = vmul.f32 %v5012, %v5019
      %v5036 = vmul.f32 %v5012, %v5020
      %v5037 = vmul.f32 %v5012, %v5021
      %v5038 = vmul.f32 %v5012, %v5022
      %v5039 = vmul.f32 %v5012, %v5023
      %v5040 = vmul.f32 %v5012, %v5024
      %v5041 = vmul.f32 %v5012, %v5025
      %v5042 = vmul.f32 %v5012, %v5026
      %v5043 = vmul.f32 %v5012, %v5027
      %v5044 = vmul.f32 %v5012, %v5028
      %v5045 = vadd.f32 %v4996, %v5029
      %v5046 = vadd.f32 %v4997, %v5030
      %v5047 = vadd.f32 %v4998, %v5031
      %v5048 = vadd.f32 %v4999, %v5032
      %v5049 = vadd.f32 %v5000, %v5033
      %v5050 = vadd.f32 %v5001, %v5034
      %v5051 = vadd.f32 %v5002, %v5035
      %v5052 = vadd.f32 %v5003, %v5036
      %v5053 = vadd.f32 %v5004, %v5037
      %v5054 = vadd.f32 %v5005, %v5038
      %v5055 = vadd.f32 %v5006, %v5039
      %v5056 = vadd.f32 %v5007, %v5040
      %v5057 = vadd.f32 %v5008, %v5041
      %v5058 = vadd.f32 %v5009, %v5042
      %v5059 = vadd.f32 %v5010, %v5043
      %v5060 = vadd.f32 %v5011, %v5044
      %v5061 = vmul.f32 %v4884, %v4913
      %v5062 = vld [vmem:[#allocation2 + $0x18] sm:$0xff]
      %v5063 = vld [vmem:[#allocation2 + $0x68] sm:$0xff]
      %v5064 = vld [vmem:[#allocation2 + $0xb8] sm:$0xff]
      %v5065 = vld [vmem:[#allocation2 + $0x108] sm:$0xff]
      %v5066 = vld [vmem:[#allocation2 + $0x158] sm:$0xff]
      %v5067 = vld [vmem:[#allocation2 + $0x1a8] sm:$0xff]
      %v5068 = vld [vmem:[#allocation2 + $0x1f8] sm:$0xff]
      %v5069 = vld [vmem:[#allocation2 + $0x248] sm:$0xff]
      %v5070 = vld [vmem:[#allocation2 + $0x298] sm:$0xff]
      %v5071 = vld [vmem:[#allocation2 + $0x2e8] sm:$0xff]
      %v5072 = vld [vmem:[#allocation2 + $0x338] sm:$0xff]
      %v5073 = vld [vmem:[#allocation2 + $0x388] sm:$0xff]
      %v5074 = vld [vmem:[#allocation2 + $0x3d8] sm:$0xff]
      %v5075 = vld [vmem:[#allocation2 + $0x428] sm:$0xff]
      %v5076 = vld [vmem:[#allocation2 + $0x478] sm:$0xff]
      %v5077 = vld [vmem:[#allocation2 + $0x4c8] sm:$0xff]
      %v5078 = vmul.f32 %v5061, %v5062
      %v5079 = vmul.f32 %v5061, %v5063
      %v5080 = vmul.f32 %v5061, %v5064
      %v5081 = vmul.f32 %v5061, %v5065
      %v5082 = vmul.f32 %v5061, %v5066
      %v5083 = vmul.f32 %v5061, %v5067
      %v5084 = vmul.f32 %v5061, %v5068
      %v5085 = vmul.f32 %v5061, %v5069
      %v5086 = vmul.f32 %v5061, %v5070
      %v5087 = vmul.f32 %v5061, %v5071
      %v5088 = vmul.f32 %v5061, %v5072
      %v5089 = vmul.f32 %v5061, %v5073
      %v5090 = vmul.f32 %v5061, %v5074
      %v5091 = vmul.f32 %v5061, %v5075
      %v5092 = vmul.f32 %v5061, %v5076
      %v5093 = vmul.f32 %v5061, %v5077
      %v5094 = vadd.f32 %v5045, %v5078
      %v5095 = vadd.f32 %v5046, %v5079
      %v5096 = vadd.f32 %v5047, %v5080
      %v5097 = vadd.f32 %v5048, %v5081
      %v5098 = vadd.f32 %v5049, %v5082
      %v5099 = vadd.f32 %v5050, %v5083
      %v5100 = vadd.f32 %v5051, %v5084
      %v5101 = vadd.f32 %v5052, %v5085
      %v5102 = vadd.f32 %v5053, %v5086
      %v5103 = vadd.f32 %v5054, %v5087
      %v5104 = vadd.f32 %v5055, %v5088
      %v5105 = vadd.f32 %v5056, %v5089
      %v5106 = vadd.f32 %v5057, %v5090
      %v5107 = vadd.f32 %v5058, %v5091
      %v5108 = vadd.f32 %v5059, %v5092
      %v5109 = vadd.f32 %v5060, %v5093
      %v5110 = vmul.f32 %v4887, %v4913
      %v5111 = vld [vmem:[#allocation2 + $0x20] sm:$0xff]
      %v5112 = vld [vmem:[#allocation2 + $0x70] sm:$0xff]
      %v5113 = vld [vmem:[#allocation2 + $0xc0] sm:$0xff]
      %v5114 = vld [vmem:[#allocation2 + $0x110] sm:$0xff]
      %v5115 = vld [vmem:[#allocation2 + $0x160] sm:$0xff]
      %v5116 = vld [vmem:[#allocation2 + $0x1b0] sm:$0xff]
      %v5117 = vld [vmem:[#allocation2 + $0x200] sm:$0xff]
      %v5118 = vld [vmem:[#allocation2 + $0x250] sm:$0xff]
      %v5119 = vld [vmem:[#allocation2 + $0x2a0] sm:$0xff]
      %v5120 = vld [vmem:[#allocation2 + $0x2f0] sm:$0xff]
      %v5121 = vld [vmem:[#allocation2 + $0x340] sm:$0xff]
      %v5122 = vld [vmem:[#allocation2 + $0x390] sm:$0xff]
      %v5123 = vld [vmem:[#allocation2 + $0x3e0] sm:$0xff]
      %v5124 = vld [vmem:[#allocation2 + $0x430] sm:$0xff]
      %v5125 = vld [vmem:[#allocation2 + $0x480] sm:$0xff]
      %v5126 = vld [vmem:[#allocation2 + $0x4d0] sm:$0xff]
      %v5127 = vmul.f32 %v5110, %v5111
      %v5128 = vmul.f32 %v5110, %v5112
      %v5129 = vmul.f32 %v5110, %v5113
      %v5130 = vmul.f32 %v5110, %v5114
      %v5131 = vmul.f32 %v5110, %v5115
      %v5132 = vmul.f32 %v5110, %v5116
      %v5133 = vmul.f32 %v5110, %v5117
      %v5134 = vmul.f32 %v5110, %v5118
      %v5135 = vmul.f32 %v5110, %v5119
      %v5136 = vmul.f32 %v5110, %v5120
      %v5137 = vmul.f32 %v5110, %v5121
      %v5138 = vmul.f32 %v5110, %v5122
      %v5139 = vmul.f32 %v5110, %v5123
      %v5140 = vmul.f32 %v5110, %v5124
      %v5141 = vmul.f32 %v5110, %v5125
      %v5142 = vmul.f32 %v5110, %v5126
      %v5143 = vadd.f32 %v5094, %v5127
      %v5144 = vadd.f32 %v5095, %v5128
      %v5145 = vadd.f32 %v5096, %v5129
      %v5146 = vadd.f32 %v5097, %v5130
      %v5147 = vadd.f32 %v5098, %v5131
      %v5148 = vadd.f32 %v5099, %v5132
      %v5149 = vadd.f32 %v5100, %v5133
      %v5150 = vadd.f32 %v5101, %v5134
      %v5151 = vadd.f32 %v5102, %v5135
      %v5152 = vadd.f32 %v5103, %v5136
      %v5153 = vadd.f32 %v5104, %v5137
      %v5154 = vadd.f32 %v5105, %v5138
      %v5155 = vadd.f32 %v5106, %v5139
      %v5156 = vadd.f32 %v5107, %v5140
      %v5157 = vadd.f32 %v5108, %v5141
      %v5158 = vadd.f32 %v5109, %v5142
      %v5159 = vmul.f32 %v4890, %v4913
      %v5160 = vld [vmem:[#allocation2 + $0x28] sm:$0xff]
      %v5161 = vld [vmem:[#allocation2 + $0x78] sm:$0xff]
      %v5162 = vld [vmem:[#allocation2 + $0xc8] sm:$0xff]
      %v5163 = vld [vmem:[#allocation2 + $0x118] sm:$0xff]
      %v5164 = vld [vmem:[#allocation2 + $0x168] sm:$0xff]
      %v5165 = vld [vmem:[#allocation2 + $0x1b8] sm:$0xff]
      %v5166 = vld [vmem:[#allocation2 + $0x208] sm:$0xff]
      %v5167 = vld [vmem:[#allocation2 + $0x258] sm:$0xff]
      %v5168 = vld [vmem:[#allocation2 + $0x2a8] sm:$0xff]
      %v5169 = vld [vmem:[#allocation2 + $0x2f8] sm:$0xff]
      %v5170 = vld [vmem:[#allocation2 + $0x348] sm:$0xff]
      %v5171 = vld [vmem:[#allocation2 + $0x398] sm:$0xff]
      %v5172 = vld [vmem:[#allocation2 + $0x3e8] sm:$0xff]
      %v5173 = vld [vmem:[#allocation2 + $0x438] sm:$0xff]
      %v5174 = vld [vmem:[#allocation2 + $0x488] sm:$0xff]
      %v5175 = vld [vmem:[#allocation2 + $0x4d8] sm:$0xff]
      %v5176 = vmul.f32 %v5159, %v5160
      %v5177 = vmul.f32 %v5159, %v5161
      %v5178 = vmul.f32 %v5159, %v5162
      %v5179 = vmul.f32 %v5159, %v5163
      %v5180 = vmul.f32 %v5159, %v5164
      %v5181 = vmul.f32 %v5159, %v5165
      %v5182 = vmul.f32 %v5159, %v5166
      %v5183 = vmul.f32 %v5159, %v5167
      %v5184 = vmul.f32 %v5159, %v5168
      %v5185 = vmul.f32 %v5159, %v5169
      %v5186 = vmul.f32 %v5159, %v5170
      %v5187 = vmul.f32 %v5159, %v5171
      %v5188 = vmul.f32 %v5159, %v5172
      %v5189 = vmul.f32 %v5159, %v5173
      %v5190 = vmul.f32 %v5159, %v5174
      %v5191 = vmul.f32 %v5159, %v5175
      %v5192 = vadd.f32 %v5143, %v5176
      %v5193 = vadd.f32 %v5144, %v5177
      %v5194 = vadd.f32 %v5145, %v5178
      %v5195 = vadd.f32 %v5146, %v5179
      %v5196 = vadd.f32 %v5147, %v5180
      %v5197 = vadd.f32 %v5148, %v5181
      %v5198 = vadd.f32 %v5149, %v5182
      %v5199 = vadd.f32 %v5150, %v5183
      %v5200 = vadd.f32 %v5151, %v5184
      %v5201 = vadd.f32 %v5152, %v5185
      %v5202 = vadd.f32 %v5153, %v5186
      %v5203 = vadd.f32 %v5154, %v5187
      %v5204 = vadd.f32 %v5155, %v5188
      %v5205 = vadd.f32 %v5156, %v5189
      %v5206 = vadd.f32 %v5157, %v5190
      %v5207 = vadd.f32 %v5158, %v5191
      %v5208 = vmul.f32 %v4893, %v4913
      %v5209 = vld [vmem:[#allocation2 + $0x30] sm:$0xff]
      %v5210 = vld [vmem:[#allocation2 + $0x80] sm:$0xff]
      %v5211 = vld [vmem:[#allocation2 + $0xd0] sm:$0xff]
      %v5212 = vld [vmem:[#allocation2 + $0x120] sm:$0xff]
      %v5213 = vld [vmem:[#allocation2 + $0x170] sm:$0xff]
      %v5214 = vld [vmem:[#allocation2 + $0x1c0] sm:$0xff]
      %v5215 = vld [vmem:[#allocation2 + $0x210] sm:$0xff]
      %v5216 = vld [vmem:[#allocation2 + $0x260] sm:$0xff]
      %v5217 = vld [vmem:[#allocation2 + $0x2b0] sm:$0xff]
      %v5218 = vld [vmem:[#allocation2 + $0x300] sm:$0xff]
      %v5219 = vld [vmem:[#allocation2 + $0x350] sm:$0xff]
      %v5220 = vld [vmem:[#allocation2 + $0x3a0] sm:$0xff]
      %v5221 = vld [vmem:[#allocation2 + $0x3f0] sm:$0xff]
      %v5222 = vld [vmem:[#allocation2 + $0x440] sm:$0xff]
      %v5223 = vld [vmem:[#allocation2 + $0x490] sm:$0xff]
      %v5224 = vld [vmem:[#allocation2 + $0x4e0] sm:$0xff]
      %v5225 = vmul.f32 %v5208, %v5209
      %v5226 = vmul.f32 %v5208, %v5210
      %v5227 = vmul.f32 %v5208, %v5211
      %v5228 = vmul.f32 %v5208, %v5212
      %v5229 = vmul.f32 %v5208, %v5213
      %v5230 = vmul.f32 %v5208, %v5214
      %v5231 = vmul.f32 %v5208, %v5215
      %v5232 = vmul.f32 %v5208, %v5216
      %v5233 = vmul.f32 %v5208, %v5217
      %v5234 = vmul.f32 %v5208, %v5218
      %v5235 = vmul.f32 %v5208, %v5219
      %v5236 = vmul.f32 %v5208, %v5220
      %v5237 = vmul.f32 %v5208, %v5221
      %v5238 = vmul.f32 %v5208, %v5222
      %v5239 = vmul.f32 %v5208, %v5223
      %v5240 = vmul.f32 %v5208, %v5224
      %v5241 = vadd.f32 %v5192, %v5225
      %v5242 = vadd.f32 %v5193, %v5226
      %v5243 = vadd.f32 %v5194, %v5227
      %v5244 = vadd.f32 %v5195, %v5228
      %v5245 = vadd.f32 %v5196, %v5229
      %v5246 = vadd.f32 %v5197, %v5230
      %v5247 = vadd.f32 %v5198, %v5231
      %v5248 = vadd.f32 %v5199, %v5232
      %v5249 = vadd.f32 %v5200, %v5233
      %v5250 = vadd.f32 %v5201, %v5234
      %v5251 = vadd.f32 %v5202, %v5235
      %v5252 = vadd.f32 %v5203, %v5236
      %v5253 = vadd.f32 %v5204, %v5237
      %v5254 = vadd.f32 %v5205, %v5238
      %v5255 = vadd.f32 %v5206, %v5239
      %v5256 = vadd.f32 %v5207, %v5240
      %v5257 = vmul.f32 %v4896, %v4913
      %v5258 = vld [vmem:[#allocation2 + $0x38] sm:$0xff]
      %v5259 = vld [vmem:[#allocation2 + $0x88] sm:$0xff]
      %v5260 = vld [vmem:[#allocation2 + $0xd8] sm:$0xff]
      %v5261 = vld [vmem:[#allocation2 + $0x128] sm:$0xff]
      %v5262 = vld [vmem:[#allocation2 + $0x178] sm:$0xff]
      %v5263 = vld [vmem:[#allocation2 + $0x1c8] sm:$0xff]
      %v5264 = vld [vmem:[#allocation2 + $0x218] sm:$0xff]
      %v5265 = vld [vmem:[#allocation2 + $0x268] sm:$0xff]
      %v5266 = vld [vmem:[#allocation2 + $0x2b8] sm:$0xff]
      %v5267 = vld [vmem:[#allocation2 + $0x308] sm:$0xff]
      %v5268 = vld [vmem:[#allocation2 + $0x358] sm:$0xff]
      %v5269 = vld [vmem:[#allocation2 + $0x3a8] sm:$0xff]
      %v5270 = vld [vmem:[#allocation2 + $0x3f8] sm:$0xff]
      %v5271 = vld [vmem:[#allocation2 + $0x448] sm:$0xff]
      %v5272 = vld [vmem:[#allocation2 + $0x498] sm:$0xff]
      %v5273 = vld [vmem:[#allocation2 + $0x4e8] sm:$0xff]
      %v5274 = vmul.f32 %v5257, %v5258
      %v5275 = vmul.f32 %v5257, %v5259
      %v5276 = vmul.f32 %v5257, %v5260
      %v5277 = vmul.f32 %v5257, %v5261
      %v5278 = vmul.f32 %v5257, %v5262
      %v5279 = vmul.f32 %v5257, %v5263
      %v5280 = vmul.f32 %v5257, %v5264
      %v5281 = vmul.f32 %v5257, %v5265
      %v5282 = vmul.f32 %v5257, %v5266
      %v5283 = vmul.f32 %v5257, %v5267
      %v5284 = vmul.f32 %v5257, %v5268
      %v5285 = vmul.f32 %v5257, %v5269
      %v5286 = vmul.f32 %v5257, %v5270
      %v5287 = vmul.f32 %v5257, %v5271
      %v5288 = vmul.f32 %v5257, %v5272
      %v5289 = vmul.f32 %v5257, %v5273
      %v5290 = vadd.f32 %v5241, %v5274
      %v5291 = vadd.f32 %v5242, %v5275
      %v5292 = vadd.f32 %v5243, %v5276
      %v5293 = vadd.f32 %v5244, %v5277
      %v5294 = vadd.f32 %v5245, %v5278
      %v5295 = vadd.f32 %v5246, %v5279
      %v5296 = vadd.f32 %v5247, %v5280
      %v5297 = vadd.f32 %v5248, %v5281
      %v5298 = vadd.f32 %v5249, %v5282
      %v5299 = vadd.f32 %v5250, %v5283
      %v5300 = vadd.f32 %v5251, %v5284
      %v5301 = vadd.f32 %v5252, %v5285
      %v5302 = vadd.f32 %v5253, %v5286
      %v5303 = vadd.f32 %v5254, %v5287
      %v5304 = vadd.f32 %v5255, %v5288
      %v5305 = vadd.f32 %v5256, %v5289
      %v5306 = vmul.f32 %v4899, %v4913
      %v5307 = vld [vmem:[#allocation2 + $0x40] sm:$0xff]
      %v5308 = vld [vmem:[#allocation2 + $0x90] sm:$0xff]
      %v5309 = vld [vmem:[#allocation2 + $0xe0] sm:$0xff]
      %v5310 = vld [vmem:[#allocation2 + $0x130] sm:$0xff]
      %v5311 = vld [vmem:[#allocation2 + $0x180] sm:$0xff]
      %v5312 = vld [vmem:[#allocation2 + $0x1d0] sm:$0xff]
      %v5313 = vld [vmem:[#allocation2 + $0x220] sm:$0xff]
      %v5314 = vld [vmem:[#allocation2 + $0x270] sm:$0xff]
      %v5315 = vld [vmem:[#allocation2 + $0x2c0] sm:$0xff]
      %v5316 = vld [vmem:[#allocation2 + $0x310] sm:$0xff]
      %v5317 = vld [vmem:[#allocation2 + $0x360] sm:$0xff]
      %v5318 = vld [vmem:[#allocation2 + $0x3b0] sm:$0xff]
      %v5319 = vld [vmem:[#allocation2 + $0x400] sm:$0xff]
      %v5320 = vld [vmem:[#allocation2 + $0x450] sm:$0xff]
      %v5321 = vld [vmem:[#allocation2 + $0x4a0] sm:$0xff]
      %v5322 = vld [vmem:[#allocation2 + $0x4f0] sm:$0xff]
      %v5323 = vmul.f32 %v5306, %v5307
      %v5324 = vmul.f32 %v5306, %v5308
      %v5325 = vmul.f32 %v5306, %v5309
      %v5326 = vmul.f32 %v5306, %v5310
      %v5327 = vmul.f32 %v5306, %v5311
      %v5328 = vmul.f32 %v5306, %v5312
      %v5329 = vmul.f32 %v5306, %v5313
      %v5330 = vmul.f32 %v5306, %v5314
      %v5331 = vmul.f32 %v5306, %v5315
      %v5332 = vmul.f32 %v5306, %v5316
      %v5333 = vmul.f32 %v5306, %v5317
      %v5334 = vmul.f32 %v5306, %v5318
      %v5335 = vmul.f32 %v5306, %v5319
      %v5336 = vmul.f32 %v5306, %v5320
      %v5337 = vmul.f32 %v5306, %v5321
      %v5338 = vmul.f32 %v5306, %v5322
      %v5339 = vadd.f32 %v5290, %v5323
      %v5340 = vadd.f32 %v5291, %v5324
      %v5341 = vadd.f32 %v5292, %v5325
      %v5342 = vadd.f32 %v5293, %v5326
      %v5343 = vadd.f32 %v5294, %v5327
      %v5344 = vadd.f32 %v5295, %v5328
      %v5345 = vadd.f32 %v5296, %v5329
      %v5346 = vadd.f32 %v5297, %v5330
      %v5347 = vadd.f32 %v5298, %v5331
      %v5348 = vadd.f32 %v5299, %v5332
      %v5349 = vadd.f32 %v5300, %v5333
      %v5350 = vadd.f32 %v5301, %v5334
      %v5351 = vadd.f32 %v5302, %v5335
      %v5352 = vadd.f32 %v5303, %v5336
      %v5353 = vadd.f32 %v5304, %v5337
      %v5354 = vadd.f32 %v5305, %v5338
      %v5355 = vmul.f32 %v4902, %v4913
      %v5356 = vld [vmem:[#allocation2 + $0x48] sm:$0xff]
      %v5357 = vld [vmem:[#allocation2 + $0x98] sm:$0xff]
      %v5358 = vld [vmem:[#allocation2 + $0xe8] sm:$0xff]
      %v5359 = vld [vmem:[#allocation2 + $0x138] sm:$0xff]
      %v5360 = vld [vmem:[#allocation2 + $0x188] sm:$0xff]
      %v5361 = vld [vmem:[#allocation2 + $0x1d8] sm:$0xff]
      %v5362 = vld [vmem:[#allocation2 + $0x228] sm:$0xff]
      %v5363 = vld [vmem:[#allocation2 + $0x278] sm:$0xff]
      %v5364 = vld [vmem:[#allocation2 + $0x2c8] sm:$0xff]
      %v5365 = vld [vmem:[#allocation2 + $0x318] sm:$0xff]
      %v5366 = vld [vmem:[#allocation2 + $0x368] sm:$0xff]
      %v5367 = vld [vmem:[#allocation2 + $0x3b8] sm:$0xff]
      %v5368 = vld [vmem:[#allocation2 + $0x408] sm:$0xff]
      %v5369 = vld [vmem:[#allocation2 + $0x458] sm:$0xff]
      %v5370 = vld [vmem:[#allocation2 + $0x4a8] sm:$0xff]
      %v5371 = vld [vmem:[#allocation2 + $0x4f8] sm:$0xff]
      %v5372 = vmul.f32 %v5355, %v5356
      %v5373 = vmul.f32 %v5355, %v5357
      %v5374 = vmul.f32 %v5355, %v5358
      %v5375 = vmul.f32 %v5355, %v5359
      %v5376 = vmul.f32 %v5355, %v5360
      %v5377 = vmul.f32 %v5355, %v5361
      %v5378 = vmul.f32 %v5355, %v5362
      %v5379 = vmul.f32 %v5355, %v5363
      %v5380 = vmul.f32 %v5355, %v5364
      %v5381 = vmul.f32 %v5355, %v5365
      %v5382 = vmul.f32 %v5355, %v5366
      %v5383 = vmul.f32 %v5355, %v5367
      %v5384 = vmul.f32 %v5355, %v5368
      %v5385 = vmul.f32 %v5355, %v5369
      %v5386 = vmul.f32 %v5355, %v5370
      %v5387 = vmul.f32 %v5355, %v5371
      %v5388 = vadd.f32 %v5339, %v5372
      %v5389 = vadd.f32 %v5340, %v5373
      %v5390 = vadd.f32 %v5341, %v5374
      %v5391 = vadd.f32 %v5342, %v5375
      %v5392 = vadd.f32 %v5343, %v5376
      %v5393 = vadd.f32 %v5344, %v5377
      %v5394 = vadd.f32 %v5345, %v5378
      %v5395 = vadd.f32 %v5346, %v5379
      %v5396 = vadd.f32 %v5347, %v5380
      %v5397 = vadd.f32 %v5348, %v5381
      %v5398 = vadd.f32 %v5349, %v5382
      %v5399 = vadd.f32 %v5350, %v5383
      %v5400 = vadd.f32 %v5351, %v5384
      %v5401 = vadd.f32 %v5352, %v5385
      %v5402 = vadd.f32 %v5353, %v5386
      %v5403 = vadd.f32 %v5354, %v5387
      %v5404 = vld [vmem:[%s8] sm:$0xff]
      %v5405 = vld [vmem:[%s8 + $0x8] sm:$0xff]
      %v5406 = vld [vmem:[%s8 + $0x10] sm:$0xff]
      %v5407 = vld [vmem:[%s8 + $0x18] sm:$0xff]
      %v5408 = vld [vmem:[%s8 + $0x20] sm:$0xff]
      %v5409 = vld [vmem:[%s8 + $0x28] sm:$0xff]
      %v5410 = vld [vmem:[%s8 + $0x30] sm:$0xff]
      %v5411 = vld [vmem:[%s8 + $0x38] sm:$0xff]
      %v5412 = vld [vmem:[%s8 + $0x40] sm:$0xff]
      %v5413 = vld [vmem:[%s8 + $0x48] sm:$0xff]
      %v5414 = vld [vmem:[%s8 + $0x50] sm:$0xff]
      %v5415 = vld [vmem:[%s8 + $0x58] sm:$0xff]
      %v5416 = vld [vmem:[%s8 + $0x60] sm:$0xff]
      %v5417 = vld [vmem:[%s8 + $0x68] sm:$0xff]
      %v5418 = vld [vmem:[%s8 + $0x70] sm:$0xff]
      %v5419 = vld [vmem:[%s8 + $0x78] sm:$0xff]
      %v5420 = vld [vmem:[%s9] sm:$0xff]
      %v5421 = vld [vmem:[%s9 + $0x8] sm:$0xff]
      %v5422 = vld [vmem:[%s9 + $0x10] sm:$0xff]
      %v5423 = vld [vmem:[%s9 + $0x18] sm:$0xff]
      %v5424 = vld [vmem:[%s9 + $0x20] sm:$0xff]
      %v5425 = vld [vmem:[%s9 + $0x28] sm:$0xff]
      %v5426 = vld [vmem:[%s9 + $0x30] sm:$0xff]
      %v5427 = vld [vmem:[%s9 + $0x38] sm:$0xff]
      %v5428 = vld [vmem:[%s9 + $0x40] sm:$0xff]
      %v5429 = vld [vmem:[%s9 + $0x48] sm:$0xff]
      %v5430 = vld [vmem:[%s9 + $0x50] sm:$0xff]
      %v5431 = vld [vmem:[%s9 + $0x58] sm:$0xff]
      %v5432 = vld [vmem:[%s9 + $0x60] sm:$0xff]
      %v5433 = vld [vmem:[%s9 + $0x68] sm:$0xff]
      %v5434 = vld [vmem:[%s9 + $0x70] sm:$0xff]
      %v5435 = vld [vmem:[%s9 + $0x78] sm:$0xff]
      %5436 = vmatprep.subr.mxu0 0.0
      %5437 = vmatpush1.msra.mxu0 %v5388
      %5438 = vmatprep.subr.mxu0 0.0
      %5439 = vmatpush1.msra.mxu0 %v5389
      %5440 = vmatprep.subr.mxu0 0.0
      %5441 = vmatpush1.msra.mxu0 %v5390
      %5442 = vmatprep.subr.mxu0 0.0
      %5443 = vmatpush1.msra.mxu0 %v5391
      %5444 = vmatprep.subr.mxu0 0.0
      %5445 = vmatpush1.msra.mxu0 %v5392
      %5446 = vmatprep.subr.mxu0 0.0
      %5447 = vmatpush1.msra.mxu0 %v5393
      %5448 = vmatprep.subr.mxu0 0.0
      %5449 = vmatpush1.msra.mxu0 %v5394
      %5450 = vmatprep.subr.mxu0 0.0
      %5451 = vmatpush1.msra.mxu0 %v5395
      %5452 = vmatprep.subr.mxu0 0.0
      %5453 = vmatpush1.msra.mxu0 %v5396
      %5454 = vmatprep.subr.mxu0 0.0
      %5455 = vmatpush1.msra.mxu0 %v5397
      %5456 = vmatprep.subr.mxu0 0.0
      %5457 = vmatpush1.msra.mxu0 %v5398
      %5458 = vmatprep.subr.mxu0 0.0
      %5459 = vmatpush1.msra.mxu0 %v5399
      %5460 = vmatprep.subr.mxu0 0.0
      %5461 = vmatpush1.msra.mxu0 %v5400
      %5462 = vmatprep.subr.mxu0 0.0
      %5463 = vmatpush1.msra.mxu0 %v5401
      %5464 = vmatprep.subr.mxu0 0.0
      %5465 = vmatpush1.msra.mxu0 %v5402
      %5466 = vmatprep.subr.mxu0 0.0
      %5467 = vmatpush1.msra.mxu0 %v5403
      %5468 = vmatprep.subr.mxu0 0.0
      %5469 = vmatpush1.msra.mxu0 0.0
      %5470 = vmatprep.subr.mxu0 0.0
      %5471 = vmatpush1.msra.mxu0 0.0
      %5472 = vmatprep.subr.mxu0 0.0
      %5473 = vmatpush1.msra.mxu0 0.0
      %5474 = vmatprep.subr.mxu0 0.0
      %5475 = vmatpush1.msra.mxu0 0.0
      %5476 = vmatprep.subr.mxu0 0.0
      %5477 = vmatpush1.msra.mxu0 0.0
      %5478 = vmatprep.subr.mxu0 0.0
      %5479 = vmatpush1.msra.mxu0 0.0
      %5480 = vmatprep.subr.mxu0 0.0
      %5481 = vmatpush1.msra.mxu0 0.0
      %5482 = vmatprep.subr.mxu0 0.0
      %5483 = vmatpush1.msra.mxu0 0.0
      %5484 = vmatprep.subr.mxu0 0.0
      %5485 = vmatpush1.msra.mxu0 0.0
      %5486 = vmatprep.subr.mxu0 0.0
      %5487 = vmatpush1.msra.mxu0 0.0
      %5488 = vmatprep.subr.mxu0 0.0
      %5489 = vmatpush1.msra.mxu0 0.0
      %5490 = vmatprep.subr.mxu0 0.0
      %5491 = vmatpush1.msra.mxu0 0.0
      %5492 = vmatprep.subr.mxu0 0.0
      %5493 = vmatpush1.msra.mxu0 0.0
      %5494 = vmatprep.subr.mxu0 0.0
      %5495 = vmatpush1.msra.mxu0 0.0
      %5496 = vmatprep.subr.mxu0 0.0
      %5497 = vmatpush1.msra.mxu0 0.0
      %5498 = vmatprep.subr.mxu0 0.0
      %5499 = vmatpush1.msra.mxu0 0.0
      %5500 = vmatprep.mubr.f32.mxu0 0.0
      %5501 = vmatmul.mubr.f32.gmra.mrb[0].mxu0 %v5420
      %v5502 = vpop.f32.mrb[0].mxu0
      %v5503 = vadd.f32 0.0, %v5502
      %v5504 = vpop.f32.mrb[0].mxu0
      %5505 = vmatprep.mubr.f32.mxu0 0.0
      %5506 = vmatmul.mubr.f32.gmra.mrb[0].mxu0 %v5421
      %v5507 = vpop.f32.mrb[0].mxu0
      %v5508 = vadd.f32 0.0, %v5507
      %v5509 = vpop.f32.mrb[0].mxu0
      %5510 = vmatprep.mubr.f32.mxu0 0.0
      %5511 = vmatmul.mubr.f32.gmra.mrb[0].mxu0 %v5422
      %v5512 = vpop.f32.mrb[0].mxu0
      %v5513 = vadd.f32 0.0, %v5512
      %v5514 = vpop.f32.mrb[0].mxu0
      %5515 = vmatprep.mubr.f32.mxu0 0.0
      %5516 = vmatmul.mubr.f32.gmra.mrb[0].mxu0 %v5423
      %v5517 = vpop.f32.mrb[0].mxu0
      %v5518 = vadd.f32 0.0, %v5517
      %v5519 = vpop.f32.mrb[0].mxu0
      %5520 = vmatprep.mubr.f32.mxu0 0.0
      %5521 = vmatmul.mubr.f32.gmra.mrb[0].mxu0 %v5424
      %v5522 = vpop.f32.mrb[0].mxu0
      %v5523 = vadd.f32 0.0, %v5522
      %v5524 = vpop.f32.mrb[0].mxu0
      %5525 = vmatprep.mubr.f32.mxu0 0.0
      %5526 = vmatmul.mubr.f32.gmra.mrb[0].mxu0 %v5425
      %v5527 = vpop.f32.mrb[0].mxu0
      %v5528 = vadd.f32 0.0, %v5527
      %v5529 = vpop.f32.mrb[0].mxu0
      %5530 = vmatprep.mubr.f32.mxu0 0.0
      %5531 = vmatmul.mubr.f32.gmra.mrb[0].mxu0 %v5426
      %v5532 = vpop.f32.mrb[0].mxu0
      %v5533 = vadd.f32 0.0, %v5532
      %v5534 = vpop.f32.mrb[0].mxu0
      %5535 = vmatprep.mubr.f32.mxu0 0.0
      %5536 = vmatmul.mubr.f32.gmra.mrb[0].mxu0 %v5427
      %v5537 = vpop.f32.mrb[0].mxu0
      %v5538 = vadd.f32 0.0, %v5537
      %v5539 = vpop.f32.mrb[0].mxu0
      %5540 = vmatprep.mubr.f32.mxu0 0.0
      %5541 = vmatmul.mubr.f32.gmra.mrb[0].mxu0 %v5428
      %v5542 = vpop.f32.mrb[0].mxu0
      %v5543 = vadd.f32 0.0, %v5542
      %v5544 = vpop.f32.mrb[0].mxu0
      %5545 = vmatprep.mubr.f32.mxu0 0.0
      %5546 = vmatmul.mubr.f32.gmra.mrb[0].mxu0 %v5429
      %v5547 = vpop.f32.mrb[0].mxu0
      %v5548 = vadd.f32 0.0, %v5547
      %v5549 = vpop.f32.mrb[0].mxu0
      %5550 = vmatprep.mubr.f32.mxu0 0.0
      %5551 = vmatmul.mubr.f32.gmra.mrb[0].mxu0 %v5430
      %v5552 = vpop.f32.mrb[0].mxu0
      %v5553 = vadd.f32 0.0, %v5552
      %v5554 = vpop.f32.mrb[0].mxu0
      %5555 = vmatprep.mubr.f32.mxu0 0.0
      %5556 = vmatmul.mubr.f32.gmra.mrb[0].mxu0 %v5431
      %v5557 = vpop.f32.mrb[0].mxu0
      %v5558 = vadd.f32 0.0, %v5557
      %v5559 = vpop.f32.mrb[0].mxu0
      %5560 = vmatprep.mubr.f32.mxu0 0.0
      %5561 = vmatmul.mubr.f32.gmra.mrb[0].mxu0 %v5432
      %v5562 = vpop.f32.mrb[0].mxu0
      %v5563 = vadd.f32 0.0, %v5562
      %v5564 = vpop.f32.mrb[0].mxu0
      %5565 = vmatprep.mubr.f32.mxu0 0.0
      %5566 = vmatmul.mubr.f32.gmra.mrb[0].mxu0 %v5433
      %v5567 = vpop.f32.mrb[0].mxu0
      %v5568 = vadd.f32 0.0, %v5567
      %v5569 = vpop.f32.mrb[0].mxu0
      %5570 = vmatprep.mubr.f32.mxu0 0.0
      %5571 = vmatmul.mubr.f32.gmra.mrb[0].mxu0 %v5434
      %v5572 = vpop.f32.mrb[0].mxu0
      %v5573 = vadd.f32 0.0, %v5572
      %v5574 = vpop.f32.mrb[0].mxu0
      %5575 = vmatprep.mubr.f32.mxu0 0.0
      %5576 = vmatmul.mubr.f32.gmra.mrb[0].mxu0 %v5435
      %v5577 = vpop.f32.mrb[0].mxu0
      %v5578 = vadd.f32 0.0, %v5577
      %v5579 = vpop.f32.mrb[0].mxu0
      %5580 = vdwg.mxu0
      %5581 = vmatprep.subr.mxu0 0.0
      %5582 = vmatpush1.msra.mxu0 %v902
      %5583 = vmatprep.subr.mxu0 0.0
      %5584 = vmatpush1.msra.mxu0 %v907
      %5585 = vmatprep.subr.mxu0 0.0
      %5586 = vmatpush1.msra.mxu0 %v912
      %5587 = vmatprep.subr.mxu0 0.0
      %5588 = vmatpush1.msra.mxu0 %v917
      %5589 = vmatprep.subr.mxu0 0.0
      %5590 = vmatpush1.msra.mxu0 %v922
      %5591 = vmatprep.subr.mxu0 0.0
      %5592 = vmatpush1.msra.mxu0 %v927
      %5593 = vmatprep.subr.mxu0 0.0
      %5594 = vmatpush1.msra.mxu0 %v932
      %5595 = vmatprep.subr.mxu0 0.0
      %5596 = vmatpush1.msra.mxu0 %v937
      %5597 = vmatprep.subr.mxu0 0.0
      %5598 = vmatpush1.msra.mxu0 %v942
      %5599 = vmatprep.subr.mxu0 0.0
      %5600 = vmatpush1.msra.mxu0 %v947
      %5601 = vmatprep.subr.mxu0 0.0
      %5602 = vmatpush1.msra.mxu0 %v952
      %5603 = vmatprep.subr.mxu0 0.0
      %5604 = vmatpush1.msra.mxu0 %v957
      %5605 = vmatprep.subr.mxu0 0.0
      %5606 = vmatpush1.msra.mxu0 %v962
      %5607 = vmatprep.subr.mxu0 0.0
      %5608 = vmatpush1.msra.mxu0 %v967
      %5609 = vmatprep.subr.mxu0 0.0
      %5610 = vmatpush1.msra.mxu0 %v972
      %5611 = vmatprep.subr.mxu0 0.0
      %5612 = vmatpush1.msra.mxu0 %v977
      %5613 = vmatprep.subr.mxu0 0.0
      %5614 = vmatpush1.msra.mxu0 0.0
      %5615 = vmatprep.subr.mxu0 0.0
      %5616 = vmatpush1.msra.mxu0 0.0
      %5617 = vmatprep.subr.mxu0 0.0
      %5618 = vmatpush1.msra.mxu0 0.0
      %5619 = vmatprep.subr.mxu0 0.0
      %5620 = vmatpush1.msra.mxu0 0.0
      %5621 = vmatprep.subr.mxu0 0.0
      %5622 = vmatpush1.msra.mxu0 0.0
      %5623 = vmatprep.subr.mxu0 0.0
      %5624 = vmatpush1.msra.mxu0 0.0
      %5625 = vmatprep.subr.mxu0 0.0
      %5626 = vmatpush1.msra.mxu0 0.0
      %5627 = vmatprep.subr.mxu0 0.0
      %5628 = vmatpush1.msra.mxu0 0.0
      %5629 = vmatprep.subr.mxu0 0.0
      %5630 = vmatpush1.msra.mxu0 0.0
      %5631 = vmatprep.subr.mxu0 0.0
      %5632 = vmatpush1.msra.mxu0 0.0
      %5633 = vmatprep.subr.mxu0 0.0
      %5634 = vmatpush1.msra.mxu0 0.0
      %5635 = vmatprep.subr.mxu0 0.0
      %5636 = vmatpush1.msra.mxu0 0.0
      %5637 = vmatprep.subr.mxu0 0.0
      %5638 = vmatpush1.msra.mxu0 0.0
      %5639 = vmatprep.subr.mxu0 0.0
      %5640 = vmatpush1.msra.mxu0 0.0
      %5641 = vmatprep.subr.mxu0 0.0
      %5642 = vmatpush1.msra.mxu0 0.0
      %5643 = vmatprep.subr.mxu0 0.0
      %5644 = vmatpush1.msra.mxu0 0.0
      %5645 = vmatprep.mubr.f32.mxu0 0.0
      %5646 = vmatmul.mubr.f32.gmra.mrb[0].mxu0 %v5404
      %v5647 = vpop.f32.mrb[0].mxu0
      %v5648 = vadd.f32 %v5503, %v5647
      %v5649 = vpop.f32.mrb[0].mxu0
      %5650 = vmatprep.mubr.f32.mxu0 0.0
      %5651 = vmatmul.mubr.f32.gmra.mrb[0].mxu0 %v5405
      %v5652 = vpop.f32.mrb[0].mxu0
      %v5653 = vadd.f32 %v5508, %v5652
      %v5654 = vpop.f32.mrb[0].mxu0
      %5655 = vmatprep.mubr.f32.mxu0 0.0
      %5656 = vmatmul.mubr.f32.gmra.mrb[0].mxu0 %v5406
      %v5657 = vpop.f32.mrb[0].mxu0
      %v5658 = vadd.f32 %v5513, %v5657
      %v5659 = vpop.f32.mrb[0].mxu0
      %5660 = vmatprep.mubr.f32.mxu0 0.0
      %5661 = vmatmul.mubr.f32.gmra.mrb[0].mxu0 %v5407
      %v5662 = vpop.f32.mrb[0].mxu0
      %v5663 = vadd.f32 %v5518, %v5662
      %v5664 = vpop.f32.mrb[0].mxu0
      %5665 = vmatprep.mubr.f32.mxu0 0.0
      %5666 = vmatmul.mubr.f32.gmra.mrb[0].mxu0 %v5408
      %v5667 = vpop.f32.mrb[0].mxu0
      %v5668 = vadd.f32 %v5523, %v5667
      %v5669 = vpop.f32.mrb[0].mxu0
      %5670 = vmatprep.mubr.f32.mxu0 0.0
      %5671 = vmatmul.mubr.f32.gmra.mrb[0].mxu0 %v5409
      %v5672 = vpop.f32.mrb[0].mxu0
      %v5673 = vadd.f32 %v5528, %v5672
      %v5674 = vpop.f32.mrb[0].mxu0
      %5675 = vmatprep.mubr.f32.mxu0 0.0
      %5676 = vmatmul.mubr.f32.gmra.mrb[0].mxu0 %v5410
      %v5677 = vpop.f32.mrb[0].mxu0
      %v5678 = vadd.f32 %v5533, %v5677
      %v5679 = vpop.f32.mrb[0].mxu0
      %5680 = vmatprep.mubr.f32.mxu0 0.0
      %5681 = vmatmul.mubr.f32.gmra.mrb[0].mxu0 %v5411
      %v5682 = vpop.f32.mrb[0].mxu0
      %v5683 = vadd.f32 %v5538, %v5682
      %v5684 = vpop.f32.mrb[0].mxu0
      %5685 = vmatprep.mubr.f32.mxu0 0.0
      %5686 = vmatmul.mubr.f32.gmra.mrb[0].mxu0 %v5412
      %v5687 = vpop.f32.mrb[0].mxu0
      %v5688 = vadd.f32 %v5543, %v5687
      %v5689 = vpop.f32.mrb[0].mxu0
      %5690 = vmatprep.mubr.f32.mxu0 0.0
      %5691 = vmatmul.mubr.f32.gmra.mrb[0].mxu0 %v5413
      %v5692 = vpop.f32.mrb[0].mxu0
      %v5693 = vadd.f32 %v5548, %v5692
      %v5694 = vpop.f32.mrb[0].mxu0
      %5695 = vmatprep.mubr.f32.mxu0 0.0
      %5696 = vmatmul.mubr.f32.gmra.mrb[0].mxu0 %v5414
      %v5697 = vpop.f32.mrb[0].mxu0
      %v5698 = vadd.f32 %v5553, %v5697
      %v5699 = vpop.f32.mrb[0].mxu0
      %5700 = vmatprep.mubr.f32.mxu0 0.0
      %5701 = vmatmul.mubr.f32.gmra.mrb[0].mxu0 %v5415
      %v5702 = vpop.f32.mrb[0].mxu0
      %v5703 = vadd.f32 %v5558, %v5702
      %v5704 = vpop.f32.mrb[0].mxu0
      %5705 = vmatprep.mubr.f32.mxu0 0.0
      %5706 = vmatmul.mubr.f32.gmra.mrb[0].mxu0 %v5416
      %v5707 = vpop.f32.mrb[0].mxu0
      %v5708 = vadd.f32 %v5563, %v5707
      %v5709 = vpop.f32.mrb[0].mxu0
      %5710 = vmatprep.mubr.f32.mxu0 0.0
      %5711 = vmatmul.mubr.f32.gmra.mrb[0].mxu0 %v5417
      %v5712 = vpop.f32.mrb[0].mxu0
      %v5713 = vadd.f32 %v5568, %v5712
      %v5714 = vpop.f32.mrb[0].mxu0
      %5715 = vmatprep.mubr.f32.mxu0 0.0
      %5716 = vmatmul.mubr.f32.gmra.mrb[0].mxu0 %v5418
      %v5717 = vpop.f32.mrb[0].mxu0
      %v5718 = vadd.f32 %v5573, %v5717
      %v5719 = vpop.f32.mrb[0].mxu0
      %5720 = vmatprep.mubr.f32.mxu0 0.0
      %5721 = vmatmul.mubr.f32.gmra.mrb[0].mxu0 %v5419
      %v5722 = vpop.f32.mrb[0].mxu0
      %v5723 = vadd.f32 %v5578, %v5722
      %v5724 = vpop.f32.mrb[0].mxu0
      %5725 = vdwg.mxu0
      %5726 = vset.pattern.permute.xlu0 4
      %5727 = vperm.xlu0 %5726, %v432
      %v5728 = vpop.permute.xlu0 %5727
      %5730 = vset.pattern.permute.xlu0 4
      %5731 = vperm.xlu0 %5730, %v433
      %v5732 = vpop.permute.xlu0 %5731
      %5734 = vset.pattern.permute.xlu0 4
      %5735 = vperm.xlu0 %5734, %v434
      %v5736 = vpop.permute.xlu0 %5735
      %5738 = vset.pattern.permute.xlu0 4
      %5739 = vperm.xlu0 %5738, %v435
      %v5740 = vpop.permute.xlu0 %5739
      %5742 = vset.pattern.permute.xlu0 4
      %5743 = vperm.xlu0 %5742, %v436
      %v5744 = vpop.permute.xlu0 %5743
      %5746 = vset.pattern.permute.xlu0 4
      %5747 = vperm.xlu0 %5746, %v437
      %v5748 = vpop.permute.xlu0 %5747
      %5750 = vset.pattern.permute.xlu0 4
      %5751 = vperm.xlu0 %5750, %v438
      %v5752 = vpop.permute.xlu0 %5751
      %5754 = vset.pattern.permute.xlu0 4
      %5755 = vperm.xlu0 %5754, %v439
      %v5756 = vpop.permute.xlu0 %5755
      %5758 = vset.pattern.permute.xlu0 4
      %5759 = vperm.xlu0 %5758, %v440
      %v5760 = vpop.permute.xlu0 %5759
      %5762 = vset.pattern.permute.xlu0 4
      %5763 = vperm.xlu0 %5762, %v441
      %v5764 = vpop.permute.xlu0 %5763
      %5766 = vset.pattern.permute.xlu0 4
      %5767 = vperm.xlu0 %5766, %v442
      %v5768 = vpop.permute.xlu0 %5767
      %5770 = vset.pattern.permute.xlu0 4
      %5771 = vperm.xlu0 %5770, %v443
      %v5772 = vpop.permute.xlu0 %5771
      %5774 = vset.pattern.permute.xlu0 4
      %5775 = vperm.xlu0 %5774, %v444
      %v5776 = vpop.permute.xlu0 %5775
      %5778 = vset.pattern.permute.xlu0 4
      %5779 = vperm.xlu0 %5778, %v445
      %v5780 = vpop.permute.xlu0 %5779
      %5782 = vset.pattern.permute.xlu0 4
      %5783 = vperm.xlu0 %5782, %v446
      %v5784 = vpop.permute.xlu0 %5783
      %5786 = vset.pattern.permute.xlu0 4
      %5787 = vperm.xlu0 %5786, %v447
      %v5788 = vpop.permute.xlu0 %5787
      %v5790 = vadd.f32 %v5648, %v5728
      %v5791 = vadd.f32 %v5653, %v5732
      %v5792 = vadd.f32 %v5658, %v5736
      %v5793 = vadd.f32 %v5663, %v5740
      %v5794 = vadd.f32 %v5668, %v5744
      %v5795 = vadd.f32 %v5673, %v5748
      %v5796 = vadd.f32 %v5678, %v5752
      %v5797 = vadd.f32 %v5683, %v5756
      %v5798 = vadd.f32 %v5688, %v5760
      %v5799 = vadd.f32 %v5693, %v5764
      %v5800 = vadd.f32 %v5698, %v5768
      %v5801 = vadd.f32 %v5703, %v5772
      %v5802 = vadd.f32 %v5708, %v5776
      %v5803 = vadd.f32 %v5713, %v5780
      %v5804 = vadd.f32 %v5718, %v5784
      %v5805 = vadd.f32 %v5723, %v5788
      %v5806 = vmax.f32 %v5790, 0.0
      %v5807 = vmax.f32 %v5791, 0.0
      %v5808 = vmax.f32 %v5792, 0.0
      %v5809 = vmax.f32 %v5793, 0.0
      %v5810 = vmax.f32 %v5794, 0.0
      %v5811 = vmax.f32 %v5795, 0.0
      %v5812 = vmax.f32 %v5796, 0.0
      %v5813 = vmax.f32 %v5797, 0.0
      %v5814 = vmax.f32 %v5798, 0.0
      %v5815 = vmax.f32 %v5799, 0.0
      %v5816 = vmax.f32 %v5800, 0.0
      %v5817 = vmax.f32 %v5801, 0.0
      %v5818 = vmax.f32 %v5802, 0.0
      %v5819 = vmax.f32 %v5803, 0.0
      %v5820 = vmax.f32 %v5804, 0.0
      %v5821 = vmax.f32 %v5805, 0.0
      %v5822 = vld [vmem:[%s10] sm:$0xff]
      %v5823 = vld [vmem:[%s10 + $0x8] sm:$0xff]
      %v5824 = vld [vmem:[%s10 + $0x10] sm:$0xff]
      %v5825 = vld [vmem:[%s10 + $0x18] sm:$0xff]
      %v5826 = vld [vmem:[%s10 + $0x20] sm:$0xff]
      %v5827 = vld [vmem:[%s10 + $0x28] sm:$0xff]
      %v5828 = vld [vmem:[%s10 + $0x30] sm:$0xff]
      %v5829 = vld [vmem:[%s10 + $0x38] sm:$0xff]
      %v5830 = vld [vmem:[%s10 + $0x40] sm:$0xff]
      %v5831 = vld [vmem:[%s10 + $0x48] sm:$0xff]
      %v5832 = vld [vmem:[%s10 + $0x50] sm:$0xff]
      %v5833 = vld [vmem:[%s10 + $0x58] sm:$0xff]
      %v5834 = vld [vmem:[%s10 + $0x60] sm:$0xff]
      %v5835 = vld [vmem:[%s10 + $0x68] sm:$0xff]
      %v5836 = vld [vmem:[%s10 + $0x70] sm:$0xff]
      %v5837 = vld [vmem:[%s10 + $0x78] sm:$0xff]
      %5838 = vset.pattern.permute.xlu0 5
      %5839 = vperm.xlu0 %5838, %v432
      %v5840 = vpop.permute.xlu0 %5839
      %5842 = vset.pattern.permute.xlu0 5
      %5843 = vperm.xlu0 %5842, %v433
      %v5844 = vpop.permute.xlu0 %5843
      %5846 = vset.pattern.permute.xlu0 5
      %5847 = vperm.xlu0 %5846, %v434
      %v5848 = vpop.permute.xlu0 %5847
      %5850 = vset.pattern.permute.xlu0 5
      %5851 = vperm.xlu0 %5850, %v435
      %v5852 = vpop.permute.xlu0 %5851
      %5854 = vset.pattern.permute.xlu0 5
      %5855 = vperm.xlu0 %5854, %v436
      %v5856 = vpop.permute.xlu0 %5855
      %5858 = vset.pattern.permute.xlu0 5
      %5859 = vperm.xlu0 %5858, %v437
      %v5860 = vpop.permute.xlu0 %5859
      %5862 = vset.pattern.permute.xlu0 5
      %5863 = vperm.xlu0 %5862, %v438
      %v5864 = vpop.permute.xlu0 %5863
      %5866 = vset.pattern.permute.xlu0 5
      %5867 = vperm.xlu0 %5866, %v439
      %v5868 = vpop.permute.xlu0 %5867
      %5870 = vset.pattern.permute.xlu0 5
      %5871 = vperm.xlu0 %5870, %v440
      %v5872 = vpop.permute.xlu0 %5871
      %5874 = vset.pattern.permute.xlu0 5
      %5875 = vperm.xlu0 %5874, %v441
      %v5876 = vpop.permute.xlu0 %5875
      %5878 = vset.pattern.permute.xlu0 5
      %5879 = vperm.xlu0 %5878, %v442
      %v5880 = vpop.permute.xlu0 %5879
      %5882 = vset.pattern.permute.xlu0 5
      %5883 = vperm.xlu0 %5882, %v443
      %v5884 = vpop.permute.xlu0 %5883
      %5886 = vset.pattern.permute.xlu0 5
      %5887 = vperm.xlu0 %5886, %v444
      %v5888 = vpop.permute.xlu0 %5887
      %5890 = vset.pattern.permute.xlu0 5
      %5891 = vperm.xlu0 %5890, %v445
      %v5892 = vpop.permute.xlu0 %5891
      %5894 = vset.pattern.permute.xlu0 5
      %5895 = vperm.xlu0 %5894, %v446
      %v5896 = vpop.permute.xlu0 %5895
      %5898 = vset.pattern.permute.xlu0 5
      %5899 = vperm.xlu0 %5898, %v447
      %v5900 = vpop.permute.xlu0 %5899
      %5902 = vmatprep.subr.mxu0 0.0
      %5903 = vmatpush1.msra.mxu0 %v5806
      %5904 = vmatprep.subr.mxu0 0.0
      %5905 = vmatpush1.msra.mxu0 %v5807
      %5906 = vmatprep.subr.mxu0 0.0
      %5907 = vmatpush1.msra.mxu0 %v5808
      %5908 = vmatprep.subr.mxu0 0.0
      %5909 = vmatpush1.msra.mxu0 %v5809
      %5910 = vmatprep.subr.mxu0 0.0
      %5911 = vmatpush1.msra.mxu0 %v5810
      %5912 = vmatprep.subr.mxu0 0.0
      %5913 = vmatpush1.msra.mxu0 %v5811
      %5914 = vmatprep.subr.mxu0 0.0
      %5915 = vmatpush1.msra.mxu0 %v5812
      %5916 = vmatprep.subr.mxu0 0.0
      %5917 = vmatpush1.msra.mxu0 %v5813
      %5918 = vmatprep.subr.mxu0 0.0
      %5919 = vmatpush1.msra.mxu0 %v5814
      %5920 = vmatprep.subr.mxu0 0.0
      %5921 = vmatpush1.msra.mxu0 %v5815
      %5922 = vmatprep.subr.mxu0 0.0
      %5923 = vmatpush1.msra.mxu0 %v5816
      %5924 = vmatprep.subr.mxu0 0.0
      %5925 = vmatpush1.msra.mxu0 %v5817
      %5926 = vmatprep.subr.mxu0 0.0
      %5927 = vmatpush1.msra.mxu0 %v5818
      %5928 = vmatprep.subr.mxu0 0.0
      %5929 = vmatpush1.msra.mxu0 %v5819
      %5930 = vmatprep.subr.mxu0 0.0
      %5931 = vmatpush1.msra.mxu0 %v5820
      %5932 = vmatprep.subr.mxu0 0.0
      %5933 = vmatpush1.msra.mxu0 %v5821
      %5934 = vmatprep.subr.mxu0 0.0
      %5935 = vmatpush1.msra.mxu0 0.0
      %5936 = vmatprep.subr.mxu0 0.0
      %5937 = vmatpush1.msra.mxu0 0.0
      %5938 = vmatprep.subr.mxu0 0.0
      %5939 = vmatpush1.msra.mxu0 0.0
      %5940 = vmatprep.subr.mxu0 0.0
      %5941 = vmatpush1.msra.mxu0 0.0
      %5942 = vmatprep.subr.mxu0 0.0
      %5943 = vmatpush1.msra.mxu0 0.0
      %5944 = vmatprep.subr.mxu0 0.0
      %5945 = vmatpush1.msra.mxu0 0.0
      %5946 = vmatprep.subr.mxu0 0.0
      %5947 = vmatpush1.msra.mxu0 0.0
      %5948 = vmatprep.subr.mxu0 0.0
      %5949 = vmatpush1.msra.mxu0 0.0
      %5950 = vmatprep.subr.mxu0 0.0
      %5951 = vmatpush1.msra.mxu0 0.0
      %5952 = vmatprep.subr.mxu0 0.0
      %5953 = vmatpush1.msra.mxu0 0.0
      %5954 = vmatprep.subr.mxu0 0.0
      %5955 = vmatpush1.msra.mxu0 0.0
      %5956 = vmatprep.subr.mxu0 0.0
      %5957 = vmatpush1.msra.mxu0 0.0
      %5958 = vmatprep.subr.mxu0 0.0
      %5959 = vmatpush1.msra.mxu0 0.0
      %5960 = vmatprep.subr.mxu0 0.0
      %5961 = vmatpush1.msra.mxu0 0.0
      %5962 = vmatprep.subr.mxu0 0.0
      %5963 = vmatpush1.msra.mxu0 0.0
      %5964 = vmatprep.subr.mxu0 0.0
      %5965 = vmatpush1.msra.mxu0 0.0
      %5966 = vmatprep.mubr.f32.mxu0 0.0
      %5967 = vmatmul.mubr.f32.gmra.mrb[0].mxu0 %v5822
      %v5968 = vpop.f32.mrb[0].mxu0
      %v5969 = vadd.f32 %v5840, %v5968
      %v5970 = vpop.f32.mrb[0].mxu0
      %5971 = vmatprep.mubr.f32.mxu0 0.0
      %5972 = vmatmul.mubr.f32.gmra.mrb[0].mxu0 %v5823
      %v5973 = vpop.f32.mrb[0].mxu0
      %v5974 = vadd.f32 %v5844, %v5973
      %v5975 = vpop.f32.mrb[0].mxu0
      %5976 = vmatprep.mubr.f32.mxu0 0.0
      %5977 = vmatmul.mubr.f32.gmra.mrb[0].mxu0 %v5824
      %v5978 = vpop.f32.mrb[0].mxu0
      %v5979 = vadd.f32 %v5848, %v5978
      %v5980 = vpop.f32.mrb[0].mxu0
      %5981 = vmatprep.mubr.f32.mxu0 0.0
      %5982 = vmatmul.mubr.f32.gmra.mrb[0].mxu0 %v5825
      %v5983 = vpop.f32.mrb[0].mxu0
      %v5984 = vadd.f32 %v5852, %v5983
      %v5985 = vpop.f32.mrb[0].mxu0
      %5986 = vmatprep.mubr.f32.mxu0 0.0
      %5987 = vmatmul.mubr.f32.gmra.mrb[0].mxu0 %v5826
      %v5988 = vpop.f32.mrb[0].mxu0
      %v5989 = vadd.f32 %v5856, %v5988
      %v5990 = vpop.f32.mrb[0].mxu0
      %5991 = vmatprep.mubr.f32.mxu0 0.0
      %5992 = vmatmul.mubr.f32.gmra.mrb[0].mxu0 %v5827
      %v5993 = vpop.f32.mrb[0].mxu0
      %v5994 = vadd.f32 %v5860, %v5993
      %v5995 = vpop.f32.mrb[0].mxu0
      %5996 = vmatprep.mubr.f32.mxu0 0.0
      %5997 = vmatmul.mubr.f32.gmra.mrb[0].mxu0 %v5828
      %v5998 = vpop.f32.mrb[0].mxu0
      %v5999 = vadd.f32 %v5864, %v5998
      %v6000 = vpop.f32.mrb[0].mxu0
      %6001 = vmatprep.mubr.f32.mxu0 0.0
      %6002 = vmatmul.mubr.f32.gmra.mrb[0].mxu0 %v5829
      %v6003 = vpop.f32.mrb[0].mxu0
      %v6004 = vadd.f32 %v5868, %v6003
      %v6005 = vpop.f32.mrb[0].mxu0
      %6006 = vmatprep.mubr.f32.mxu0 0.0
      %6007 = vmatmul.mubr.f32.gmra.mrb[0].mxu0 %v5830
      %v6008 = vpop.f32.mrb[0].mxu0
      %v6009 = vadd.f32 %v5872, %v6008
      %v6010 = vpop.f32.mrb[0].mxu0
      %6011 = vmatprep.mubr.f32.mxu0 0.0
      %6012 = vmatmul.mubr.f32.gmra.mrb[0].mxu0 %v5831
      %v6013 = vpop.f32.mrb[0].mxu0
      %v6014 = vadd.f32 %v5876, %v6013
      %v6015 = vpop.f32.mrb[0].mxu0
      %6016 = vmatprep.mubr.f32.mxu0 0.0
      %6017 = vmatmul.mubr.f32.gmra.mrb[0].mxu0 %v5832
      %v6018 = vpop.f32.mrb[0].mxu0
      %v6019 = vadd.f32 %v5880, %v6018
      %v6020 = vpop.f32.mrb[0].mxu0
      %6021 = vmatprep.mubr.f32.mxu0 0.0
      %6022 = vmatmul.mubr.f32.gmra.mrb[0].mxu0 %v5833
      %v6023 = vpop.f32.mrb[0].mxu0
      %v6024 = vadd.f32 %v5884, %v6023
      %v6025 = vpop.f32.mrb[0].mxu0
      %6026 = vmatprep.mubr.f32.mxu0 0.0
      %6027 = vmatmul.mubr.f32.gmra.mrb[0].mxu0 %v5834
      %v6028 = vpop.f32.mrb[0].mxu0
      %v6029 = vadd.f32 %v5888, %v6028
      %v6030 = vpop.f32.mrb[0].mxu0
      %6031 = vmatprep.mubr.f32.mxu0 0.0
      %6032 = vmatmul.mubr.f32.gmra.mrb[0].mxu0 %v5835
      %v6033 = vpop.f32.mrb[0].mxu0
      %v6034 = vadd.f32 %v5892, %v6033
      %v6035 = vpop.f32.mrb[0].mxu0
      %6036 = vmatprep.mubr.f32.mxu0 0.0
      %6037 = vmatmul.mubr.f32.gmra.mrb[0].mxu0 %v5836
      %v6038 = vpop.f32.mrb[0].mxu0
      %v6039 = vadd.f32 %v5896, %v6038
      %v6040 = vpop.f32.mrb[0].mxu0
      %6041 = vmatprep.mubr.f32.mxu0 0.0
      %6042 = vmatmul.mubr.f32.gmra.mrb[0].mxu0 %v5837
      %v6043 = vpop.f32.mrb[0].mxu0
      %v6044 = vadd.f32 %v5900, %v6043
      %v6045 = vpop.f32.mrb[0].mxu0
      %6046 = vdwg.mxu0
      %v6047 = vmax.f32 %v5969, 0.0
      %v6048 = vmax.f32 %v5974, 0.0
      %v6049 = vmax.f32 %v5979, 0.0
      %v6050 = vmax.f32 %v5984, 0.0
      %v6051 = vmax.f32 %v5989, 0.0
      %v6052 = vmax.f32 %v5994, 0.0
      %v6053 = vmax.f32 %v5999, 0.0
      %v6054 = vmax.f32 %v6004, 0.0
      %v6055 = vmax.f32 %v6009, 0.0
      %v6056 = vmax.f32 %v6014, 0.0
      %v6057 = vmax.f32 %v6019, 0.0
      %v6058 = vmax.f32 %v6024, 0.0
      %v6059 = vmax.f32 %v6029, 0.0
      %v6060 = vmax.f32 %v6034, 0.0
      %v6061 = vmax.f32 %v6039, 0.0
      %v6062 = vmax.f32 %v6044, 0.0
      %v6063 = vadd.f32 %v4915, %v6047
      %v6064 = vadd.f32 %v4916, %v6048
      %v6065 = vadd.f32 %v4917, %v6049
      %v6066 = vadd.f32 %v4918, %v6050
      %v6067 = vadd.f32 %v4919, %v6051
      %v6068 = vadd.f32 %v4920, %v6052
      %v6069 = vadd.f32 %v4921, %v6053
      %v6070 = vadd.f32 %v4922, %v6054
      %v6071 = vadd.f32 %v4923, %v6055
      %v6072 = vadd.f32 %v4924, %v6056
      %v6073 = vadd.f32 %v4925, %v6057
      %v6074 = vadd.f32 %v4926, %v6058
      %v6075 = vadd.f32 %v4927, %v6059
      %v6076 = vadd.f32 %v4928, %v6060
      %v6077 = vadd.f32 %v4929, %v6061
      %v6078 = vadd.f32 %v4930, %v6062
      %v6079 = vtanh.pop %v6063
      %v6080 = vtanh.pop %v6064
      %v6081 = vtanh.pop %v6065
      %v6082 = vtanh.pop %v6066
      %v6083 = vtanh.pop %v6067
      %v6084 = vtanh.pop %v6068
      %v6085 = vtanh.pop %v6069
      %v6086 = vtanh.pop %v6070
      %v6087 = vtanh.pop %v6071
      %v6088 = vtanh.pop %v6072
      %v6089 = vtanh.pop %v6073
      %v6090 = vtanh.pop %v6074
      %v6091 = vtanh.pop %v6075
      %v6092 = vtanh.pop %v6076
      %v6093 = vtanh.pop %v6077
      %v6094 = vtanh.pop %v6078
      %6095 = vset.pattern.permute.xlu0 7
      %6096 = vperm.xlu0 %6095, %v432
      %v6097 = vpop.permute.xlu0 %6096
      %6099 = vset.pattern.permute.xlu0 7
      %6100 = vperm.xlu0 %6099, %v433
      %v6101 = vpop.permute.xlu0 %6100
      %6103 = vset.pattern.permute.xlu0 7
      %6104 = vperm.xlu0 %6103, %v434
      %v6105 = vpop.permute.xlu0 %6104
      %6107 = vset.pattern.permute.xlu0 7
      %6108 = vperm.xlu0 %6107, %v435
      %v6109 = vpop.permute.xlu0 %6108
      %6111 = vset.pattern.permute.xlu0 7
      %6112 = vperm.xlu0 %6111, %v436
      %v6113 = vpop.permute.xlu0 %6112
      %6115 = vset.pattern.permute.xlu0 7
      %6116 = vperm.xlu0 %6115, %v437
      %v6117 = vpop.permute.xlu0 %6116
      %6119 = vset.pattern.permute.xlu0 7
      %6120 = vperm.xlu0 %6119, %v438
      %v6121 = vpop.permute.xlu0 %6120
      %6123 = vset.pattern.permute.xlu0 7
      %6124 = vperm.xlu0 %6123, %v439
      %v6125 = vpop.permute.xlu0 %6124
      %6127 = vset.pattern.permute.xlu0 7
      %6128 = vperm.xlu0 %6127, %v440
      %v6129 = vpop.permute.xlu0 %6128
      %6131 = vset.pattern.permute.xlu0 7
      %6132 = vperm.xlu0 %6131, %v441
      %v6133 = vpop.permute.xlu0 %6132
      %6135 = vset.pattern.permute.xlu0 7
      %6136 = vperm.xlu0 %6135, %v442
      %v6137 = vpop.permute.xlu0 %6136
      %6139 = vset.pattern.permute.xlu0 7
      %6140 = vperm.xlu0 %6139, %v443
      %v6141 = vpop.permute.xlu0 %6140
      %6143 = vset.pattern.permute.xlu0 7
      %6144 = vperm.xlu0 %6143, %v444
      %v6145 = vpop.permute.xlu0 %6144
      %6147 = vset.pattern.permute.xlu0 7
      %6148 = vperm.xlu0 %6147, %v445
      %v6149 = vpop.permute.xlu0 %6148
      %6151 = vset.pattern.permute.xlu0 7
      %6152 = vperm.xlu0 %6151, %v446
      %v6153 = vpop.permute.xlu0 %6152
      %6155 = vset.pattern.permute.xlu0 7
      %6156 = vperm.xlu0 %6155, %v447
      %v6157 = vpop.permute.xlu0 %6156
      %v6159 = vmul.f32 %v6097, %v6079
      %v6160 = vmul.f32 %v6101, %v6080
      %v6161 = vmul.f32 %v6105, %v6081
      %v6162 = vmul.f32 %v6109, %v6082
      %v6163 = vmul.f32 %v6113, %v6083
      %v6164 = vmul.f32 %v6117, %v6084
      %v6165 = vmul.f32 %v6121, %v6085
      %v6166 = vmul.f32 %v6125, %v6086
      %v6167 = vmul.f32 %v6129, %v6087
      %v6168 = vmul.f32 %v6133, %v6088
      %v6169 = vmul.f32 %v6137, %v6089
      %v6170 = vmul.f32 %v6141, %v6090
      %v6171 = vmul.f32 %v6145, %v6091
      %v6172 = vmul.f32 %v6149, %v6092
      %v6173 = vmul.f32 %v6153, %v6093
      %v6174 = vmul.f32 %v6157, %v6094
      %v6175 = vadd.f32 %v6159, %v6160
      %v6176 = vadd.f32 %v6175, %v6161
      %v6177 = vadd.f32 %v6176, %v6162
      %v6178 = vadd.f32 %v6177, %v6163
      %v6179 = vadd.f32 %v6178, %v6164
      %v6180 = vadd.f32 %v6179, %v6165
      %v6181 = vadd.f32 %v6180, %v6166
      %v6182 = vadd.f32 %v6181, %v6167
      %v6183 = vadd.f32 %v6182, %v6168
      %v6184 = vadd.f32 %v6183, %v6169
      %v6185 = vadd.f32 %v6184, %v6170
      %v6186 = vadd.f32 %v6185, %v6171
      %v6187 = vadd.f32 %v6186, %v6172
      %v6188 = vadd.f32 %v6187, %v6173
      %v6189 = vadd.f32 %v6188, %v6174
      %v6190 = vrot.slane %v6189, 4
      %v6191 = vadd.f32 %v6189, %v6190
      %v6192 = vrot.slane %v6191, 2
      %v6193 = vadd.f32 %v6191, %v6192
      %v6194 = vrot.slane %v6193, 1
      %v6195 = vadd.f32 %v6193, %v6194
      %v6196 = vadd.f32 %v4964, %v6047
      %v6197 = vadd.f32 %v4965, %v6048
      %v6198 = vadd.f32 %v4966, %v6049
      %v6199 = vadd.f32 %v4967, %v6050
      %v6200 = vadd.f32 %v4968, %v6051
      %v6201 = vadd.f32 %v4969, %v6052
      %v6202 = vadd.f32 %v4970, %v6053
      %v6203 = vadd.f32 %v4971, %v6054
      %v6204 = vadd.f32 %v4972, %v6055
      %v6205 = vadd.f32 %v4973, %v6056
      %v6206 = vadd.f32 %v4974, %v6057
      %v6207 = vadd.f32 %v4975, %v6058
      %v6208 = vadd.f32 %v4976, %v6059
      %v6209 = vadd.f32 %v4977, %v6060
      %v6210 = vadd.f32 %v4978, %v6061
      %v6211 = vadd.f32 %v4979, %v6062
      %v6212 = vtanh.pop %v6196
      %v6213 = vtanh.pop %v6197
      %v6214 = vtanh.pop %v6198
      %v6215 = vtanh.pop %v6199
      %v6216 = vtanh.pop %v6200
      %v6217 = vtanh.pop %v6201
      %v6218 = vtanh.pop %v6202
      %v6219 = vtanh.pop %v6203
      %v6220 = vtanh.pop %v6204
      %v6221 = vtanh.pop %v6205
      %v6222 = vtanh.pop %v6206
      %v6223 = vtanh.pop %v6207
      %v6224 = vtanh.pop %v6208
      %v6225 = vtanh.pop %v6209
      %v6226 = vtanh.pop %v6210
      %v6227 = vtanh.pop %v6211
      %v6228 = vmul.f32 %v6097, %v6212
      %v6229 = vmul.f32 %v6101, %v6213
      %v6230 = vmul.f32 %v6105, %v6214
      %v6231 = vmul.f32 %v6109, %v6215
      %v6232 = vmul.f32 %v6113, %v6216
      %v6233 = vmul.f32 %v6117, %v6217
      %v6234 = vmul.f32 %v6121, %v6218
      %v6235 = vmul.f32 %v6125, %v6219
      %v6236 = vmul.f32 %v6129, %v6220
      %v6237 = vmul.f32 %v6133, %v6221
      %v6238 = vmul.f32 %v6137, %v6222
      %v6239 = vmul.f32 %v6141, %v6223
      %v6240 = vmul.f32 %v6145, %v6224
      %v6241 = vmul.f32 %v6149, %v6225
      %v6242 = vmul.f32 %v6153, %v6226
      %v6243 = vmul.f32 %v6157, %v6227
      %v6244 = vadd.f32 %v6228, %v6229
      %v6245 = vadd.f32 %v6244, %v6230
      %v6246 = vadd.f32 %v6245, %v6231
      %v6247 = vadd.f32 %v6246, %v6232
      %v6248 = vadd.f32 %v6247, %v6233
      %v6249 = vadd.f32 %v6248, %v6234
      %v6250 = vadd.f32 %v6249, %v6235
      %v6251 = vadd.f32 %v6250, %v6236
      %v6252 = vadd.f32 %v6251, %v6237
      %v6253 = vadd.f32 %v6252, %v6238
      %v6254 = vadd.f32 %v6253, %v6239
      %v6255 = vadd.f32 %v6254, %v6240
      %v6256 = vadd.f32 %v6255, %v6241
      %v6257 = vadd.f32 %v6256, %v6242
      %v6258 = vadd.f32 %v6257, %v6243
      %v6259 = vrot.slane %v6258, 4
      %v6260 = vadd.f32 %v6258, %v6259
      %v6261 = vrot.slane %v6260, 2
      %v6262 = vadd.f32 %v6260, %v6261
      %v6263 = vrot.slane %v6262, 1
      %v6264 = vadd.f32 %v6262, %v6263
      %v6265 = vadd.f32 %v5013, %v6047
      %v6266 = vadd.f32 %v5014, %v6048
      %v6267 = vadd.f32 %v5015, %v6049
      %v6268 = vadd.f32 %v5016, %v6050
      %v6269 = vadd.f32 %v5017, %v6051
      %v6270 = vadd.f32 %v5018, %v6052
      %v6271 = vadd.f32 %v5019, %v6053
      %v6272 = vadd.f32 %v5020, %v6054
      %v6273 = vadd.f32 %v5021, %v6055
      %v6274 = vadd.f32 %v5022, %v6056
      %v6275 = vadd.f32 %v5023, %v6057
      %v6276 = vadd.f32 %v5024, %v6058
      %v6277 = vadd.f32 %v5025, %v6059
      %v6278 = vadd.f32 %v5026, %v6060
      %v6279 = vadd.f32 %v5027, %v6061
      %v6280 = vadd.f32 %v5028, %v6062
      %v6281 = vtanh.pop %v6265
      %v6282 = vtanh.pop %v6266
      %v6283 = vtanh.pop %v6267
      %v6284 = vtanh.pop %v6268
      %v6285 = vtanh.pop %v6269
      %v6286 = vtanh.pop %v6270
      %v6287 = vtanh.pop %v6271
      %v6288 = vtanh.pop %v6272
      %v6289 = vtanh.pop %v6273
      %v6290 = vtanh.pop %v6274
      %v6291 = vtanh.pop %v6275
      %v6292 = vtanh.pop %v6276
      %v6293 = vtanh.pop %v6277
      %v6294 = vtanh.pop %v6278
      %v6295 = vtanh.pop %v6279
      %v6296 = vtanh.pop %v6280
      %v6297 = vmul.f32 %v6097, %v6281
      %v6298 = vmul.f32 %v6101, %v6282
      %v6299 = vmul.f32 %v6105, %v6283
      %v6300 = vmul.f32 %v6109, %v6284
      %v6301 = vmul.f32 %v6113, %v6285
      %v6302 = vmul.f32 %v6117, %v6286
      %v6303 = vmul.f32 %v6121, %v6287
      %v6304 = vmul.f32 %v6125, %v6288
      %v6305 = vmul.f32 %v6129, %v6289
      %v6306 = vmul.f32 %v6133, %v6290
      %v6307 = vmul.f32 %v6137, %v6291
      %v6308 = vmul.f32 %v6141, %v6292
      %v6309 = vmul.f32 %v6145, %v6293
      %v6310 = vmul.f32 %v6149, %v6294
      %v6311 = vmul.f32 %v6153, %v6295
      %v6312 = vmul.f32 %v6157, %v6296
      %v6313 = vadd.f32 %v6297, %v6298
      %v6314 = vadd.f32 %v6313, %v6299
      %v6315 = vadd.f32 %v6314, %v6300
      %v6316 = vadd.f32 %v6315, %v6301
      %v6317 = vadd.f32 %v6316, %v6302
      %v6318 = vadd.f32 %v6317, %v6303
      %v6319 = vadd.f32 %v6318, %v6304
      %v6320 = vadd.f32 %v6319, %v6305
      %v6321 = vadd.f32 %v6320, %v6306
      %v6322 = vadd.f32 %v6321, %v6307
      %v6323 = vadd.f32 %v6322, %v6308
      %v6324 = vadd.f32 %v6323, %v6309
      %v6325 = vadd.f32 %v6324, %v6310
      %v6326 = vadd.f32 %v6325, %v6311
      %v6327 = vadd.f32 %v6326, %v6312
      %v6328 = vrot.slane %v6327, 4
      %v6329 = vadd.f32 %v6327, %v6328
      %v6330 = vrot.slane %v6329, 2
      %v6331 = vadd.f32 %v6329, %v6330
      %v6332 = vrot.slane %v6331, 1
      %v6333 = vadd.f32 %v6331, %v6332
      %v6334 = vadd.f32 %v5062, %v6047
      %v6335 = vadd.f32 %v5063, %v6048
      %v6336 = vadd.f32 %v5064, %v6049
      %v6337 = vadd.f32 %v5065, %v6050
      %v6338 = vadd.f32 %v5066, %v6051
      %v6339 = vadd.f32 %v5067, %v6052
      %v6340 = vadd.f32 %v5068, %v6053
      %v6341 = vadd.f32 %v5069, %v6054
      %v6342 = vadd.f32 %v5070, %v6055
      %v6343 = vadd.f32 %v5071, %v6056
      %v6344 = vadd.f32 %v5072, %v6057
      %v6345 = vadd.f32 %v5073, %v6058
      %v6346 = vadd.f32 %v5074, %v6059
      %v6347 = vadd.f32 %v5075, %v6060
      %v6348 = vadd.f32 %v5076, %v6061
      %v6349 = vadd.f32 %v5077, %v6062
      %v6350 = vtanh.pop %v6334
      %v6351 = vtanh.pop %v6335
      %v6352 = vtanh.pop %v6336
      %v6353 = vtanh.pop %v6337
      %v6354 = vtanh.pop %v6338
      %v6355 = vtanh.pop %v6339
      %v6356 = vtanh.pop %v6340
      %v6357 = vtanh.pop %v6341
      %v6358 = vtanh.pop %v6342
      %v6359 = vtanh.pop %v6343
      %v6360 = vtanh.pop %v6344
      %v6361 = vtanh.pop %v6345
      %v6362 = vtanh.pop %v6346
      %v6363 = vtanh.pop %v6347
      %v6364 = vtanh.pop %v6348
      %v6365 = vtanh.pop %v6349
      %v6366 = vmul.f32 %v6097, %v6350
      %v6367 = vmul.f32 %v6101, %v6351
      %v6368 = vmul.f32 %v6105, %v6352
      %v6369 = vmul.f32 %v6109, %v6353
      %v6370 = vmul.f32 %v6113, %v6354
      %v6371 = vmul.f32 %v6117, %v6355
      %v6372 = vmul.f32 %v6121, %v6356
      %v6373 = vmul.f32 %v6125, %v6357
      %v6374 = vmul.f32 %v6129, %v6358
      %v6375 = vmul.f32 %v6133, %v6359
      %v6376 = vmul.f32 %v6137, %v6360
      %v6377 = vmul.f32 %v6141, %v6361
      %v6378 = vmul.f32 %v6145, %v6362
      %v6379 = vmul.f32 %v6149, %v6363
      %v6380 = vmul.f32 %v6153, %v6364
      %v6381 = vmul.f32 %v6157, %v6365
      %v6382 = vadd.f32 %v6366, %v6367
      %v6383 = vadd.f32 %v6382, %v6368
      %v6384 = vadd.f32 %v6383, %v6369
      %v6385 = vadd.f32 %v6384, %v6370
      %v6386 = vadd.f32 %v6385, %v6371
      %v6387 = vadd.f32 %v6386, %v6372
      %v6388 = vadd.f32 %v6387, %v6373
      %v6389 = vadd.f32 %v6388, %v6374
      %v6390 = vadd.f32 %v6389, %v6375
      %v6391 = vadd.f32 %v6390, %v6376
      %v6392 = vadd.f32 %v6391, %v6377
      %v6393 = vadd.f32 %v6392, %v6378
      %v6394 = vadd.f32 %v6393, %v6379
      %v6395 = vadd.f32 %v6394, %v6380
      %v6396 = vadd.f32 %v6395, %v6381
      %v6397 = vrot.slane %v6396, 4
      %v6398 = vadd.f32 %v6396, %v6397
      %v6399 = vrot.slane %v6398, 2
      %v6400 = vadd.f32 %v6398, %v6399
      %v6401 = vrot.slane %v6400, 1
      %v6402 = vadd.f32 %v6400, %v6401
      %v6403 = vadd.f32 %v5111, %v6047
      %v6404 = vadd.f32 %v5112, %v6048
      %v6405 = vadd.f32 %v5113, %v6049
      %v6406 = vadd.f32 %v5114, %v6050
      %v6407 = vadd.f32 %v5115, %v6051
      %v6408 = vadd.f32 %v5116, %v6052
      %v6409 = vadd.f32 %v5117, %v6053
      %v6410 = vadd.f32 %v5118, %v6054
      %v6411 = vadd.f32 %v5119, %v6055
      %v6412 = vadd.f32 %v5120, %v6056
      %v6413 = vadd.f32 %v5121, %v6057
      %v6414 = vadd.f32 %v5122, %v6058
      %v6415 = vadd.f32 %v5123, %v6059
      %v6416 = vadd.f32 %v5124, %v6060
      %v6417 = vadd.f32 %v5125, %v6061
      %v6418 = vadd.f32 %v5126, %v6062
      %v6419 = vtanh.pop %v6403
      %v6420 = vtanh.pop %v6404
      %v6421 = vtanh.pop %v6405
      %v6422 = vtanh.pop %v6406
      %v6423 = vtanh.pop %v6407
      %v6424 = vtanh.pop %v6408
      %v6425 = vtanh.pop %v6409
      %v6426 = vtanh.pop %v6410
      %v6427 = vtanh.pop %v6411
      %v6428 = vtanh.pop %v6412
      %v6429 = vtanh.pop %v6413
      %v6430 = vtanh.pop %v6414
      %v6431 = vtanh.pop %v6415
      %v6432 = vtanh.pop %v6416
      %v6433 = vtanh.pop %v6417
      %v6434 = vtanh.pop %v6418
      %v6435 = vmul.f32 %v6097, %v6419
      %v6436 = vmul.f32 %v6101, %v6420
      %v6437 = vmul.f32 %v6105, %v6421
      %v6438 = vmul.f32 %v6109, %v6422
      %v6439 = vmul.f32 %v6113, %v6423
      %v6440 = vmul.f32 %v6117, %v6424
      %v6441 = vmul.f32 %v6121, %v6425
      %v6442 = vmul.f32 %v6125, %v6426
      %v6443 = vmul.f32 %v6129, %v6427
      %v6444 = vmul.f32 %v6133, %v6428
      %v6445 = vmul.f32 %v6137, %v6429
      %v6446 = vmul.f32 %v6141, %v6430
      %v6447 = vmul.f32 %v6145, %v6431
      %v6448 = vmul.f32 %v6149, %v6432
      %v6449 = vmul.f32 %v6153, %v6433
      %v6450 = vmul.f32 %v6157, %v6434
      %v6451 = vadd.f32 %v6435, %v6436
      %v6452 = vadd.f32 %v6451, %v6437
      %v6453 = vadd.f32 %v6452, %v6438
      %v6454 = vadd.f32 %v6453, %v6439
      %v6455 = vadd.f32 %v6454, %v6440
      %v6456 = vadd.f32 %v6455, %v6441
      %v6457 = vadd.f32 %v6456, %v6442
      %v6458 = vadd.f32 %v6457, %v6443
      %v6459 = vadd.f32 %v6458, %v6444
      %v6460 = vadd.f32 %v6459, %v6445
      %v6461 = vadd.f32 %v6460, %v6446
      %v6462 = vadd.f32 %v6461, %v6447
      %v6463 = vadd.f32 %v6462, %v6448
      %v6464 = vadd.f32 %v6463, %v6449
      %v6465 = vadd.f32 %v6464, %v6450
      %v6466 = vrot.slane %v6465, 4
      %v6467 = vadd.f32 %v6465, %v6466
      %v6468 = vrot.slane %v6467, 2
      %v6469 = vadd.f32 %v6467, %v6468
      %v6470 = vrot.slane %v6469, 1
      %v6471 = vadd.f32 %v6469, %v6470
      %v6472 = vadd.f32 %v5160, %v6047
      %v6473 = vadd.f32 %v5161, %v6048
      %v6474 = vadd.f32 %v5162, %v6049
      %v6475 = vadd.f32 %v5163, %v6050
      %v6476 = vadd.f32 %v5164, %v6051
      %v6477 = vadd.f32 %v5165, %v6052
      %v6478 = vadd.f32 %v5166, %v6053
      %v6479 = vadd.f32 %v5167, %v6054
      %v6480 = vadd.f32 %v5168, %v6055
      %v6481 = vadd.f32 %v5169, %v6056
      %v6482 = vadd.f32 %v5170, %v6057
      %v6483 = vadd.f32 %v5171, %v6058
      %v6484 = vadd.f32 %v5172, %v6059
      %v6485 = vadd.f32 %v5173, %v6060
      %v6486 = vadd.f32 %v5174, %v6061
      %v6487 = vadd.f32 %v5175, %v6062
      %v6488 = vtanh.pop %v6472
      %v6489 = vtanh.pop %v6473
      %v6490 = vtanh.pop %v6474
      %v6491 = vtanh.pop %v6475
      %v6492 = vtanh.pop %v6476
      %v6493 = vtanh.pop %v6477
      %v6494 = vtanh.pop %v6478
      %v6495 = vtanh.pop %v6479
      %v6496 = vtanh.pop %v6480
      %v6497 = vtanh.pop %v6481
      %v6498 = vtanh.pop %v6482
      %v6499 = vtanh.pop %v6483
      %v6500 = vtanh.pop %v6484
      %v6501 = vtanh.pop %v6485
      %v6502 = vtanh.pop %v6486
      %v6503 = vtanh.pop %v6487
      %v6504 = vmul.f32 %v6097, %v6488
      %v6505 = vmul.f32 %v6101, %v6489
      %v6506 = vmul.f32 %v6105, %v6490
      %v6507 = vmul.f32 %v6109, %v6491
      %v6508 = vmul.f32 %v6113, %v6492
      %v6509 = vmul.f32 %v6117, %v6493
      %v6510 = vmul.f32 %v6121, %v6494
      %v6511 = vmul.f32 %v6125, %v6495
      %v6512 = vmul.f32 %v6129, %v6496
      %v6513 = vmul.f32 %v6133, %v6497
      %v6514 = vmul.f32 %v6137, %v6498
      %v6515 = vmul.f32 %v6141, %v6499
      %v6516 = vmul.f32 %v6145, %v6500
      %v6517 = vmul.f32 %v6149, %v6501
      %v6518 = vmul.f32 %v6153, %v6502
      %v6519 = vmul.f32 %v6157, %v6503
      %v6520 = vadd.f32 %v6504, %v6505
      %v6521 = vadd.f32 %v6520, %v6506
      %v6522 = vadd.f32 %v6521, %v6507
      %v6523 = vadd.f32 %v6522, %v6508
      %v6524 = vadd.f32 %v6523, %v6509
      %v6525 = vadd.f32 %v6524, %v6510
      %v6526 = vadd.f32 %v6525, %v6511
      %v6527 = vadd.f32 %v6526, %v6512
      %v6528 = vadd.f32 %v6527, %v6513
      %v6529 = vadd.f32 %v6528, %v6514
      %v6530 = vadd.f32 %v6529, %v6515
      %v6531 = vadd.f32 %v6530, %v6516
      %v6532 = vadd.f32 %v6531, %v6517
      %v6533 = vadd.f32 %v6532, %v6518
      %v6534 = vadd.f32 %v6533, %v6519
      %v6535 = vrot.slane %v6534, 4
      %v6536 = vadd.f32 %v6534, %v6535
      %v6537 = vrot.slane %v6536, 2
      %v6538 = vadd.f32 %v6536, %v6537
      %v6539 = vrot.slane %v6538, 1
      %v6540 = vadd.f32 %v6538, %v6539
      %v6541 = vadd.f32 %v5209, %v6047
      %v6542 = vadd.f32 %v5210, %v6048
      %v6543 = vadd.f32 %v5211, %v6049
      %v6544 = vadd.f32 %v5212, %v6050
      %v6545 = vadd.f32 %v5213, %v6051
      %v6546 = vadd.f32 %v5214, %v6052
      %v6547 = vadd.f32 %v5215, %v6053
      %v6548 = vadd.f32 %v5216, %v6054
      %v6549 = vadd.f32 %v5217, %v6055
      %v6550 = vadd.f32 %v5218, %v6056
      %v6551 = vadd.f32 %v5219, %v6057
      %v6552 = vadd.f32 %v5220, %v6058
      %v6553 = vadd.f32 %v5221, %v6059
      %v6554 = vadd.f32 %v5222, %v6060
      %v6555 = vadd.f32 %v5223, %v6061
      %v6556 = vadd.f32 %v5224, %v6062
      %v6557 = vtanh.pop %v6541
      %v6558 = vtanh.pop %v6542
      %v6559 = vtanh.pop %v6543
      %v6560 = vtanh.pop %v6544
      %v6561 = vtanh.pop %v6545
      %v6562 = vtanh.pop %v6546
      %v6563 = vtanh.pop %v6547
      %v6564 = vtanh.pop %v6548
      %v6565 = vtanh.pop %v6549
      %v6566 = vtanh.pop %v6550
      %v6567 = vtanh.pop %v6551
      %v6568 = vtanh.pop %v6552
      %v6569 = vtanh.pop %v6553
      %v6570 = vtanh.pop %v6554
      %v6571 = vtanh.pop %v6555
      %v6572 = vtanh.pop %v6556
      %v6573 = vmul.f32 %v6097, %v6557
      %v6574 = vmul.f32 %v6101, %v6558
      %v6575 = vmul.f32 %v6105, %v6559
      %v6576 = vmul.f32 %v6109, %v6560
      %v6577 = vmul.f32 %v6113, %v6561
      %v6578 = vmul.f32 %v6117, %v6562
      %v6579 = vmul.f32 %v6121, %v6563
      %v6580 = vmul.f32 %v6125, %v6564
      %v6581 = vmul.f32 %v6129, %v6565
      %v6582 = vmul.f32 %v6133, %v6566
      %v6583 = vmul.f32 %v6137, %v6567
      %v6584 = vmul.f32 %v6141, %v6568
      %v6585 = vmul.f32 %v6145, %v6569
      %v6586 = vmul.f32 %v6149, %v6570
      %v6587 = vmul.f32 %v6153, %v6571
      %v6588 = vmul.f32 %v6157, %v6572
      %v6589 = vadd.f32 %v6573, %v6574
      %v6590 = vadd.f32 %v6589, %v6575
      %v6591 = vadd.f32 %v6590, %v6576
      %v6592 = vadd.f32 %v6591, %v6577
      %v6593 = vadd.f32 %v6592, %v6578
      %v6594 = vadd.f32 %v6593, %v6579
      %v6595 = vadd.f32 %v6594, %v6580
      %v6596 = vadd.f32 %v6595, %v6581
      %v6597 = vadd.f32 %v6596, %v6582
      %v6598 = vadd.f32 %v6597, %v6583
      %v6599 = vadd.f32 %v6598, %v6584
      %v6600 = vadd.f32 %v6599, %v6585
      %v6601 = vadd.f32 %v6600, %v6586
      %v6602 = vadd.f32 %v6601, %v6587
      %v6603 = vadd.f32 %v6602, %v6588
      %v6604 = vrot.slane %v6603, 4
      %v6605 = vadd.f32 %v6603, %v6604
      %v6606 = vrot.slane %v6605, 2
      %v6607 = vadd.f32 %v6605, %v6606
      %v6608 = vrot.slane %v6607, 1
      %v6609 = vadd.f32 %v6607, %v6608
      %v6610 = vadd.f32 %v5258, %v6047
      %v6611 = vadd.f32 %v5259, %v6048
      %v6612 = vadd.f32 %v5260, %v6049
      %v6613 = vadd.f32 %v5261, %v6050
      %v6614 = vadd.f32 %v5262, %v6051
      %v6615 = vadd.f32 %v5263, %v6052
      %v6616 = vadd.f32 %v5264, %v6053
      %v6617 = vadd.f32 %v5265, %v6054
      %v6618 = vadd.f32 %v5266, %v6055
      %v6619 = vadd.f32 %v5267, %v6056
      %v6620 = vadd.f32 %v5268, %v6057
      %v6621 = vadd.f32 %v5269, %v6058
      %v6622 = vadd.f32 %v5270, %v6059
      %v6623 = vadd.f32 %v5271, %v6060
      %v6624 = vadd.f32 %v5272, %v6061
      %v6625 = vadd.f32 %v5273, %v6062
      %v6626 = vtanh.pop %v6610
      %v6627 = vtanh.pop %v6611
      %v6628 = vtanh.pop %v6612
      %v6629 = vtanh.pop %v6613
      %v6630 = vtanh.pop %v6614
      %v6631 = vtanh.pop %v6615
      %v6632 = vtanh.pop %v6616
      %v6633 = vtanh.pop %v6617
      %v6634 = vtanh.pop %v6618
      %v6635 = vtanh.pop %v6619
      %v6636 = vtanh.pop %v6620
      %v6637 = vtanh.pop %v6621
      %v6638 = vtanh.pop %v6622
      %v6639 = vtanh.pop %v6623
      %v6640 = vtanh.pop %v6624
      %v6641 = vtanh.pop %v6625
      %v6642 = vmul.f32 %v6097, %v6626
      %v6643 = vmul.f32 %v6101, %v6627
      %v6644 = vmul.f32 %v6105, %v6628
      %v6645 = vmul.f32 %v6109, %v6629
      %v6646 = vmul.f32 %v6113, %v6630
      %v6647 = vmul.f32 %v6117, %v6631
      %v6648 = vmul.f32 %v6121, %v6632
      %v6649 = vmul.f32 %v6125, %v6633
      %v6650 = vmul.f32 %v6129, %v6634
      %v6651 = vmul.f32 %v6133, %v6635
      %v6652 = vmul.f32 %v6137, %v6636
      %v6653 = vmul.f32 %v6141, %v6637
      %v6654 = vmul.f32 %v6145, %v6638
      %v6655 = vmul.f32 %v6149, %v6639
      %v6656 = vmul.f32 %v6153, %v6640
      %v6657 = vmul.f32 %v6157, %v6641
      %v6658 = vadd.f32 %v6642, %v6643
      %v6659 = vadd.f32 %v6658, %v6644
      %v6660 = vadd.f32 %v6659, %v6645
      %v6661 = vadd.f32 %v6660, %v6646
      %v6662 = vadd.f32 %v6661, %v6647
      %v6663 = vadd.f32 %v6662, %v6648
      %v6664 = vadd.f32 %v6663, %v6649
      %v6665 = vadd.f32 %v6664, %v6650
      %v6666 = vadd.f32 %v6665, %v6651
      %v6667 = vadd.f32 %v6666, %v6652
      %v6668 = vadd.f32 %v6667, %v6653
      %v6669 = vadd.f32 %v6668, %v6654
      %v6670 = vadd.f32 %v6669, %v6655
      %v6671 = vadd.f32 %v6670, %v6656
      %v6672 = vadd.f32 %v6671, %v6657
      %v6673 = vrot.slane %v6672, 4
      %v6674 = vadd.f32 %v6672, %v6673
      %v6675 = vrot.slane %v6674, 2
      %v6676 = vadd.f32 %v6674, %v6675
      %v6677 = vrot.slane %v6676, 1
      %v6678 = vadd.f32 %v6676, %v6677
      %v6679 = vadd.f32 %v5307, %v6047
      %v6680 = vadd.f32 %v5308, %v6048
      %v6681 = vadd.f32 %v5309, %v6049
      %v6682 = vadd.f32 %v5310, %v6050
      %v6683 = vadd.f32 %v5311, %v6051
      %v6684 = vadd.f32 %v5312, %v6052
      %v6685 = vadd.f32 %v5313, %v6053
      %v6686 = vadd.f32 %v5314, %v6054
      %v6687 = vadd.f32 %v5315, %v6055
      %v6688 = vadd.f32 %v5316, %v6056
      %v6689 = vadd.f32 %v5317, %v6057
      %v6690 = vadd.f32 %v5318, %v6058
      %v6691 = vadd.f32 %v5319, %v6059
      %v6692 = vadd.f32 %v5320, %v6060
      %v6693 = vadd.f32 %v5321, %v6061
      %v6694 = vadd.f32 %v5322, %v6062
      %v6695 = vtanh.pop %v6679
      %v6696 = vtanh.pop %v6680
      %v6697 = vtanh.pop %v6681
      %v6698 = vtanh.pop %v6682
      %v6699 = vtanh.pop %v6683
      %v6700 = vtanh.pop %v6684
      %v6701 = vtanh.pop %v6685
      %v6702 = vtanh.pop %v6686
      %v6703 = vtanh.pop %v6687
      %v6704 = vtanh.pop %v6688
      %v6705 = vtanh.pop %v6689
      %v6706 = vtanh.pop %v6690
      %v6707 = vtanh.pop %v6691
      %v6708 = vtanh.pop %v6692
      %v6709 = vtanh.pop %v6693
      %v6710 = vtanh.pop %v6694
      %v6711 = vmul.f32 %v6097, %v6695
      %v6712 = vmul.f32 %v6101, %v6696
      %v6713 = vmul.f32 %v6105, %v6697
      %v6714 = vmul.f32 %v6109, %v6698
      %v6715 = vmul.f32 %v6113, %v6699
      %v6716 = vmul.f32 %v6117, %v6700
      %v6717 = vmul.f32 %v6121, %v6701
      %v6718 = vmul.f32 %v6125, %v6702
      %v6719 = vmul.f32 %v6129, %v6703
      %v6720 = vmul.f32 %v6133, %v6704
      %v6721 = vmul.f32 %v6137, %v6705
      %v6722 = vmul.f32 %v6141, %v6706
      %v6723 = vmul.f32 %v6145, %v6707
      %v6724 = vmul.f32 %v6149, %v6708
      %v6725 = vmul.f32 %v6153, %v6709
      %v6726 = vmul.f32 %v6157, %v6710
      %v6727 = vadd.f32 %v6711, %v6712
      %v6728 = vadd.f32 %v6727, %v6713
      %v6729 = vadd.f32 %v6728, %v6714
      %v6730 = vadd.f32 %v6729, %v6715
      %v6731 = vadd.f32 %v6730, %v6716
      %v6732 = vadd.f32 %v6731, %v6717
      %v6733 = vadd.f32 %v6732, %v6718
      %v6734 = vadd.f32 %v6733, %v6719
      %v6735 = vadd.f32 %v6734, %v6720
      %v6736 = vadd.f32 %v6735, %v6721
      %v6737 = vadd.f32 %v6736, %v6722
      %v6738 = vadd.f32 %v6737, %v6723
      %v6739 = vadd.f32 %v6738, %v6724
      %v6740 = vadd.f32 %v6739, %v6725
      %v6741 = vadd.f32 %v6740, %v6726
      %v6742 = vrot.slane %v6741, 4
      %v6743 = vadd.f32 %v6741, %v6742
      %v6744 = vrot.slane %v6743, 2
      %v6745 = vadd.f32 %v6743, %v6744
      %v6746 = vrot.slane %v6745, 1
      %v6747 = vadd.f32 %v6745, %v6746
      %v6748 = vadd.f32 %v5356, %v6047
      %v6749 = vadd.f32 %v5357, %v6048
      %v6750 = vadd.f32 %v5358, %v6049
      %v6751 = vadd.f32 %v5359, %v6050
      %v6752 = vadd.f32 %v5360, %v6051
      %v6753 = vadd.f32 %v5361, %v6052
      %v6754 = vadd.f32 %v5362, %v6053
      %v6755 = vadd.f32 %v5363, %v6054
      %v6756 = vadd.f32 %v5364, %v6055
      %v6757 = vadd.f32 %v5365, %v6056
      %v6758 = vadd.f32 %v5366, %v6057
      %v6759 = vadd.f32 %v5367, %v6058
      %v6760 = vadd.f32 %v5368, %v6059
      %v6761 = vadd.f32 %v5369, %v6060
      %v6762 = vadd.f32 %v5370, %v6061
      %v6763 = vadd.f32 %v5371, %v6062
      %v6764 = vtanh.pop %v6748
      %v6765 = vtanh.pop %v6749
      %v6766 = vtanh.pop %v6750
      %v6767 = vtanh.pop %v6751
      %v6768 = vtanh.pop %v6752
      %v6769 = vtanh.pop %v6753
      %v6770 = vtanh.pop %v6754
      %v6771 = vtanh.pop %v6755
      %v6772 = vtanh.pop %v6756
      %v6773 = vtanh.pop %v6757
      %v6774 = vtanh.pop %v6758
      %v6775 = vtanh.pop %v6759
      %v6776 = vtanh.pop %v6760
      %v6777 = vtanh.pop %v6761
      %v6778 = vtanh.pop %v6762
      %v6779 = vtanh.pop %v6763
      %v6780 = vmul.f32 %v6097, %v6764
      %v6781 = vmul.f32 %v6101, %v6765
      %v6782 = vmul.f32 %v6105, %v6766
      %v6783 = vmul.f32 %v6109, %v6767
      %v6784 = vmul.f32 %v6113, %v6768
      %v6785 = vmul.f32 %v6117, %v6769
      %v6786 = vmul.f32 %v6121, %v6770
      %v6787 = vmul.f32 %v6125, %v6771
      %v6788 = vmul.f32 %v6129, %v6772
      %v6789 = vmul.f32 %v6133, %v6773
      %v6790 = vmul.f32 %v6137, %v6774
      %v6791 = vmul.f32 %v6141, %v6775
      %v6792 = vmul.f32 %v6145, %v6776
      %v6793 = vmul.f32 %v6149, %v6777
      %v6794 = vmul.f32 %v6153, %v6778
      %v6795 = vmul.f32 %v6157, %v6779
      %v6796 = vadd.f32 %v6780, %v6781
      %v6797 = vadd.f32 %v6796, %v6782
      %v6798 = vadd.f32 %v6797, %v6783
      %v6799 = vadd.f32 %v6798, %v6784
      %v6800 = vadd.f32 %v6799, %v6785
      %v6801 = vadd.f32 %v6800, %v6786
      %v6802 = vadd.f32 %v6801, %v6787
      %v6803 = vadd.f32 %v6802, %v6788
      %v6804 = vadd.f32 %v6803, %v6789
      %v6805 = vadd.f32 %v6804, %v6790
      %v6806 = vadd.f32 %v6805, %v6791
      %v6807 = vadd.f32 %v6806, %v6792
      %v6808 = vadd.f32 %v6807, %v6793
      %v6809 = vadd.f32 %v6808, %v6794
      %v6810 = vadd.f32 %v6809, %v6795
      %v6811 = vrot.slane %v6810, 4
      %v6812 = vadd.f32 %v6810, %v6811
      %v6813 = vrot.slane %v6812, 2
      %v6814 = vadd.f32 %v6812, %v6813
      %v6815 = vrot.slane %v6814, 1
      %v6816 = vadd.f32 %v6814, %v6815
      %v6827 = vcombine.low %v6195, %v6264
      %v6828 = vcombine.low %v6333, %v6402
      %v6829 = vcombine.low %v6471, %v6540
      %v6830 = vcombine.low %v6609, %v6678
      %v6832 = vunpack.c.l.s4 1966171168
      %v6833 = vunpack.c.0.s8 %v6832
      %v6834 = vlaneseq
      %v6835 = vshrl.u32 %v6834, 7
      %v6836 = vsub.s32 %v6833, %v6835
      %v6837 = vrot.slane %v6827, %v6836
      %v6839 = vunpack.c.l.s4 1966171168
      %v6840 = vunpack.c.0.s8 %v6839
      %v6841 = vlaneseq
      %v6842 = vshrl.u32 %v6841, 7
      %v6843 = vsub.s32 %v6840, %v6842
      %v6844 = vrot.slane %v6828, %v6843
      %v6846 = vunpack.c.l.s4 1966171168
      %v6847 = vunpack.c.0.s8 %v6846
      %v6848 = vlaneseq
      %v6849 = vshrl.u32 %v6848, 7
      %v6850 = vsub.s32 %v6847, %v6849
      %v6851 = vrot.slane %v6829, %v6850
      %v6853 = vunpack.c.l.s4 1966171168
      %v6854 = vunpack.c.0.s8 %v6853
      %v6855 = vlaneseq
      %v6856 = vshrl.u32 %v6855, 7
      %v6857 = vsub.s32 %v6854, %v6856
      %v6858 = vrot.slane %v6830, %v6857
      %v6859 = vcombine.low %v6837, %v6844
      %v6860 = vcombine.low %v6851, %v6858
      %v6862 = vunpack.c.l.s4 1966171168
      %v6863 = vunpack.c.0.s8 %v6862
      %v6864 = vlaneseq
      %v6865 = vshrl.u32 %v6864, 7
      %v6866 = vsub.s32 %v6863, %v6865
      %v6867 = vrot.slane %v6859, %v6866
      %v6869 = vunpack.c.l.s4 1966171168
      %v6870 = vunpack.c.0.s8 %v6869
      %v6871 = vlaneseq
      %v6872 = vshrl.u32 %v6871, 7
      %v6873 = vsub.s32 %v6870, %v6872
      %v6874 = vrot.slane %v6860, %v6873
      %v6875 = vcombine.low %v6867, %v6874
      %v6876 = vcombine.low %v6747, %v6816
      %v6878 = vunpack.c.l.s4 1966171168
      %v6879 = vunpack.c.0.s8 %v6878
      %v6880 = vlaneseq
      %v6881 = vshrl.u32 %v6880, 7
      %v6882 = vsub.s32 %v6879, %v6881
      %v6883 = vrot.slane %v6876, %v6882
      %v6885 = vunpack.c.l.s4 1966171168
      %v6886 = vunpack.c.0.s8 %v6885
      %v6887 = vlaneseq
      %v6888 = vshrl.u32 %v6887, 7
      %v6889 = vsub.s32 %v6886, %v6888
      %v6890 = vrot.slane %v6883, %v6889
      %6893 = vst [vmem:[%s430] sm:$0xff] %v6875
      %v6894 = vlaneseq
      %vm6895 = vcmp.ge.s32.totalorder %v6894, 0
      %vm6896 = vcmp.lt.s32.totalorder %v6894, 256
      %vm6897 = vmand %vm6895, %vm6896
      %6898 = vst.msk [vmem:[%s430 + $0x8] sm:$0x3] %vm6897, %v6890
      %s6899 = smul.u32 10, %s23
      %p6900 = scmp.lt.s32.totalorder %s6899, 19
      %s6901 = scalar_select %p6900, %s6899, 19
      %s6902 = scalar_lea.vmem %s12, %s6901
      // Predicated region
      $region69: #{vrp_actor_forward.1} parent=67 // pred_check
        %p6903 = pneg %p303
      $region70: #{vrp_actor_forward.1} parent=67 // pred_check_branch
        %6905 = sbr.rel (%p6903) target = $region72
      $region71: #{vrp_actor_forward.1} parent=67 // pred_region
        %s6906 = smul.u32 10, %s23
      $region72: #{vrp_actor_forward.1} parent=67 // pred_fallthru
        _
    $region68: #{vrp_actor_forward.1} parent=5 // pred_fallthru
      _
    %p6907 = scmp.le.s32.totalorder 2, %s18
    // Predicated region
    $region73: #{vrp_actor_forward.1} parent=5 // pred_check
      %p6908 = pneg %p6907
    $region74: #{vrp_actor_forward.1} parent=5 // pred_check_branch
      %6910 = sbr.rel (%p6908) target = $region76
    $region75: #{vrp_actor_forward.1} parent=5 // pred_region
      %s6911 = ssub.s32 %s18, 2
      // Predicated region
      $region77: #{vrp_actor_forward.1} parent=75 // pred_check
        %p6912 = pneg %p309
      $region78: #{vrp_actor_forward.1} parent=75 // pred_check_branch
        %6914 = sbr.rel (%p6912) target = $region80
      $region79: #{vrp_actor_forward.1} parent=75 // pred_region
        %s6915 = smul.u32 10, %s24
        %p6916 = scmp.lt.s32.totalorder %s6915, 19
        %s6917 = scalar_select %p6916, %s6915, 19
        %s6918 = scalar_lea.vmem %s12, %s6917
      $region80: #{vrp_actor_forward.1} parent=75 // pred_fallthru
        _
    $region76: #{vrp_actor_forward.1} parent=5 // pred_fallthru
      _
  $region6: #{vrp_actor_forward.1} parent=0 // loop_footer
    %s22 = sadd.s32 1, %s18
  $region7: #{vrp_actor_forward.1} parent=0 // loop_footer_branch
    %17 = sbr.rel target = $region3
  $region8: #{vrp_actor_forward.1} parent=0 // loop_exit
    _

</llo_original>
